<compile_context>
chip_gen: v6e
topology: v6e:2x2x1
jax: 0.10.0
libtpu: 0.0.40
codegen_flags: <defaults>
</compile_context>

<pallas_src>
import jax
import jax.numpy as jnp
from jax import lax
from jax.experimental import pallas as pl
from jax.experimental.pallas import tpu as pltpu

_EPS = 1e-5
_MXU_DTYPE = jnp.bfloat16     # MXU operand dtype (accumulation is always f32)


def _im2col_3x3(xp, H, W):
    """(C, H+2, W+2) padded slab -> (9*C, H*W) patch matrix, rows in (dy, dx, ci) order."""
    C = xp.shape[0]
    cols = []
    for dy in range(3):
        for dx in range(3):
            cols.append(xp[:, dy:dy + H, dx:dx + W].reshape(C, H * W))
    return jnp.concatenate(cols, axis=0)


def _double_conv_kernel(x_ref, w1_ref, g1_ref, b1_ref, w2_ref, g2_ref, b2_ref,
                        out_ref,
                        xpad_ref, apad_ref, y1_ref,
                        s1_ref, ss1_ref, s2_ref, ss2_ref):
    n = pl.program_id(0)
    N, Cmid, HW = y1_ref.shape
    Cin, Hp, Wp = xpad_ref.shape
    H, W = Hp - 2, Wp - 2
    inv_count = 1.0 / float(N * HW)

    # One-time init: zero the padded-input halo and the BN1 stat accumulators.
    @pl.when(n == 0)
    def _init():
        xpad_ref[...] = jnp.zeros_like(xpad_ref)
        s1_ref[...] = jnp.zeros_like(s1_ref)
        ss1_ref[...] = jnp.zeros_like(ss1_ref)

    # ---- conv1 for image n: one deep K = 9*Cin bf16 matmul, f32 accumulate. --
    xpad_ref[:, 1:H + 1, 1:W + 1] = x_ref[0]           # interior copy; halo stays 0
    p1 = _im2col_3x3(xpad_ref[...], H, W).astype(_MXU_DTYPE)            # (9*Cin, HW)
    y1 = jnp.dot(w1_ref[...], p1, preferred_element_type=jnp.float32)   # (Cmid, HW)

    # One-pass BN1 statistics over (N, H, W), accumulated across grid steps.
    s1_ref[...] += jnp.sum(y1, axis=1, keepdims=True)
    ss1_ref[...] += jnp.sum(y1 * y1, axis=1, keepdims=True)
    y1_ref[n] = y1                                     # pre-BN conv1 output, VMEM-resident

    # ---- last grid step: BN1+ReLU -> conv2 -> BN2+ReLU, entirely in VMEM. ----
    @pl.when(n == N - 1)
    def _finalize():
        mean1 = s1_ref[...] * inv_count
        var1 = ss1_ref[...] * inv_count - mean1 * mean1
        scale1 = g1_ref[...] * lax.rsqrt(var1 + _EPS)  # folded BN: y * scale + bias
        bias1 = b1_ref[...] - mean1 * scale1

        apad_ref[...] = jnp.zeros_like(apad_ref)
        s2_ref[...] = jnp.zeros_like(s2_ref)
        ss2_ref[...] = jnp.zeros_like(ss2_ref)

        def conv2_body(i, carry):
            a = jnp.maximum(y1_ref[i] * scale1 + bias1, 0.0)            # (Cmid, HW) f32
            apad_ref[:, 1:H + 1, 1:W + 1] = a.reshape(Cmid, H, W)
            p2 = _im2col_3x3(apad_ref[...], H, W).astype(_MXU_DTYPE)    # (9*Cmid, HW)
            y2 = jnp.dot(w2_ref[...], p2,
                         preferred_element_type=jnp.float32)            # (Cout, HW)
            s2_ref[...] += jnp.sum(y2, axis=1, keepdims=True)
            ss2_ref[...] += jnp.sum(y2 * y2, axis=1, keepdims=True)
            out_ref[i] = y2          # out block index is constant -> stays VMEM-resident
            return carry

        lax.fori_loop(0, N, conv2_body, 0, unroll=True)

        mean2 = s2_ref[...] * inv_count
        var2 = ss2_ref[...] * inv_count - mean2 * mean2
        scale2 = g2_ref[...] * lax.rsqrt(var2 + _EPS)
        bias2 = b2_ref[...] - mean2 * scale2

        def bn2_body(i, carry):
            out_ref[i] = jnp.maximum(out_ref[i] * scale2 + bias2, 0.0)
            return carry

        lax.fori_loop(0, N, bn2_body, 0, unroll=True)


@jax.jit
def double_conv(x_nchw, params):
    """Fused DoubleConv forward: (N, Cin, H, W) f32 -> (N, Cout, H, W) f32."""
    w1, g1, b1, w2, g2, b2 = params                    # PyTorch layouts: OIHW, (C,)
    N, Cin, H, W = x_nchw.shape
    Cmid, Cout = w1.shape[0], w2.shape[0]

    # Flatten conv weights OIHW -> (Cout, dy, dx, ci) -> (Cout, 9*Cin); bf16 MXU feed.
    w1_flat = jnp.transpose(w1, (0, 2, 3, 1)).reshape(Cmid, 9 * Cin).astype(_MXU_DTYPE)
    w2_flat = jnp.transpose(w2, (0, 2, 3, 1)).reshape(Cout, 9 * Cmid).astype(_MXU_DTYPE)
    g1c, b1c = g1.reshape(Cmid, 1), b1.reshape(Cmid, 1)
    g2c, b2c = g2.reshape(Cout, 1), b2.reshape(Cout, 1)

    const2 = lambda n: (0, 0)
    out_flat = pl.pallas_call(
        _double_conv_kernel,
        grid=(N,),
        out_shape=jax.ShapeDtypeStruct((N, Cout, H * W), jnp.float32),
        in_specs=[
            pl.BlockSpec((1, Cin, H, W), lambda n: (n, 0, 0, 0)),   # per-image input tile
            pl.BlockSpec((Cmid, 9 * Cin), const2),                  # w1 (bf16)
            pl.BlockSpec((Cmid, 1), const2),                        # gamma1
            pl.BlockSpec((Cmid, 1), const2),                        # beta1
            pl.BlockSpec((Cout, 9 * Cmid), const2),                 # w2 (bf16)
            pl.BlockSpec((Cout, 1), const2),                        # gamma2
            pl.BlockSpec((Cout, 1), const2),                        # beta2
        ],
        # Lane-dense output slab (last dim = H*W); reshaped for free below.
        out_specs=pl.BlockSpec((N, Cout, H * W), lambda n: (0, 0, 0)),
        scratch_shapes=[
            pltpu.VMEM((Cin, H + 2, W + 2), jnp.float32),    # padded input (halo zeroed once)
            pltpu.VMEM((Cmid, H + 2, W + 2), jnp.float32),   # padded BN1+ReLU activation
            pltpu.VMEM((N, Cmid, H * W), jnp.float32),       # pre-BN conv1 output (whole batch)
            pltpu.VMEM((Cmid, 1), jnp.float32),              # BN1 sum
            pltpu.VMEM((Cmid, 1), jnp.float32),              # BN1 sum of squares
            pltpu.VMEM((Cout, 1), jnp.float32),              # BN2 sum
            pltpu.VMEM((Cout, 1), jnp.float32),              # BN2 sum of squares
        ],
        compiler_params=pltpu.CompilerParams(
            # The batch axis carries the BN stats reduction -> must stay "arbitrary".
            dimension_semantics=("arbitrary",),
        ),
    )(x_nchw, w1_flat, g1c, b1c, w2_flat, g2c, b2c)
    return out_flat.reshape(N, Cout, H, W)


def init_params(key, in_channels, out_channels, mid_channels=None):
    if not mid_channels:
        mid_channels = out_channels
    k1, k2 = jax.random.split(key)
    # PyTorch Conv2d weight layout (Cout, Cin, 3, 3), bias-free.
    w1 = 0.1 * jax.random.normal(k1, (mid_channels, in_channels, 3, 3), jnp.float32)
    w2 = 0.1 * jax.random.normal(k2, (out_channels, mid_channels, 3, 3), jnp.float32)
    g1 = jnp.ones((mid_channels,), jnp.float32)
    b1 = jnp.zeros((mid_channels,), jnp.float32)
    g2 = jnp.ones((out_channels,), jnp.float32)
    b2 = jnp.zeros((out_channels,), jnp.float32)
    return (w1, g1, b1, w2, g2, b2)


def _reference(x_nchw, params):
    """Pure-JAX f32 reference mirroring the PyTorch forward (training-mode BN)."""
    w1, g1, b1, w2, g2, b2 = params

    def conv(x, w):
        return lax.conv_general_dilated(
            x, w, window_strides=(1, 1), padding=((1, 1), (1, 1)),
            dimension_numbers=("NCHW", "OIHW", "NCHW"),
            precision=lax.Precision.HIGHEST)

    def bn_relu(y, g, b):
        mean = jnp.mean(y, axis=(0, 2, 3), keepdims=True)
        var = jnp.mean((y - mean) ** 2, axis=(0, 2, 3), keepdims=True)
        yn = (y - mean) * lax.rsqrt(var + _EPS)
        yn = yn * g.reshape(1, -1, 1, 1) + b.reshape(1, -1, 1, 1)
        return jnp.maximum(yn, 0.0)

    y = bn_relu(conv(x_nchw, w1), g1, b1)
    return bn_relu(conv(y, w2), g2, b2)


if __name__ == "__main__":
    key = jax.random.PRNGKey(0)
    kx, kp = jax.random.split(key)

    N, in_channels, out_channels, H, W = 2, 4, 8, 16, 16
    x = jax.random.normal(kx, (N, in_channels, H, W), jnp.float32)   # NCHW
    params = init_params(kp, in_channels, out_channels)

    out = jax.block_until_ready(double_conv(x, params))
    ref = jax.block_until_ready(_reference(x, params))

    assert out.shape == (N, out_channels, H, W)
    # Tolerance covers bf16 MXU operands through two convs vs. the exact-f32
    # reference; the mean-error bound guards against any algorithmic mismatch.
    err = jnp.abs(out - ref)
    assert jnp.allclose(out, ref, atol=5e-2, rtol=5e-2), float(jnp.max(err))
    assert float(jnp.mean(err)) < 1e-2, float(jnp.mean(err))
    print("KERNEL_OK")
</pallas_src>

<mosaic_0001>
module attributes {stable_mosaic.version = 11 : i64} {
  func.func @_double_conv_kernel(%arg0: i32, %arg1: memref<1x4x16x16xf32, #tpu.memory_space<vmem>>, %arg2: memref<8x36xbf16, #tpu.memory_space<vmem>>, %arg3: memref<8x1xf32, #tpu.memory_space<vmem>>, %arg4: memref<8x1xf32, #tpu.memory_space<vmem>>, %arg5: memref<8x72xbf16, #tpu.memory_space<vmem>>, %arg6: memref<8x1xf32, #tpu.memory_space<vmem>>, %arg7: memref<8x1xf32, #tpu.memory_space<vmem>>, %arg8: memref<2x8x256xf32, #tpu.memory_space<vmem>>, %arg9: memref<4x18x18xf32, #tpu.memory_space<vmem>>, %arg10: memref<8x18x18xf32, #tpu.memory_space<vmem>>, %arg11: memref<2x8x256xf32, #tpu.memory_space<vmem>>, %arg12: memref<8x1xf32, #tpu.memory_space<vmem>>, %arg13: memref<8x1xf32, #tpu.memory_space<vmem>>, %arg14: memref<8x1xf32, #tpu.memory_space<vmem>>, %arg15: memref<8x1xf32, #tpu.memory_space<vmem>>) attributes {dimension_semantics = [#tpu.dimension_semantics<arbitrary>], iteration_bounds = array<i64: 2>, scalar_prefetch = 0 : i64, scratch_operands = 7 : i64, tpu.core_type = #tpu.core_type<tc>, window_params = [{transform_indices = @transform_0, window_bounds = array<i64: 1, 4, 16, 16>}, {pipeline_mode = #tpu.pipeline_mode<synchronous>, transform_indices = @transform_1, window_bounds = array<i64: 8, 36>}, {pipeline_mode = #tpu.pipeline_mode<synchronous>, transform_indices = @transform_2, window_bounds = array<i64: 8, 1>}, {pipeline_mode = #tpu.pipeline_mode<synchronous>, transform_indices = @transform_3, window_bounds = array<i64: 8, 1>}, {pipeline_mode = #tpu.pipeline_mode<synchronous>, transform_indices = @transform_4, window_bounds = array<i64: 8, 72>}, {pipeline_mode = #tpu.pipeline_mode<synchronous>, transform_indices = @transform_5, window_bounds = array<i64: 8, 1>}, {pipeline_mode = #tpu.pipeline_mode<synchronous>, transform_indices = @transform_6, window_bounds = array<i64: 8, 1>}, {pipeline_mode = #tpu.pipeline_mode<synchronous>, transform_indices = @transform_7, window_bounds = array<i64: 2, 8, 256>}]} {
    %c0_i32 = arith.constant 0 : i32
    %0 = arith.cmpi eq, %arg0, %c0_i32 : i32
    %1 = arith.extui %0 : i1 to i32
    %c0_i32_0 = arith.constant 0 : i32
    %2 = arith.cmpi ne, %1, %c0_i32_0 : i32
    scf.if %2 {
      %cst_24 = arith.constant 0.000000e+00 : f32
      %47 = vector.broadcast %cst_24 : f32 to vector<4x18x18xf32>
      %c0_25 = arith.constant 0 : index
      %c0_26 = arith.constant 0 : index
      %c0_27 = arith.constant 0 : index
      %48 = vector.load %arg9[%c0_25, %c0_26, %c0_27] : memref<4x18x18xf32, #tpu.memory_space<vmem>>, vector<4x18x18xf32>
      tpu.vector_store %arg9[%c0_25, %c0_26, %c0_27], %47 {strides = array<i32>} : memref<4x18x18xf32, #tpu.memory_space<vmem>>, vector<4x18x18xf32>,
      %cst_28 = arith.constant 0.000000e+00 : f32
      %49 = vector.broadcast %cst_28 : f32 to vector<8x1xf32>
      %c0_29 = arith.constant 0 : index
      %c0_30 = arith.constant 0 : index
      %50 = vector.load %arg12[%c0_29, %c0_30] : memref<8x1xf32, #tpu.memory_space<vmem>>, vector<8x1xf32>
      tpu.vector_store %arg12[%c0_29, %c0_30], %49 {strides = array<i32>} : memref<8x1xf32, #tpu.memory_space<vmem>>, vector<8x1xf32>,
      %cst_31 = arith.constant 0.000000e+00 : f32
      %51 = vector.broadcast %cst_31 : f32 to vector<8x1xf32>
      %c0_32 = arith.constant 0 : index
      %c0_33 = arith.constant 0 : index
      %52 = vector.load %arg13[%c0_32, %c0_33] : memref<8x1xf32, #tpu.memory_space<vmem>>, vector<8x1xf32>
      tpu.vector_store %arg13[%c0_32, %c0_33], %51 {strides = array<i32>} : memref<8x1xf32, #tpu.memory_space<vmem>>, vector<8x1xf32>,
    } else {
    }
    %c0 = arith.constant 0 : index
    %c0_1 = arith.constant 0 : index
    %c0_2 = arith.constant 0 : index
    %c0_3 = arith.constant 0 : index
    %3 = vector.load %arg1[%c0, %c0_1, %c0_2, %c0_3] : memref<1x4x16x16xf32, #tpu.memory_space<vmem>>, vector<1x4x16x16xf32>
    %4 = vector.shape_cast %3 : vector<1x4x16x16xf32> to vector<4x16x16xf32>
    %c0_4 = arith.constant 0 : index
    %c1 = arith.constant 1 : index
    %c1_5 = arith.constant 1 : index
    %5 = vector.load %arg9[%c0_4, %c1, %c1_5] : memref<4x18x18xf32, #tpu.memory_space<vmem>>, vector<4x16x16xf32>
    tpu.vector_store %arg9[%c0_4, %c1, %c1_5], %4 {strides = array<i32>} : memref<4x18x18xf32, #tpu.memory_space<vmem>>, vector<4x16x16xf32>,
    %c0_6 = arith.constant 0 : index
    %c0_7 = arith.constant 0 : index
    %c0_8 = arith.constant 0 : index
    %6 = vector.load %arg9[%c0_6, %c0_7, %c0_8] : memref<4x18x18xf32, #tpu.memory_space<vmem>>, vector<4x18x18xf32>
    %7 = vector.extract_strided_slice %6 {offsets = [0, 0, 0], sizes = [4, 16, 16], strides = [1, 1, 1]} : vector<4x18x18xf32> to vector<4x16x16xf32>
    %8 = vector.shape_cast %7 : vector<4x16x16xf32> to vector<4x256xf32>
    %9 = vector.extract_strided_slice %6 {offsets = [0, 0, 1], sizes = [4, 16, 16], strides = [1, 1, 1]} : vector<4x18x18xf32> to vector<4x16x16xf32>
    %10 = vector.shape_cast %9 : vector<4x16x16xf32> to vector<4x256xf32>
    %11 = vector.extract_strided_slice %6 {offsets = [0, 0, 2], sizes = [4, 16, 16], strides = [1, 1, 1]} : vector<4x18x18xf32> to vector<4x16x16xf32>
    %12 = vector.shape_cast %11 : vector<4x16x16xf32> to vector<4x256xf32>
    %13 = vector.extract_strided_slice %6 {offsets = [0, 1, 0], sizes = [4, 16, 16], strides = [1, 1, 1]} : vector<4x18x18xf32> to vector<4x16x16xf32>
    %14 = vector.shape_cast %13 : vector<4x16x16xf32> to vector<4x256xf32>
    %15 = vector.extract_strided_slice %6 {offsets = [0, 1, 1], sizes = [4, 16, 16], strides = [1, 1, 1]} : vector<4x18x18xf32> to vector<4x16x16xf32>
    %16 = vector.shape_cast %15 : vector<4x16x16xf32> to vector<4x256xf32>
    %17 = vector.extract_strided_slice %6 {offsets = [0, 1, 2], sizes = [4, 16, 16], strides = [1, 1, 1]} : vector<4x18x18xf32> to vector<4x16x16xf32>
    %18 = vector.shape_cast %17 : vector<4x16x16xf32> to vector<4x256xf32>
    %19 = vector.extract_strided_slice %6 {offsets = [0, 2, 0], sizes = [4, 16, 16], strides = [1, 1, 1]} : vector<4x18x18xf32> to vector<4x16x16xf32>
    %20 = vector.shape_cast %19 : vector<4x16x16xf32> to vector<4x256xf32>
    %21 = vector.extract_strided_slice %6 {offsets = [0, 2, 1], sizes = [4, 16, 16], strides = [1, 1, 1]} : vector<4x18x18xf32> to vector<4x16x16xf32>
    %22 = vector.shape_cast %21 : vector<4x16x16xf32> to vector<4x256xf32>
    %23 = vector.extract_strided_slice %6 {offsets = [0, 2, 2], sizes = [4, 16, 16], strides = [1, 1, 1]} : vector<4x18x18xf32> to vector<4x16x16xf32>
    %24 = vector.shape_cast %23 : vector<4x16x16xf32> to vector<4x256xf32>
    %25 = tpu.concatenate %8, %10, %12, %14, %16, %18, %20, %22, %24 in 0 : vector<4x256xf32>, vector<4x256xf32>, vector<4x256xf32>, vector<4x256xf32>, vector<4x256xf32>, vector<4x256xf32>, vector<4x256xf32>, vector<4x256xf32>, vector<4x256xf32> -> vector<36x256xf32>
    %26 = arith.truncf %25 : vector<36x256xf32> to vector<36x256xbf16>
    %c0_9 = arith.constant 0 : index
    %c0_10 = arith.constant 0 : index
    %27 = vector.load %arg2[%c0_9, %c0_10] : memref<8x36xbf16, #tpu.memory_space<vmem>>, vector<8x36xbf16>
    %cst = arith.constant dense<0.000000e+00> : vector<8x256xf32>
    %28 = tpu.matmul %27, %26, %cst {dimension_numbers = #tpu.dot_dimension_numbers<[1], [0], [0], [1], [0, 0, 1, 1], [], []>} : vector<8x36xbf16>, vector<36x256xbf16>, vector<8x256xf32> -> vector<8x256xf32>
    %c0_11 = arith.constant 0 : index
    %c0_12 = arith.constant 0 : index
    %29 = vector.load %arg12[%c0_11, %c0_12] : memref<8x1xf32, #tpu.memory_space<vmem>>, vector<8x1xf32>
    %cst_13 = arith.constant dense<0.000000e+00> : vector<8xf32>
    %30 = vector.multi_reduction <add>, %28, %cst_13 [1] : vector<8x256xf32> to vector<8xf32>
    %31 = vector.shape_cast %30 : vector<8xf32> to vector<8x1xf32>
    %32 = arith.addf %29, %31 : vector<8x1xf32>
    %c0_14 = arith.constant 0 : index
    %c0_15 = arith.constant 0 : index
    %33 = vector.load %arg12[%c0_14, %c0_15] : memref<8x1xf32, #tpu.memory_space<vmem>>, vector<8x1xf32>
    tpu.vector_store %arg12[%c0_14, %c0_15], %32 {strides = array<i32>} : memref<8x1xf32, #tpu.memory_space<vmem>>, vector<8x1xf32>,
    %c0_16 = arith.constant 0 : index
    %c0_17 = arith.constant 0 : index
    %34 = vector.load %arg13[%c0_16, %c0_17] : memref<8x1xf32, #tpu.memory_space<vmem>>, vector<8x1xf32>
    %35 = arith.mulf %28, %28 : vector<8x256xf32>
    %cst_18 = arith.constant dense<0.000000e+00> : vector<8xf32>
    %36 = vector.multi_reduction <add>, %35, %cst_18 [1] : vector<8x256xf32> to vector<8xf32>
    %37 = vector.shape_cast %36 : vector<8xf32> to vector<8x1xf32>
    %38 = arith.addf %34, %37 : vector<8x1xf32>
    %c0_19 = arith.constant 0 : index
    %c0_20 = arith.constant 0 : index
    %39 = vector.load %arg13[%c0_19, %c0_20] : memref<8x1xf32, #tpu.memory_space<vmem>>, vector<8x1xf32>
    tpu.vector_store %arg13[%c0_19, %c0_20], %38 {strides = array<i32>} : memref<8x1xf32, #tpu.memory_space<vmem>>, vector<8x1xf32>,
    %40 = arith.index_cast %arg0 : i32 to index
    %c0_21 = arith.constant 0 : index
    %c0_22 = arith.constant 0 : index
    %41 = vector.load %arg11[%40, %c0_21, %c0_22] : memref<2x8x256xf32, #tpu.memory_space<vmem>>, vector<1x8x256xf32>
    %42 = vector.shape_cast %41 : vector<1x8x256xf32> to vector<8x256xf32>
    %43 = vector.shape_cast %28 : vector<8x256xf32> to vector<1x8x256xf32>
    tpu.vector_store %arg11[%40, %c0_21, %c0_22], %43 {strides = array<i32>} : memref<2x8x256xf32, #tpu.memory_space<vmem>>, vector<1x8x256xf32>,
    %c1_i32 = arith.constant 1 : i32
    %44 = arith.cmpi eq, %arg0, %c1_i32 : i32
    %45 = arith.extui %44 : i1 to i32
    %c0_i32_23 = arith.constant 0 : i32
    %46 = arith.cmpi ne, %45, %c0_i32_23 : i32
    scf.if %46 {
      %c0_24 = arith.constant 0 : index
      %c0_25 = arith.constant 0 : index
      %47 = vector.load %arg12[%c0_24, %c0_25] : memref<8x1xf32, #tpu.memory_space<vmem>>, vector<8x1xf32>
      %cst_26 = arith.constant 0.001953125 : f32
      %48 = vector.broadcast %cst_26 : f32 to vector<8x1xf32>
      %49 = arith.mulf %47, %48 : vector<8x1xf32>
      %c0_27 = arith.constant 0 : index
      %c0_28 = arith.constant 0 : index
      %50 = vector.load %arg13[%c0_27, %c0_28] : memref<8x1xf32, #tpu.memory_space<vmem>>, vector<8x1xf32>
      %cst_29 = arith.constant 0.001953125 : f32
      %51 = vector.broadcast %cst_29 : f32 to vector<8x1xf32>
      %52 = arith.mulf %50, %51 : vector<8x1xf32>
      %53 = arith.mulf %49, %49 : vector<8x1xf32>
      %54 = arith.subf %52, %53 : vector<8x1xf32>
      %c0_30 = arith.constant 0 : index
      %c0_31 = arith.constant 0 : index
      %55 = vector.load %arg3[%c0_30, %c0_31] : memref<8x1xf32, #tpu.memory_space<vmem>>, vector<8x1xf32>
      %cst_32 = arith.constant 9.99999974E-6 : f32
      %56 = vector.broadcast %cst_32 : f32 to vector<8x1xf32>
      %57 = arith.addf %54, %56 : vector<8x1xf32>
      %58 = math.rsqrt %57 : vector<8x1xf32>
      %59 = arith.mulf %55, %58 : vector<8x1xf32>
      %c0_33 = arith.constant 0 : index
      %c0_34 = arith.constant 0 : index
      %60 = vector.load %arg4[%c0_33, %c0_34] : memref<8x1xf32, #tpu.memory_space<vmem>>, vector<8x1xf32>
      %61 = arith.mulf %49, %59 : vector<8x1xf32>
      %62 = arith.subf %60, %61 : vector<8x1xf32>
      %cst_35 = arith.constant 0.000000e+00 : f32
      %63 = vector.broadcast %cst_35 : f32 to vector<8x18x18xf32>
      %c0_36 = arith.constant 0 : index
      %c0_37 = arith.constant 0 : index
      %c0_38 = arith.constant 0 : index
      %64 = vector.load %arg10[%c0_36, %c0_37, %c0_38] : memref<8x18x18xf32, #tpu.memory_space<vmem>>, vector<8x18x18xf32>
      tpu.vector_store %arg10[%c0_36, %c0_37, %c0_38], %63 {strides = array<i32>} : memref<8x18x18xf32, #tpu.memory_space<vmem>>, vector<8x18x18xf32>,
      %cst_39 = arith.constant 0.000000e+00 : f32
      %65 = vector.broadcast %cst_39 : f32 to vector<8x1xf32>
      %c0_40 = arith.constant 0 : index
      %c0_41 = arith.constant 0 : index
      %66 = vector.load %arg14[%c0_40, %c0_41] : memref<8x1xf32, #tpu.memory_space<vmem>>, vector<8x1xf32>
      tpu.vector_store %arg14[%c0_40, %c0_41], %65 {strides = array<i32>} : memref<8x1xf32, #tpu.memory_space<vmem>>, vector<8x1xf32>,
      %cst_42 = arith.constant 0.000000e+00 : f32
      %67 = vector.broadcast %cst_42 : f32 to vector<8x1xf32>
      %c0_43 = arith.constant 0 : index
      %c0_44 = arith.constant 0 : index
      %68 = vector.load %arg15[%c0_43, %c0_44] : memref<8x1xf32, #tpu.memory_space<vmem>>, vector<8x1xf32>
      tpu.vector_store %arg15[%c0_43, %c0_44], %67 {strides = array<i32>} : memref<8x1xf32, #tpu.memory_space<vmem>>, vector<8x1xf32>,
      %c0_i32_45 = arith.constant 0 : i32
      %69 = arith.index_cast %c0_i32_45 : i32 to index
      %c0_46 = arith.constant 0 : index
      %c0_47 = arith.constant 0 : index
      %70 = vector.load %arg11[%69, %c0_46, %c0_47] : memref<2x8x256xf32, #tpu.memory_space<vmem>>, vector<1x8x256xf32>
      %71 = vector.shape_cast %70 : vector<1x8x256xf32> to vector<8x256xf32>
      %72 = vector.broadcast %59 : vector<8x1xf32> to vector<8x256xf32>
      %73 = arith.mulf %71, %72 : vector<8x256xf32>
      %74 = vector.broadcast %62 : vector<8x1xf32> to vector<8x256xf32>
      %75 = arith.addf %73, %74 : vector<8x256xf32>
      %cst_48 = arith.constant 0.000000e+00 : f32
      %76 = vector.broadcast %cst_48 : f32 to vector<8x256xf32>
      %77 = arith.maximumf %75, %76 : vector<8x256xf32>
      %78 = vector.shape_cast %77 : vector<8x256xf32> to vector<8x16x16xf32>
      %c0_49 = arith.constant 0 : index
      %c1_50 = arith.constant 1 : index
      %c1_51 = arith.constant 1 : index
      %79 = vector.load %arg10[%c0_49, %c1_50, %c1_51] : memref<8x18x18xf32, #tpu.memory_space<vmem>>, vector<8x16x16xf32>
      tpu.vector_store %arg10[%c0_49, %c1_50, %c1_51], %78 {strides = array<i32>} : memref<8x18x18xf32, #tpu.memory_space<vmem>>, vector<8x16x16xf32>,
      %c0_52 = arith.constant 0 : index
      %c0_53 = arith.constant 0 : index
      %c0_54 = arith.constant 0 : index
      %80 = vector.load %arg10[%c0_52, %c0_53, %c0_54] : memref<8x18x18xf32, #tpu.memory_space<vmem>>, vector<8x18x18xf32>
      %81 = vector.extract_strided_slice %80 {offsets = [0, 0, 0], sizes = [8, 16, 16], strides = [1, 1, 1]} : vector<8x18x18xf32> to vector<8x16x16xf32>
      %82 = vector.shape_cast %81 : vector<8x16x16xf32> to vector<8x256xf32>
      %83 = vector.extract_strided_slice %80 {offsets = [0, 0, 1], sizes = [8, 16, 16], strides = [1, 1, 1]} : vector<8x18x18xf32> to vector<8x16x16xf32>
      %84 = vector.shape_cast %83 : vector<8x16x16xf32> to vector<8x256xf32>
      %85 = vector.extract_strided_slice %80 {offsets = [0, 0, 2], sizes = [8, 16, 16], strides = [1, 1, 1]} : vector<8x18x18xf32> to vector<8x16x16xf32>
      %86 = vector.shape_cast %85 : vector<8x16x16xf32> to vector<8x256xf32>
      %87 = vector.extract_strided_slice %80 {offsets = [0, 1, 0], sizes = [8, 16, 16], strides = [1, 1, 1]} : vector<8x18x18xf32> to vector<8x16x16xf32>
      %88 = vector.shape_cast %87 : vector<8x16x16xf32> to vector<8x256xf32>
      %89 = vector.extract_strided_slice %80 {offsets = [0, 1, 1], sizes = [8, 16, 16], strides = [1, 1, 1]} : vector<8x18x18xf32> to vector<8x16x16xf32>
      %90 = vector.shape_cast %89 : vector<8x16x16xf32> to vector<8x256xf32>
      %91 = vector.extract_strided_slice %80 {offsets = [0, 1, 2], sizes = [8, 16, 16], strides = [1, 1, 1]} : vector<8x18x18xf32> to vector<8x16x16xf32>
      %92 = vector.shape_cast %91 : vector<8x16x16xf32> to vector<8x256xf32>
      %93 = vector.extract_strided_slice %80 {offsets = [0, 2, 0], sizes = [8, 16, 16], strides = [1, 1, 1]} : vector<8x18x18xf32> to vector<8x16x16xf32>
      %94 = vector.shape_cast %93 : vector<8x16x16xf32> to vector<8x256xf32>
      %95 = vector.extract_strided_slice %80 {offsets = [0, 2, 1], sizes = [8, 16, 16], strides = [1, 1, 1]} : vector<8x18x18xf32> to vector<8x16x16xf32>
      %96 = vector.shape_cast %95 : vector<8x16x16xf32> to vector<8x256xf32>
      %97 = vector.extract_strided_slice %80 {offsets = [0, 2, 2], sizes = [8, 16, 16], strides = [1, 1, 1]} : vector<8x18x18xf32> to vector<8x16x16xf32>
      %98 = vector.shape_cast %97 : vector<8x16x16xf32> to vector<8x256xf32>
      %99 = tpu.concatenate %82, %84, %86, %88, %90, %92, %94, %96, %98 in 0 : vector<8x256xf32>, vector<8x256xf32>, vector<8x256xf32>, vector<8x256xf32>, vector<8x256xf32>, vector<8x256xf32>, vector<8x256xf32>, vector<8x256xf32>, vector<8x256xf32> -> vector<72x256xf32>
      %100 = arith.truncf %99 : vector<72x256xf32> to vector<72x256xbf16>
      %c0_55 = arith.constant 0 : index
      %c0_56 = arith.constant 0 : index
      %101 = vector.load %arg5[%c0_55, %c0_56] : memref<8x72xbf16, #tpu.memory_space<vmem>>, vector<8x72xbf16>
      %cst_57 = arith.constant dense<0.000000e+00> : vector<8x256xf32>
      %102 = tpu.matmul %101, %100, %cst_57 {dimension_numbers = #tpu.dot_dimension_numbers<[1], [0], [0], [1], [0, 0, 1, 1], [], []>} : vector<8x72xbf16>, vector<72x256xbf16>, vector<8x256xf32> -> vector<8x256xf32>
      %c0_58 = arith.constant 0 : index
      %c0_59 = arith.constant 0 : index
      %103 = vector.load %arg14[%c0_58, %c0_59] : memref<8x1xf32, #tpu.memory_space<vmem>>, vector<8x1xf32>
      %cst_60 = arith.constant dense<0.000000e+00> : vector<8xf32>
      %104 = vector.multi_reduction <add>, %102, %cst_60 [1] : vector<8x256xf32> to vector<8xf32>
      %105 = vector.shape_cast %104 : vector<8xf32> to vector<8x1xf32>
      %106 = arith.addf %103, %105 : vector<8x1xf32>
      %c0_61 = arith.constant 0 : index
      %c0_62 = arith.constant 0 : index
      %107 = vector.load %arg14[%c0_61, %c0_62] : memref<8x1xf32, #tpu.memory_space<vmem>>, vector<8x1xf32>
      tpu.vector_store %arg14[%c0_61, %c0_62], %106 {strides = array<i32>} : memref<8x1xf32, #tpu.memory_space<vmem>>, vector<8x1xf32>,
      %c0_63 = arith.constant 0 : index
      %c0_64 = arith.constant 0 : index
      %108 = vector.load %arg15[%c0_63, %c0_64] : memref<8x1xf32, #tpu.memory_space<vmem>>, vector<8x1xf32>
      %109 = arith.mulf %102, %102 : vector<8x256xf32>
      %cst_65 = arith.constant dense<0.000000e+00> : vector<8xf32>
      %110 = vector.multi_reduction <add>, %109, %cst_65 [1] : vector<8x256xf32> to vector<8xf32>
      %111 = vector.shape_cast %110 : vector<8xf32> to vector<8x1xf32>
      %112 = arith.addf %108, %111 : vector<8x1xf32>
      %c0_66 = arith.constant 0 : index
      %c0_67 = arith.constant 0 : index
      %113 = vector.load %arg15[%c0_66, %c0_67] : memref<8x1xf32, #tpu.memory_space<vmem>>, vector<8x1xf32>
      tpu.vector_store %arg15[%c0_66, %c0_67], %112 {strides = array<i32>} : memref<8x1xf32, #tpu.memory_space<vmem>>, vector<8x1xf32>,
      %114 = arith.index_cast %c0_i32_45 : i32 to index
      %c0_68 = arith.constant 0 : index
      %c0_69 = arith.constant 0 : index
      %115 = vector.load %arg8[%114, %c0_68, %c0_69] : memref<2x8x256xf32, #tpu.memory_space<vmem>>, vector<1x8x256xf32>
      %116 = vector.shape_cast %115 : vector<1x8x256xf32> to vector<8x256xf32>
      %117 = vector.shape_cast %102 : vector<8x256xf32> to vector<1x8x256xf32>
      tpu.vector_store %arg8[%114, %c0_68, %c0_69], %117 {strides = array<i32>} : memref<2x8x256xf32, #tpu.memory_space<vmem>>, vector<1x8x256xf32>,
      %c1_i32_70 = arith.constant 1 : i32
      %118 = arith.index_cast %c1_i32_70 : i32 to index
      %c0_71 = arith.constant 0 : index
      %c0_72 = arith.constant 0 : index
      %119 = vector.load %arg11[%118, %c0_71, %c0_72] : memref<2x8x256xf32, #tpu.memory_space<vmem>>, vector<1x8x256xf32>
      %120 = vector.shape_cast %119 : vector<1x8x256xf32> to vector<8x256xf32>
      %121 = vector.broadcast %59 : vector<8x1xf32> to vector<8x256xf32>
      %122 = arith.mulf %120, %121 : vector<8x256xf32>
      %123 = vector.broadcast %62 : vector<8x1xf32> to vector<8x256xf32>
      %124 = arith.addf %122, %123 : vector<8x256xf32>
      %cst_73 = arith.constant 0.000000e+00 : f32
      %125 = vector.broadcast %cst_73 : f32 to vector<8x256xf32>
      %126 = arith.maximumf %124, %125 : vector<8x256xf32>
      %127 = vector.shape_cast %126 : vector<8x256xf32> to vector<8x16x16xf32>
      %c0_74 = arith.constant 0 : index
      %c1_75 = arith.constant 1 : index
      %c1_76 = arith.constant 1 : index
      %128 = vector.load %arg10[%c0_74, %c1_75, %c1_76] : memref<8x18x18xf32, #tpu.memory_space<vmem>>, vector<8x16x16xf32>
      tpu.vector_store %arg10[%c0_74, %c1_75, %c1_76], %127 {strides = array<i32>} : memref<8x18x18xf32, #tpu.memory_space<vmem>>, vector<8x16x16xf32>,
      %c0_77 = arith.constant 0 : index
      %c0_78 = arith.constant 0 : index
      %c0_79 = arith.constant 0 : index
      %129 = vector.load %arg10[%c0_77, %c0_78, %c0_79] : memref<8x18x18xf32, #tpu.memory_space<vmem>>, vector<8x18x18xf32>
      %130 = vector.extract_strided_slice %129 {offsets = [0, 0, 0], sizes = [8, 16, 16], strides = [1, 1, 1]} : vector<8x18x18xf32> to vector<8x16x16xf32>
      %131 = vector.shape_cast %130 : vector<8x16x16xf32> to vector<8x256xf32>
      %132 = vector.extract_strided_slice %129 {offsets = [0, 0, 1], sizes = [8, 16, 16], strides = [1, 1, 1]} : vector<8x18x18xf32> to vector<8x16x16xf32>
      %133 = vector.shape_cast %132 : vector<8x16x16xf32> to vector<8x256xf32>
      %134 = vector.extract_strided_slice %129 {offsets = [0, 0, 2], sizes = [8, 16, 16], strides = [1, 1, 1]} : vector<8x18x18xf32> to vector<8x16x16xf32>
      %135 = vector.shape_cast %134 : vector<8x16x16xf32> to vector<8x256xf32>
      %136 = vector.extract_strided_slice %129 {offsets = [0, 1, 0], sizes = [8, 16, 16], strides = [1, 1, 1]} : vector<8x18x18xf32> to vector<8x16x16xf32>
      %137 = vector.shape_cast %136 : vector<8x16x16xf32> to vector<8x256xf32>
      %138 = vector.extract_strided_slice %129 {offsets = [0, 1, 1], sizes = [8, 16, 16], strides = [1, 1, 1]} : vector<8x18x18xf32> to vector<8x16x16xf32>
      %139 = vector.shape_cast %138 : vector<8x16x16xf32> to vector<8x256xf32>
      %140 = vector.extract_strided_slice %129 {offsets = [0, 1, 2], sizes = [8, 16, 16], strides = [1, 1, 1]} : vector<8x18x18xf32> to vector<8x16x16xf32>
      %141 = vector.shape_cast %140 : vector<8x16x16xf32> to vector<8x256xf32>
      %142 = vector.extract_strided_slice %129 {offsets = [0, 2, 0], sizes = [8, 16, 16], strides = [1, 1, 1]} : vector<8x18x18xf32> to vector<8x16x16xf32>
      %143 = vector.shape_cast %142 : vector<8x16x16xf32> to vector<8x256xf32>
      %144 = vector.extract_strided_slice %129 {offsets = [0, 2, 1], sizes = [8, 16, 16], strides = [1, 1, 1]} : vector<8x18x18xf32> to vector<8x16x16xf32>
      %145 = vector.shape_cast %144 : vector<8x16x16xf32> to vector<8x256xf32>
      %146 = vector.extract_strided_slice %129 {offsets = [0, 2, 2], sizes = [8, 16, 16], strides = [1, 1, 1]} : vector<8x18x18xf32> to vector<8x16x16xf32>
      %147 = vector.shape_cast %146 : vector<8x16x16xf32> to vector<8x256xf32>
      %148 = tpu.concatenate %131, %133, %135, %137, %139, %141, %143, %145, %147 in 0 : vector<8x256xf32>, vector<8x256xf32>, vector<8x256xf32>, vector<8x256xf32>, vector<8x256xf32>, vector<8x256xf32>, vector<8x256xf32>, vector<8x256xf32>, vector<8x256xf32> -> vector<72x256xf32>
      %149 = arith.truncf %148 : vector<72x256xf32> to vector<72x256xbf16>
      %c0_80 = arith.constant 0 : index
      %c0_81 = arith.constant 0 : index
      %150 = vector.load %arg5[%c0_80, %c0_81] : memref<8x72xbf16, #tpu.memory_space<vmem>>, vector<8x72xbf16>
      %cst_82 = arith.constant dense<0.000000e+00> : vector<8x256xf32>
      %151 = tpu.matmul %150, %149, %cst_82 {dimension_numbers = #tpu.dot_dimension_numbers<[1], [0], [0], [1], [0, 0, 1, 1], [], []>} : vector<8x72xbf16>, vector<72x256xbf16>, vector<8x256xf32> -> vector<8x256xf32>
      %c0_83 = arith.constant 0 : index
      %c0_84 = arith.constant 0 : index
      %152 = vector.load %arg14[%c0_83, %c0_84] : memref<8x1xf32, #tpu.memory_space<vmem>>, vector<8x1xf32>
      %cst_85 = arith.constant dense<0.000000e+00> : vector<8xf32>
      %153 = vector.multi_reduction <add>, %151, %cst_85 [1] : vector<8x256xf32> to vector<8xf32>
      %154 = vector.shape_cast %153 : vector<8xf32> to vector<8x1xf32>
      %155 = arith.addf %152, %154 : vector<8x1xf32>
      %c0_86 = arith.constant 0 : index
      %c0_87 = arith.constant 0 : index
      %156 = vector.load %arg14[%c0_86, %c0_87] : memref<8x1xf32, #tpu.memory_space<vmem>>, vector<8x1xf32>
      tpu.vector_store %arg14[%c0_86, %c0_87], %155 {strides = array<i32>} : memref<8x1xf32, #tpu.memory_space<vmem>>, vector<8x1xf32>,
      %c0_88 = arith.constant 0 : index
      %c0_89 = arith.constant 0 : index
      %157 = vector.load %arg15[%c0_88, %c0_89] : memref<8x1xf32, #tpu.memory_space<vmem>>, vector<8x1xf32>
      %158 = arith.mulf %151, %151 : vector<8x256xf32>
      %cst_90 = arith.constant dense<0.000000e+00> : vector<8xf32>
      %159 = vector.multi_reduction <add>, %158, %cst_90 [1] : vector<8x256xf32> to vector<8xf32>
      %160 = vector.shape_cast %159 : vector<8xf32> to vector<8x1xf32>
      %161 = arith.addf %157, %160 : vector<8x1xf32>
      %c0_91 = arith.constant 0 : index
      %c0_92 = arith.constant 0 : index
      %162 = vector.load %arg15[%c0_91, %c0_92] : memref<8x1xf32, #tpu.memory_space<vmem>>, vector<8x1xf32>
      tpu.vector_store %arg15[%c0_91, %c0_92], %161 {strides = array<i32>} : memref<8x1xf32, #tpu.memory_space<vmem>>, vector<8x1xf32>,
      %163 = arith.index_cast %c1_i32_70 : i32 to index
      %c0_93 = arith.constant 0 : index
      %c0_94 = arith.constant 0 : index
      %164 = vector.load %arg8[%163, %c0_93, %c0_94] : memref<2x8x256xf32, #tpu.memory_space<vmem>>, vector<1x8x256xf32>
      %165 = vector.shape_cast %164 : vector<1x8x256xf32> to vector<8x256xf32>
      %166 = vector.shape_cast %151 : vector<8x256xf32> to vector<1x8x256xf32>
      tpu.vector_store %arg8[%163, %c0_93, %c0_94], %166 {strides = array<i32>} : memref<2x8x256xf32, #tpu.memory_space<vmem>>, vector<1x8x256xf32>,
      %c2_i32 = arith.constant 2 : i32
      %c0_95 = arith.constant 0 : index
      %c0_96 = arith.constant 0 : index
      %167 = vector.load %arg14[%c0_95, %c0_96] : memref<8x1xf32, #tpu.memory_space<vmem>>, vector<8x1xf32>
      %cst_97 = arith.constant 0.001953125 : f32
      %168 = vector.broadcast %cst_97 : f32 to vector<8x1xf32>
      %169 = arith.mulf %167, %168 : vector<8x1xf32>
      %c0_98 = arith.constant 0 : index
      %c0_99 = arith.constant 0 : index
      %170 = vector.load %arg15[%c0_98, %c0_99] : memref<8x1xf32, #tpu.memory_space<vmem>>, vector<8x1xf32>
      %cst_100 = arith.constant 0.001953125 : f32
      %171 = vector.broadcast %cst_100 : f32 to vector<8x1xf32>
      %172 = arith.mulf %170, %171 : vector<8x1xf32>
      %173 = arith.mulf %169, %169 : vector<8x1xf32>
      %174 = arith.subf %172, %173 : vector<8x1xf32>
      %c0_101 = arith.constant 0 : index
      %c0_102 = arith.constant 0 : index
      %175 = vector.load %arg6[%c0_101, %c0_102] : memref<8x1xf32, #tpu.memory_space<vmem>>, vector<8x1xf32>
      %cst_103 = arith.constant 9.99999974E-6 : f32
      %176 = vector.broadcast %cst_103 : f32 to vector<8x1xf32>
      %177 = arith.addf %174, %176 : vector<8x1xf32>
      %178 = math.rsqrt %177 : vector<8x1xf32>
      %179 = arith.mulf %175, %178 : vector<8x1xf32>
      %c0_104 = arith.constant 0 : index
      %c0_105 = arith.constant 0 : index
      %180 = vector.load %arg7[%c0_104, %c0_105] : memref<8x1xf32, #tpu.memory_space<vmem>>, vector<8x1xf32>
      %181 = arith.mulf %169, %179 : vector<8x1xf32>
      %182 = arith.subf %180, %181 : vector<8x1xf32>
      %c0_i32_106 = arith.constant 0 : i32
      %183 = arith.index_cast %c0_i32_106 : i32 to index
      %c0_107 = arith.constant 0 : index
      %c0_108 = arith.constant 0 : index
      %184 = vector.load %arg8[%183, %c0_107, %c0_108] : memref<2x8x256xf32, #tpu.memory_space<vmem>>, vector<1x8x256xf32>
      %185 = vector.shape_cast %184 : vector<1x8x256xf32> to vector<8x256xf32>
      %186 = vector.broadcast %179 : vector<8x1xf32> to vector<8x256xf32>
      %187 = arith.mulf %185, %186 : vector<8x256xf32>
      %188 = vector.broadcast %182 : vector<8x1xf32> to vector<8x256xf32>
      %189 = arith.addf %187, %188 : vector<8x256xf32>
      %cst_109 = arith.constant 0.000000e+00 : f32
      %190 = vector.broadcast %cst_109 : f32 to vector<8x256xf32>
      %191 = arith.maximumf %189, %190 : vector<8x256xf32>
      %192 = arith.index_cast %c0_i32_106 : i32 to index
      %c0_110 = arith.constant 0 : index
      %c0_111 = arith.constant 0 : index
      %193 = vector.load %arg8[%192, %c0_110, %c0_111] : memref<2x8x256xf32, #tpu.memory_space<vmem>>, vector<1x8x256xf32>
      %194 = vector.shape_cast %193 : vector<1x8x256xf32> to vector<8x256xf32>
      %195 = vector.shape_cast %191 : vector<8x256xf32> to vector<1x8x256xf32>
      tpu.vector_store %arg8[%192, %c0_110, %c0_111], %195 {strides = array<i32>} : memref<2x8x256xf32, #tpu.memory_space<vmem>>, vector<1x8x256xf32>,
      %c1_i32_112 = arith.constant 1 : i32
      %196 = arith.index_cast %c1_i32_112 : i32 to index
      %c0_113 = arith.constant 0 : index
      %c0_114 = arith.constant 0 : index
      %197 = vector.load %arg8[%196, %c0_113, %c0_114] : memref<2x8x256xf32, #tpu.memory_space<vmem>>, vector<1x8x256xf32>
      %198 = vector.shape_cast %197 : vector<1x8x256xf32> to vector<8x256xf32>
      %199 = vector.broadcast %179 : vector<8x1xf32> to vector<8x256xf32>
      %200 = arith.mulf %198, %199 : vector<8x256xf32>
      %201 = vector.broadcast %182 : vector<8x1xf32> to vector<8x256xf32>
      %202 = arith.addf %200, %201 : vector<8x256xf32>
      %cst_115 = arith.constant 0.000000e+00 : f32
      %203 = vector.broadcast %cst_115 : f32 to vector<8x256xf32>
      %204 = arith.maximumf %202, %203 : vector<8x256xf32>
      %205 = arith.index_cast %c1_i32_112 : i32 to index
      %c0_116 = arith.constant 0 : index
      %c0_117 = arith.constant 0 : index
      %206 = vector.load %arg8[%205, %c0_116, %c0_117] : memref<2x8x256xf32, #tpu.memory_space<vmem>>, vector<1x8x256xf32>
      %207 = vector.shape_cast %206 : vector<1x8x256xf32> to vector<8x256xf32>
      %208 = vector.shape_cast %204 : vector<8x256xf32> to vector<1x8x256xf32>
      tpu.vector_store %arg8[%205, %c0_116, %c0_117], %208 {strides = array<i32>} : memref<2x8x256xf32, #tpu.memory_space<vmem>>, vector<1x8x256xf32>,
      %c2_i32_118 = arith.constant 2 : i32
    } else {
    }
    return
  }
  func.func @transform_0(%arg0: i32) -> (i32, i32, i32, i32) {
    %c0_i32 = arith.constant 0 : i32
    %c0_i32_0 = arith.constant 0 : i32
    %c0_i32_1 = arith.constant 0 : i32
    %c0_i32_2 = arith.constant 0 : i32
    return %arg0, %c0_i32, %c0_i32_0, %c0_i32_1 : i32, i32, i32, i32
  }
  func.func @transform_1(%arg0: i32) -> (i32, i32) {
    %c0_i32 = arith.constant 0 : i32
    %c0_i32_0 = arith.constant 0 : i32
    %c0_i32_1 = arith.constant 0 : i32
    return %c0_i32, %c0_i32_0 : i32, i32
  }
  func.func @transform_2(%arg0: i32) -> (i32, i32) {
    %c0_i32 = arith.constant 0 : i32
    %c0_i32_0 = arith.constant 0 : i32
    %c0_i32_1 = arith.constant 0 : i32
    return %c0_i32, %c0_i32_0 : i32, i32
  }
  func.func @transform_3(%arg0: i32) -> (i32, i32) {
    %c0_i32 = arith.constant 0 : i32
    %c0_i32_0 = arith.constant 0 : i32
    %c0_i32_1 = arith.constant 0 : i32
    return %c0_i32, %c0_i32_0 : i32, i32
  }
  func.func @transform_4(%arg0: i32) -> (i32, i32) {
    %c0_i32 = arith.constant 0 : i32
    %c0_i32_0 = arith.constant 0 : i32
    %c0_i32_1 = arith.constant 0 : i32
    return %c0_i32, %c0_i32_0 : i32, i32
  }
  func.func @transform_5(%arg0: i32) -> (i32, i32) {
    %c0_i32 = arith.constant 0 : i32
    %c0_i32_0 = arith.constant 0 : i32
    %c0_i32_1 = arith.constant 0 : i32
    return %c0_i32, %c0_i32_0 : i32, i32
  }
  func.func @transform_6(%arg0: i32) -> (i32, i32) {
    %c0_i32 = arith.constant 0 : i32
    %c0_i32_0 = arith.constant 0 : i32
    %c0_i32_1 = arith.constant 0 : i32
    return %c0_i32, %c0_i32_0 : i32, i32
  }
  func.func @transform_7(%arg0: i32) -> (i32, i32, i32) {
    %c0_i32 = arith.constant 0 : i32
    %c0_i32_0 = arith.constant 0 : i32
    %c0_i32_1 = arith.constant 0 : i32
    %c0_i32_2 = arith.constant 0 : i32
    return %c0_i32, %c0_i32_0, %c0_i32_1 : i32, i32, i32
  }
}

</mosaic_0001>

<llo_original>
// kernel: double_conv.1
$region0: #{double_conv.1}
  #allocation0 [shape = 'u32[]', space=smem, size = 0x4, offset = 0x4, fixed_abs, tag = 'smem constant byte address 0x4 - core index']
  #allocation1 [shape = 'u32[144,128]{1,0:T(1,128)}', space=vmem, size = 0x12000, scoped, tag = 'internal scratch']
  #allocation2 [shape = 'f32[4,18,18]{2,1,0:T(8,128)}', space=vmem, size = 0xc000, scoped, tag = 'scratch operand']
  #allocation3 [shape = 'f32[8,18,18]{2,1,0:T(8,128)}', space=vmem, size = 0x18000, scoped, tag = 'scratch operand']
  #allocation4 [shape = 'f32[2,8,256]{2,1,0:T(8,128)}', space=vmem, size = 0x4000, scoped, tag = 'scratch operand']
  #allocation5 [shape = 'f32[8,1]{1,0:T(8,128)}', space=vmem, size = 0x1000, scoped, tag = 'scratch operand']
  #allocation6 [shape = 'f32[8,1]{1,0:T(8,128)}', space=vmem, size = 0x1000, scoped, tag = 'scratch operand']
  #allocation7 [shape = 'f32[8,1]{1,0:T(8,128)}', space=vmem, size = 0x1000, scoped, tag = 'scratch operand']
  #allocation8 [shape = 'f32[8,1]{1,0:T(8,128)}', space=vmem, size = 0x1000, scoped, tag = 'scratch operand']
  %s0 = inlined_call_operand.vmem [shape: f32[2,4,16,16], index: 0, kind: input, shape index: {}]
  %s1 = inlined_call_operand.vmem [shape: bf16[8,36], index: 1, kind: input, shape index: {}]
  %s2 = inlined_call_operand.vmem [shape: f32[8,1], index: 2, kind: input, shape index: {}]
  %s3 = inlined_call_operand.vmem [shape: f32[8,1], index: 3, kind: input, shape index: {}]
  %s4 = inlined_call_operand.vmem [shape: bf16[8,72], index: 4, kind: input, shape index: {}]
  %s5 = inlined_call_operand.vmem [shape: f32[8,1], index: 5, kind: input, shape index: {}]
  %s6 = inlined_call_operand.vmem [shape: f32[8,1], index: 6, kind: input, shape index: {}]
  %s7 = inlined_call_operand.vmem [shape: f32[2,8,256], index: 7, kind: output, shape index: {}]
  %s8 = sld [smem:[#allocation0]]
  $region69: #{double_conv.1} parent=0
    _
  %s10 = ssub.s32 1, %s8
  %s11 = scalar_select 0, %s10, %s8
  loop: start=0, step=1, limit=4
  $region2: #{double_conv.1} parent=0 // loop_pre_header
    _
  $region3: #{double_conv.1} parent=0 // loop_header
    %s13 = sphi 0, %s17
    %p14 = scmp.ge.s32.totalorder %s13, 4
    %s23 = sphi 0, %s25
    %s26 = sphi 0, %s23
    %s27 = sphi 0, %s26
    %s43 = sphi 0, %s27
    %s47 = sphi 0, %s47
    %s49 = sphi 0, %s47
    %s50 = sphi 0, %s49
    %s64 = sphi 0, %s50
    %s68 = sphi 0, %s68
    %s70 = sphi 0, %s68
    %s71 = sphi 0, %s70
    %s85 = sphi 0, %s71
    %s89 = sphi 0, %s89
    %s91 = sphi 0, %s89
    %s92 = sphi 0, %s91
    %s106 = sphi 0, %s92
    %s110 = sphi 0, %s110
    %s112 = sphi 0, %s110
    %s113 = sphi 0, %s112
    %s127 = sphi 0, %s113
    %s131 = sphi 0, %s131
    %s133 = sphi 0, %s131
    %s134 = sphi 0, %s133
    %s148 = sphi 0, %s134
    %s152 = sphi 0, %s152
    %s154 = sphi 0, %s152
    %s155 = sphi 0, %s154
    %s169 = sphi 0, %s155
    %s173 = sphi 0, %s173
    %s175 = sphi 0, %s173
    %s176 = sphi 0, %s175
    %s190 = sphi 0, %s176
  $region4: #{double_conv.1} parent=0 // loop_header_branch
    %16 = sbr.rel (%p14) target = $region8
  $region5: #{double_conv.1} parent=0 // loop_body
    %s18 = ssub.s32 %s13, 1
    %s19 = ssub.s32 %s13, 2
    %s20 = sadd.s32 %s13, 1
    %s21 = ssub.s32 %s13, %s20
    %p22 = scmp.eq.s32.totalorder %s21, 0
    %s24 = sadd.s32 %s23, 1
    %s25 = scalar_select %p22, %s23, %s24
    %p28 = pneg %p22
    %p29 = scmp.eq.s32.totalorder %s13, 1
    %p30 = por %p28, %p29
    %p31 = scmp.ne.s32.totalorder %s23, %s26
    %p32 = scmp.eq.s32.totalorder %s13, 0
    %p33 = por %p31, %p32
    %p34 = scmp.ne.s32.totalorder %s23, %s26
    %p35 = scmp.eq.s32.totalorder %s18, 1
    %p36 = por %p34, %p35
    %p37 = scmp.ne.s32.totalorder %s26, %s27
    %p38 = scmp.eq.s32.totalorder %s18, 0
    %p39 = por %p37, %p38
    %p40 = scmp.ne.s32.totalorder %s26, %s27
    %p41 = scmp.eq.s32.totalorder %s19, 1
    %p42 = por %p40, %p41
    %p44 = scmp.ne.s32.totalorder %s27, %s43
    %p45 = scmp.eq.s32.totalorder %s19, 0
    %p46 = por %p44, %p45
    %s48 = sadd.s32 %s47, 1
    %p51 = scmp.eq.s32.totalorder %s13, 1
    %p52 = scmp.ne.s32.totalorder %s47, %s49
    %p53 = scmp.eq.s32.totalorder %s13, 0
    %p54 = por %p52, %p53
    %p55 = scmp.ne.s32.totalorder %s47, %s49
    %p56 = scmp.eq.s32.totalorder %s18, 1
    %p57 = por %p55, %p56
    %p58 = scmp.ne.s32.totalorder %s49, %s50
    %p59 = scmp.eq.s32.totalorder %s18, 0
    %p60 = por %p58, %p59
    %p61 = scmp.ne.s32.totalorder %s49, %s50
    %p62 = scmp.eq.s32.totalorder %s19, 1
    %p63 = por %p61, %p62
    %p65 = scmp.ne.s32.totalorder %s50, %s64
    %p66 = scmp.eq.s32.totalorder %s19, 0
    %p67 = por %p65, %p66
    %s69 = sadd.s32 %s68, 1
    %p72 = scmp.eq.s32.totalorder %s13, 1
    %p73 = scmp.ne.s32.totalorder %s68, %s70
    %p74 = scmp.eq.s32.totalorder %s13, 0
    %p75 = por %p73, %p74
    %p76 = scmp.ne.s32.totalorder %s68, %s70
    %p77 = scmp.eq.s32.totalorder %s18, 1
    %p78 = por %p76, %p77
    %p79 = scmp.ne.s32.totalorder %s70, %s71
    %p80 = scmp.eq.s32.totalorder %s18, 0
    %p81 = por %p79, %p80
    %p82 = scmp.ne.s32.totalorder %s70, %s71
    %p83 = scmp.eq.s32.totalorder %s19, 1
    %p84 = por %p82, %p83
    %p86 = scmp.ne.s32.totalorder %s71, %s85
    %p87 = scmp.eq.s32.totalorder %s19, 0
    %p88 = por %p86, %p87
    %s90 = sadd.s32 %s89, 1
    %p93 = scmp.eq.s32.totalorder %s13, 1
    %p94 = scmp.ne.s32.totalorder %s89, %s91
    %p95 = scmp.eq.s32.totalorder %s13, 0
    %p96 = por %p94, %p95
    %p97 = scmp.ne.s32.totalorder %s89, %s91
    %p98 = scmp.eq.s32.totalorder %s18, 1
    %p99 = por %p97, %p98
    %p100 = scmp.ne.s32.totalorder %s91, %s92
    %p101 = scmp.eq.s32.totalorder %s18, 0
    %p102 = por %p100, %p101
    %p103 = scmp.ne.s32.totalorder %s91, %s92
    %p104 = scmp.eq.s32.totalorder %s19, 1
    %p105 = por %p103, %p104
    %p107 = scmp.ne.s32.totalorder %s92, %s106
    %p108 = scmp.eq.s32.totalorder %s19, 0
    %p109 = por %p107, %p108
    %s111 = sadd.s32 %s110, 1
    %p114 = scmp.eq.s32.totalorder %s13, 1
    %p115 = scmp.ne.s32.totalorder %s110, %s112
    %p116 = scmp.eq.s32.totalorder %s13, 0
    %p117 = por %p115, %p116
    %p118 = scmp.ne.s32.totalorder %s110, %s112
    %p119 = scmp.eq.s32.totalorder %s18, 1
    %p120 = por %p118, %p119
    %p121 = scmp.ne.s32.totalorder %s112, %s113
    %p122 = scmp.eq.s32.totalorder %s18, 0
    %p123 = por %p121, %p122
    %p124 = scmp.ne.s32.totalorder %s112, %s113
    %p125 = scmp.eq.s32.totalorder %s19, 1
    %p126 = por %p124, %p125
    %p128 = scmp.ne.s32.totalorder %s113, %s127
    %p129 = scmp.eq.s32.totalorder %s19, 0
    %p130 = por %p128, %p129
    %s132 = sadd.s32 %s131, 1
    %p135 = scmp.eq.s32.totalorder %s13, 1
    %p136 = scmp.ne.s32.totalorder %s131, %s133
    %p137 = scmp.eq.s32.totalorder %s13, 0
    %p138 = por %p136, %p137
    %p139 = scmp.ne.s32.totalorder %s131, %s133
    %p140 = scmp.eq.s32.totalorder %s18, 1
    %p141 = por %p139, %p140
    %p142 = scmp.ne.s32.totalorder %s133, %s134
    %p143 = scmp.eq.s32.totalorder %s18, 0
    %p144 = por %p142, %p143
    %p145 = scmp.ne.s32.totalorder %s133, %s134
    %p146 = scmp.eq.s32.totalorder %s19, 1
    %p147 = por %p145, %p146
    %p149 = scmp.ne.s32.totalorder %s134, %s148
    %p150 = scmp.eq.s32.totalorder %s19, 0
    %p151 = por %p149, %p150
    %s153 = sadd.s32 %s152, 1
    %p156 = scmp.eq.s32.totalorder %s13, 1
    %p157 = scmp.ne.s32.totalorder %s152, %s154
    %p158 = scmp.eq.s32.totalorder %s13, 0
    %p159 = por %p157, %p158
    %p160 = scmp.ne.s32.totalorder %s152, %s154
    %p161 = scmp.eq.s32.totalorder %s18, 1
    %p162 = por %p160, %p161
    %p163 = scmp.ne.s32.totalorder %s154, %s155
    %p164 = scmp.eq.s32.totalorder %s18, 0
    %p165 = por %p163, %p164
    %p166 = scmp.ne.s32.totalorder %s154, %s155
    %p167 = scmp.eq.s32.totalorder %s19, 1
    %p168 = por %p166, %p167
    %p170 = scmp.ne.s32.totalorder %s155, %s169
    %p171 = scmp.eq.s32.totalorder %s19, 0
    %p172 = por %p170, %p171
    %s174 = sadd.s32 %s173, 1
    %p177 = scmp.eq.s32.totalorder %s13, 1
    %p178 = scmp.ne.s32.totalorder %s173, %s175
    %p179 = scmp.eq.s32.totalorder %s13, 0
    %p180 = por %p178, %p179
    %p181 = scmp.ne.s32.totalorder %s173, %s175
    %p182 = scmp.eq.s32.totalorder %s18, 1
    %p183 = por %p181, %p182
    %p184 = scmp.ne.s32.totalorder %s175, %s176
    %p185 = scmp.eq.s32.totalorder %s18, 0
    %p186 = por %p184, %p185
    %p187 = scmp.ne.s32.totalorder %s175, %s176
    %p188 = scmp.eq.s32.totalorder %s19, 1
    %p189 = por %p187, %p188
    %p191 = scmp.ne.s32.totalorder %s176, %s190
    %p192 = scmp.eq.s32.totalorder %s19, 0
    %p193 = por %p191, %p192
    %p194 = scmp.le.s32.totalorder 1, %s13
    %p195 = scmp.lt.s32.totalorder %s13, 3
    %p196 = pnand %p194, %p195
    %p197 = pneg %p196
    // Predicated region
    $region9: #{double_conv.1} parent=5 // pred_check
      _
    $region10: #{double_conv.1} parent=5 // pred_check_branch
      %199 = sbr.rel (%p196) target = $region12
    $region11: #{double_conv.1} parent=5 // pred_region
      %s200 = ssub.s32 %s13, 1
      // Predicated region
      $region13: #{double_conv.1} parent=11 // pred_check
        %p201 = pneg %p60
      $region14: #{double_conv.1} parent=11 // pred_check_branch
        %203 = sbr.rel (%p201) target = $region16
      $region15: #{double_conv.1} parent=11 // pred_region
        _
      $region16: #{double_conv.1} parent=11 // pred_fallthru
        _
      // Predicated region
      $region17: #{double_conv.1} parent=11 // pred_check
        %p204 = pneg %p81
      $region18: #{double_conv.1} parent=11 // pred_check_branch
        %206 = sbr.rel (%p204) target = $region20
      $region19: #{double_conv.1} parent=11 // pred_region
        _
      $region20: #{double_conv.1} parent=11 // pred_fallthru
        _
      // Predicated region
      $region21: #{double_conv.1} parent=11 // pred_check
        %p207 = pneg %p102
      $region22: #{double_conv.1} parent=11 // pred_check_branch
        %209 = sbr.rel (%p207) target = $region24
      $region23: #{double_conv.1} parent=11 // pred_region
        _
      $region24: #{double_conv.1} parent=11 // pred_fallthru
        _
      // Predicated region
      $region25: #{double_conv.1} parent=11 // pred_check
        %p210 = pneg %p123
      $region26: #{double_conv.1} parent=11 // pred_check_branch
        %212 = sbr.rel (%p210) target = $region28
      $region27: #{double_conv.1} parent=11 // pred_region
        _
      $region28: #{double_conv.1} parent=11 // pred_fallthru
        _
      // Predicated region
      $region29: #{double_conv.1} parent=11 // pred_check
        %p213 = pneg %p144
      $region30: #{double_conv.1} parent=11 // pred_check_branch
        %215 = sbr.rel (%p213) target = $region32
      $region31: #{double_conv.1} parent=11 // pred_region
        _
      $region32: #{double_conv.1} parent=11 // pred_fallthru
        _
      // Predicated region
      $region33: #{double_conv.1} parent=11 // pred_check
        %p216 = pneg %p165
      $region34: #{double_conv.1} parent=11 // pred_check_branch
        %218 = sbr.rel (%p216) target = $region36
      $region35: #{double_conv.1} parent=11 // pred_region
        _
      $region36: #{double_conv.1} parent=11 // pred_fallthru
        _
    $region12: #{double_conv.1} parent=5 // pred_fallthru
      _
    %p219 = scmp.lt.s32.totalorder %s13, 2
    // Predicated region
    $region37: #{double_conv.1} parent=5 // pred_check
      %p220 = pneg %p219
    $region38: #{double_conv.1} parent=5 // pred_check_branch
      %222 = sbr.rel (%p220) target = $region40
    $region39: #{double_conv.1} parent=5 // pred_region
      // Predicated region
      $region41: #{double_conv.1} parent=39 // pred_check
        %p223 = pneg %p33
      $region42: #{double_conv.1} parent=39 // pred_check_branch
        %225 = sbr.rel (%p223) target = $region44
      $region43: #{double_conv.1} parent=39 // pred_region
        %p226 = scmp.lt.s32.totalorder %s13, 1
        %s227 = scalar_select %p226, %s13, 1
        %s228 = smul.addr %s227, 8
        %s229 = smul.addr %s228, 8
        %s230 = scalar_lea.vmem %s0, %s229
      $region44: #{double_conv.1} parent=39 // pred_fallthru
        _
    $region40: #{double_conv.1} parent=5 // pred_fallthru
      _
    %p231 = scmp.le.s32.totalorder 1, %s13
    %p232 = scmp.lt.s32.totalorder %s13, 3
    %p233 = pnand %p231, %p232
    %p234 = pneg %p233
    // Predicated region
    $region45: #{double_conv.1} parent=5 // pred_check
      _
    $region46: #{double_conv.1} parent=5 // pred_check_branch
      %236 = sbr.rel (%p233) target = $region48
    $region47: #{double_conv.1} parent=5 // pred_region
      %s237 = ssub.s32 %s13, 1
      %p238 = scmp.lt.s32.totalorder %s18, 1
      %s239 = scalar_select %p238, %s18, 1
      %s240 = smul.addr %s239, 8
      %s241 = smul.addr %s240, 8
      %s242 = scalar_lea.vmem %s0, %s241
      %p243 = pneg %p39
      %p244 = pneg %p36
      %p245 = pneg %p60
      %p246 = pneg %p57
      %p247 = pneg %p81
      %p248 = pneg %p78
      %p249 = pneg %p102
      %p250 = pneg %p99
      %p251 = pneg %p123
      %p252 = pneg %p120
      %p253 = pneg %p144
      %p254 = pneg %p141
      %p255 = pneg %p165
      %p256 = pneg %p162
      %p257 = pneg %p186
      %p258 = pneg %p183
      %p259 = scmp.lt.s32.totalorder %s18, 1
      %s260 = scalar_select %p259, %s18, 1
      %s261 = smul.addr %s260, 8
      %s262 = smul.addr %s261, 8
      %s263 = scalar_lea.vmem %s0, %s262
      %p265 = scmp.eq.s32.totalorder %s18, 0
      // Predicated region
      $region49: #{double_conv.1} parent=47 // pred_check
        %p266 = pneg %p265
      $region50: #{double_conv.1} parent=47 // pred_check_branch
        %268 = sbr.rel (%p266) target = $region52
      $region51: #{double_conv.1} parent=47 // pred_region
        %vm269 = vcmask 146432
        %270 = vst.msk [vmem:[#allocation2] sm:$0xff] %vm269, 0.0
        %271 = vst.msk [vmem:[#allocation2 + $0x8] sm:$0xff] %vm269, 0.0
        %vm272 = vcmask 140288
        %273 = vst.msk [vmem:[#allocation2 + $0x10] sm:$0x3] %vm272, 0.0
        %274 = vst.msk [vmem:[#allocation2 + $0x18] sm:$0xff] %vm269, 0.0
        %275 = vst.msk [vmem:[#allocation2 + $0x20] sm:$0xff] %vm269, 0.0
        %276 = vst.msk [vmem:[#allocation2 + $0x28] sm:$0x3] %vm272, 0.0
        %277 = vst.msk [vmem:[#allocation2 + $0x30] sm:$0xff] %vm269, 0.0
        %278 = vst.msk [vmem:[#allocation2 + $0x38] sm:$0xff] %vm269, 0.0
        %279 = vst.msk [vmem:[#allocation2 + $0x40] sm:$0x3] %vm272, 0.0
        %280 = vst.msk [vmem:[#allocation2 + $0x48] sm:$0xff] %vm269, 0.0
        %281 = vst.msk [vmem:[#allocation2 + $0x50] sm:$0xff] %vm269, 0.0
        %282 = vst.msk [vmem:[#allocation2 + $0x58] sm:$0x3] %vm272, 0.0
        %vm283 = vcmask 7168
        %284 = vst.msk [vmem:[#allocation5] sm:$0xff] %vm283, 0.0
        %285 = vst.msk [vmem:[#allocation6] sm:$0xff] %vm283, 0.0
      $region52: #{double_conv.1} parent=47 // pred_fallthru
        _
      %v286 = vld [vmem:[%s263] sm:$0xff]
      %v287 = vld [vmem:[%s263 + $0x8] sm:$0xff]
      %v288 = vld [vmem:[%s263 + $0x10] sm:$0xff]
      %v289 = vld [vmem:[%s263 + $0x18] sm:$0xff]
      %v290 = vld [vmem:[%s263 + $0x20] sm:$0xff]
      %v291 = vld [vmem:[%s263 + $0x28] sm:$0xff]
      %v292 = vld [vmem:[%s263 + $0x30] sm:$0xff]
      %v293 = vld [vmem:[%s263 + $0x38] sm:$0xff]
      %302 = vrot.lane.b32.xlu0 %v286, 1
      %v303 = vpop.permute.xlu0 %302
      %304 = vrot.lane.b32.xlu0 %v287, 1
      %v305 = vpop.permute.xlu0 %304
      %306 = vrot.lane.b32.xlu0 %v288, 1
      %v307 = vpop.permute.xlu0 %306
      %308 = vrot.lane.b32.xlu0 %v289, 1
      %v309 = vpop.permute.xlu0 %308
      %310 = vrot.lane.b32.xlu0 %v290, 1
      %v311 = vpop.permute.xlu0 %310
      %312 = vrot.lane.b32.xlu0 %v291, 1
      %v313 = vpop.permute.xlu0 %312
      %314 = vrot.lane.b32.xlu0 %v292, 1
      %v315 = vpop.permute.xlu0 %314
      %316 = vrot.lane.b32.xlu0 %v293, 1
      %v317 = vpop.permute.xlu0 %316
      %vm326 = vcmask 138248
      %327 = vst.msk [vmem:[#allocation2 + $0x1] sm:$0xff] %vm326, %v303
      %328 = vst.msk [vmem:[#allocation2 + $0x9] sm:$0xff] %vm326, %v305
      %329 = vst.msk [vmem:[#allocation2 + $0x19] sm:$0xff] %vm326, %v307
      %330 = vst.msk [vmem:[#allocation2 + $0x21] sm:$0xff] %vm326, %v309
      %331 = vst.msk [vmem:[#allocation2 + $0x31] sm:$0xff] %vm326, %v311
      %332 = vst.msk [vmem:[#allocation2 + $0x39] sm:$0xff] %vm326, %v313
      %333 = vst.msk [vmem:[#allocation2 + $0x49] sm:$0xff] %vm326, %v315
      %334 = vst.msk [vmem:[#allocation2 + $0x51] sm:$0xff] %vm326, %v317
      %v335 = vld [vmem:[#allocation2] sm:$0xff]
      %v336 = vld [vmem:[#allocation2 + $0x8] sm:$0xff]
      %v337 = vld [vmem:[#allocation2 + $0x10] sm:$0x3]
      %v338 = vld [vmem:[#allocation2 + $0x18] sm:$0xff]
      %v339 = vld [vmem:[#allocation2 + $0x20] sm:$0xff]
      %v340 = vld [vmem:[#allocation2 + $0x28] sm:$0x3]
      %v341 = vld [vmem:[#allocation2 + $0x30] sm:$0xff]
      %v342 = vld [vmem:[#allocation2 + $0x38] sm:$0xff]
      %v343 = vld [vmem:[#allocation2 + $0x40] sm:$0x3]
      %v344 = vld [vmem:[#allocation2 + $0x48] sm:$0xff]
      %v345 = vld [vmem:[#allocation2 + $0x50] sm:$0xff]
      %v346 = vld [vmem:[#allocation2 + $0x58] sm:$0x3]
      %v347 = vcombine.low %v335, %v341
      %v348 = vcombine.high %v335, %v341
      %v350 = vunpack.c.l.s4 1983009808
      %v351 = vunpack.c.0.s8 %v350
      %v352 = vlaneseq
      %v353 = vshrl.u32 %v352, 7
      %v354 = vsub.s32 %v351, %v353
      %v355 = vrot.slane %v347, %v354
      %v357 = vunpack.c.l.s4 1983009808
      %v358 = vunpack.c.0.s8 %v357
      %v359 = vlaneseq
      %v360 = vshrl.u32 %v359, 7
      %v361 = vsub.s32 %v358, %v360
      %v362 = vrot.slane %v348, %v361
      %v363 = vcombine.low %v338, %v344
      %v364 = vcombine.high %v338, %v344
      %v366 = vunpack.c.l.s4 1983009808
      %v367 = vunpack.c.0.s8 %v366
      %v368 = vlaneseq
      %v369 = vshrl.u32 %v368, 7
      %v370 = vsub.s32 %v367, %v369
      %v371 = vrot.slane %v363, %v370
      %v373 = vunpack.c.l.s4 1983009808
      %v374 = vunpack.c.0.s8 %v373
      %v375 = vlaneseq
      %v376 = vshrl.u32 %v375, 7
      %v377 = vsub.s32 %v374, %v376
      %v378 = vrot.slane %v364, %v377
      %v379 = vcombine.low %v355, %v371
      %v380 = vcombine.high %v355, %v371
      %v382 = vunpack.c.l.s4 1934713408
      %v383 = vunpack.c.0.s8 %v382
      %v384 = vlaneseq
      %v385 = vshrl.u32 %v384, 7
      %v386 = vsub.s32 %v383, %v385
      %v387 = vrot.slane %v379, %v386
      %v389 = vunpack.c.l.s4 1934713408
      %v390 = vunpack.c.0.s8 %v389
      %v391 = vlaneseq
      %v392 = vshrl.u32 %v391, 7
      %v393 = vsub.s32 %v390, %v392
      %v394 = vrot.slane %v380, %v393
      %v395 = vcombine.low %v362, %v378
      %v396 = vcombine.high %v362, %v378
      %v398 = vunpack.c.l.s4 1934713408
      %v399 = vunpack.c.0.s8 %v398
      %v400 = vlaneseq
      %v401 = vshrl.u32 %v400, 7
      %v402 = vsub.s32 %v399, %v401
      %v403 = vrot.slane %v395, %v402
      %v405 = vunpack.c.l.s4 1934713408
      %v406 = vunpack.c.0.s8 %v405
      %v407 = vlaneseq
      %v408 = vshrl.u32 %v407, 7
      %v409 = vsub.s32 %v406, %v408
      %v410 = vrot.slane %v396, %v409
      %v411 = vcombine.high %v387, 0.0
      %v412 = vcombine.high %v394, 0.0
      %v413 = vcombine.high %v403, 0.0
      %v414 = vcombine.high %v410, 0.0
      %v415 = vcombine.low %v336, %v342
      %v416 = vcombine.high %v336, %v342
      %v418 = vunpack.c.l.s4 1983009808
      %v419 = vunpack.c.0.s8 %v418
      %v420 = vlaneseq
      %v421 = vshrl.u32 %v420, 7
      %v422 = vsub.s32 %v419, %v421
      %v423 = vrot.slane %v415, %v422
      %v425 = vunpack.c.l.s4 1983009808
      %v426 = vunpack.c.0.s8 %v425
      %v427 = vlaneseq
      %v428 = vshrl.u32 %v427, 7
      %v429 = vsub.s32 %v426, %v428
      %v430 = vrot.slane %v416, %v429
      %v431 = vcombine.low %v339, %v345
      %v432 = vcombine.high %v339, %v345
      %v434 = vunpack.c.l.s4 1983009808
      %v435 = vunpack.c.0.s8 %v434
      %v436 = vlaneseq
      %v437 = vshrl.u32 %v436, 7
      %v438 = vsub.s32 %v435, %v437
      %v439 = vrot.slane %v431, %v438
      %v441 = vunpack.c.l.s4 1983009808
      %v442 = vunpack.c.0.s8 %v441
      %v443 = vlaneseq
      %v444 = vshrl.u32 %v443, 7
      %v445 = vsub.s32 %v442, %v444
      %v446 = vrot.slane %v432, %v445
      %v447 = vcombine.low %v423, %v439
      %v448 = vcombine.high %v423, %v439
      %v450 = vunpack.c.l.s4 1934713408
      %v451 = vunpack.c.0.s8 %v450
      %v452 = vlaneseq
      %v453 = vshrl.u32 %v452, 7
      %v454 = vsub.s32 %v451, %v453
      %v455 = vrot.slane %v447, %v454
      %v457 = vunpack.c.l.s4 1934713408
      %v458 = vunpack.c.0.s8 %v457
      %v459 = vlaneseq
      %v460 = vshrl.u32 %v459, 7
      %v461 = vsub.s32 %v458, %v460
      %v462 = vrot.slane %v448, %v461
      %v463 = vcombine.low %v430, %v446
      %v464 = vcombine.high %v430, %v446
      %v466 = vunpack.c.l.s4 1934713408
      %v467 = vunpack.c.0.s8 %v466
      %v468 = vlaneseq
      %v469 = vshrl.u32 %v468, 7
      %v470 = vsub.s32 %v467, %v469
      %v471 = vrot.slane %v463, %v470
      %v473 = vunpack.c.l.s4 1934713408
      %v474 = vunpack.c.0.s8 %v473
      %v475 = vlaneseq
      %v476 = vshrl.u32 %v475, 7
      %v477 = vsub.s32 %v474, %v476
      %v478 = vrot.slane %v464, %v477
      %v479 = vcombine.high %v455, 0.0
      %v480 = vcombine.high %v462, 0.0
      %v481 = vcombine.high %v471, 0.0
      %v482 = vcombine.high %v478, 0.0
      %484 = vrot.lane.b32.xlu0 %v411, 16
      %v485 = vpop.permute.xlu0 %484
      %488 = vrot.lane.b32.xlu0 %v394, 32
      %v489 = vpop.permute.xlu0 %488
      %492 = vrot.lane.b32.xlu0 %v412, 48
      %v493 = vpop.permute.xlu0 %492
      %496 = vrot.lane.b32.xlu0 %v403, 64
      %v497 = vpop.permute.xlu0 %496
      %500 = vrot.lane.b32.xlu0 %v413, 80
      %v501 = vpop.permute.xlu0 %500
      %504 = vrot.lane.b32.xlu0 %v410, 96
      %v505 = vpop.permute.xlu0 %504
      %508 = vrot.lane.b32.xlu0 %v414, 112
      %v509 = vpop.permute.xlu0 %508
      %512 = vrot.lane.b32.xlu0 %v479, 16
      %v513 = vpop.permute.xlu0 %512
      %516 = vrot.lane.b32.xlu0 %v462, 32
      %v517 = vpop.permute.xlu0 %516
      %520 = vrot.lane.b32.xlu0 %v480, 48
      %v521 = vpop.permute.xlu0 %520
      %524 = vrot.lane.b32.xlu0 %v471, 64
      %v525 = vpop.permute.xlu0 %524
      %528 = vrot.lane.b32.xlu0 %v481, 80
      %v529 = vpop.permute.xlu0 %528
      %532 = vrot.lane.b32.xlu0 %v478, 96
      %v533 = vpop.permute.xlu0 %532
      %536 = vrot.lane.b32.xlu0 %v482, 112
      %v537 = vpop.permute.xlu0 %536
      %vm539 = vcmask 130048
      %v540 = vsel %vm539, %v387, %v485
      %vm541 = vcmask 261120
      %v542 = vsel %vm541, %v540, %v489
      %vm543 = vcmask 392192
      %v544 = vsel %vm543, %v542, %v493
      %vm545 = vcmask 523264
      %v546 = vsel %vm545, %v544, %v497
      %vm547 = vcmask 654336
      %v548 = vsel %vm547, %v546, %v501
      %vm549 = vcmask 785408
      %v550 = vsel %vm549, %v548, %v505
      %vm551 = vcmask 916480
      %v552 = vsel %vm551, %v550, %v509
      %v553 = vsel %vm539, %v455, %v513
      %v554 = vsel %vm541, %v553, %v517
      %v555 = vsel %vm543, %v554, %v521
      %v556 = vsel %vm545, %v555, %v525
      %v557 = vsel %vm547, %v556, %v529
      %v558 = vsel %vm549, %v557, %v533
      %v559 = vsel %vm551, %v558, %v537
      %568 = vrot.lane.b32.xlu0 %v335, 127
      %v569 = vpop.permute.xlu0 %568
      %570 = vrot.lane.b32.xlu0 %v336, 127
      %v571 = vpop.permute.xlu0 %570
      %572 = vrot.lane.b32.xlu0 %v338, 127
      %v573 = vpop.permute.xlu0 %572
      %574 = vrot.lane.b32.xlu0 %v339, 127
      %v575 = vpop.permute.xlu0 %574
      %576 = vrot.lane.b32.xlu0 %v341, 127
      %v577 = vpop.permute.xlu0 %576
      %578 = vrot.lane.b32.xlu0 %v342, 127
      %v579 = vpop.permute.xlu0 %578
      %580 = vrot.lane.b32.xlu0 %v344, 127
      %v581 = vpop.permute.xlu0 %580
      %582 = vrot.lane.b32.xlu0 %v345, 127
      %v583 = vpop.permute.xlu0 %582
      %v592 = vcombine.low %v569, %v577
      %v593 = vcombine.high %v569, %v577
      %v595 = vunpack.c.l.s4 1983009808
      %v596 = vunpack.c.0.s8 %v595
      %v597 = vlaneseq
      %v598 = vshrl.u32 %v597, 7
      %v599 = vsub.s32 %v596, %v598
      %v600 = vrot.slane %v592, %v599
      %v602 = vunpack.c.l.s4 1983009808
      %v603 = vunpack.c.0.s8 %v602
      %v604 = vlaneseq
      %v605 = vshrl.u32 %v604, 7
      %v606 = vsub.s32 %v603, %v605
      %v607 = vrot.slane %v593, %v606
      %v608 = vcombine.low %v573, %v581
      %v609 = vcombine.high %v573, %v581
      %v611 = vunpack.c.l.s4 1983009808
      %v612 = vunpack.c.0.s8 %v611
      %v613 = vlaneseq
      %v614 = vshrl.u32 %v613, 7
      %v615 = vsub.s32 %v612, %v614
      %v616 = vrot.slane %v608, %v615
      %v618 = vunpack.c.l.s4 1983009808
      %v619 = vunpack.c.0.s8 %v618
      %v620 = vlaneseq
      %v621 = vshrl.u32 %v620, 7
      %v622 = vsub.s32 %v619, %v621
      %v623 = vrot.slane %v609, %v622
      %v624 = vcombine.low %v600, %v616
      %v625 = vcombine.high %v600, %v616
      %v627 = vunpack.c.l.s4 1934713408
      %v628 = vunpack.c.0.s8 %v627
      %v629 = vlaneseq
      %v630 = vshrl.u32 %v629, 7
      %v631 = vsub.s32 %v628, %v630
      %v632 = vrot.slane %v624, %v631
      %v634 = vunpack.c.l.s4 1934713408
      %v635 = vunpack.c.0.s8 %v634
      %v636 = vlaneseq
      %v637 = vshrl.u32 %v636, 7
      %v638 = vsub.s32 %v635, %v637
      %v639 = vrot.slane %v625, %v638
      %v640 = vcombine.low %v607, %v623
      %v641 = vcombine.high %v607, %v623
      %v643 = vunpack.c.l.s4 1934713408
      %v644 = vunpack.c.0.s8 %v643
      %v645 = vlaneseq
      %v646 = vshrl.u32 %v645, 7
      %v647 = vsub.s32 %v644, %v646
      %v648 = vrot.slane %v640, %v647
      %v650 = vunpack.c.l.s4 1934713408
      %v651 = vunpack.c.0.s8 %v650
      %v652 = vlaneseq
      %v653 = vshrl.u32 %v652, 7
      %v654 = vsub.s32 %v651, %v653
      %v655 = vrot.slane %v641, %v654
      %v656 = vcombine.high %v632, 0.0
      %v657 = vcombine.high %v639, 0.0
      %v658 = vcombine.high %v648, 0.0
      %v659 = vcombine.high %v655, 0.0
      %v660 = vcombine.low %v571, %v579
      %v661 = vcombine.high %v571, %v579
      %v663 = vunpack.c.l.s4 1983009808
      %v664 = vunpack.c.0.s8 %v663
      %v665 = vlaneseq
      %v666 = vshrl.u32 %v665, 7
      %v667 = vsub.s32 %v664, %v666
      %v668 = vrot.slane %v660, %v667
      %v670 = vunpack.c.l.s4 1983009808
      %v671 = vunpack.c.0.s8 %v670
      %v672 = vlaneseq
      %v673 = vshrl.u32 %v672, 7
      %v674 = vsub.s32 %v671, %v673
      %v675 = vrot.slane %v661, %v674
      %v676 = vcombine.low %v575, %v583
      %v677 = vcombine.high %v575, %v583
      %v679 = vunpack.c.l.s4 1983009808
      %v680 = vunpack.c.0.s8 %v679
      %v681 = vlaneseq
      %v682 = vshrl.u32 %v681, 7
      %v683 = vsub.s32 %v680, %v682
      %v684 = vrot.slane %v676, %v683
      %v686 = vunpack.c.l.s4 1983009808
      %v687 = vunpack.c.0.s8 %v686
      %v688 = vlaneseq
      %v689 = vshrl.u32 %v688, 7
      %v690 = vsub.s32 %v687, %v689
      %v691 = vrot.slane %v677, %v690
      %v692 = vcombine.low %v668, %v684
      %v693 = vcombine.high %v668, %v684
      %v695 = vunpack.c.l.s4 1934713408
      %v696 = vunpack.c.0.s8 %v695
      %v697 = vlaneseq
      %v698 = vshrl.u32 %v697, 7
      %v699 = vsub.s32 %v696, %v698
      %v700 = vrot.slane %v692, %v699
      %v702 = vunpack.c.l.s4 1934713408
      %v703 = vunpack.c.0.s8 %v702
      %v704 = vlaneseq
      %v705 = vshrl.u32 %v704, 7
      %v706 = vsub.s32 %v703, %v705
      %v707 = vrot.slane %v693, %v706
      %v708 = vcombine.low %v675, %v691
      %v709 = vcombine.high %v675, %v691
      %v711 = vunpack.c.l.s4 1934713408
      %v712 = vunpack.c.0.s8 %v711
      %v713 = vlaneseq
      %v714 = vshrl.u32 %v713, 7
      %v715 = vsub.s32 %v712, %v714
      %v716 = vrot.slane %v708, %v715
      %v718 = vunpack.c.l.s4 1934713408
      %v719 = vunpack.c.0.s8 %v718
      %v720 = vlaneseq
      %v721 = vshrl.u32 %v720, 7
      %v722 = vsub.s32 %v719, %v721
      %v723 = vrot.slane %v709, %v722
      %v724 = vcombine.high %v700, 0.0
      %v725 = vcombine.high %v707, 0.0
      %v726 = vcombine.high %v716, 0.0
      %v727 = vcombine.high %v723, 0.0
      %729 = vrot.lane.b32.xlu0 %v656, 16
      %v730 = vpop.permute.xlu0 %729
      %733 = vrot.lane.b32.xlu0 %v639, 32
      %v734 = vpop.permute.xlu0 %733
      %737 = vrot.lane.b32.xlu0 %v657, 48
      %v738 = vpop.permute.xlu0 %737
      %741 = vrot.lane.b32.xlu0 %v648, 64
      %v742 = vpop.permute.xlu0 %741
      %745 = vrot.lane.b32.xlu0 %v658, 80
      %v746 = vpop.permute.xlu0 %745
      %749 = vrot.lane.b32.xlu0 %v655, 96
      %v750 = vpop.permute.xlu0 %749
      %753 = vrot.lane.b32.xlu0 %v659, 112
      %v754 = vpop.permute.xlu0 %753
      %757 = vrot.lane.b32.xlu0 %v724, 16
      %v758 = vpop.permute.xlu0 %757
      %761 = vrot.lane.b32.xlu0 %v707, 32
      %v762 = vpop.permute.xlu0 %761
      %765 = vrot.lane.b32.xlu0 %v725, 48
      %v766 = vpop.permute.xlu0 %765
      %769 = vrot.lane.b32.xlu0 %v716, 64
      %v770 = vpop.permute.xlu0 %769
      %773 = vrot.lane.b32.xlu0 %v726, 80
      %v774 = vpop.permute.xlu0 %773
      %777 = vrot.lane.b32.xlu0 %v723, 96
      %v778 = vpop.permute.xlu0 %777
      %781 = vrot.lane.b32.xlu0 %v727, 112
      %v782 = vpop.permute.xlu0 %781
      %v784 = vsel %vm539, %v632, %v730
      %v785 = vsel %vm541, %v784, %v734
      %v786 = vsel %vm543, %v785, %v738
      %v787 = vsel %vm545, %v786, %v742
      %v788 = vsel %vm547, %v787, %v746
      %v789 = vsel %vm549, %v788, %v750
      %v790 = vsel %vm551, %v789, %v754
      %v791 = vsel %vm539, %v700, %v758
      %v792 = vsel %vm541, %v791, %v762
      %v793 = vsel %vm543, %v792, %v766
      %v794 = vsel %vm545, %v793, %v770
      %v795 = vsel %vm547, %v794, %v774
      %v796 = vsel %vm549, %v795, %v778
      %v797 = vsel %vm551, %v796, %v782
      %798 = vrot.lane.b32.xlu0 %v335, 126
      %v799 = vpop.permute.xlu0 %798
      %800 = vrot.lane.b32.xlu0 %v336, 126
      %v801 = vpop.permute.xlu0 %800
      %802 = vrot.lane.b32.xlu0 %v338, 126
      %v803 = vpop.permute.xlu0 %802
      %804 = vrot.lane.b32.xlu0 %v339, 126
      %v805 = vpop.permute.xlu0 %804
      %806 = vrot.lane.b32.xlu0 %v341, 126
      %v807 = vpop.permute.xlu0 %806
      %808 = vrot.lane.b32.xlu0 %v342, 126
      %v809 = vpop.permute.xlu0 %808
      %810 = vrot.lane.b32.xlu0 %v344, 126
      %v811 = vpop.permute.xlu0 %810
      %812 = vrot.lane.b32.xlu0 %v345, 126
      %v813 = vpop.permute.xlu0 %812
      %v822 = vcombine.low %v799, %v807
      %v823 = vcombine.high %v799, %v807
      %v825 = vunpack.c.l.s4 1983009808
      %v826 = vunpack.c.0.s8 %v825
      %v827 = vlaneseq
      %v828 = vshrl.u32 %v827, 7
      %v829 = vsub.s32 %v826, %v828
      %v830 = vrot.slane %v822, %v829
      %v832 = vunpack.c.l.s4 1983009808
      %v833 = vunpack.c.0.s8 %v832
      %v834 = vlaneseq
      %v835 = vshrl.u32 %v834, 7
      %v836 = vsub.s32 %v833, %v835
      %v837 = vrot.slane %v823, %v836
      %v838 = vcombine.low %v803, %v811
      %v839 = vcombine.high %v803, %v811
      %v841 = vunpack.c.l.s4 1983009808
      %v842 = vunpack.c.0.s8 %v841
      %v843 = vlaneseq
      %v844 = vshrl.u32 %v843, 7
      %v845 = vsub.s32 %v842, %v844
      %v846 = vrot.slane %v838, %v845
      %v848 = vunpack.c.l.s4 1983009808
      %v849 = vunpack.c.0.s8 %v848
      %v850 = vlaneseq
      %v851 = vshrl.u32 %v850, 7
      %v852 = vsub.s32 %v849, %v851
      %v853 = vrot.slane %v839, %v852
      %v854 = vcombine.low %v830, %v846
      %v855 = vcombine.high %v830, %v846
      %v857 = vunpack.c.l.s4 1934713408
      %v858 = vunpack.c.0.s8 %v857
      %v859 = vlaneseq
      %v860 = vshrl.u32 %v859, 7
      %v861 = vsub.s32 %v858, %v860
      %v862 = vrot.slane %v854, %v861
      %v864 = vunpack.c.l.s4 1934713408
      %v865 = vunpack.c.0.s8 %v864
      %v866 = vlaneseq
      %v867 = vshrl.u32 %v866, 7
      %v868 = vsub.s32 %v865, %v867
      %v869 = vrot.slane %v855, %v868
      %v870 = vcombine.low %v837, %v853
      %v871 = vcombine.high %v837, %v853
      %v873 = vunpack.c.l.s4 1934713408
      %v874 = vunpack.c.0.s8 %v873
      %v875 = vlaneseq
      %v876 = vshrl.u32 %v875, 7
      %v877 = vsub.s32 %v874, %v876
      %v878 = vrot.slane %v870, %v877
      %v880 = vunpack.c.l.s4 1934713408
      %v881 = vunpack.c.0.s8 %v880
      %v882 = vlaneseq
      %v883 = vshrl.u32 %v882, 7
      %v884 = vsub.s32 %v881, %v883
      %v885 = vrot.slane %v871, %v884
      %v886 = vcombine.high %v862, 0.0
      %v887 = vcombine.high %v869, 0.0
      %v888 = vcombine.high %v878, 0.0
      %v889 = vcombine.high %v885, 0.0
      %v890 = vcombine.low %v801, %v809
      %v891 = vcombine.high %v801, %v809
      %v893 = vunpack.c.l.s4 1983009808
      %v894 = vunpack.c.0.s8 %v893
      %v895 = vlaneseq
      %v896 = vshrl.u32 %v895, 7
      %v897 = vsub.s32 %v894, %v896
      %v898 = vrot.slane %v890, %v897
      %v900 = vunpack.c.l.s4 1983009808
      %v901 = vunpack.c.0.s8 %v900
      %v902 = vlaneseq
      %v903 = vshrl.u32 %v902, 7
      %v904 = vsub.s32 %v901, %v903
      %v905 = vrot.slane %v891, %v904
      %v906 = vcombine.low %v805, %v813
      %v907 = vcombine.high %v805, %v813
      %v909 = vunpack.c.l.s4 1983009808
      %v910 = vunpack.c.0.s8 %v909
      %v911 = vlaneseq
      %v912 = vshrl.u32 %v911, 7
      %v913 = vsub.s32 %v910, %v912
      %v914 = vrot.slane %v906, %v913
      %v916 = vunpack.c.l.s4 1983009808
      %v917 = vunpack.c.0.s8 %v916
      %v918 = vlaneseq
      %v919 = vshrl.u32 %v918, 7
      %v920 = vsub.s32 %v917, %v919
      %v921 = vrot.slane %v907, %v920
      %v922 = vcombine.low %v898, %v914
      %v923 = vcombine.high %v898, %v914
      %v925 = vunpack.c.l.s4 1934713408
      %v926 = vunpack.c.0.s8 %v925
      %v927 = vlaneseq
      %v928 = vshrl.u32 %v927, 7
      %v929 = vsub.s32 %v926, %v928
      %v930 = vrot.slane %v922, %v929
      %v932 = vunpack.c.l.s4 1934713408
      %v933 = vunpack.c.0.s8 %v932
      %v934 = vlaneseq
      %v935 = vshrl.u32 %v934, 7
      %v936 = vsub.s32 %v933, %v935
      %v937 = vrot.slane %v923, %v936
      %v938 = vcombine.low %v905, %v921
      %v939 = vcombine.high %v905, %v921
      %v941 = vunpack.c.l.s4 1934713408
      %v942 = vunpack.c.0.s8 %v941
      %v943 = vlaneseq
      %v944 = vshrl.u32 %v943, 7
      %v945 = vsub.s32 %v942, %v944
      %v946 = vrot.slane %v938, %v945
      %v948 = vunpack.c.l.s4 1934713408
      %v949 = vunpack.c.0.s8 %v948
      %v950 = vlaneseq
      %v951 = vshrl.u32 %v950, 7
      %v952 = vsub.s32 %v949, %v951
      %v953 = vrot.slane %v939, %v952
      %v954 = vcombine.high %v930, 0.0
      %v955 = vcombine.high %v937, 0.0
      %v956 = vcombine.high %v946, 0.0
      %v957 = vcombine.high %v953, 0.0
      %959 = vrot.lane.b32.xlu0 %v886, 16
      %v960 = vpop.permute.xlu0 %959
      %963 = vrot.lane.b32.xlu0 %v869, 32
      %v964 = vpop.permute.xlu0 %963
      %967 = vrot.lane.b32.xlu0 %v887, 48
      %v968 = vpop.permute.xlu0 %967
      %971 = vrot.lane.b32.xlu0 %v878, 64
      %v972 = vpop.permute.xlu0 %971
      %975 = vrot.lane.b32.xlu0 %v888, 80
      %v976 = vpop.permute.xlu0 %975
      %979 = vrot.lane.b32.xlu0 %v885, 96
      %v980 = vpop.permute.xlu0 %979
      %983 = vrot.lane.b32.xlu0 %v889, 112
      %v984 = vpop.permute.xlu0 %983
      %987 = vrot.lane.b32.xlu0 %v954, 16
      %v988 = vpop.permute.xlu0 %987
      %991 = vrot.lane.b32.xlu0 %v937, 32
      %v992 = vpop.permute.xlu0 %991
      %995 = vrot.lane.b32.xlu0 %v955, 48
      %v996 = vpop.permute.xlu0 %995
      %999 = vrot.lane.b32.xlu0 %v946, 64
      %v1000 = vpop.permute.xlu0 %999
      %1003 = vrot.lane.b32.xlu0 %v956, 80
      %v1004 = vpop.permute.xlu0 %1003
      %1007 = vrot.lane.b32.xlu0 %v953, 96
      %v1008 = vpop.permute.xlu0 %1007
      %1011 = vrot.lane.b32.xlu0 %v957, 112
      %v1012 = vpop.permute.xlu0 %1011
      %v1014 = vsel %vm539, %v862, %v960
      %v1015 = vsel %vm541, %v1014, %v964
      %v1016 = vsel %vm543, %v1015, %v968
      %v1017 = vsel %vm545, %v1016, %v972
      %v1018 = vsel %vm547, %v1017, %v976
      %v1019 = vsel %vm549, %v1018, %v980
      %v1020 = vsel %vm551, %v1019, %v984
      %v1021 = vsel %vm539, %v930, %v988
      %v1022 = vsel %vm541, %v1021, %v992
      %v1023 = vsel %vm543, %v1022, %v996
      %v1024 = vsel %vm545, %v1023, %v1000
      %v1025 = vsel %vm547, %v1024, %v1004
      %v1026 = vsel %vm549, %v1025, %v1008
      %v1027 = vsel %vm551, %v1026, %v1012
      %vm1032 = vcmask 1046528
      %v1033 = vrot.slane %v335, 1
      %v1034 = vrot.slane %v336, 1
      %v1035 = vsel %vm1032, %v1033, %v1034
      %v1036 = vrot.slane %v337, 1
      %v1037 = vsel %vm1032, %v1034, %v1036
      %v1038 = vrot.slane %v338, 1
      %v1039 = vrot.slane %v339, 1
      %v1040 = vsel %vm1032, %v1038, %v1039
      %v1041 = vrot.slane %v340, 1
      %v1042 = vsel %vm1032, %v1039, %v1041
      %v1043 = vrot.slane %v341, 1
      %v1044 = vrot.slane %v342, 1
      %v1045 = vsel %vm1032, %v1043, %v1044
      %v1046 = vrot.slane %v343, 1
      %v1047 = vsel %vm1032, %v1044, %v1046
      %v1048 = vrot.slane %v344, 1
      %v1049 = vrot.slane %v345, 1
      %v1050 = vsel %vm1032, %v1048, %v1049
      %v1051 = vrot.slane %v346, 1
      %v1052 = vsel %vm1032, %v1049, %v1051
      %v1061 = vcombine.low %v1035, %v1045
      %v1062 = vcombine.high %v1035, %v1045
      %v1064 = vunpack.c.l.s4 1983009808
      %v1065 = vunpack.c.0.s8 %v1064
      %v1066 = vlaneseq
      %v1067 = vshrl.u32 %v1066, 7
      %v1068 = vsub.s32 %v1065, %v1067
      %v1069 = vrot.slane %v1061, %v1068
      %v1071 = vunpack.c.l.s4 1983009808
      %v1072 = vunpack.c.0.s8 %v1071
      %v1073 = vlaneseq
      %v1074 = vshrl.u32 %v1073, 7
      %v1075 = vsub.s32 %v1072, %v1074
      %v1076 = vrot.slane %v1062, %v1075
      %v1077 = vcombine.low %v1040, %v1050
      %v1078 = vcombine.high %v1040, %v1050
      %v1080 = vunpack.c.l.s4 1983009808
      %v1081 = vunpack.c.0.s8 %v1080
      %v1082 = vlaneseq
      %v1083 = vshrl.u32 %v1082, 7
      %v1084 = vsub.s32 %v1081, %v1083
      %v1085 = vrot.slane %v1077, %v1084
      %v1087 = vunpack.c.l.s4 1983009808
      %v1088 = vunpack.c.0.s8 %v1087
      %v1089 = vlaneseq
      %v1090 = vshrl.u32 %v1089, 7
      %v1091 = vsub.s32 %v1088, %v1090
      %v1092 = vrot.slane %v1078, %v1091
      %v1093 = vcombine.low %v1069, %v1085
      %v1094 = vcombine.high %v1069, %v1085
      %v1096 = vunpack.c.l.s4 1934713408
      %v1097 = vunpack.c.0.s8 %v1096
      %v1098 = vlaneseq
      %v1099 = vshrl.u32 %v1098, 7
      %v1100 = vsub.s32 %v1097, %v1099
      %v1101 = vrot.slane %v1093, %v1100
      %v1103 = vunpack.c.l.s4 1934713408
      %v1104 = vunpack.c.0.s8 %v1103
      %v1105 = vlaneseq
      %v1106 = vshrl.u32 %v1105, 7
      %v1107 = vsub.s32 %v1104, %v1106
      %v1108 = vrot.slane %v1094, %v1107
      %v1109 = vcombine.low %v1076, %v1092
      %v1110 = vcombine.high %v1076, %v1092
      %v1112 = vunpack.c.l.s4 1934713408
      %v1113 = vunpack.c.0.s8 %v1112
      %v1114 = vlaneseq
      %v1115 = vshrl.u32 %v1114, 7
      %v1116 = vsub.s32 %v1113, %v1115
      %v1117 = vrot.slane %v1109, %v1116
      %v1119 = vunpack.c.l.s4 1934713408
      %v1120 = vunpack.c.0.s8 %v1119
      %v1121 = vlaneseq
      %v1122 = vshrl.u32 %v1121, 7
      %v1123 = vsub.s32 %v1120, %v1122
      %v1124 = vrot.slane %v1110, %v1123
      %v1125 = vcombine.high %v1101, 0.0
      %v1126 = vcombine.high %v1108, 0.0
      %v1127 = vcombine.high %v1117, 0.0
      %v1128 = vcombine.high %v1124, 0.0
      %v1129 = vcombine.low %v1037, %v1047
      %v1130 = vcombine.high %v1037, %v1047
      %v1132 = vunpack.c.l.s4 1983009808
      %v1133 = vunpack.c.0.s8 %v1132
      %v1134 = vlaneseq
      %v1135 = vshrl.u32 %v1134, 7
      %v1136 = vsub.s32 %v1133, %v1135
      %v1137 = vrot.slane %v1129, %v1136
      %v1139 = vunpack.c.l.s4 1983009808
      %v1140 = vunpack.c.0.s8 %v1139
      %v1141 = vlaneseq
      %v1142 = vshrl.u32 %v1141, 7
      %v1143 = vsub.s32 %v1140, %v1142
      %v1144 = vrot.slane %v1130, %v1143
      %v1145 = vcombine.low %v1042, %v1052
      %v1146 = vcombine.high %v1042, %v1052
      %v1148 = vunpack.c.l.s4 1983009808
      %v1149 = vunpack.c.0.s8 %v1148
      %v1150 = vlaneseq
      %v1151 = vshrl.u32 %v1150, 7
      %v1152 = vsub.s32 %v1149, %v1151
      %v1153 = vrot.slane %v1145, %v1152
      %v1155 = vunpack.c.l.s4 1983009808
      %v1156 = vunpack.c.0.s8 %v1155
      %v1157 = vlaneseq
      %v1158 = vshrl.u32 %v1157, 7
      %v1159 = vsub.s32 %v1156, %v1158
      %v1160 = vrot.slane %v1146, %v1159
      %v1161 = vcombine.low %v1137, %v1153
      %v1162 = vcombine.high %v1137, %v1153
      %v1164 = vunpack.c.l.s4 1934713408
      %v1165 = vunpack.c.0.s8 %v1164
      %v1166 = vlaneseq
      %v1167 = vshrl.u32 %v1166, 7
      %v1168 = vsub.s32 %v1165, %v1167
      %v1169 = vrot.slane %v1161, %v1168
      %v1171 = vunpack.c.l.s4 1934713408
      %v1172 = vunpack.c.0.s8 %v1171
      %v1173 = vlaneseq
      %v1174 = vshrl.u32 %v1173, 7
      %v1175 = vsub.s32 %v1172, %v1174
      %v1176 = vrot.slane %v1162, %v1175
      %v1177 = vcombine.low %v1144, %v1160
      %v1178 = vcombine.high %v1144, %v1160
      %v1180 = vunpack.c.l.s4 1934713408
      %v1181 = vunpack.c.0.s8 %v1180
      %v1182 = vlaneseq
      %v1183 = vshrl.u32 %v1182, 7
      %v1184 = vsub.s32 %v1181, %v1183
      %v1185 = vrot.slane %v1177, %v1184
      %v1187 = vunpack.c.l.s4 1934713408
      %v1188 = vunpack.c.0.s8 %v1187
      %v1189 = vlaneseq
      %v1190 = vshrl.u32 %v1189, 7
      %v1191 = vsub.s32 %v1188, %v1190
      %v1192 = vrot.slane %v1178, %v1191
      %v1193 = vcombine.high %v1169, 0.0
      %v1194 = vcombine.high %v1176, 0.0
      %v1195 = vcombine.high %v1185, 0.0
      %v1196 = vcombine.high %v1192, 0.0
      %1198 = vrot.lane.b32.xlu0 %v1125, 16
      %v1199 = vpop.permute.xlu0 %1198
      %1202 = vrot.lane.b32.xlu0 %v1108, 32
      %v1203 = vpop.permute.xlu0 %1202
      %1206 = vrot.lane.b32.xlu0 %v1126, 48
      %v1207 = vpop.permute.xlu0 %1206
      %1210 = vrot.lane.b32.xlu0 %v1117, 64
      %v1211 = vpop.permute.xlu0 %1210
      %1214 = vrot.lane.b32.xlu0 %v1127, 80
      %v1215 = vpop.permute.xlu0 %1214
      %1218 = vrot.lane.b32.xlu0 %v1124, 96
      %v1219 = vpop.permute.xlu0 %1218
      %1222 = vrot.lane.b32.xlu0 %v1128, 112
      %v1223 = vpop.permute.xlu0 %1222
      %1226 = vrot.lane.b32.xlu0 %v1193, 16
      %v1227 = vpop.permute.xlu0 %1226
      %1230 = vrot.lane.b32.xlu0 %v1176, 32
      %v1231 = vpop.permute.xlu0 %1230
      %1234 = vrot.lane.b32.xlu0 %v1194, 48
      %v1235 = vpop.permute.xlu0 %1234
      %1238 = vrot.lane.b32.xlu0 %v1185, 64
      %v1239 = vpop.permute.xlu0 %1238
      %1242 = vrot.lane.b32.xlu0 %v1195, 80
      %v1243 = vpop.permute.xlu0 %1242
      %1246 = vrot.lane.b32.xlu0 %v1192, 96
      %v1247 = vpop.permute.xlu0 %1246
      %1250 = vrot.lane.b32.xlu0 %v1196, 112
      %v1251 = vpop.permute.xlu0 %1250
      %v1253 = vsel %vm539, %v1101, %v1199
      %v1254 = vsel %vm541, %v1253, %v1203
      %v1255 = vsel %vm543, %v1254, %v1207
      %v1256 = vsel %vm545, %v1255, %v1211
      %v1257 = vsel %vm547, %v1256, %v1215
      %v1258 = vsel %vm549, %v1257, %v1219
      %v1259 = vsel %vm551, %v1258, %v1223
      %v1260 = vsel %vm539, %v1169, %v1227
      %v1261 = vsel %vm541, %v1260, %v1231
      %v1262 = vsel %vm543, %v1261, %v1235
      %v1263 = vsel %vm545, %v1262, %v1239
      %v1264 = vsel %vm547, %v1263, %v1243
      %v1265 = vsel %vm549, %v1264, %v1247
      %v1266 = vsel %vm551, %v1265, %v1251
      %1267 = vrot.lane.b32.xlu0 %v1035, 127
      %v1268 = vpop.permute.xlu0 %1267
      %1269 = vrot.lane.b32.xlu0 %v1037, 127
      %v1270 = vpop.permute.xlu0 %1269
      %1271 = vrot.lane.b32.xlu0 %v1040, 127
      %v1272 = vpop.permute.xlu0 %1271
      %1273 = vrot.lane.b32.xlu0 %v1042, 127
      %v1274 = vpop.permute.xlu0 %1273
      %1275 = vrot.lane.b32.xlu0 %v1045, 127
      %v1276 = vpop.permute.xlu0 %1275
      %1277 = vrot.lane.b32.xlu0 %v1047, 127
      %v1278 = vpop.permute.xlu0 %1277
      %1279 = vrot.lane.b32.xlu0 %v1050, 127
      %v1280 = vpop.permute.xlu0 %1279
      %1281 = vrot.lane.b32.xlu0 %v1052, 127
      %v1282 = vpop.permute.xlu0 %1281
      %v1291 = vcombine.low %v1268, %v1276
      %v1292 = vcombine.high %v1268, %v1276
      %v1294 = vunpack.c.l.s4 1983009808
      %v1295 = vunpack.c.0.s8 %v1294
      %v1296 = vlaneseq
      %v1297 = vshrl.u32 %v1296, 7
      %v1298 = vsub.s32 %v1295, %v1297
      %v1299 = vrot.slane %v1291, %v1298
      %v1301 = vunpack.c.l.s4 1983009808
      %v1302 = vunpack.c.0.s8 %v1301
      %v1303 = vlaneseq
      %v1304 = vshrl.u32 %v1303, 7
      %v1305 = vsub.s32 %v1302, %v1304
      %v1306 = vrot.slane %v1292, %v1305
      %v1307 = vcombine.low %v1272, %v1280
      %v1308 = vcombine.high %v1272, %v1280
      %v1310 = vunpack.c.l.s4 1983009808
      %v1311 = vunpack.c.0.s8 %v1310
      %v1312 = vlaneseq
      %v1313 = vshrl.u32 %v1312, 7
      %v1314 = vsub.s32 %v1311, %v1313
      %v1315 = vrot.slane %v1307, %v1314
      %v1317 = vunpack.c.l.s4 1983009808
      %v1318 = vunpack.c.0.s8 %v1317
      %v1319 = vlaneseq
      %v1320 = vshrl.u32 %v1319, 7
      %v1321 = vsub.s32 %v1318, %v1320
      %v1322 = vrot.slane %v1308, %v1321
      %v1323 = vcombine.low %v1299, %v1315
      %v1324 = vcombine.high %v1299, %v1315
      %v1326 = vunpack.c.l.s4 1934713408
      %v1327 = vunpack.c.0.s8 %v1326
      %v1328 = vlaneseq
      %v1329 = vshrl.u32 %v1328, 7
      %v1330 = vsub.s32 %v1327, %v1329
      %v1331 = vrot.slane %v1323, %v1330
      %v1333 = vunpack.c.l.s4 1934713408
      %v1334 = vunpack.c.0.s8 %v1333
      %v1335 = vlaneseq
      %v1336 = vshrl.u32 %v1335, 7
      %v1337 = vsub.s32 %v1334, %v1336
      %v1338 = vrot.slane %v1324, %v1337
      %v1339 = vcombine.low %v1306, %v1322
      %v1340 = vcombine.high %v1306, %v1322
      %v1342 = vunpack.c.l.s4 1934713408
      %v1343 = vunpack.c.0.s8 %v1342
      %v1344 = vlaneseq
      %v1345 = vshrl.u32 %v1344, 7
      %v1346 = vsub.s32 %v1343, %v1345
      %v1347 = vrot.slane %v1339, %v1346
      %v1349 = vunpack.c.l.s4 1934713408
      %v1350 = vunpack.c.0.s8 %v1349
      %v1351 = vlaneseq
      %v1352 = vshrl.u32 %v1351, 7
      %v1353 = vsub.s32 %v1350, %v1352
      %v1354 = vrot.slane %v1340, %v1353
      %v1355 = vcombine.high %v1331, 0.0
      %v1356 = vcombine.high %v1338, 0.0
      %v1357 = vcombine.high %v1347, 0.0
      %v1358 = vcombine.high %v1354, 0.0
      %v1359 = vcombine.low %v1270, %v1278
      %v1360 = vcombine.high %v1270, %v1278
      %v1362 = vunpack.c.l.s4 1983009808
      %v1363 = vunpack.c.0.s8 %v1362
      %v1364 = vlaneseq
      %v1365 = vshrl.u32 %v1364, 7
      %v1366 = vsub.s32 %v1363, %v1365
      %v1367 = vrot.slane %v1359, %v1366
      %v1369 = vunpack.c.l.s4 1983009808
      %v1370 = vunpack.c.0.s8 %v1369
      %v1371 = vlaneseq
      %v1372 = vshrl.u32 %v1371, 7
      %v1373 = vsub.s32 %v1370, %v1372
      %v1374 = vrot.slane %v1360, %v1373
      %v1375 = vcombine.low %v1274, %v1282
      %v1376 = vcombine.high %v1274, %v1282
      %v1378 = vunpack.c.l.s4 1983009808
      %v1379 = vunpack.c.0.s8 %v1378
      %v1380 = vlaneseq
      %v1381 = vshrl.u32 %v1380, 7
      %v1382 = vsub.s32 %v1379, %v1381
      %v1383 = vrot.slane %v1375, %v1382
      %v1385 = vunpack.c.l.s4 1983009808
      %v1386 = vunpack.c.0.s8 %v1385
      %v1387 = vlaneseq
      %v1388 = vshrl.u32 %v1387, 7
      %v1389 = vsub.s32 %v1386, %v1388
      %v1390 = vrot.slane %v1376, %v1389
      %v1391 = vcombine.low %v1367, %v1383
      %v1392 = vcombine.high %v1367, %v1383
      %v1394 = vunpack.c.l.s4 1934713408
      %v1395 = vunpack.c.0.s8 %v1394
      %v1396 = vlaneseq
      %v1397 = vshrl.u32 %v1396, 7
      %v1398 = vsub.s32 %v1395, %v1397
      %v1399 = vrot.slane %v1391, %v1398
      %v1401 = vunpack.c.l.s4 1934713408
      %v1402 = vunpack.c.0.s8 %v1401
      %v1403 = vlaneseq
      %v1404 = vshrl.u32 %v1403, 7
      %v1405 = vsub.s32 %v1402, %v1404
      %v1406 = vrot.slane %v1392, %v1405
      %v1407 = vcombine.low %v1374, %v1390
      %v1408 = vcombine.high %v1374, %v1390
      %v1410 = vunpack.c.l.s4 1934713408
      %v1411 = vunpack.c.0.s8 %v1410
      %v1412 = vlaneseq
      %v1413 = vshrl.u32 %v1412, 7
      %v1414 = vsub.s32 %v1411, %v1413
      %v1415 = vrot.slane %v1407, %v1414
      %v1417 = vunpack.c.l.s4 1934713408
      %v1418 = vunpack.c.0.s8 %v1417
      %v1419 = vlaneseq
      %v1420 = vshrl.u32 %v1419, 7
      %v1421 = vsub.s32 %v1418, %v1420
      %v1422 = vrot.slane %v1408, %v1421
      %v1423 = vcombine.high %v1399, 0.0
      %v1424 = vcombine.high %v1406, 0.0
      %v1425 = vcombine.high %v1415, 0.0
      %v1426 = vcombine.high %v1422, 0.0
      %1428 = vrot.lane.b32.xlu0 %v1355, 16
      %v1429 = vpop.permute.xlu0 %1428
      %1432 = vrot.lane.b32.xlu0 %v1338, 32
      %v1433 = vpop.permute.xlu0 %1432
      %1436 = vrot.lane.b32.xlu0 %v1356, 48
      %v1437 = vpop.permute.xlu0 %1436
      %1440 = vrot.lane.b32.xlu0 %v1347, 64
      %v1441 = vpop.permute.xlu0 %1440
      %1444 = vrot.lane.b32.xlu0 %v1357, 80
      %v1445 = vpop.permute.xlu0 %1444
      %1448 = vrot.lane.b32.xlu0 %v1354, 96
      %v1449 = vpop.permute.xlu0 %1448
      %1452 = vrot.lane.b32.xlu0 %v1358, 112
      %v1453 = vpop.permute.xlu0 %1452
      %1456 = vrot.lane.b32.xlu0 %v1423, 16
      %v1457 = vpop.permute.xlu0 %1456
      %1460 = vrot.lane.b32.xlu0 %v1406, 32
      %v1461 = vpop.permute.xlu0 %1460
      %1464 = vrot.lane.b32.xlu0 %v1424, 48
      %v1465 = vpop.permute.xlu0 %1464
      %1468 = vrot.lane.b32.xlu0 %v1415, 64
      %v1469 = vpop.permute.xlu0 %1468
      %1472 = vrot.lane.b32.xlu0 %v1425, 80
      %v1473 = vpop.permute.xlu0 %1472
      %1476 = vrot.lane.b32.xlu0 %v1422, 96
      %v1477 = vpop.permute.xlu0 %1476
      %1480 = vrot.lane.b32.xlu0 %v1426, 112
      %v1481 = vpop.permute.xlu0 %1480
      %v1483 = vsel %vm539, %v1331, %v1429
      %v1484 = vsel %vm541, %v1483, %v1433
      %v1485 = vsel %vm543, %v1484, %v1437
      %v1486 = vsel %vm545, %v1485, %v1441
      %v1487 = vsel %vm547, %v1486, %v1445
      %v1488 = vsel %vm549, %v1487, %v1449
      %v1489 = vsel %vm551, %v1488, %v1453
      %v1490 = vsel %vm539, %v1399, %v1457
      %v1491 = vsel %vm541, %v1490, %v1461
      %v1492 = vsel %vm543, %v1491, %v1465
      %v1493 = vsel %vm545, %v1492, %v1469
      %v1494 = vsel %vm547, %v1493, %v1473
      %v1495 = vsel %vm549, %v1494, %v1477
      %v1496 = vsel %vm551, %v1495, %v1481
      %1497 = vrot.lane.b32.xlu0 %v1035, 126
      %v1498 = vpop.permute.xlu0 %1497
      %1499 = vrot.lane.b32.xlu0 %v1037, 126
      %v1500 = vpop.permute.xlu0 %1499
      %1501 = vrot.lane.b32.xlu0 %v1040, 126
      %v1502 = vpop.permute.xlu0 %1501
      %1503 = vrot.lane.b32.xlu0 %v1042, 126
      %v1504 = vpop.permute.xlu0 %1503
      %1505 = vrot.lane.b32.xlu0 %v1045, 126
      %v1506 = vpop.permute.xlu0 %1505
      %1507 = vrot.lane.b32.xlu0 %v1047, 126
      %v1508 = vpop.permute.xlu0 %1507
      %1509 = vrot.lane.b32.xlu0 %v1050, 126
      %v1510 = vpop.permute.xlu0 %1509
      %1511 = vrot.lane.b32.xlu0 %v1052, 126
      %v1512 = vpop.permute.xlu0 %1511
      %v1521 = vcombine.low %v1498, %v1506
      %v1522 = vcombine.high %v1498, %v1506
      %v1524 = vunpack.c.l.s4 1983009808
      %v1525 = vunpack.c.0.s8 %v1524
      %v1526 = vlaneseq
      %v1527 = vshrl.u32 %v1526, 7
      %v1528 = vsub.s32 %v1525, %v1527
      %v1529 = vrot.slane %v1521, %v1528
      %v1531 = vunpack.c.l.s4 1983009808
      %v1532 = vunpack.c.0.s8 %v1531
      %v1533 = vlaneseq
      %v1534 = vshrl.u32 %v1533, 7
      %v1535 = vsub.s32 %v1532, %v1534
      %v1536 = vrot.slane %v1522, %v1535
      %v1537 = vcombine.low %v1502, %v1510
      %v1538 = vcombine.high %v1502, %v1510
      %v1540 = vunpack.c.l.s4 1983009808
      %v1541 = vunpack.c.0.s8 %v1540
      %v1542 = vlaneseq
      %v1543 = vshrl.u32 %v1542, 7
      %v1544 = vsub.s32 %v1541, %v1543
      %v1545 = vrot.slane %v1537, %v1544
      %v1547 = vunpack.c.l.s4 1983009808
      %v1548 = vunpack.c.0.s8 %v1547
      %v1549 = vlaneseq
      %v1550 = vshrl.u32 %v1549, 7
      %v1551 = vsub.s32 %v1548, %v1550
      %v1552 = vrot.slane %v1538, %v1551
      %v1553 = vcombine.low %v1529, %v1545
      %v1554 = vcombine.high %v1529, %v1545
      %v1556 = vunpack.c.l.s4 1934713408
      %v1557 = vunpack.c.0.s8 %v1556
      %v1558 = vlaneseq
      %v1559 = vshrl.u32 %v1558, 7
      %v1560 = vsub.s32 %v1557, %v1559
      %v1561 = vrot.slane %v1553, %v1560
      %v1563 = vunpack.c.l.s4 1934713408
      %v1564 = vunpack.c.0.s8 %v1563
      %v1565 = vlaneseq
      %v1566 = vshrl.u32 %v1565, 7
      %v1567 = vsub.s32 %v1564, %v1566
      %v1568 = vrot.slane %v1554, %v1567
      %v1569 = vcombine.low %v1536, %v1552
      %v1570 = vcombine.high %v1536, %v1552
      %v1572 = vunpack.c.l.s4 1934713408
      %v1573 = vunpack.c.0.s8 %v1572
      %v1574 = vlaneseq
      %v1575 = vshrl.u32 %v1574, 7
      %v1576 = vsub.s32 %v1573, %v1575
      %v1577 = vrot.slane %v1569, %v1576
      %v1579 = vunpack.c.l.s4 1934713408
      %v1580 = vunpack.c.0.s8 %v1579
      %v1581 = vlaneseq
      %v1582 = vshrl.u32 %v1581, 7
      %v1583 = vsub.s32 %v1580, %v1582
      %v1584 = vrot.slane %v1570, %v1583
      %v1585 = vcombine.high %v1561, 0.0
      %v1586 = vcombine.high %v1568, 0.0
      %v1587 = vcombine.high %v1577, 0.0
      %v1588 = vcombine.high %v1584, 0.0
      %v1589 = vcombine.low %v1500, %v1508
      %v1590 = vcombine.high %v1500, %v1508
      %v1592 = vunpack.c.l.s4 1983009808
      %v1593 = vunpack.c.0.s8 %v1592
      %v1594 = vlaneseq
      %v1595 = vshrl.u32 %v1594, 7
      %v1596 = vsub.s32 %v1593, %v1595
      %v1597 = vrot.slane %v1589, %v1596
      %v1599 = vunpack.c.l.s4 1983009808
      %v1600 = vunpack.c.0.s8 %v1599
      %v1601 = vlaneseq
      %v1602 = vshrl.u32 %v1601, 7
      %v1603 = vsub.s32 %v1600, %v1602
      %v1604 = vrot.slane %v1590, %v1603
      %v1605 = vcombine.low %v1504, %v1512
      %v1606 = vcombine.high %v1504, %v1512
      %v1608 = vunpack.c.l.s4 1983009808
      %v1609 = vunpack.c.0.s8 %v1608
      %v1610 = vlaneseq
      %v1611 = vshrl.u32 %v1610, 7
      %v1612 = vsub.s32 %v1609, %v1611
      %v1613 = vrot.slane %v1605, %v1612
      %v1615 = vunpack.c.l.s4 1983009808
      %v1616 = vunpack.c.0.s8 %v1615
      %v1617 = vlaneseq
      %v1618 = vshrl.u32 %v1617, 7
      %v1619 = vsub.s32 %v1616, %v1618
      %v1620 = vrot.slane %v1606, %v1619
      %v1621 = vcombine.low %v1597, %v1613
      %v1622 = vcombine.high %v1597, %v1613
      %v1624 = vunpack.c.l.s4 1934713408
      %v1625 = vunpack.c.0.s8 %v1624
      %v1626 = vlaneseq
      %v1627 = vshrl.u32 %v1626, 7
      %v1628 = vsub.s32 %v1625, %v1627
      %v1629 = vrot.slane %v1621, %v1628
      %v1631 = vunpack.c.l.s4 1934713408
      %v1632 = vunpack.c.0.s8 %v1631
      %v1633 = vlaneseq
      %v1634 = vshrl.u32 %v1633, 7
      %v1635 = vsub.s32 %v1632, %v1634
      %v1636 = vrot.slane %v1622, %v1635
      %v1637 = vcombine.low %v1604, %v1620
      %v1638 = vcombine.high %v1604, %v1620
      %v1640 = vunpack.c.l.s4 1934713408
      %v1641 = vunpack.c.0.s8 %v1640
      %v1642 = vlaneseq
      %v1643 = vshrl.u32 %v1642, 7
      %v1644 = vsub.s32 %v1641, %v1643
      %v1645 = vrot.slane %v1637, %v1644
      %v1647 = vunpack.c.l.s4 1934713408
      %v1648 = vunpack.c.0.s8 %v1647
      %v1649 = vlaneseq
      %v1650 = vshrl.u32 %v1649, 7
      %v1651 = vsub.s32 %v1648, %v1650
      %v1652 = vrot.slane %v1638, %v1651
      %v1653 = vcombine.high %v1629, 0.0
      %v1654 = vcombine.high %v1636, 0.0
      %v1655 = vcombine.high %v1645, 0.0
      %v1656 = vcombine.high %v1652, 0.0
      %1658 = vrot.lane.b32.xlu0 %v1585, 16
      %v1659 = vpop.permute.xlu0 %1658
      %1662 = vrot.lane.b32.xlu0 %v1568, 32
      %v1663 = vpop.permute.xlu0 %1662
      %1666 = vrot.lane.b32.xlu0 %v1586, 48
      %v1667 = vpop.permute.xlu0 %1666
      %1670 = vrot.lane.b32.xlu0 %v1577, 64
      %v1671 = vpop.permute.xlu0 %1670
      %1674 = vrot.lane.b32.xlu0 %v1587, 80
      %v1675 = vpop.permute.xlu0 %1674
      %1678 = vrot.lane.b32.xlu0 %v1584, 96
      %v1679 = vpop.permute.xlu0 %1678
      %1682 = vrot.lane.b32.xlu0 %v1588, 112
      %v1683 = vpop.permute.xlu0 %1682
      %1686 = vrot.lane.b32.xlu0 %v1653, 16
      %v1687 = vpop.permute.xlu0 %1686
      %1690 = vrot.lane.b32.xlu0 %v1636, 32
      %v1691 = vpop.permute.xlu0 %1690
      %1694 = vrot.lane.b32.xlu0 %v1654, 48
      %v1695 = vpop.permute.xlu0 %1694
      %1698 = vrot.lane.b32.xlu0 %v1645, 64
      %v1699 = vpop.permute.xlu0 %1698
      %1702 = vrot.lane.b32.xlu0 %v1655, 80
      %v1703 = vpop.permute.xlu0 %1702
      %1706 = vrot.lane.b32.xlu0 %v1652, 96
      %v1707 = vpop.permute.xlu0 %1706
      %1710 = vrot.lane.b32.xlu0 %v1656, 112
      %v1711 = vpop.permute.xlu0 %1710
      %v1713 = vsel %vm539, %v1561, %v1659
      %v1714 = vsel %vm541, %v1713, %v1663
      %v1715 = vsel %vm543, %v1714, %v1667
      %v1716 = vsel %vm545, %v1715, %v1671
      %v1717 = vsel %vm547, %v1716, %v1675
      %v1718 = vsel %vm549, %v1717, %v1679
      %v1719 = vsel %vm551, %v1718, %v1683
      %v1720 = vsel %vm539, %v1629, %v1687
      %v1721 = vsel %vm541, %v1720, %v1691
      %v1722 = vsel %vm543, %v1721, %v1695
      %v1723 = vsel %vm545, %v1722, %v1699
      %v1724 = vsel %vm547, %v1723, %v1703
      %v1725 = vsel %vm549, %v1724, %v1707
      %v1726 = vsel %vm551, %v1725, %v1711
      %vm1727 = vcmask 1045504
      %v1728 = vrot.slane %v335, 2
      %v1729 = vrot.slane %v336, 2
      %v1730 = vsel %vm1727, %v1728, %v1729
      %v1731 = vrot.slane %v337, 2
      %v1732 = vsel %vm1727, %v1729, %v1731
      %v1733 = vrot.slane %v338, 2
      %v1734 = vrot.slane %v339, 2
      %v1735 = vsel %vm1727, %v1733, %v1734
      %v1736 = vrot.slane %v340, 2
      %v1737 = vsel %vm1727, %v1734, %v1736
      %v1738 = vrot.slane %v341, 2
      %v1739 = vrot.slane %v342, 2
      %v1740 = vsel %vm1727, %v1738, %v1739
      %v1741 = vrot.slane %v343, 2
      %v1742 = vsel %vm1727, %v1739, %v1741
      %v1743 = vrot.slane %v344, 2
      %v1744 = vrot.slane %v345, 2
      %v1745 = vsel %vm1727, %v1743, %v1744
      %v1746 = vrot.slane %v346, 2
      %v1747 = vsel %vm1727, %v1744, %v1746
      %v1756 = vcombine.low %v1730, %v1740
      %v1757 = vcombine.high %v1730, %v1740
      %v1759 = vunpack.c.l.s4 1983009808
      %v1760 = vunpack.c.0.s8 %v1759
      %v1761 = vlaneseq
      %v1762 = vshrl.u32 %v1761, 7
      %v1763 = vsub.s32 %v1760, %v1762
      %v1764 = vrot.slane %v1756, %v1763
      %v1766 = vunpack.c.l.s4 1983009808
      %v1767 = vunpack.c.0.s8 %v1766
      %v1768 = vlaneseq
      %v1769 = vshrl.u32 %v1768, 7
      %v1770 = vsub.s32 %v1767, %v1769
      %v1771 = vrot.slane %v1757, %v1770
      %v1772 = vcombine.low %v1735, %v1745
      %v1773 = vcombine.high %v1735, %v1745
      %v1775 = vunpack.c.l.s4 1983009808
      %v1776 = vunpack.c.0.s8 %v1775
      %v1777 = vlaneseq
      %v1778 = vshrl.u32 %v1777, 7
      %v1779 = vsub.s32 %v1776, %v1778
      %v1780 = vrot.slane %v1772, %v1779
      %v1782 = vunpack.c.l.s4 1983009808
      %v1783 = vunpack.c.0.s8 %v1782
      %v1784 = vlaneseq
      %v1785 = vshrl.u32 %v1784, 7
      %v1786 = vsub.s32 %v1783, %v1785
      %v1787 = vrot.slane %v1773, %v1786
      %v1788 = vcombine.low %v1764, %v1780
      %v1789 = vcombine.high %v1764, %v1780
      %v1791 = vunpack.c.l.s4 1934713408
      %v1792 = vunpack.c.0.s8 %v1791
      %v1793 = vlaneseq
      %v1794 = vshrl.u32 %v1793, 7
      %v1795 = vsub.s32 %v1792, %v1794
      %v1796 = vrot.slane %v1788, %v1795
      %v1798 = vunpack.c.l.s4 1934713408
      %v1799 = vunpack.c.0.s8 %v1798
      %v1800 = vlaneseq
      %v1801 = vshrl.u32 %v1800, 7
      %v1802 = vsub.s32 %v1799, %v1801
      %v1803 = vrot.slane %v1789, %v1802
      %v1804 = vcombine.low %v1771, %v1787
      %v1805 = vcombine.high %v1771, %v1787
      %v1807 = vunpack.c.l.s4 1934713408
      %v1808 = vunpack.c.0.s8 %v1807
      %v1809 = vlaneseq
      %v1810 = vshrl.u32 %v1809, 7
      %v1811 = vsub.s32 %v1808, %v1810
      %v1812 = vrot.slane %v1804, %v1811
      %v1814 = vunpack.c.l.s4 1934713408
      %v1815 = vunpack.c.0.s8 %v1814
      %v1816 = vlaneseq
      %v1817 = vshrl.u32 %v1816, 7
      %v1818 = vsub.s32 %v1815, %v1817
      %v1819 = vrot.slane %v1805, %v1818
      %v1820 = vcombine.high %v1796, 0.0
      %v1821 = vcombine.high %v1803, 0.0
      %v1822 = vcombine.high %v1812, 0.0
      %v1823 = vcombine.high %v1819, 0.0
      %v1824 = vcombine.low %v1732, %v1742
      %v1825 = vcombine.high %v1732, %v1742
      %v1827 = vunpack.c.l.s4 1983009808
      %v1828 = vunpack.c.0.s8 %v1827
      %v1829 = vlaneseq
      %v1830 = vshrl.u32 %v1829, 7
      %v1831 = vsub.s32 %v1828, %v1830
      %v1832 = vrot.slane %v1824, %v1831
      %v1834 = vunpack.c.l.s4 1983009808
      %v1835 = vunpack.c.0.s8 %v1834
      %v1836 = vlaneseq
      %v1837 = vshrl.u32 %v1836, 7
      %v1838 = vsub.s32 %v1835, %v1837
      %v1839 = vrot.slane %v1825, %v1838
      %v1840 = vcombine.low %v1737, %v1747
      %v1841 = vcombine.high %v1737, %v1747
      %v1843 = vunpack.c.l.s4 1983009808
      %v1844 = vunpack.c.0.s8 %v1843
      %v1845 = vlaneseq
      %v1846 = vshrl.u32 %v1845, 7
      %v1847 = vsub.s32 %v1844, %v1846
      %v1848 = vrot.slane %v1840, %v1847
      %v1850 = vunpack.c.l.s4 1983009808
      %v1851 = vunpack.c.0.s8 %v1850
      %v1852 = vlaneseq
      %v1853 = vshrl.u32 %v1852, 7
      %v1854 = vsub.s32 %v1851, %v1853
      %v1855 = vrot.slane %v1841, %v1854
      %v1856 = vcombine.low %v1832, %v1848
      %v1857 = vcombine.high %v1832, %v1848
      %v1859 = vunpack.c.l.s4 1934713408
      %v1860 = vunpack.c.0.s8 %v1859
      %v1861 = vlaneseq
      %v1862 = vshrl.u32 %v1861, 7
      %v1863 = vsub.s32 %v1860, %v1862
      %v1864 = vrot.slane %v1856, %v1863
      %v1866 = vunpack.c.l.s4 1934713408
      %v1867 = vunpack.c.0.s8 %v1866
      %v1868 = vlaneseq
      %v1869 = vshrl.u32 %v1868, 7
      %v1870 = vsub.s32 %v1867, %v1869
      %v1871 = vrot.slane %v1857, %v1870
      %v1872 = vcombine.low %v1839, %v1855
      %v1873 = vcombine.high %v1839, %v1855
      %v1875 = vunpack.c.l.s4 1934713408
      %v1876 = vunpack.c.0.s8 %v1875
      %v1877 = vlaneseq
      %v1878 = vshrl.u32 %v1877, 7
      %v1879 = vsub.s32 %v1876, %v1878
      %v1880 = vrot.slane %v1872, %v1879
      %v1882 = vunpack.c.l.s4 1934713408
      %v1883 = vunpack.c.0.s8 %v1882
      %v1884 = vlaneseq
      %v1885 = vshrl.u32 %v1884, 7
      %v1886 = vsub.s32 %v1883, %v1885
      %v1887 = vrot.slane %v1873, %v1886
      %v1888 = vcombine.high %v1864, 0.0
      %v1889 = vcombine.high %v1871, 0.0
      %v1890 = vcombine.high %v1880, 0.0
      %v1891 = vcombine.high %v1887, 0.0
      %1893 = vrot.lane.b32.xlu0 %v1820, 16
      %v1894 = vpop.permute.xlu0 %1893
      %1897 = vrot.lane.b32.xlu0 %v1803, 32
      %v1898 = vpop.permute.xlu0 %1897
      %1901 = vrot.lane.b32.xlu0 %v1821, 48
      %v1902 = vpop.permute.xlu0 %1901
      %1905 = vrot.lane.b32.xlu0 %v1812, 64
      %v1906 = vpop.permute.xlu0 %1905
      %1909 = vrot.lane.b32.xlu0 %v1822, 80
      %v1910 = vpop.permute.xlu0 %1909
      %1913 = vrot.lane.b32.xlu0 %v1819, 96
      %v1914 = vpop.permute.xlu0 %1913
      %1917 = vrot.lane.b32.xlu0 %v1823, 112
      %v1918 = vpop.permute.xlu0 %1917
      %1921 = vrot.lane.b32.xlu0 %v1888, 16
      %v1922 = vpop.permute.xlu0 %1921
      %1925 = vrot.lane.b32.xlu0 %v1871, 32
      %v1926 = vpop.permute.xlu0 %1925
      %1929 = vrot.lane.b32.xlu0 %v1889, 48
      %v1930 = vpop.permute.xlu0 %1929
      %1933 = vrot.lane.b32.xlu0 %v1880, 64
      %v1934 = vpop.permute.xlu0 %1933
      %1937 = vrot.lane.b32.xlu0 %v1890, 80
      %v1938 = vpop.permute.xlu0 %1937
      %1941 = vrot.lane.b32.xlu0 %v1887, 96
      %v1942 = vpop.permute.xlu0 %1941
      %1945 = vrot.lane.b32.xlu0 %v1891, 112
      %v1946 = vpop.permute.xlu0 %1945
      %v1948 = vsel %vm539, %v1796, %v1894
      %v1949 = vsel %vm541, %v1948, %v1898
      %v1950 = vsel %vm543, %v1949, %v1902
      %v1951 = vsel %vm545, %v1950, %v1906
      %v1952 = vsel %vm547, %v1951, %v1910
      %v1953 = vsel %vm549, %v1952, %v1914
      %v1954 = vsel %vm551, %v1953, %v1918
      %v1955 = vsel %vm539, %v1864, %v1922
      %v1956 = vsel %vm541, %v1955, %v1926
      %v1957 = vsel %vm543, %v1956, %v1930
      %v1958 = vsel %vm545, %v1957, %v1934
      %v1959 = vsel %vm547, %v1958, %v1938
      %v1960 = vsel %vm549, %v1959, %v1942
      %v1961 = vsel %vm551, %v1960, %v1946
      %1962 = vrot.lane.b32.xlu0 %v1730, 127
      %v1963 = vpop.permute.xlu0 %1962
      %1964 = vrot.lane.b32.xlu0 %v1732, 127
      %v1965 = vpop.permute.xlu0 %1964
      %1966 = vrot.lane.b32.xlu0 %v1735, 127
      %v1967 = vpop.permute.xlu0 %1966
      %1968 = vrot.lane.b32.xlu0 %v1737, 127
      %v1969 = vpop.permute.xlu0 %1968
      %1970 = vrot.lane.b32.xlu0 %v1740, 127
      %v1971 = vpop.permute.xlu0 %1970
      %1972 = vrot.lane.b32.xlu0 %v1742, 127
      %v1973 = vpop.permute.xlu0 %1972
      %1974 = vrot.lane.b32.xlu0 %v1745, 127
      %v1975 = vpop.permute.xlu0 %1974
      %1976 = vrot.lane.b32.xlu0 %v1747, 127
      %v1977 = vpop.permute.xlu0 %1976
      %v1986 = vcombine.low %v1963, %v1971
      %v1987 = vcombine.high %v1963, %v1971
      %v1989 = vunpack.c.l.s4 1983009808
      %v1990 = vunpack.c.0.s8 %v1989
      %v1991 = vlaneseq
      %v1992 = vshrl.u32 %v1991, 7
      %v1993 = vsub.s32 %v1990, %v1992
      %v1994 = vrot.slane %v1986, %v1993
      %v1996 = vunpack.c.l.s4 1983009808
      %v1997 = vunpack.c.0.s8 %v1996
      %v1998 = vlaneseq
      %v1999 = vshrl.u32 %v1998, 7
      %v2000 = vsub.s32 %v1997, %v1999
      %v2001 = vrot.slane %v1987, %v2000
      %v2002 = vcombine.low %v1967, %v1975
      %v2003 = vcombine.high %v1967, %v1975
      %v2005 = vunpack.c.l.s4 1983009808
      %v2006 = vunpack.c.0.s8 %v2005
      %v2007 = vlaneseq
      %v2008 = vshrl.u32 %v2007, 7
      %v2009 = vsub.s32 %v2006, %v2008
      %v2010 = vrot.slane %v2002, %v2009
      %v2012 = vunpack.c.l.s4 1983009808
      %v2013 = vunpack.c.0.s8 %v2012
      %v2014 = vlaneseq
      %v2015 = vshrl.u32 %v2014, 7
      %v2016 = vsub.s32 %v2013, %v2015
      %v2017 = vrot.slane %v2003, %v2016
      %v2018 = vcombine.low %v1994, %v2010
      %v2019 = vcombine.high %v1994, %v2010
      %v2021 = vunpack.c.l.s4 1934713408
      %v2022 = vunpack.c.0.s8 %v2021
      %v2023 = vlaneseq
      %v2024 = vshrl.u32 %v2023, 7
      %v2025 = vsub.s32 %v2022, %v2024
      %v2026 = vrot.slane %v2018, %v2025
      %v2028 = vunpack.c.l.s4 1934713408
      %v2029 = vunpack.c.0.s8 %v2028
      %v2030 = vlaneseq
      %v2031 = vshrl.u32 %v2030, 7
      %v2032 = vsub.s32 %v2029, %v2031
      %v2033 = vrot.slane %v2019, %v2032
      %v2034 = vcombine.low %v2001, %v2017
      %v2035 = vcombine.high %v2001, %v2017
      %v2037 = vunpack.c.l.s4 1934713408
      %v2038 = vunpack.c.0.s8 %v2037
      %v2039 = vlaneseq
      %v2040 = vshrl.u32 %v2039, 7
      %v2041 = vsub.s32 %v2038, %v2040
      %v2042 = vrot.slane %v2034, %v2041
      %v2044 = vunpack.c.l.s4 1934713408
      %v2045 = vunpack.c.0.s8 %v2044
      %v2046 = vlaneseq
      %v2047 = vshrl.u32 %v2046, 7
      %v2048 = vsub.s32 %v2045, %v2047
      %v2049 = vrot.slane %v2035, %v2048
      %v2050 = vcombine.high %v2026, 0.0
      %v2051 = vcombine.high %v2033, 0.0
      %v2052 = vcombine.high %v2042, 0.0
      %v2053 = vcombine.high %v2049, 0.0
      %v2054 = vcombine.low %v1965, %v1973
      %v2055 = vcombine.high %v1965, %v1973
      %v2057 = vunpack.c.l.s4 1983009808
      %v2058 = vunpack.c.0.s8 %v2057
      %v2059 = vlaneseq
      %v2060 = vshrl.u32 %v2059, 7
      %v2061 = vsub.s32 %v2058, %v2060
      %v2062 = vrot.slane %v2054, %v2061
      %v2064 = vunpack.c.l.s4 1983009808
      %v2065 = vunpack.c.0.s8 %v2064
      %v2066 = vlaneseq
      %v2067 = vshrl.u32 %v2066, 7
      %v2068 = vsub.s32 %v2065, %v2067
      %v2069 = vrot.slane %v2055, %v2068
      %v2070 = vcombine.low %v1969, %v1977
      %v2071 = vcombine.high %v1969, %v1977
      %v2073 = vunpack.c.l.s4 1983009808
      %v2074 = vunpack.c.0.s8 %v2073
      %v2075 = vlaneseq
      %v2076 = vshrl.u32 %v2075, 7
      %v2077 = vsub.s32 %v2074, %v2076
      %v2078 = vrot.slane %v2070, %v2077
      %v2080 = vunpack.c.l.s4 1983009808
      %v2081 = vunpack.c.0.s8 %v2080
      %v2082 = vlaneseq
      %v2083 = vshrl.u32 %v2082, 7
      %v2084 = vsub.s32 %v2081, %v2083
      %v2085 = vrot.slane %v2071, %v2084
      %v2086 = vcombine.low %v2062, %v2078
      %v2087 = vcombine.high %v2062, %v2078
      %v2089 = vunpack.c.l.s4 1934713408
      %v2090 = vunpack.c.0.s8 %v2089
      %v2091 = vlaneseq
      %v2092 = vshrl.u32 %v2091, 7
      %v2093 = vsub.s32 %v2090, %v2092
      %v2094 = vrot.slane %v2086, %v2093
      %v2096 = vunpack.c.l.s4 1934713408
      %v2097 = vunpack.c.0.s8 %v2096
      %v2098 = vlaneseq
      %v2099 = vshrl.u32 %v2098, 7
      %v2100 = vsub.s32 %v2097, %v2099
      %v2101 = vrot.slane %v2087, %v2100
      %v2102 = vcombine.low %v2069, %v2085
      %v2103 = vcombine.high %v2069, %v2085
      %v2105 = vunpack.c.l.s4 1934713408
      %v2106 = vunpack.c.0.s8 %v2105
      %v2107 = vlaneseq
      %v2108 = vshrl.u32 %v2107, 7
      %v2109 = vsub.s32 %v2106, %v2108
      %v2110 = vrot.slane %v2102, %v2109
      %v2112 = vunpack.c.l.s4 1934713408
      %v2113 = vunpack.c.0.s8 %v2112
      %v2114 = vlaneseq
      %v2115 = vshrl.u32 %v2114, 7
      %v2116 = vsub.s32 %v2113, %v2115
      %v2117 = vrot.slane %v2103, %v2116
      %v2118 = vcombine.high %v2094, 0.0
      %v2119 = vcombine.high %v2101, 0.0
      %v2120 = vcombine.high %v2110, 0.0
      %v2121 = vcombine.high %v2117, 0.0
      %2123 = vrot.lane.b32.xlu0 %v2050, 16
      %v2124 = vpop.permute.xlu0 %2123
      %2127 = vrot.lane.b32.xlu0 %v2033, 32
      %v2128 = vpop.permute.xlu0 %2127
      %2131 = vrot.lane.b32.xlu0 %v2051, 48
      %v2132 = vpop.permute.xlu0 %2131
      %2135 = vrot.lane.b32.xlu0 %v2042, 64
      %v2136 = vpop.permute.xlu0 %2135
      %2139 = vrot.lane.b32.xlu0 %v2052, 80
      %v2140 = vpop.permute.xlu0 %2139
      %2143 = vrot.lane.b32.xlu0 %v2049, 96
      %v2144 = vpop.permute.xlu0 %2143
      %2147 = vrot.lane.b32.xlu0 %v2053, 112
      %v2148 = vpop.permute.xlu0 %2147
      %2151 = vrot.lane.b32.xlu0 %v2118, 16
      %v2152 = vpop.permute.xlu0 %2151
      %2155 = vrot.lane.b32.xlu0 %v2101, 32
      %v2156 = vpop.permute.xlu0 %2155
      %2159 = vrot.lane.b32.xlu0 %v2119, 48
      %v2160 = vpop.permute.xlu0 %2159
      %2163 = vrot.lane.b32.xlu0 %v2110, 64
      %v2164 = vpop.permute.xlu0 %2163
      %2167 = vrot.lane.b32.xlu0 %v2120, 80
      %v2168 = vpop.permute.xlu0 %2167
      %2171 = vrot.lane.b32.xlu0 %v2117, 96
      %v2172 = vpop.permute.xlu0 %2171
      %2175 = vrot.lane.b32.xlu0 %v2121, 112
      %v2176 = vpop.permute.xlu0 %2175
      %v2178 = vsel %vm539, %v2026, %v2124
      %v2179 = vsel %vm541, %v2178, %v2128
      %v2180 = vsel %vm543, %v2179, %v2132
      %v2181 = vsel %vm545, %v2180, %v2136
      %v2182 = vsel %vm547, %v2181, %v2140
      %v2183 = vsel %vm549, %v2182, %v2144
      %v2184 = vsel %vm551, %v2183, %v2148
      %v2185 = vsel %vm539, %v2094, %v2152
      %v2186 = vsel %vm541, %v2185, %v2156
      %v2187 = vsel %vm543, %v2186, %v2160
      %v2188 = vsel %vm545, %v2187, %v2164
      %v2189 = vsel %vm547, %v2188, %v2168
      %v2190 = vsel %vm549, %v2189, %v2172
      %v2191 = vsel %vm551, %v2190, %v2176
      %2192 = vrot.lane.b32.xlu0 %v1730, 126
      %v2193 = vpop.permute.xlu0 %2192
      %2194 = vrot.lane.b32.xlu0 %v1732, 126
      %v2195 = vpop.permute.xlu0 %2194
      %2196 = vrot.lane.b32.xlu0 %v1735, 126
      %v2197 = vpop.permute.xlu0 %2196
      %2198 = vrot.lane.b32.xlu0 %v1737, 126
      %v2199 = vpop.permute.xlu0 %2198
      %2200 = vrot.lane.b32.xlu0 %v1740, 126
      %v2201 = vpop.permute.xlu0 %2200
      %2202 = vrot.lane.b32.xlu0 %v1742, 126
      %v2203 = vpop.permute.xlu0 %2202
      %2204 = vrot.lane.b32.xlu0 %v1745, 126
      %v2205 = vpop.permute.xlu0 %2204
      %2206 = vrot.lane.b32.xlu0 %v1747, 126
      %v2207 = vpop.permute.xlu0 %2206
      %v2216 = vcombine.low %v2193, %v2201
      %v2217 = vcombine.high %v2193, %v2201
      %v2219 = vunpack.c.l.s4 1983009808
      %v2220 = vunpack.c.0.s8 %v2219
      %v2221 = vlaneseq
      %v2222 = vshrl.u32 %v2221, 7
      %v2223 = vsub.s32 %v2220, %v2222
      %v2224 = vrot.slane %v2216, %v2223
      %v2226 = vunpack.c.l.s4 1983009808
      %v2227 = vunpack.c.0.s8 %v2226
      %v2228 = vlaneseq
      %v2229 = vshrl.u32 %v2228, 7
      %v2230 = vsub.s32 %v2227, %v2229
      %v2231 = vrot.slane %v2217, %v2230
      %v2232 = vcombine.low %v2197, %v2205
      %v2233 = vcombine.high %v2197, %v2205
      %v2235 = vunpack.c.l.s4 1983009808
      %v2236 = vunpack.c.0.s8 %v2235
      %v2237 = vlaneseq
      %v2238 = vshrl.u32 %v2237, 7
      %v2239 = vsub.s32 %v2236, %v2238
      %v2240 = vrot.slane %v2232, %v2239
      %v2242 = vunpack.c.l.s4 1983009808
      %v2243 = vunpack.c.0.s8 %v2242
      %v2244 = vlaneseq
      %v2245 = vshrl.u32 %v2244, 7
      %v2246 = vsub.s32 %v2243, %v2245
      %v2247 = vrot.slane %v2233, %v2246
      %v2248 = vcombine.low %v2224, %v2240
      %v2249 = vcombine.high %v2224, %v2240
      %v2251 = vunpack.c.l.s4 1934713408
      %v2252 = vunpack.c.0.s8 %v2251
      %v2253 = vlaneseq
      %v2254 = vshrl.u32 %v2253, 7
      %v2255 = vsub.s32 %v2252, %v2254
      %v2256 = vrot.slane %v2248, %v2255
      %v2258 = vunpack.c.l.s4 1934713408
      %v2259 = vunpack.c.0.s8 %v2258
      %v2260 = vlaneseq
      %v2261 = vshrl.u32 %v2260, 7
      %v2262 = vsub.s32 %v2259, %v2261
      %v2263 = vrot.slane %v2249, %v2262
      %v2264 = vcombine.low %v2231, %v2247
      %v2265 = vcombine.high %v2231, %v2247
      %v2267 = vunpack.c.l.s4 1934713408
      %v2268 = vunpack.c.0.s8 %v2267
      %v2269 = vlaneseq
      %v2270 = vshrl.u32 %v2269, 7
      %v2271 = vsub.s32 %v2268, %v2270
      %v2272 = vrot.slane %v2264, %v2271
      %v2274 = vunpack.c.l.s4 1934713408
      %v2275 = vunpack.c.0.s8 %v2274
      %v2276 = vlaneseq
      %v2277 = vshrl.u32 %v2276, 7
      %v2278 = vsub.s32 %v2275, %v2277
      %v2279 = vrot.slane %v2265, %v2278
      %v2280 = vcombine.high %v2256, 0.0
      %v2281 = vcombine.high %v2263, 0.0
      %v2282 = vcombine.high %v2272, 0.0
      %v2283 = vcombine.high %v2279, 0.0
      %v2284 = vcombine.low %v2195, %v2203
      %v2285 = vcombine.high %v2195, %v2203
      %v2287 = vunpack.c.l.s4 1983009808
      %v2288 = vunpack.c.0.s8 %v2287
      %v2289 = vlaneseq
      %v2290 = vshrl.u32 %v2289, 7
      %v2291 = vsub.s32 %v2288, %v2290
      %v2292 = vrot.slane %v2284, %v2291
      %v2294 = vunpack.c.l.s4 1983009808
      %v2295 = vunpack.c.0.s8 %v2294
      %v2296 = vlaneseq
      %v2297 = vshrl.u32 %v2296, 7
      %v2298 = vsub.s32 %v2295, %v2297
      %v2299 = vrot.slane %v2285, %v2298
      %v2300 = vcombine.low %v2199, %v2207
      %v2301 = vcombine.high %v2199, %v2207
      %v2303 = vunpack.c.l.s4 1983009808
      %v2304 = vunpack.c.0.s8 %v2303
      %v2305 = vlaneseq
      %v2306 = vshrl.u32 %v2305, 7
      %v2307 = vsub.s32 %v2304, %v2306
      %v2308 = vrot.slane %v2300, %v2307
      %v2310 = vunpack.c.l.s4 1983009808
      %v2311 = vunpack.c.0.s8 %v2310
      %v2312 = vlaneseq
      %v2313 = vshrl.u32 %v2312, 7
      %v2314 = vsub.s32 %v2311, %v2313
      %v2315 = vrot.slane %v2301, %v2314
      %v2316 = vcombine.low %v2292, %v2308
      %v2317 = vcombine.high %v2292, %v2308
      %v2319 = vunpack.c.l.s4 1934713408
      %v2320 = vunpack.c.0.s8 %v2319
      %v2321 = vlaneseq
      %v2322 = vshrl.u32 %v2321, 7
      %v2323 = vsub.s32 %v2320, %v2322
      %v2324 = vrot.slane %v2316, %v2323
      %v2326 = vunpack.c.l.s4 1934713408
      %v2327 = vunpack.c.0.s8 %v2326
      %v2328 = vlaneseq
      %v2329 = vshrl.u32 %v2328, 7
      %v2330 = vsub.s32 %v2327, %v2329
      %v2331 = vrot.slane %v2317, %v2330
      %v2332 = vcombine.low %v2299, %v2315
      %v2333 = vcombine.high %v2299, %v2315
      %v2335 = vunpack.c.l.s4 1934713408
      %v2336 = vunpack.c.0.s8 %v2335
      %v2337 = vlaneseq
      %v2338 = vshrl.u32 %v2337, 7
      %v2339 = vsub.s32 %v2336, %v2338
      %v2340 = vrot.slane %v2332, %v2339
      %v2342 = vunpack.c.l.s4 1934713408
      %v2343 = vunpack.c.0.s8 %v2342
      %v2344 = vlaneseq
      %v2345 = vshrl.u32 %v2344, 7
      %v2346 = vsub.s32 %v2343, %v2345
      %v2347 = vrot.slane %v2333, %v2346
      %v2348 = vcombine.high %v2324, 0.0
      %v2349 = vcombine.high %v2331, 0.0
      %v2350 = vcombine.high %v2340, 0.0
      %v2351 = vcombine.high %v2347, 0.0
      %2353 = vrot.lane.b32.xlu0 %v2280, 16
      %v2354 = vpop.permute.xlu0 %2353
      %2357 = vrot.lane.b32.xlu0 %v2263, 32
      %v2358 = vpop.permute.xlu0 %2357
      %2361 = vrot.lane.b32.xlu0 %v2281, 48
      %v2362 = vpop.permute.xlu0 %2361
      %2365 = vrot.lane.b32.xlu0 %v2272, 64
      %v2366 = vpop.permute.xlu0 %2365
      %2369 = vrot.lane.b32.xlu0 %v2282, 80
      %v2370 = vpop.permute.xlu0 %2369
      %2373 = vrot.lane.b32.xlu0 %v2279, 96
      %v2374 = vpop.permute.xlu0 %2373
      %2377 = vrot.lane.b32.xlu0 %v2283, 112
      %v2378 = vpop.permute.xlu0 %2377
      %2381 = vrot.lane.b32.xlu0 %v2348, 16
      %v2382 = vpop.permute.xlu0 %2381
      %2385 = vrot.lane.b32.xlu0 %v2331, 32
      %v2386 = vpop.permute.xlu0 %2385
      %2389 = vrot.lane.b32.xlu0 %v2349, 48
      %v2390 = vpop.permute.xlu0 %2389
      %2393 = vrot.lane.b32.xlu0 %v2340, 64
      %v2394 = vpop.permute.xlu0 %2393
      %2397 = vrot.lane.b32.xlu0 %v2350, 80
      %v2398 = vpop.permute.xlu0 %2397
      %2401 = vrot.lane.b32.xlu0 %v2347, 96
      %v2402 = vpop.permute.xlu0 %2401
      %2405 = vrot.lane.b32.xlu0 %v2351, 112
      %v2406 = vpop.permute.xlu0 %2405
      %v2408 = vsel %vm539, %v2256, %v2354
      %v2409 = vsel %vm541, %v2408, %v2358
      %v2410 = vsel %vm543, %v2409, %v2362
      %v2411 = vsel %vm545, %v2410, %v2366
      %v2412 = vsel %vm547, %v2411, %v2370
      %v2413 = vsel %vm549, %v2412, %v2374
      %v2414 = vsel %vm551, %v2413, %v2378
      %v2415 = vsel %vm539, %v2324, %v2382
      %v2416 = vsel %vm541, %v2415, %v2386
      %v2417 = vsel %vm543, %v2416, %v2390
      %v2418 = vsel %vm545, %v2417, %v2394
      %v2419 = vsel %vm547, %v2418, %v2398
      %v2420 = vsel %vm549, %v2419, %v2402
      %v2421 = vsel %vm551, %v2420, %v2406
      %v2424 = vrot.slane %v790, 4
      %v2425 = vrot.slane %v797, 4
      %v2430 = vrot.slane %v1259, 4
      %v2431 = vrot.slane %v1266, 4
      %v2436 = vrot.slane %v1719, 4
      %v2437 = vrot.slane %v1726, 4
      %v2442 = vrot.slane %v2184, 4
      %v2443 = vrot.slane %v2191, 4
      %vm2446 = vcmask 1043456
      %v2447 = vsel %vm2446, %v552, %v2424
      %v2448 = vsel %vm2446, %v559, %v2425
      %v2449 = vsel %vm2446, %v1020, %v2430
      %v2450 = vsel %vm2446, %v1027, %v2431
      %v2451 = vsel %vm2446, %v1489, %v2436
      %v2452 = vsel %vm2446, %v1496, %v2437
      %v2453 = vsel %vm2446, %v1954, %v2442
      %v2454 = vsel %vm2446, %v1961, %v2443
      %v2455 = vpack.c.bf16 %v2449, %v2447
      %v2456 = vpack.c.bf16 %v2450, %v2448
      %v2457 = vpack.c.bf16 %v2453, %v2451
      %v2458 = vpack.c.bf16 %v2454, %v2452
      %v2459 = vpack.c.bf16 %v2414, %v2414
      %v2460 = vpack.c.bf16 %v2421, %v2421
      %v2461 = vld [vmem:[%s1] sm:$0xf]
      %vm2462 = vcmask 293888
      %v2464 = vsel %vm2462, %v2461, 0
      %vm2466 = vcmask 1041408
      %v2468 = vsel %vm2466, %v2459, 0
      %v2471 = vsel %vm2466, %v2460, 0
      %2473 = vmatprep.subr.bf16.mxu0 0
      %2474 = vmatpush1.bf16.msra.mxu0 0
      %2475 = vmatprep.subr.bf16.mxu0 0
      %2476 = vmatpush1.bf16.msra.mxu0 0
      %2477 = vmatprep.subr.bf16.mxu0 0
      %2478 = vmatpush1.bf16.msra.mxu0 0
      %2479 = vmatprep.subr.bf16.mxu0 0
      %2480 = vmatpush1.bf16.msra.mxu0 0
      %2481 = vmatprep.subr.bf16.mxu0 0
      %2482 = vmatpush1.bf16.msra.mxu0 0
      %2483 = vmatprep.subr.bf16.mxu0 %v2471
      %2484 = vmatpush1.bf16.msra.mxu0 %v2468
      %2485 = vmatprep.subr.bf16.mxu0 %v2458
      %2486 = vmatpush1.bf16.msra.mxu0 %v2457
      %2487 = vmatprep.subr.bf16.mxu0 %v2456
      %2488 = vmatpush1.bf16.msra.mxu0 %v2455
      %2489 = vmatprep.subr.bf16.mxu0 0
      %2490 = vmatpush2.bf16.msra.mxu0 0
      %2491 = vmatprep.subr.bf16.mxu0 0
      %2492 = vmatpush2.bf16.msra.mxu0 0
      %2493 = vmatprep.subr.bf16.mxu0 0
      %2494 = vmatpush2.bf16.msra.mxu0 0
      %2495 = vmatprep.subr.bf16.mxu0 0
      %2496 = vmatpush2.bf16.msra.mxu0 0
      %2497 = vmatprep.subr.bf16.mxu0 0
      %2498 = vmatpush2.bf16.msra.mxu0 0
      %2499 = vmatprep.subr.bf16.mxu0 0
      %2500 = vmatpush2.bf16.msra.mxu0 0
      %2501 = vmatprep.subr.bf16.mxu0 0
      %2502 = vmatpush2.bf16.msra.mxu0 0
      %2503 = vmatprep.subr.bf16.mxu0 0
      %2504 = vmatpush2.bf16.msra.mxu0 0
      %2505 = vmatprep.mubr.bf16.mxu0 0
      %2506 = vmatmul.mubr.bf16.gmra.mxu0 %v2464
      %v2507 = vpop.f32.mrf.mxu0
      %v2508 = vadd.f32 0.0, %v2507
      %v2509 = vpop.f32.mrf.mxu0
      %v2510 = vadd.f32 0.0, %v2509
      %v2511 = vpop.f32.mrf.mxu0
      %v2512 = vpop.f32.mrf.mxu0
      %2513 = vdwg.mxu0
      %v2514 = vld [vmem:[#allocation5] sm:$0xff]
      %v2515 = vadd.f32 %v2508, %v2510
      %2516 = vadd.xlane.f32.xlu0 %v2515
      %v2517 = vpop.xlane.xlu0 %2516
      %v2518 = vadd.f32 %v2514, %v2517
      %vm2519 = vcmask 7168
      %2520 = vst.msk [vmem:[#allocation5] sm:$0xff] %vm2519, %v2518
      %v2521 = vld [vmem:[#allocation6] sm:$0xff]
      %v2522 = vmul.f32 %v2508, %v2508
      %v2523 = vmul.f32 %v2510, %v2510
      %v2524 = vadd.f32 %v2522, %v2523
      %2525 = vadd.xlane.f32.xlu0 %v2524
      %v2526 = vpop.xlane.xlu0 %2525
      %v2527 = vadd.f32 %v2521, %v2526
      %2528 = vst.msk [vmem:[#allocation6] sm:$0xff] %vm2519, %v2527
      %s2529 = smul.u32 %s18, 2
      %s2530 = smul.addr %s2529, 8
      %s2531 = scalar_lea.vmem [#allocation4], %s2530
      %2532 = vst [vmem:[%s2531] sm:$0xff] %v2508
      %2533 = vst [vmem:[%s2531 + $0x8] sm:$0xff] %v2510
      %p2534 = scmp.eq.s32.totalorder %s18, 1
      // Predicated region
      $region53: #{double_conv.1} parent=47 // pred_check
        %p2535 = pneg %p2534
      $region54: #{double_conv.1} parent=47 // pred_check_branch
        %2537 = sbr.rel (%p2535) target = $region56
      $region55: #{double_conv.1} parent=47 // pred_region
        %v2538 = vld [vmem:[#allocation5] sm:$0xff]
        %v2539 = vmul.f32 %v2538, 0.001953125
        %v2540 = vld [vmem:[#allocation6] sm:$0xff]
        %v2541 = vmul.f32 %v2540, 0.001953125
        %v2542 = vmul.f32 %v2539, %v2539
        %v2543 = vsub.f32 %v2541, %v2542
        %v2544 = vld [vmem:[%s2] sm:$0xff]
        %v2545 = vadd.f32 %v2543, 1e-05
        %v2546 = vrsqrt.pop %v2545
        %v2547 = vmul.f32 %v2544, %v2546
        %v2548 = vld [vmem:[%s3] sm:$0xff]
        %v2549 = vmul.f32 %v2539, %v2547
        %v2550 = vsub.f32 %v2548, %v2549
        %vm2551 = vcmask 146432
        %2552 = vst.msk [vmem:[#allocation3] sm:$0xff] %vm2551, 0.0
        %2553 = vst.msk [vmem:[#allocation3 + $0x8] sm:$0xff] %vm2551, 0.0
        %vm2554 = vcmask 140288
        %2555 = vst.msk [vmem:[#allocation3 + $0x10] sm:$0x3] %vm2554, 0.0
        %2556 = vst.msk [vmem:[#allocation3 + $0x18] sm:$0xff] %vm2551, 0.0
        %2557 = vst.msk [vmem:[#allocation3 + $0x20] sm:$0xff] %vm2551, 0.0
        %2558 = vst.msk [vmem:[#allocation3 + $0x28] sm:$0x3] %vm2554, 0.0
        %2559 = vst.msk [vmem:[#allocation3 + $0x30] sm:$0xff] %vm2551, 0.0
        %2560 = vst.msk [vmem:[#allocation3 + $0x38] sm:$0xff] %vm2551, 0.0
        %2561 = vst.msk [vmem:[#allocation3 + $0x40] sm:$0x3] %vm2554, 0.0
        %2562 = vst.msk [vmem:[#allocation3 + $0x48] sm:$0xff] %vm2551, 0.0
        %2563 = vst.msk [vmem:[#allocation3 + $0x50] sm:$0xff] %vm2551, 0.0
        %2564 = vst.msk [vmem:[#allocation3 + $0x58] sm:$0x3] %vm2554, 0.0
        %2565 = vst.msk [vmem:[#allocation3 + $0x60] sm:$0xff] %vm2551, 0.0
        %2566 = vst.msk [vmem:[#allocation3 + $0x68] sm:$0xff] %vm2551, 0.0
        %2567 = vst.msk [vmem:[#allocation3 + $0x70] sm:$0x3] %vm2554, 0.0
        %2568 = vst.msk [vmem:[#allocation3 + $0x78] sm:$0xff] %vm2551, 0.0
        %2569 = vst.msk [vmem:[#allocation3 + $0x80] sm:$0xff] %vm2551, 0.0
        %2570 = vst.msk [vmem:[#allocation3 + $0x88] sm:$0x3] %vm2554, 0.0
        %2571 = vst.msk [vmem:[#allocation3 + $0x90] sm:$0xff] %vm2551, 0.0
        %2572 = vst.msk [vmem:[#allocation3 + $0x98] sm:$0xff] %vm2551, 0.0
        %2573 = vst.msk [vmem:[#allocation3 + $0xa0] sm:$0x3] %vm2554, 0.0
        %2574 = vst.msk [vmem:[#allocation3 + $0xa8] sm:$0xff] %vm2551, 0.0
        %2575 = vst.msk [vmem:[#allocation3 + $0xb0] sm:$0xff] %vm2551, 0.0
        %2576 = vst.msk [vmem:[#allocation3 + $0xb8] sm:$0x3] %vm2554, 0.0
        %2577 = vst.msk [vmem:[#allocation7] sm:$0xff] %vm2519, 0.0
        %2578 = vst.msk [vmem:[#allocation8] sm:$0xff] %vm2519, 0.0
        %v2579 = vld [vmem:[#allocation4] sm:$0xff]
        %v2580 = vld [vmem:[#allocation4 + $0x8] sm:$0xff]
        %2582 = vset.pattern.permute.xlu0 0
        %2583 = vperm.xlu0 %2582, %v2547
        %v2584 = vpop.permute.xlu0 %2583
        %v2586 = vmul.f32 %v2579, %v2584
        %v2587 = vmul.f32 %v2580, %v2584
        %2589 = vset.pattern.permute.xlu0 0
        %2590 = vperm.xlu0 %2589, %v2550
        %v2591 = vpop.permute.xlu0 %2590
        %v2593 = vadd.f32 %v2586, %v2591
        %v2594 = vadd.f32 %v2587, %v2591
        %v2595 = vmax.f32 %v2593, 0.0
        %v2596 = vmax.f32 %v2594, 0.0
        %2598 = vrot.lane.b32.xlu0 %v2595, 112
        %v2599 = vpop.permute.xlu0 %2598
        %2601 = vrot.lane.b32.xlu0 %v2595, 96
        %v2602 = vpop.permute.xlu0 %2601
        %2604 = vrot.lane.b32.xlu0 %v2595, 80
        %v2605 = vpop.permute.xlu0 %2604
        %2607 = vrot.lane.b32.xlu0 %v2595, 64
        %v2608 = vpop.permute.xlu0 %2607
        %2610 = vrot.lane.b32.xlu0 %v2595, 48
        %v2611 = vpop.permute.xlu0 %2610
        %2613 = vrot.lane.b32.xlu0 %v2595, 32
        %v2614 = vpop.permute.xlu0 %2613
        %2616 = vrot.lane.b32.xlu0 %v2595, 16
        %v2617 = vpop.permute.xlu0 %2616
        %2620 = vrot.lane.b32.xlu0 %v2596, 112
        %v2621 = vpop.permute.xlu0 %2620
        %2623 = vrot.lane.b32.xlu0 %v2596, 96
        %v2624 = vpop.permute.xlu0 %2623
        %2626 = vrot.lane.b32.xlu0 %v2596, 80
        %v2627 = vpop.permute.xlu0 %2626
        %2629 = vrot.lane.b32.xlu0 %v2596, 64
        %v2630 = vpop.permute.xlu0 %2629
        %2632 = vrot.lane.b32.xlu0 %v2596, 48
        %v2633 = vpop.permute.xlu0 %2632
        %2635 = vrot.lane.b32.xlu0 %v2596, 32
        %v2636 = vpop.permute.xlu0 %2635
        %2638 = vrot.lane.b32.xlu0 %v2596, 16
        %v2639 = vpop.permute.xlu0 %2638
        %v2641 = vcombine.low %v2595, %v2602
        %v2642 = vcombine.high %v2595, %v2602
        %v2644 = vunpack.c.l.s4 1983009808
        %v2645 = vunpack.c.0.s8 %v2644
        %v2646 = vlaneseq
        %v2647 = vshrl.u32 %v2646, 7
        %v2648 = vsub.s32 %v2645, %v2647
        %v2649 = vrot.slane %v2641, %v2648
        %v2651 = vunpack.c.l.s4 1983009808
        %v2652 = vunpack.c.0.s8 %v2651
        %v2653 = vlaneseq
        %v2654 = vshrl.u32 %v2653, 7
        %v2655 = vsub.s32 %v2652, %v2654
        %v2656 = vrot.slane %v2642, %v2655
        %v2657 = vcombine.low %v2599, %v2605
        %v2658 = vcombine.high %v2599, %v2605
        %v2660 = vunpack.c.l.s4 1983009808
        %v2661 = vunpack.c.0.s8 %v2660
        %v2662 = vlaneseq
        %v2663 = vshrl.u32 %v2662, 7
        %v2664 = vsub.s32 %v2661, %v2663
        %v2665 = vrot.slane %v2657, %v2664
        %v2667 = vunpack.c.l.s4 1983009808
        %v2668 = vunpack.c.0.s8 %v2667
        %v2669 = vlaneseq
        %v2670 = vshrl.u32 %v2669, 7
        %v2671 = vsub.s32 %v2668, %v2670
        %v2672 = vrot.slane %v2658, %v2671
        %v2673 = vcombine.low %v2608, %v2614
        %v2674 = vcombine.high %v2608, %v2614
        %v2676 = vunpack.c.l.s4 1983009808
        %v2677 = vunpack.c.0.s8 %v2676
        %v2678 = vlaneseq
        %v2679 = vshrl.u32 %v2678, 7
        %v2680 = vsub.s32 %v2677, %v2679
        %v2681 = vrot.slane %v2673, %v2680
        %v2683 = vunpack.c.l.s4 1983009808
        %v2684 = vunpack.c.0.s8 %v2683
        %v2685 = vlaneseq
        %v2686 = vshrl.u32 %v2685, 7
        %v2687 = vsub.s32 %v2684, %v2686
        %v2688 = vrot.slane %v2674, %v2687
        %v2689 = vcombine.low %v2611, %v2617
        %v2690 = vcombine.high %v2611, %v2617
        %v2692 = vunpack.c.l.s4 1983009808
        %v2693 = vunpack.c.0.s8 %v2692
        %v2694 = vlaneseq
        %v2695 = vshrl.u32 %v2694, 7
        %v2696 = vsub.s32 %v2693, %v2695
        %v2697 = vrot.slane %v2689, %v2696
        %v2699 = vunpack.c.l.s4 1983009808
        %v2700 = vunpack.c.0.s8 %v2699
        %v2701 = vlaneseq
        %v2702 = vshrl.u32 %v2701, 7
        %v2703 = vsub.s32 %v2700, %v2702
        %v2704 = vrot.slane %v2690, %v2703
        %v2705 = vcombine.low %v2649, %v2665
        %v2706 = vcombine.high %v2649, %v2665
        %v2708 = vunpack.c.l.s4 1934713408
        %v2709 = vunpack.c.0.s8 %v2708
        %v2710 = vlaneseq
        %v2711 = vshrl.u32 %v2710, 7
        %v2712 = vsub.s32 %v2709, %v2711
        %v2713 = vrot.slane %v2705, %v2712
        %v2715 = vunpack.c.l.s4 1934713408
        %v2716 = vunpack.c.0.s8 %v2715
        %v2717 = vlaneseq
        %v2718 = vshrl.u32 %v2717, 7
        %v2719 = vsub.s32 %v2716, %v2718
        %v2720 = vrot.slane %v2706, %v2719
        %v2721 = vcombine.low %v2656, %v2672
        %v2722 = vcombine.high %v2656, %v2672
        %v2724 = vunpack.c.l.s4 1934713408
        %v2725 = vunpack.c.0.s8 %v2724
        %v2726 = vlaneseq
        %v2727 = vshrl.u32 %v2726, 7
        %v2728 = vsub.s32 %v2725, %v2727
        %v2729 = vrot.slane %v2721, %v2728
        %v2731 = vunpack.c.l.s4 1934713408
        %v2732 = vunpack.c.0.s8 %v2731
        %v2733 = vlaneseq
        %v2734 = vshrl.u32 %v2733, 7
        %v2735 = vsub.s32 %v2732, %v2734
        %v2736 = vrot.slane %v2722, %v2735
        %v2737 = vcombine.low %v2681, %v2697
        %v2738 = vcombine.high %v2681, %v2697
        %v2740 = vunpack.c.l.s4 1934713408
        %v2741 = vunpack.c.0.s8 %v2740
        %v2742 = vlaneseq
        %v2743 = vshrl.u32 %v2742, 7
        %v2744 = vsub.s32 %v2741, %v2743
        %v2745 = vrot.slane %v2737, %v2744
        %v2747 = vunpack.c.l.s4 1934713408
        %v2748 = vunpack.c.0.s8 %v2747
        %v2749 = vlaneseq
        %v2750 = vshrl.u32 %v2749, 7
        %v2751 = vsub.s32 %v2748, %v2750
        %v2752 = vrot.slane %v2738, %v2751
        %v2753 = vcombine.low %v2688, %v2704
        %v2754 = vcombine.high %v2688, %v2704
        %v2756 = vunpack.c.l.s4 1934713408
        %v2757 = vunpack.c.0.s8 %v2756
        %v2758 = vlaneseq
        %v2759 = vshrl.u32 %v2758, 7
        %v2760 = vsub.s32 %v2757, %v2759
        %v2761 = vrot.slane %v2753, %v2760
        %v2763 = vunpack.c.l.s4 1934713408
        %v2764 = vunpack.c.0.s8 %v2763
        %v2765 = vlaneseq
        %v2766 = vshrl.u32 %v2765, 7
        %v2767 = vsub.s32 %v2764, %v2766
        %v2768 = vrot.slane %v2754, %v2767
        %v2769 = vcombine.low %v2713, %v2745
        %v2770 = vcombine.high %v2713, %v2745
        %v2771 = vcombine.low %v2720, %v2752
        %v2772 = vcombine.high %v2720, %v2752
        %v2773 = vcombine.low %v2729, %v2761
        %v2774 = vcombine.high %v2729, %v2761
        %v2775 = vcombine.low %v2736, %v2768
        %v2776 = vcombine.high %v2736, %v2768
        %v2777 = vcombine.low %v2596, %v2624
        %v2778 = vcombine.high %v2596, %v2624
        %v2780 = vunpack.c.l.s4 1983009808
        %v2781 = vunpack.c.0.s8 %v2780
        %v2782 = vlaneseq
        %v2783 = vshrl.u32 %v2782, 7
        %v2784 = vsub.s32 %v2781, %v2783
        %v2785 = vrot.slane %v2777, %v2784
        %v2787 = vunpack.c.l.s4 1983009808
        %v2788 = vunpack.c.0.s8 %v2787
        %v2789 = vlaneseq
        %v2790 = vshrl.u32 %v2789, 7
        %v2791 = vsub.s32 %v2788, %v2790
        %v2792 = vrot.slane %v2778, %v2791
        %v2793 = vcombine.low %v2621, %v2627
        %v2794 = vcombine.high %v2621, %v2627
        %v2796 = vunpack.c.l.s4 1983009808
        %v2797 = vunpack.c.0.s8 %v2796
        %v2798 = vlaneseq
        %v2799 = vshrl.u32 %v2798, 7
        %v2800 = vsub.s32 %v2797, %v2799
        %v2801 = vrot.slane %v2793, %v2800
        %v2803 = vunpack.c.l.s4 1983009808
        %v2804 = vunpack.c.0.s8 %v2803
        %v2805 = vlaneseq
        %v2806 = vshrl.u32 %v2805, 7
        %v2807 = vsub.s32 %v2804, %v2806
        %v2808 = vrot.slane %v2794, %v2807
        %v2809 = vcombine.low %v2630, %v2636
        %v2810 = vcombine.high %v2630, %v2636
        %v2812 = vunpack.c.l.s4 1983009808
        %v2813 = vunpack.c.0.s8 %v2812
        %v2814 = vlaneseq
        %v2815 = vshrl.u32 %v2814, 7
        %v2816 = vsub.s32 %v2813, %v2815
        %v2817 = vrot.slane %v2809, %v2816
        %v2819 = vunpack.c.l.s4 1983009808
        %v2820 = vunpack.c.0.s8 %v2819
        %v2821 = vlaneseq
        %v2822 = vshrl.u32 %v2821, 7
        %v2823 = vsub.s32 %v2820, %v2822
        %v2824 = vrot.slane %v2810, %v2823
        %v2825 = vcombine.low %v2633, %v2639
        %v2826 = vcombine.high %v2633, %v2639
        %v2828 = vunpack.c.l.s4 1983009808
        %v2829 = vunpack.c.0.s8 %v2828
        %v2830 = vlaneseq
        %v2831 = vshrl.u32 %v2830, 7
        %v2832 = vsub.s32 %v2829, %v2831
        %v2833 = vrot.slane %v2825, %v2832
        %v2835 = vunpack.c.l.s4 1983009808
        %v2836 = vunpack.c.0.s8 %v2835
        %v2837 = vlaneseq
        %v2838 = vshrl.u32 %v2837, 7
        %v2839 = vsub.s32 %v2836, %v2838
        %v2840 = vrot.slane %v2826, %v2839
        %v2841 = vcombine.low %v2785, %v2801
        %v2842 = vcombine.high %v2785, %v2801
        %v2844 = vunpack.c.l.s4 1934713408
        %v2845 = vunpack.c.0.s8 %v2844
        %v2846 = vlaneseq
        %v2847 = vshrl.u32 %v2846, 7
        %v2848 = vsub.s32 %v2845, %v2847
        %v2849 = vrot.slane %v2841, %v2848
        %v2851 = vunpack.c.l.s4 1934713408
        %v2852 = vunpack.c.0.s8 %v2851
        %v2853 = vlaneseq
        %v2854 = vshrl.u32 %v2853, 7
        %v2855 = vsub.s32 %v2852, %v2854
        %v2856 = vrot.slane %v2842, %v2855
        %v2857 = vcombine.low %v2792, %v2808
        %v2858 = vcombine.high %v2792, %v2808
        %v2860 = vunpack.c.l.s4 1934713408
        %v2861 = vunpack.c.0.s8 %v2860
        %v2862 = vlaneseq
        %v2863 = vshrl.u32 %v2862, 7
        %v2864 = vsub.s32 %v2861, %v2863
        %v2865 = vrot.slane %v2857, %v2864
        %v2867 = vunpack.c.l.s4 1934713408
        %v2868 = vunpack.c.0.s8 %v2867
        %v2869 = vlaneseq
        %v2870 = vshrl.u32 %v2869, 7
        %v2871 = vsub.s32 %v2868, %v2870
        %v2872 = vrot.slane %v2858, %v2871
        %v2873 = vcombine.low %v2817, %v2833
        %v2874 = vcombine.high %v2817, %v2833
        %v2876 = vunpack.c.l.s4 1934713408
        %v2877 = vunpack.c.0.s8 %v2876
        %v2878 = vlaneseq
        %v2879 = vshrl.u32 %v2878, 7
        %v2880 = vsub.s32 %v2877, %v2879
        %v2881 = vrot.slane %v2873, %v2880
        %v2883 = vunpack.c.l.s4 1934713408
        %v2884 = vunpack.c.0.s8 %v2883
        %v2885 = vlaneseq
        %v2886 = vshrl.u32 %v2885, 7
        %v2887 = vsub.s32 %v2884, %v2886
        %v2888 = vrot.slane %v2874, %v2887
        %v2889 = vcombine.low %v2824, %v2840
        %v2890 = vcombine.high %v2824, %v2840
        %v2892 = vunpack.c.l.s4 1934713408
        %v2893 = vunpack.c.0.s8 %v2892
        %v2894 = vlaneseq
        %v2895 = vshrl.u32 %v2894, 7
        %v2896 = vsub.s32 %v2893, %v2895
        %v2897 = vrot.slane %v2889, %v2896
        %v2899 = vunpack.c.l.s4 1934713408
        %v2900 = vunpack.c.0.s8 %v2899
        %v2901 = vlaneseq
        %v2902 = vshrl.u32 %v2901, 7
        %v2903 = vsub.s32 %v2900, %v2902
        %v2904 = vrot.slane %v2890, %v2903
        %v2905 = vcombine.low %v2849, %v2881
        %v2906 = vcombine.high %v2849, %v2881
        %v2907 = vcombine.low %v2856, %v2888
        %v2908 = vcombine.high %v2856, %v2888
        %v2909 = vcombine.low %v2865, %v2897
        %v2910 = vcombine.high %v2865, %v2897
        %v2911 = vcombine.low %v2872, %v2904
        %v2912 = vcombine.high %v2872, %v2904
        %2929 = vrot.lane.b32.xlu0 %v2769, 1
        %v2930 = vpop.permute.xlu0 %2929
        %2931 = vrot.lane.b32.xlu0 %v2905, 1
        %v2932 = vpop.permute.xlu0 %2931
        %2933 = vrot.lane.b32.xlu0 %v2770, 1
        %v2934 = vpop.permute.xlu0 %2933
        %2935 = vrot.lane.b32.xlu0 %v2906, 1
        %v2936 = vpop.permute.xlu0 %2935
        %2937 = vrot.lane.b32.xlu0 %v2771, 1
        %v2938 = vpop.permute.xlu0 %2937
        %2939 = vrot.lane.b32.xlu0 %v2907, 1
        %v2940 = vpop.permute.xlu0 %2939
        %2941 = vrot.lane.b32.xlu0 %v2772, 1
        %v2942 = vpop.permute.xlu0 %2941
        %2943 = vrot.lane.b32.xlu0 %v2908, 1
        %v2944 = vpop.permute.xlu0 %2943
        %2945 = vrot.lane.b32.xlu0 %v2773, 1
        %v2946 = vpop.permute.xlu0 %2945
        %2947 = vrot.lane.b32.xlu0 %v2909, 1
        %v2948 = vpop.permute.xlu0 %2947
        %2949 = vrot.lane.b32.xlu0 %v2774, 1
        %v2950 = vpop.permute.xlu0 %2949
        %2951 = vrot.lane.b32.xlu0 %v2910, 1
        %v2952 = vpop.permute.xlu0 %2951
        %2953 = vrot.lane.b32.xlu0 %v2775, 1
        %v2954 = vpop.permute.xlu0 %2953
        %2955 = vrot.lane.b32.xlu0 %v2911, 1
        %v2956 = vpop.permute.xlu0 %2955
        %2957 = vrot.lane.b32.xlu0 %v2776, 1
        %v2958 = vpop.permute.xlu0 %2957
        %2959 = vrot.lane.b32.xlu0 %v2912, 1
        %v2960 = vpop.permute.xlu0 %2959
        %2977 = vst.msk [vmem:[#allocation3 + $0x1] sm:$0xff] %vm326, %v2930
        %2978 = vst.msk [vmem:[#allocation3 + $0x9] sm:$0xff] %vm326, %v2932
        %2979 = vst.msk [vmem:[#allocation3 + $0x19] sm:$0xff] %vm326, %v2934
        %2980 = vst.msk [vmem:[#allocation3 + $0x21] sm:$0xff] %vm326, %v2936
        %2981 = vst.msk [vmem:[#allocation3 + $0x31] sm:$0xff] %vm326, %v2938
        %2982 = vst.msk [vmem:[#allocation3 + $0x39] sm:$0xff] %vm326, %v2940
        %2983 = vst.msk [vmem:[#allocation3 + $0x49] sm:$0xff] %vm326, %v2942
        %2984 = vst.msk [vmem:[#allocation3 + $0x51] sm:$0xff] %vm326, %v2944
        %2985 = vst.msk [vmem:[#allocation3 + $0x61] sm:$0xff] %vm326, %v2946
        %2986 = vst.msk [vmem:[#allocation3 + $0x69] sm:$0xff] %vm326, %v2948
        %2987 = vst.msk [vmem:[#allocation3 + $0x79] sm:$0xff] %vm326, %v2950
        %2988 = vst.msk [vmem:[#allocation3 + $0x81] sm:$0xff] %vm326, %v2952
        %2989 = vst.msk [vmem:[#allocation3 + $0x91] sm:$0xff] %vm326, %v2954
        %2990 = vst.msk [vmem:[#allocation3 + $0x99] sm:$0xff] %vm326, %v2956
        %2991 = vst.msk [vmem:[#allocation3 + $0xa9] sm:$0xff] %vm326, %v2958
        %2992 = vst.msk [vmem:[#allocation3 + $0xb1] sm:$0xff] %vm326, %v2960
        %v2993 = vld [vmem:[#allocation3] sm:$0xff]
        %v2994 = vld [vmem:[#allocation3 + $0x8] sm:$0xff]
        %v2995 = vld [vmem:[#allocation3 + $0x10] sm:$0x3]
        %v2996 = vld [vmem:[#allocation3 + $0x18] sm:$0xff]
        %v2997 = vld [vmem:[#allocation3 + $0x20] sm:$0xff]
        %v2998 = vld [vmem:[#allocation3 + $0x28] sm:$0x3]
        %v2999 = vld [vmem:[#allocation3 + $0x30] sm:$0xff]
        %v3000 = vld [vmem:[#allocation3 + $0x38] sm:$0xff]
        %v3001 = vld [vmem:[#allocation3 + $0x40] sm:$0x3]
        %v3002 = vld [vmem:[#allocation3 + $0x48] sm:$0xff]
        %v3003 = vld [vmem:[#allocation3 + $0x50] sm:$0xff]
        %v3004 = vld [vmem:[#allocation3 + $0x58] sm:$0x3]
        %v3005 = vld [vmem:[#allocation3 + $0x60] sm:$0xff]
        %v3006 = vld [vmem:[#allocation3 + $0x68] sm:$0xff]
        %v3007 = vld [vmem:[#allocation3 + $0x70] sm:$0x3]
        %v3008 = vld [vmem:[#allocation3 + $0x78] sm:$0xff]
        %v3009 = vld [vmem:[#allocation3 + $0x80] sm:$0xff]
        %v3010 = vld [vmem:[#allocation3 + $0x88] sm:$0x3]
        %v3011 = vld [vmem:[#allocation3 + $0x90] sm:$0xff]
        %v3012 = vld [vmem:[#allocation3 + $0x98] sm:$0xff]
        %v3013 = vld [vmem:[#allocation3 + $0xa0] sm:$0x3]
        %v3014 = vld [vmem:[#allocation3 + $0xa8] sm:$0xff]
        %v3015 = vld [vmem:[#allocation3 + $0xb0] sm:$0xff]
        %v3016 = vld [vmem:[#allocation3 + $0xb8] sm:$0x3]
        %v3017 = vcombine.low %v2993, %v2999
        %v3018 = vcombine.high %v2993, %v2999
        %v3020 = vunpack.c.l.s4 1983009808
        %v3021 = vunpack.c.0.s8 %v3020
        %v3022 = vlaneseq
        %v3023 = vshrl.u32 %v3022, 7
        %v3024 = vsub.s32 %v3021, %v3023
        %v3025 = vrot.slane %v3017, %v3024
        %v3027 = vunpack.c.l.s4 1983009808
        %v3028 = vunpack.c.0.s8 %v3027
        %v3029 = vlaneseq
        %v3030 = vshrl.u32 %v3029, 7
        %v3031 = vsub.s32 %v3028, %v3030
        %v3032 = vrot.slane %v3018, %v3031
        %v3033 = vcombine.low %v2996, %v3002
        %v3034 = vcombine.high %v2996, %v3002
        %v3036 = vunpack.c.l.s4 1983009808
        %v3037 = vunpack.c.0.s8 %v3036
        %v3038 = vlaneseq
        %v3039 = vshrl.u32 %v3038, 7
        %v3040 = vsub.s32 %v3037, %v3039
        %v3041 = vrot.slane %v3033, %v3040
        %v3043 = vunpack.c.l.s4 1983009808
        %v3044 = vunpack.c.0.s8 %v3043
        %v3045 = vlaneseq
        %v3046 = vshrl.u32 %v3045, 7
        %v3047 = vsub.s32 %v3044, %v3046
        %v3048 = vrot.slane %v3034, %v3047
        %v3049 = vcombine.low %v3005, %v3011
        %v3050 = vcombine.high %v3005, %v3011
        %v3052 = vunpack.c.l.s4 1983009808
        %v3053 = vunpack.c.0.s8 %v3052
        %v3054 = vlaneseq
        %v3055 = vshrl.u32 %v3054, 7
        %v3056 = vsub.s32 %v3053, %v3055
        %v3057 = vrot.slane %v3049, %v3056
        %v3059 = vunpack.c.l.s4 1983009808
        %v3060 = vunpack.c.0.s8 %v3059
        %v3061 = vlaneseq
        %v3062 = vshrl.u32 %v3061, 7
        %v3063 = vsub.s32 %v3060, %v3062
        %v3064 = vrot.slane %v3050, %v3063
        %v3065 = vcombine.low %v3008, %v3014
        %v3066 = vcombine.high %v3008, %v3014
        %v3068 = vunpack.c.l.s4 1983009808
        %v3069 = vunpack.c.0.s8 %v3068
        %v3070 = vlaneseq
        %v3071 = vshrl.u32 %v3070, 7
        %v3072 = vsub.s32 %v3069, %v3071
        %v3073 = vrot.slane %v3065, %v3072
        %v3075 = vunpack.c.l.s4 1983009808
        %v3076 = vunpack.c.0.s8 %v3075
        %v3077 = vlaneseq
        %v3078 = vshrl.u32 %v3077, 7
        %v3079 = vsub.s32 %v3076, %v3078
        %v3080 = vrot.slane %v3066, %v3079
        %v3081 = vcombine.low %v3025, %v3041
        %v3082 = vcombine.high %v3025, %v3041
        %v3084 = vunpack.c.l.s4 1934713408
        %v3085 = vunpack.c.0.s8 %v3084
        %v3086 = vlaneseq
        %v3087 = vshrl.u32 %v3086, 7
        %v3088 = vsub.s32 %v3085, %v3087
        %v3089 = vrot.slane %v3081, %v3088
        %v3091 = vunpack.c.l.s4 1934713408
        %v3092 = vunpack.c.0.s8 %v3091
        %v3093 = vlaneseq
        %v3094 = vshrl.u32 %v3093, 7
        %v3095 = vsub.s32 %v3092, %v3094
        %v3096 = vrot.slane %v3082, %v3095
        %v3097 = vcombine.low %v3032, %v3048
        %v3098 = vcombine.high %v3032, %v3048
        %v3100 = vunpack.c.l.s4 1934713408
        %v3101 = vunpack.c.0.s8 %v3100
        %v3102 = vlaneseq
        %v3103 = vshrl.u32 %v3102, 7
        %v3104 = vsub.s32 %v3101, %v3103
        %v3105 = vrot.slane %v3097, %v3104
        %v3107 = vunpack.c.l.s4 1934713408
        %v3108 = vunpack.c.0.s8 %v3107
        %v3109 = vlaneseq
        %v3110 = vshrl.u32 %v3109, 7
        %v3111 = vsub.s32 %v3108, %v3110
        %v3112 = vrot.slane %v3098, %v3111
        %v3113 = vcombine.low %v3057, %v3073
        %v3114 = vcombine.high %v3057, %v3073
        %v3116 = vunpack.c.l.s4 1934713408
        %v3117 = vunpack.c.0.s8 %v3116
        %v3118 = vlaneseq
        %v3119 = vshrl.u32 %v3118, 7
        %v3120 = vsub.s32 %v3117, %v3119
        %v3121 = vrot.slane %v3113, %v3120
        %v3123 = vunpack.c.l.s4 1934713408
        %v3124 = vunpack.c.0.s8 %v3123
        %v3125 = vlaneseq
        %v3126 = vshrl.u32 %v3125, 7
        %v3127 = vsub.s32 %v3124, %v3126
        %v3128 = vrot.slane %v3114, %v3127
        %v3129 = vcombine.low %v3064, %v3080
        %v3130 = vcombine.high %v3064, %v3080
        %v3132 = vunpack.c.l.s4 1934713408
        %v3133 = vunpack.c.0.s8 %v3132
        %v3134 = vlaneseq
        %v3135 = vshrl.u32 %v3134, 7
        %v3136 = vsub.s32 %v3133, %v3135
        %v3137 = vrot.slane %v3129, %v3136
        %v3139 = vunpack.c.l.s4 1934713408
        %v3140 = vunpack.c.0.s8 %v3139
        %v3141 = vlaneseq
        %v3142 = vshrl.u32 %v3141, 7
        %v3143 = vsub.s32 %v3140, %v3142
        %v3144 = vrot.slane %v3130, %v3143
        %v3145 = vcombine.low %v3089, %v3121
        %v3146 = vcombine.high %v3089, %v3121
        %v3147 = vcombine.low %v3096, %v3128
        %v3148 = vcombine.high %v3096, %v3128
        %v3149 = vcombine.low %v3105, %v3137
        %v3150 = vcombine.high %v3105, %v3137
        %v3151 = vcombine.low %v3112, %v3144
        %v3152 = vcombine.high %v3112, %v3144
        %v3153 = vcombine.low %v2994, %v3000
        %v3154 = vcombine.high %v2994, %v3000
        %v3156 = vunpack.c.l.s4 1983009808
        %v3157 = vunpack.c.0.s8 %v3156
        %v3158 = vlaneseq
        %v3159 = vshrl.u32 %v3158, 7
        %v3160 = vsub.s32 %v3157, %v3159
        %v3161 = vrot.slane %v3153, %v3160
        %v3163 = vunpack.c.l.s4 1983009808
        %v3164 = vunpack.c.0.s8 %v3163
        %v3165 = vlaneseq
        %v3166 = vshrl.u32 %v3165, 7
        %v3167 = vsub.s32 %v3164, %v3166
        %v3168 = vrot.slane %v3154, %v3167
        %v3169 = vcombine.low %v2997, %v3003
        %v3170 = vcombine.high %v2997, %v3003
        %v3172 = vunpack.c.l.s4 1983009808
        %v3173 = vunpack.c.0.s8 %v3172
        %v3174 = vlaneseq
        %v3175 = vshrl.u32 %v3174, 7
        %v3176 = vsub.s32 %v3173, %v3175
        %v3177 = vrot.slane %v3169, %v3176
        %v3179 = vunpack.c.l.s4 1983009808
        %v3180 = vunpack.c.0.s8 %v3179
        %v3181 = vlaneseq
        %v3182 = vshrl.u32 %v3181, 7
        %v3183 = vsub.s32 %v3180, %v3182
        %v3184 = vrot.slane %v3170, %v3183
        %v3185 = vcombine.low %v3006, %v3012
        %v3186 = vcombine.high %v3006, %v3012
        %v3188 = vunpack.c.l.s4 1983009808
        %v3189 = vunpack.c.0.s8 %v3188
        %v3190 = vlaneseq
        %v3191 = vshrl.u32 %v3190, 7
        %v3192 = vsub.s32 %v3189, %v3191
        %v3193 = vrot.slane %v3185, %v3192
        %v3195 = vunpack.c.l.s4 1983009808
        %v3196 = vunpack.c.0.s8 %v3195
        %v3197 = vlaneseq
        %v3198 = vshrl.u32 %v3197, 7
        %v3199 = vsub.s32 %v3196, %v3198
        %v3200 = vrot.slane %v3186, %v3199
        %v3201 = vcombine.low %v3009, %v3015
        %v3202 = vcombine.high %v3009, %v3015
        %v3204 = vunpack.c.l.s4 1983009808
        %v3205 = vunpack.c.0.s8 %v3204
        %v3206 = vlaneseq
        %v3207 = vshrl.u32 %v3206, 7
        %v3208 = vsub.s32 %v3205, %v3207
        %v3209 = vrot.slane %v3201, %v3208
        %v3211 = vunpack.c.l.s4 1983009808
        %v3212 = vunpack.c.0.s8 %v3211
        %v3213 = vlaneseq
        %v3214 = vshrl.u32 %v3213, 7
        %v3215 = vsub.s32 %v3212, %v3214
        %v3216 = vrot.slane %v3202, %v3215
        %v3217 = vcombine.low %v3161, %v3177
        %v3218 = vcombine.high %v3161, %v3177
        %v3220 = vunpack.c.l.s4 1934713408
        %v3221 = vunpack.c.0.s8 %v3220
        %v3222 = vlaneseq
        %v3223 = vshrl.u32 %v3222, 7
        %v3224 = vsub.s32 %v3221, %v3223
        %v3225 = vrot.slane %v3217, %v3224
        %v3227 = vunpack.c.l.s4 1934713408
        %v3228 = vunpack.c.0.s8 %v3227
        %v3229 = vlaneseq
        %v3230 = vshrl.u32 %v3229, 7
        %v3231 = vsub.s32 %v3228, %v3230
        %v3232 = vrot.slane %v3218, %v3231
        %v3233 = vcombine.low %v3168, %v3184
        %v3234 = vcombine.high %v3168, %v3184
        %v3236 = vunpack.c.l.s4 1934713408
        %v3237 = vunpack.c.0.s8 %v3236
        %v3238 = vlaneseq
        %v3239 = vshrl.u32 %v3238, 7
        %v3240 = vsub.s32 %v3237, %v3239
        %v3241 = vrot.slane %v3233, %v3240
        %v3243 = vunpack.c.l.s4 1934713408
        %v3244 = vunpack.c.0.s8 %v3243
        %v3245 = vlaneseq
        %v3246 = vshrl.u32 %v3245, 7
        %v3247 = vsub.s32 %v3244, %v3246
        %v3248 = vrot.slane %v3234, %v3247
        %v3249 = vcombine.low %v3193, %v3209
        %v3250 = vcombine.high %v3193, %v3209
        %v3252 = vunpack.c.l.s4 1934713408
        %v3253 = vunpack.c.0.s8 %v3252
        %v3254 = vlaneseq
        %v3255 = vshrl.u32 %v3254, 7
        %v3256 = vsub.s32 %v3253, %v3255
        %v3257 = vrot.slane %v3249, %v3256
        %v3259 = vunpack.c.l.s4 1934713408
        %v3260 = vunpack.c.0.s8 %v3259
        %v3261 = vlaneseq
        %v3262 = vshrl.u32 %v3261, 7
        %v3263 = vsub.s32 %v3260, %v3262
        %v3264 = vrot.slane %v3250, %v3263
        %v3265 = vcombine.low %v3200, %v3216
        %v3266 = vcombine.high %v3200, %v3216
        %v3268 = vunpack.c.l.s4 1934713408
        %v3269 = vunpack.c.0.s8 %v3268
        %v3270 = vlaneseq
        %v3271 = vshrl.u32 %v3270, 7
        %v3272 = vsub.s32 %v3269, %v3271
        %v3273 = vrot.slane %v3265, %v3272
        %v3275 = vunpack.c.l.s4 1934713408
        %v3276 = vunpack.c.0.s8 %v3275
        %v3277 = vlaneseq
        %v3278 = vshrl.u32 %v3277, 7
        %v3279 = vsub.s32 %v3276, %v3278
        %v3280 = vrot.slane %v3266, %v3279
        %v3281 = vcombine.low %v3225, %v3257
        %v3282 = vcombine.high %v3225, %v3257
        %v3283 = vcombine.low %v3232, %v3264
        %v3284 = vcombine.high %v3232, %v3264
        %v3285 = vcombine.low %v3241, %v3273
        %v3286 = vcombine.high %v3241, %v3273
        %v3287 = vcombine.low %v3248, %v3280
        %v3288 = vcombine.high %v3248, %v3280
        %3290 = vrot.lane.b32.xlu0 %v3146, 16
        %v3291 = vpop.permute.xlu0 %3290
        %3294 = vrot.lane.b32.xlu0 %v3147, 32
        %v3295 = vpop.permute.xlu0 %3294
        %3298 = vrot.lane.b32.xlu0 %v3148, 48
        %v3299 = vpop.permute.xlu0 %3298
        %3302 = vrot.lane.b32.xlu0 %v3149, 64
        %v3303 = vpop.permute.xlu0 %3302
        %3306 = vrot.lane.b32.xlu0 %v3150, 80
        %v3307 = vpop.permute.xlu0 %3306
        %3310 = vrot.lane.b32.xlu0 %v3151, 96
        %v3311 = vpop.permute.xlu0 %3310
        %3314 = vrot.lane.b32.xlu0 %v3152, 112
        %v3315 = vpop.permute.xlu0 %3314
        %3318 = vrot.lane.b32.xlu0 %v3282, 16
        %v3319 = vpop.permute.xlu0 %3318
        %3322 = vrot.lane.b32.xlu0 %v3283, 32
        %v3323 = vpop.permute.xlu0 %3322
        %3326 = vrot.lane.b32.xlu0 %v3284, 48
        %v3327 = vpop.permute.xlu0 %3326
        %3330 = vrot.lane.b32.xlu0 %v3285, 64
        %v3331 = vpop.permute.xlu0 %3330
        %3334 = vrot.lane.b32.xlu0 %v3286, 80
        %v3335 = vpop.permute.xlu0 %3334
        %3338 = vrot.lane.b32.xlu0 %v3287, 96
        %v3339 = vpop.permute.xlu0 %3338
        %3342 = vrot.lane.b32.xlu0 %v3288, 112
        %v3343 = vpop.permute.xlu0 %3342
        %v3345 = vsel %vm539, %v3145, %v3291
        %v3346 = vsel %vm541, %v3345, %v3295
        %v3347 = vsel %vm543, %v3346, %v3299
        %v3348 = vsel %vm545, %v3347, %v3303
        %v3349 = vsel %vm547, %v3348, %v3307
        %v3350 = vsel %vm549, %v3349, %v3311
        %v3351 = vsel %vm551, %v3350, %v3315
        %v3352 = vsel %vm539, %v3281, %v3319
        %v3353 = vsel %vm541, %v3352, %v3323
        %v3354 = vsel %vm543, %v3353, %v3327
        %v3355 = vsel %vm545, %v3354, %v3331
        %v3356 = vsel %vm547, %v3355, %v3335
        %v3357 = vsel %vm549, %v3356, %v3339
        %v3358 = vsel %vm551, %v3357, %v3343
        %3375 = vrot.lane.b32.xlu0 %v2993, 127
        %v3376 = vpop.permute.xlu0 %3375
        %3377 = vrot.lane.b32.xlu0 %v2994, 127
        %v3378 = vpop.permute.xlu0 %3377
        %3379 = vrot.lane.b32.xlu0 %v2996, 127
        %v3380 = vpop.permute.xlu0 %3379
        %3381 = vrot.lane.b32.xlu0 %v2997, 127
        %v3382 = vpop.permute.xlu0 %3381
        %3383 = vrot.lane.b32.xlu0 %v2999, 127
        %v3384 = vpop.permute.xlu0 %3383
        %3385 = vrot.lane.b32.xlu0 %v3000, 127
        %v3386 = vpop.permute.xlu0 %3385
        %3387 = vrot.lane.b32.xlu0 %v3002, 127
        %v3388 = vpop.permute.xlu0 %3387
        %3389 = vrot.lane.b32.xlu0 %v3003, 127
        %v3390 = vpop.permute.xlu0 %3389
        %3391 = vrot.lane.b32.xlu0 %v3005, 127
        %v3392 = vpop.permute.xlu0 %3391
        %3393 = vrot.lane.b32.xlu0 %v3006, 127
        %v3394 = vpop.permute.xlu0 %3393
        %3395 = vrot.lane.b32.xlu0 %v3008, 127
        %v3396 = vpop.permute.xlu0 %3395
        %3397 = vrot.lane.b32.xlu0 %v3009, 127
        %v3398 = vpop.permute.xlu0 %3397
        %3399 = vrot.lane.b32.xlu0 %v3011, 127
        %v3400 = vpop.permute.xlu0 %3399
        %3401 = vrot.lane.b32.xlu0 %v3012, 127
        %v3402 = vpop.permute.xlu0 %3401
        %3403 = vrot.lane.b32.xlu0 %v3014, 127
        %v3404 = vpop.permute.xlu0 %3403
        %3405 = vrot.lane.b32.xlu0 %v3015, 127
        %v3406 = vpop.permute.xlu0 %3405
        %v3423 = vcombine.low %v3376, %v3384
        %v3424 = vcombine.high %v3376, %v3384
        %v3426 = vunpack.c.l.s4 1983009808
        %v3427 = vunpack.c.0.s8 %v3426
        %v3428 = vlaneseq
        %v3429 = vshrl.u32 %v3428, 7
        %v3430 = vsub.s32 %v3427, %v3429
        %v3431 = vrot.slane %v3423, %v3430
        %v3433 = vunpack.c.l.s4 1983009808
        %v3434 = vunpack.c.0.s8 %v3433
        %v3435 = vlaneseq
        %v3436 = vshrl.u32 %v3435, 7
        %v3437 = vsub.s32 %v3434, %v3436
        %v3438 = vrot.slane %v3424, %v3437
        %v3439 = vcombine.low %v3380, %v3388
        %v3440 = vcombine.high %v3380, %v3388
        %v3442 = vunpack.c.l.s4 1983009808
        %v3443 = vunpack.c.0.s8 %v3442
        %v3444 = vlaneseq
        %v3445 = vshrl.u32 %v3444, 7
        %v3446 = vsub.s32 %v3443, %v3445
        %v3447 = vrot.slane %v3439, %v3446
        %v3449 = vunpack.c.l.s4 1983009808
        %v3450 = vunpack.c.0.s8 %v3449
        %v3451 = vlaneseq
        %v3452 = vshrl.u32 %v3451, 7
        %v3453 = vsub.s32 %v3450, %v3452
        %v3454 = vrot.slane %v3440, %v3453
        %v3455 = vcombine.low %v3392, %v3400
        %v3456 = vcombine.high %v3392, %v3400
        %v3458 = vunpack.c.l.s4 1983009808
        %v3459 = vunpack.c.0.s8 %v3458
        %v3460 = vlaneseq
        %v3461 = vshrl.u32 %v3460, 7
        %v3462 = vsub.s32 %v3459, %v3461
        %v3463 = vrot.slane %v3455, %v3462
        %v3465 = vunpack.c.l.s4 1983009808
        %v3466 = vunpack.c.0.s8 %v3465
        %v3467 = vlaneseq
        %v3468 = vshrl.u32 %v3467, 7
        %v3469 = vsub.s32 %v3466, %v3468
        %v3470 = vrot.slane %v3456, %v3469
        %v3471 = vcombine.low %v3396, %v3404
        %v3472 = vcombine.high %v3396, %v3404
        %v3474 = vunpack.c.l.s4 1983009808
        %v3475 = vunpack.c.0.s8 %v3474
        %v3476 = vlaneseq
        %v3477 = vshrl.u32 %v3476, 7
        %v3478 = vsub.s32 %v3475, %v3477
        %v3479 = vrot.slane %v3471, %v3478
        %v3481 = vunpack.c.l.s4 1983009808
        %v3482 = vunpack.c.0.s8 %v3481
        %v3483 = vlaneseq
        %v3484 = vshrl.u32 %v3483, 7
        %v3485 = vsub.s32 %v3482, %v3484
        %v3486 = vrot.slane %v3472, %v3485
        %v3487 = vcombine.low %v3431, %v3447
        %v3488 = vcombine.high %v3431, %v3447
        %v3490 = vunpack.c.l.s4 1934713408
        %v3491 = vunpack.c.0.s8 %v3490
        %v3492 = vlaneseq
        %v3493 = vshrl.u32 %v3492, 7
        %v3494 = vsub.s32 %v3491, %v3493
        %v3495 = vrot.slane %v3487, %v3494
        %v3497 = vunpack.c.l.s4 1934713408
        %v3498 = vunpack.c.0.s8 %v3497
        %v3499 = vlaneseq
        %v3500 = vshrl.u32 %v3499, 7
        %v3501 = vsub.s32 %v3498, %v3500
        %v3502 = vrot.slane %v3488, %v3501
        %v3503 = vcombine.low %v3438, %v3454
        %v3504 = vcombine.high %v3438, %v3454
        %v3506 = vunpack.c.l.s4 1934713408
        %v3507 = vunpack.c.0.s8 %v3506
        %v3508 = vlaneseq
        %v3509 = vshrl.u32 %v3508, 7
        %v3510 = vsub.s32 %v3507, %v3509
        %v3511 = vrot.slane %v3503, %v3510
        %v3513 = vunpack.c.l.s4 1934713408
        %v3514 = vunpack.c.0.s8 %v3513
        %v3515 = vlaneseq
        %v3516 = vshrl.u32 %v3515, 7
        %v3517 = vsub.s32 %v3514, %v3516
        %v3518 = vrot.slane %v3504, %v3517
        %v3519 = vcombine.low %v3463, %v3479
        %v3520 = vcombine.high %v3463, %v3479
        %v3522 = vunpack.c.l.s4 1934713408
        %v3523 = vunpack.c.0.s8 %v3522
        %v3524 = vlaneseq
        %v3525 = vshrl.u32 %v3524, 7
        %v3526 = vsub.s32 %v3523, %v3525
        %v3527 = vrot.slane %v3519, %v3526
        %v3529 = vunpack.c.l.s4 1934713408
        %v3530 = vunpack.c.0.s8 %v3529
        %v3531 = vlaneseq
        %v3532 = vshrl.u32 %v3531, 7
        %v3533 = vsub.s32 %v3530, %v3532
        %v3534 = vrot.slane %v3520, %v3533
        %v3535 = vcombine.low %v3470, %v3486
        %v3536 = vcombine.high %v3470, %v3486
        %v3538 = vunpack.c.l.s4 1934713408
        %v3539 = vunpack.c.0.s8 %v3538
        %v3540 = vlaneseq
        %v3541 = vshrl.u32 %v3540, 7
        %v3542 = vsub.s32 %v3539, %v3541
        %v3543 = vrot.slane %v3535, %v3542
        %v3545 = vunpack.c.l.s4 1934713408
        %v3546 = vunpack.c.0.s8 %v3545
        %v3547 = vlaneseq
        %v3548 = vshrl.u32 %v3547, 7
        %v3549 = vsub.s32 %v3546, %v3548
        %v3550 = vrot.slane %v3536, %v3549
        %v3551 = vcombine.low %v3495, %v3527
        %v3552 = vcombine.high %v3495, %v3527
        %v3553 = vcombine.low %v3502, %v3534
        %v3554 = vcombine.high %v3502, %v3534
        %v3555 = vcombine.low %v3511, %v3543
        %v3556 = vcombine.high %v3511, %v3543
        %v3557 = vcombine.low %v3518, %v3550
        %v3558 = vcombine.high %v3518, %v3550
        %v3559 = vcombine.low %v3378, %v3386
        %v3560 = vcombine.high %v3378, %v3386
        %v3562 = vunpack.c.l.s4 1983009808
        %v3563 = vunpack.c.0.s8 %v3562
        %v3564 = vlaneseq
        %v3565 = vshrl.u32 %v3564, 7
        %v3566 = vsub.s32 %v3563, %v3565
        %v3567 = vrot.slane %v3559, %v3566
        %v3569 = vunpack.c.l.s4 1983009808
        %v3570 = vunpack.c.0.s8 %v3569
        %v3571 = vlaneseq
        %v3572 = vshrl.u32 %v3571, 7
        %v3573 = vsub.s32 %v3570, %v3572
        %v3574 = vrot.slane %v3560, %v3573
        %v3575 = vcombine.low %v3382, %v3390
        %v3576 = vcombine.high %v3382, %v3390
        %v3578 = vunpack.c.l.s4 1983009808
        %v3579 = vunpack.c.0.s8 %v3578
        %v3580 = vlaneseq
        %v3581 = vshrl.u32 %v3580, 7
        %v3582 = vsub.s32 %v3579, %v3581
        %v3583 = vrot.slane %v3575, %v3582
        %v3585 = vunpack.c.l.s4 1983009808
        %v3586 = vunpack.c.0.s8 %v3585
        %v3587 = vlaneseq
        %v3588 = vshrl.u32 %v3587, 7
        %v3589 = vsub.s32 %v3586, %v3588
        %v3590 = vrot.slane %v3576, %v3589
        %v3591 = vcombine.low %v3394, %v3402
        %v3592 = vcombine.high %v3394, %v3402
        %v3594 = vunpack.c.l.s4 1983009808
        %v3595 = vunpack.c.0.s8 %v3594
        %v3596 = vlaneseq
        %v3597 = vshrl.u32 %v3596, 7
        %v3598 = vsub.s32 %v3595, %v3597
        %v3599 = vrot.slane %v3591, %v3598
        %v3601 = vunpack.c.l.s4 1983009808
        %v3602 = vunpack.c.0.s8 %v3601
        %v3603 = vlaneseq
        %v3604 = vshrl.u32 %v3603, 7
        %v3605 = vsub.s32 %v3602, %v3604
        %v3606 = vrot.slane %v3592, %v3605
        %v3607 = vcombine.low %v3398, %v3406
        %v3608 = vcombine.high %v3398, %v3406
        %v3610 = vunpack.c.l.s4 1983009808
        %v3611 = vunpack.c.0.s8 %v3610
        %v3612 = vlaneseq
        %v3613 = vshrl.u32 %v3612, 7
        %v3614 = vsub.s32 %v3611, %v3613
        %v3615 = vrot.slane %v3607, %v3614
        %v3617 = vunpack.c.l.s4 1983009808
        %v3618 = vunpack.c.0.s8 %v3617
        %v3619 = vlaneseq
        %v3620 = vshrl.u32 %v3619, 7
        %v3621 = vsub.s32 %v3618, %v3620
        %v3622 = vrot.slane %v3608, %v3621
        %v3623 = vcombine.low %v3567, %v3583
        %v3624 = vcombine.high %v3567, %v3583
        %v3626 = vunpack.c.l.s4 1934713408
        %v3627 = vunpack.c.0.s8 %v3626
        %v3628 = vlaneseq
        %v3629 = vshrl.u32 %v3628, 7
        %v3630 = vsub.s32 %v3627, %v3629
        %v3631 = vrot.slane %v3623, %v3630
        %v3633 = vunpack.c.l.s4 1934713408
        %v3634 = vunpack.c.0.s8 %v3633
        %v3635 = vlaneseq
        %v3636 = vshrl.u32 %v3635, 7
        %v3637 = vsub.s32 %v3634, %v3636
        %v3638 = vrot.slane %v3624, %v3637
        %v3639 = vcombine.low %v3574, %v3590
        %v3640 = vcombine.high %v3574, %v3590
        %v3642 = vunpack.c.l.s4 1934713408
        %v3643 = vunpack.c.0.s8 %v3642
        %v3644 = vlaneseq
        %v3645 = vshrl.u32 %v3644, 7
        %v3646 = vsub.s32 %v3643, %v3645
        %v3647 = vrot.slane %v3639, %v3646
        %v3649 = vunpack.c.l.s4 1934713408
        %v3650 = vunpack.c.0.s8 %v3649
        %v3651 = vlaneseq
        %v3652 = vshrl.u32 %v3651, 7
        %v3653 = vsub.s32 %v3650, %v3652
        %v3654 = vrot.slane %v3640, %v3653
        %v3655 = vcombine.low %v3599, %v3615
        %v3656 = vcombine.high %v3599, %v3615
        %v3658 = vunpack.c.l.s4 1934713408
        %v3659 = vunpack.c.0.s8 %v3658
        %v3660 = vlaneseq
        %v3661 = vshrl.u32 %v3660, 7
        %v3662 = vsub.s32 %v3659, %v3661
        %v3663 = vrot.slane %v3655, %v3662
        %v3665 = vunpack.c.l.s4 1934713408
        %v3666 = vunpack.c.0.s8 %v3665
        %v3667 = vlaneseq
        %v3668 = vshrl.u32 %v3667, 7
        %v3669 = vsub.s32 %v3666, %v3668
        %v3670 = vrot.slane %v3656, %v3669
        %v3671 = vcombine.low %v3606, %v3622
        %v3672 = vcombine.high %v3606, %v3622
        %v3674 = vunpack.c.l.s4 1934713408
        %v3675 = vunpack.c.0.s8 %v3674
        %v3676 = vlaneseq
        %v3677 = vshrl.u32 %v3676, 7
        %v3678 = vsub.s32 %v3675, %v3677
        %v3679 = vrot.slane %v3671, %v3678
        %v3681 = vunpack.c.l.s4 1934713408
        %v3682 = vunpack.c.0.s8 %v3681
        %v3683 = vlaneseq
        %v3684 = vshrl.u32 %v3683, 7
        %v3685 = vsub.s32 %v3682, %v3684
        %v3686 = vrot.slane %v3672, %v3685
        %v3687 = vcombine.low %v3631, %v3663
        %v3688 = vcombine.high %v3631, %v3663
        %v3689 = vcombine.low %v3638, %v3670
        %v3690 = vcombine.high %v3638, %v3670
        %v3691 = vcombine.low %v3647, %v3679
        %v3692 = vcombine.high %v3647, %v3679
        %v3693 = vcombine.low %v3654, %v3686
        %v3694 = vcombine.high %v3654, %v3686
        %3696 = vrot.lane.b32.xlu0 %v3552, 16
        %v3697 = vpop.permute.xlu0 %3696
        %3700 = vrot.lane.b32.xlu0 %v3553, 32
        %v3701 = vpop.permute.xlu0 %3700
        %3704 = vrot.lane.b32.xlu0 %v3554, 48
        %v3705 = vpop.permute.xlu0 %3704
        %3708 = vrot.lane.b32.xlu0 %v3555, 64
        %v3709 = vpop.permute.xlu0 %3708
        %3712 = vrot.lane.b32.xlu0 %v3556, 80
        %v3713 = vpop.permute.xlu0 %3712
        %3716 = vrot.lane.b32.xlu0 %v3557, 96
        %v3717 = vpop.permute.xlu0 %3716
        %3720 = vrot.lane.b32.xlu0 %v3558, 112
        %v3721 = vpop.permute.xlu0 %3720
        %3724 = vrot.lane.b32.xlu0 %v3688, 16
        %v3725 = vpop.permute.xlu0 %3724
        %3728 = vrot.lane.b32.xlu0 %v3689, 32
        %v3729 = vpop.permute.xlu0 %3728
        %3732 = vrot.lane.b32.xlu0 %v3690, 48
        %v3733 = vpop.permute.xlu0 %3732
        %3736 = vrot.lane.b32.xlu0 %v3691, 64
        %v3737 = vpop.permute.xlu0 %3736
        %3740 = vrot.lane.b32.xlu0 %v3692, 80
        %v3741 = vpop.permute.xlu0 %3740
        %3744 = vrot.lane.b32.xlu0 %v3693, 96
        %v3745 = vpop.permute.xlu0 %3744
        %3748 = vrot.lane.b32.xlu0 %v3694, 112
        %v3749 = vpop.permute.xlu0 %3748
        %v3751 = vsel %vm539, %v3551, %v3697
        %v3752 = vsel %vm541, %v3751, %v3701
        %v3753 = vsel %vm543, %v3752, %v3705
        %v3754 = vsel %vm545, %v3753, %v3709
        %v3755 = vsel %vm547, %v3754, %v3713
        %v3756 = vsel %vm549, %v3755, %v3717
        %v3757 = vsel %vm551, %v3756, %v3721
        %v3758 = vsel %vm539, %v3687, %v3725
        %v3759 = vsel %vm541, %v3758, %v3729
        %v3760 = vsel %vm543, %v3759, %v3733
        %v3761 = vsel %vm545, %v3760, %v3737
        %v3762 = vsel %vm547, %v3761, %v3741
        %v3763 = vsel %vm549, %v3762, %v3745
        %v3764 = vsel %vm551, %v3763, %v3749
        %3765 = vrot.lane.b32.xlu0 %v2993, 126
        %v3766 = vpop.permute.xlu0 %3765
        %3767 = vrot.lane.b32.xlu0 %v2994, 126
        %v3768 = vpop.permute.xlu0 %3767
        %3769 = vrot.lane.b32.xlu0 %v2996, 126
        %v3770 = vpop.permute.xlu0 %3769
        %3771 = vrot.lane.b32.xlu0 %v2997, 126
        %v3772 = vpop.permute.xlu0 %3771
        %3773 = vrot.lane.b32.xlu0 %v2999, 126
        %v3774 = vpop.permute.xlu0 %3773
        %3775 = vrot.lane.b32.xlu0 %v3000, 126
        %v3776 = vpop.permute.xlu0 %3775
        %3777 = vrot.lane.b32.xlu0 %v3002, 126
        %v3778 = vpop.permute.xlu0 %3777
        %3779 = vrot.lane.b32.xlu0 %v3003, 126
        %v3780 = vpop.permute.xlu0 %3779
        %3781 = vrot.lane.b32.xlu0 %v3005, 126
        %v3782 = vpop.permute.xlu0 %3781
        %3783 = vrot.lane.b32.xlu0 %v3006, 126
        %v3784 = vpop.permute.xlu0 %3783
        %3785 = vrot.lane.b32.xlu0 %v3008, 126
        %v3786 = vpop.permute.xlu0 %3785
        %3787 = vrot.lane.b32.xlu0 %v3009, 126
        %v3788 = vpop.permute.xlu0 %3787
        %3789 = vrot.lane.b32.xlu0 %v3011, 126
        %v3790 = vpop.permute.xlu0 %3789
        %3791 = vrot.lane.b32.xlu0 %v3012, 126
        %v3792 = vpop.permute.xlu0 %3791
        %3793 = vrot.lane.b32.xlu0 %v3014, 126
        %v3794 = vpop.permute.xlu0 %3793
        %3795 = vrot.lane.b32.xlu0 %v3015, 126
        %v3796 = vpop.permute.xlu0 %3795
        %v3813 = vcombine.low %v3766, %v3774
        %v3814 = vcombine.high %v3766, %v3774
        %v3816 = vunpack.c.l.s4 1983009808
        %v3817 = vunpack.c.0.s8 %v3816
        %v3818 = vlaneseq
        %v3819 = vshrl.u32 %v3818, 7
        %v3820 = vsub.s32 %v3817, %v3819
        %v3821 = vrot.slane %v3813, %v3820
        %v3823 = vunpack.c.l.s4 1983009808
        %v3824 = vunpack.c.0.s8 %v3823
        %v3825 = vlaneseq
        %v3826 = vshrl.u32 %v3825, 7
        %v3827 = vsub.s32 %v3824, %v3826
        %v3828 = vrot.slane %v3814, %v3827
        %v3829 = vcombine.low %v3770, %v3778
        %v3830 = vcombine.high %v3770, %v3778
        %v3832 = vunpack.c.l.s4 1983009808
        %v3833 = vunpack.c.0.s8 %v3832
        %v3834 = vlaneseq
        %v3835 = vshrl.u32 %v3834, 7
        %v3836 = vsub.s32 %v3833, %v3835
        %v3837 = vrot.slane %v3829, %v3836
        %v3839 = vunpack.c.l.s4 1983009808
        %v3840 = vunpack.c.0.s8 %v3839
        %v3841 = vlaneseq
        %v3842 = vshrl.u32 %v3841, 7
        %v3843 = vsub.s32 %v3840, %v3842
        %v3844 = vrot.slane %v3830, %v3843
        %v3845 = vcombine.low %v3782, %v3790
        %v3846 = vcombine.high %v3782, %v3790
        %v3848 = vunpack.c.l.s4 1983009808
        %v3849 = vunpack.c.0.s8 %v3848
        %v3850 = vlaneseq
        %v3851 = vshrl.u32 %v3850, 7
        %v3852 = vsub.s32 %v3849, %v3851
        %v3853 = vrot.slane %v3845, %v3852
        %v3855 = vunpack.c.l.s4 1983009808
        %v3856 = vunpack.c.0.s8 %v3855
        %v3857 = vlaneseq
        %v3858 = vshrl.u32 %v3857, 7
        %v3859 = vsub.s32 %v3856, %v3858
        %v3860 = vrot.slane %v3846, %v3859
        %v3861 = vcombine.low %v3786, %v3794
        %v3862 = vcombine.high %v3786, %v3794
        %v3864 = vunpack.c.l.s4 1983009808
        %v3865 = vunpack.c.0.s8 %v3864
        %v3866 = vlaneseq
        %v3867 = vshrl.u32 %v3866, 7
        %v3868 = vsub.s32 %v3865, %v3867
        %v3869 = vrot.slane %v3861, %v3868
        %v3871 = vunpack.c.l.s4 1983009808
        %v3872 = vunpack.c.0.s8 %v3871
        %v3873 = vlaneseq
        %v3874 = vshrl.u32 %v3873, 7
        %v3875 = vsub.s32 %v3872, %v3874
        %v3876 = vrot.slane %v3862, %v3875
        %v3877 = vcombine.low %v3821, %v3837
        %v3878 = vcombine.high %v3821, %v3837
        %v3880 = vunpack.c.l.s4 1934713408
        %v3881 = vunpack.c.0.s8 %v3880
        %v3882 = vlaneseq
        %v3883 = vshrl.u32 %v3882, 7
        %v3884 = vsub.s32 %v3881, %v3883
        %v3885 = vrot.slane %v3877, %v3884
        %v3887 = vunpack.c.l.s4 1934713408
        %v3888 = vunpack.c.0.s8 %v3887
        %v3889 = vlaneseq
        %v3890 = vshrl.u32 %v3889, 7
        %v3891 = vsub.s32 %v3888, %v3890
        %v3892 = vrot.slane %v3878, %v3891
        %v3893 = vcombine.low %v3828, %v3844
        %v3894 = vcombine.high %v3828, %v3844
        %v3896 = vunpack.c.l.s4 1934713408
        %v3897 = vunpack.c.0.s8 %v3896
        %v3898 = vlaneseq
        %v3899 = vshrl.u32 %v3898, 7
        %v3900 = vsub.s32 %v3897, %v3899
        %v3901 = vrot.slane %v3893, %v3900
        %v3903 = vunpack.c.l.s4 1934713408
        %v3904 = vunpack.c.0.s8 %v3903
        %v3905 = vlaneseq
        %v3906 = vshrl.u32 %v3905, 7
        %v3907 = vsub.s32 %v3904, %v3906
        %v3908 = vrot.slane %v3894, %v3907
        %v3909 = vcombine.low %v3853, %v3869
        %v3910 = vcombine.high %v3853, %v3869
        %v3912 = vunpack.c.l.s4 1934713408
        %v3913 = vunpack.c.0.s8 %v3912
        %v3914 = vlaneseq
        %v3915 = vshrl.u32 %v3914, 7
        %v3916 = vsub.s32 %v3913, %v3915
        %v3917 = vrot.slane %v3909, %v3916
        %v3919 = vunpack.c.l.s4 1934713408
        %v3920 = vunpack.c.0.s8 %v3919
        %v3921 = vlaneseq
        %v3922 = vshrl.u32 %v3921, 7
        %v3923 = vsub.s32 %v3920, %v3922
        %v3924 = vrot.slane %v3910, %v3923
        %v3925 = vcombine.low %v3860, %v3876
        %v3926 = vcombine.high %v3860, %v3876
        %v3928 = vunpack.c.l.s4 1934713408
        %v3929 = vunpack.c.0.s8 %v3928
        %v3930 = vlaneseq
        %v3931 = vshrl.u32 %v3930, 7
        %v3932 = vsub.s32 %v3929, %v3931
        %v3933 = vrot.slane %v3925, %v3932
        %v3935 = vunpack.c.l.s4 1934713408
        %v3936 = vunpack.c.0.s8 %v3935
        %v3937 = vlaneseq
        %v3938 = vshrl.u32 %v3937, 7
        %v3939 = vsub.s32 %v3936, %v3938
        %v3940 = vrot.slane %v3926, %v3939
        %v3941 = vcombine.low %v3885, %v3917
        %v3942 = vcombine.high %v3885, %v3917
        %v3943 = vcombine.low %v3892, %v3924
        %v3944 = vcombine.high %v3892, %v3924
        %v3945 = vcombine.low %v3901, %v3933
        %v3946 = vcombine.high %v3901, %v3933
        %v3947 = vcombine.low %v3908, %v3940
        %v3948 = vcombine.high %v3908, %v3940
        %v3949 = vcombine.low %v3768, %v3776
        %v3950 = vcombine.high %v3768, %v3776
        %v3952 = vunpack.c.l.s4 1983009808
        %v3953 = vunpack.c.0.s8 %v3952
        %v3954 = vlaneseq
        %v3955 = vshrl.u32 %v3954, 7
        %v3956 = vsub.s32 %v3953, %v3955
        %v3957 = vrot.slane %v3949, %v3956
        %v3959 = vunpack.c.l.s4 1983009808
        %v3960 = vunpack.c.0.s8 %v3959
        %v3961 = vlaneseq
        %v3962 = vshrl.u32 %v3961, 7
        %v3963 = vsub.s32 %v3960, %v3962
        %v3964 = vrot.slane %v3950, %v3963
        %v3965 = vcombine.low %v3772, %v3780
        %v3966 = vcombine.high %v3772, %v3780
        %v3968 = vunpack.c.l.s4 1983009808
        %v3969 = vunpack.c.0.s8 %v3968
        %v3970 = vlaneseq
        %v3971 = vshrl.u32 %v3970, 7
        %v3972 = vsub.s32 %v3969, %v3971
        %v3973 = vrot.slane %v3965, %v3972
        %v3975 = vunpack.c.l.s4 1983009808
        %v3976 = vunpack.c.0.s8 %v3975
        %v3977 = vlaneseq
        %v3978 = vshrl.u32 %v3977, 7
        %v3979 = vsub.s32 %v3976, %v3978
        %v3980 = vrot.slane %v3966, %v3979
        %v3981 = vcombine.low %v3784, %v3792
        %v3982 = vcombine.high %v3784, %v3792
        %v3984 = vunpack.c.l.s4 1983009808
        %v3985 = vunpack.c.0.s8 %v3984
        %v3986 = vlaneseq
        %v3987 = vshrl.u32 %v3986, 7
        %v3988 = vsub.s32 %v3985, %v3987
        %v3989 = vrot.slane %v3981, %v3988
        %v3991 = vunpack.c.l.s4 1983009808
        %v3992 = vunpack.c.0.s8 %v3991
        %v3993 = vlaneseq
        %v3994 = vshrl.u32 %v3993, 7
        %v3995 = vsub.s32 %v3992, %v3994
        %v3996 = vrot.slane %v3982, %v3995
        %v3997 = vcombine.low %v3788, %v3796
        %v3998 = vcombine.high %v3788, %v3796
        %v4000 = vunpack.c.l.s4 1983009808
        %v4001 = vunpack.c.0.s8 %v4000
        %v4002 = vlaneseq
        %v4003 = vshrl.u32 %v4002, 7
        %v4004 = vsub.s32 %v4001, %v4003
        %v4005 = vrot.slane %v3997, %v4004
        %v4007 = vunpack.c.l.s4 1983009808
        %v4008 = vunpack.c.0.s8 %v4007
        %v4009 = vlaneseq
        %v4010 = vshrl.u32 %v4009, 7
        %v4011 = vsub.s32 %v4008, %v4010
        %v4012 = vrot.slane %v3998, %v4011
        %v4013 = vcombine.low %v3957, %v3973
        %v4014 = vcombine.high %v3957, %v3973
        %v4016 = vunpack.c.l.s4 1934713408
        %v4017 = vunpack.c.0.s8 %v4016
        %v4018 = vlaneseq
        %v4019 = vshrl.u32 %v4018, 7
        %v4020 = vsub.s32 %v4017, %v4019
        %v4021 = vrot.slane %v4013, %v4020
        %v4023 = vunpack.c.l.s4 1934713408
        %v4024 = vunpack.c.0.s8 %v4023
        %v4025 = vlaneseq
        %v4026 = vshrl.u32 %v4025, 7
        %v4027 = vsub.s32 %v4024, %v4026
        %v4028 = vrot.slane %v4014, %v4027
        %v4029 = vcombine.low %v3964, %v3980
        %v4030 = vcombine.high %v3964, %v3980
        %v4032 = vunpack.c.l.s4 1934713408
        %v4033 = vunpack.c.0.s8 %v4032
        %v4034 = vlaneseq
        %v4035 = vshrl.u32 %v4034, 7
        %v4036 = vsub.s32 %v4033, %v4035
        %v4037 = vrot.slane %v4029, %v4036
        %v4039 = vunpack.c.l.s4 1934713408
        %v4040 = vunpack.c.0.s8 %v4039
        %v4041 = vlaneseq
        %v4042 = vshrl.u32 %v4041, 7
        %v4043 = vsub.s32 %v4040, %v4042
        %v4044 = vrot.slane %v4030, %v4043
        %v4045 = vcombine.low %v3989, %v4005
        %v4046 = vcombine.high %v3989, %v4005
        %v4048 = vunpack.c.l.s4 1934713408
        %v4049 = vunpack.c.0.s8 %v4048
        %v4050 = vlaneseq
        %v4051 = vshrl.u32 %v4050, 7
        %v4052 = vsub.s32 %v4049, %v4051
        %v4053 = vrot.slane %v4045, %v4052
        %v4055 = vunpack.c.l.s4 1934713408
        %v4056 = vunpack.c.0.s8 %v4055
        %v4057 = vlaneseq
        %v4058 = vshrl.u32 %v4057, 7
        %v4059 = vsub.s32 %v4056, %v4058
        %v4060 = vrot.slane %v4046, %v4059
        %v4061 = vcombine.low %v3996, %v4012
        %v4062 = vcombine.high %v3996, %v4012
        %v4064 = vunpack.c.l.s4 1934713408
        %v4065 = vunpack.c.0.s8 %v4064
        %v4066 = vlaneseq
        %v4067 = vshrl.u32 %v4066, 7
        %v4068 = vsub.s32 %v4065, %v4067
        %v4069 = vrot.slane %v4061, %v4068
        %v4071 = vunpack.c.l.s4 1934713408
        %v4072 = vunpack.c.0.s8 %v4071
        %v4073 = vlaneseq
        %v4074 = vshrl.u32 %v4073, 7
        %v4075 = vsub.s32 %v4072, %v4074
        %v4076 = vrot.slane %v4062, %v4075
        %v4077 = vcombine.low %v4021, %v4053
        %v4078 = vcombine.high %v4021, %v4053
        %v4079 = vcombine.low %v4028, %v4060
        %v4080 = vcombine.high %v4028, %v4060
        %v4081 = vcombine.low %v4037, %v4069
        %v4082 = vcombine.high %v4037, %v4069
        %v4083 = vcombine.low %v4044, %v4076
        %v4084 = vcombine.high %v4044, %v4076
        %4086 = vrot.lane.b32.xlu0 %v3942, 16
        %v4087 = vpop.permute.xlu0 %4086
        %4090 = vrot.lane.b32.xlu0 %v3943, 32
        %v4091 = vpop.permute.xlu0 %4090
        %4094 = vrot.lane.b32.xlu0 %v3944, 48
        %v4095 = vpop.permute.xlu0 %4094
        %4098 = vrot.lane.b32.xlu0 %v3945, 64
        %v4099 = vpop.permute.xlu0 %4098
        %4102 = vrot.lane.b32.xlu0 %v3946, 80
        %v4103 = vpop.permute.xlu0 %4102
        %4106 = vrot.lane.b32.xlu0 %v3947, 96
        %v4107 = vpop.permute.xlu0 %4106
        %4110 = vrot.lane.b32.xlu0 %v3948, 112
        %v4111 = vpop.permute.xlu0 %4110
        %4114 = vrot.lane.b32.xlu0 %v4078, 16
        %v4115 = vpop.permute.xlu0 %4114
        %4118 = vrot.lane.b32.xlu0 %v4079, 32
        %v4119 = vpop.permute.xlu0 %4118
        %4122 = vrot.lane.b32.xlu0 %v4080, 48
        %v4123 = vpop.permute.xlu0 %4122
        %4126 = vrot.lane.b32.xlu0 %v4081, 64
        %v4127 = vpop.permute.xlu0 %4126
        %4130 = vrot.lane.b32.xlu0 %v4082, 80
        %v4131 = vpop.permute.xlu0 %4130
        %4134 = vrot.lane.b32.xlu0 %v4083, 96
        %v4135 = vpop.permute.xlu0 %4134
        %4138 = vrot.lane.b32.xlu0 %v4084, 112
        %v4139 = vpop.permute.xlu0 %4138
        %v4141 = vsel %vm539, %v3941, %v4087
        %v4142 = vsel %vm541, %v4141, %v4091
        %v4143 = vsel %vm543, %v4142, %v4095
        %v4144 = vsel %vm545, %v4143, %v4099
        %v4145 = vsel %vm547, %v4144, %v4103
        %v4146 = vsel %vm549, %v4145, %v4107
        %v4147 = vsel %vm551, %v4146, %v4111
        %v4148 = vsel %vm539, %v4077, %v4115
        %v4149 = vsel %vm541, %v4148, %v4119
        %v4150 = vsel %vm543, %v4149, %v4123
        %v4151 = vsel %vm545, %v4150, %v4127
        %v4152 = vsel %vm547, %v4151, %v4131
        %v4153 = vsel %vm549, %v4152, %v4135
        %v4154 = vsel %vm551, %v4153, %v4139
        %v4163 = vrot.slane %v2993, 1
        %v4164 = vrot.slane %v2994, 1
        %v4165 = vsel %vm1032, %v4163, %v4164
        %v4166 = vrot.slane %v2995, 1
        %v4167 = vsel %vm1032, %v4164, %v4166
        %v4168 = vrot.slane %v2996, 1
        %v4169 = vrot.slane %v2997, 1
        %v4170 = vsel %vm1032, %v4168, %v4169
        %v4171 = vrot.slane %v2998, 1
        %v4172 = vsel %vm1032, %v4169, %v4171
        %v4173 = vrot.slane %v2999, 1
        %v4174 = vrot.slane %v3000, 1
        %v4175 = vsel %vm1032, %v4173, %v4174
        %v4176 = vrot.slane %v3001, 1
        %v4177 = vsel %vm1032, %v4174, %v4176
        %v4178 = vrot.slane %v3002, 1
        %v4179 = vrot.slane %v3003, 1
        %v4180 = vsel %vm1032, %v4178, %v4179
        %v4181 = vrot.slane %v3004, 1
        %v4182 = vsel %vm1032, %v4179, %v4181
        %v4183 = vrot.slane %v3005, 1
        %v4184 = vrot.slane %v3006, 1
        %v4185 = vsel %vm1032, %v4183, %v4184
        %v4186 = vrot.slane %v3007, 1
        %v4187 = vsel %vm1032, %v4184, %v4186
        %v4188 = vrot.slane %v3008, 1
        %v4189 = vrot.slane %v3009, 1
        %v4190 = vsel %vm1032, %v4188, %v4189
        %v4191 = vrot.slane %v3010, 1
        %v4192 = vsel %vm1032, %v4189, %v4191
        %v4193 = vrot.slane %v3011, 1
        %v4194 = vrot.slane %v3012, 1
        %v4195 = vsel %vm1032, %v4193, %v4194
        %v4196 = vrot.slane %v3013, 1
        %v4197 = vsel %vm1032, %v4194, %v4196
        %v4198 = vrot.slane %v3014, 1
        %v4199 = vrot.slane %v3015, 1
        %v4200 = vsel %vm1032, %v4198, %v4199
        %v4201 = vrot.slane %v3016, 1
        %v4202 = vsel %vm1032, %v4199, %v4201
        %v4219 = vcombine.low %v4165, %v4175
        %v4220 = vcombine.high %v4165, %v4175
        %v4222 = vunpack.c.l.s4 1983009808
        %v4223 = vunpack.c.0.s8 %v4222
        %v4224 = vlaneseq
        %v4225 = vshrl.u32 %v4224, 7
        %v4226 = vsub.s32 %v4223, %v4225
        %v4227 = vrot.slane %v4219, %v4226
        %v4229 = vunpack.c.l.s4 1983009808
        %v4230 = vunpack.c.0.s8 %v4229
        %v4231 = vlaneseq
        %v4232 = vshrl.u32 %v4231, 7
        %v4233 = vsub.s32 %v4230, %v4232
        %v4234 = vrot.slane %v4220, %v4233
        %v4235 = vcombine.low %v4170, %v4180
        %v4236 = vcombine.high %v4170, %v4180
        %v4238 = vunpack.c.l.s4 1983009808
        %v4239 = vunpack.c.0.s8 %v4238
        %v4240 = vlaneseq
        %v4241 = vshrl.u32 %v4240, 7
        %v4242 = vsub.s32 %v4239, %v4241
        %v4243 = vrot.slane %v4235, %v4242
        %v4245 = vunpack.c.l.s4 1983009808
        %v4246 = vunpack.c.0.s8 %v4245
        %v4247 = vlaneseq
        %v4248 = vshrl.u32 %v4247, 7
        %v4249 = vsub.s32 %v4246, %v4248
        %v4250 = vrot.slane %v4236, %v4249
        %v4251 = vcombine.low %v4185, %v4195
        %v4252 = vcombine.high %v4185, %v4195
        %v4254 = vunpack.c.l.s4 1983009808
        %v4255 = vunpack.c.0.s8 %v4254
        %v4256 = vlaneseq
        %v4257 = vshrl.u32 %v4256, 7
        %v4258 = vsub.s32 %v4255, %v4257
        %v4259 = vrot.slane %v4251, %v4258
        %v4261 = vunpack.c.l.s4 1983009808
        %v4262 = vunpack.c.0.s8 %v4261
        %v4263 = vlaneseq
        %v4264 = vshrl.u32 %v4263, 7
        %v4265 = vsub.s32 %v4262, %v4264
        %v4266 = vrot.slane %v4252, %v4265
        %v4267 = vcombine.low %v4190, %v4200
        %v4268 = vcombine.high %v4190, %v4200
        %v4270 = vunpack.c.l.s4 1983009808
        %v4271 = vunpack.c.0.s8 %v4270
        %v4272 = vlaneseq
        %v4273 = vshrl.u32 %v4272, 7
        %v4274 = vsub.s32 %v4271, %v4273
        %v4275 = vrot.slane %v4267, %v4274
        %v4277 = vunpack.c.l.s4 1983009808
        %v4278 = vunpack.c.0.s8 %v4277
        %v4279 = vlaneseq
        %v4280 = vshrl.u32 %v4279, 7
        %v4281 = vsub.s32 %v4278, %v4280
        %v4282 = vrot.slane %v4268, %v4281
        %v4283 = vcombine.low %v4227, %v4243
        %v4284 = vcombine.high %v4227, %v4243
        %v4286 = vunpack.c.l.s4 1934713408
        %v4287 = vunpack.c.0.s8 %v4286
        %v4288 = vlaneseq
        %v4289 = vshrl.u32 %v4288, 7
        %v4290 = vsub.s32 %v4287, %v4289
        %v4291 = vrot.slane %v4283, %v4290
        %v4293 = vunpack.c.l.s4 1934713408
        %v4294 = vunpack.c.0.s8 %v4293
        %v4295 = vlaneseq
        %v4296 = vshrl.u32 %v4295, 7
        %v4297 = vsub.s32 %v4294, %v4296
        %v4298 = vrot.slane %v4284, %v4297
        %v4299 = vcombine.low %v4234, %v4250
        %v4300 = vcombine.high %v4234, %v4250
        %v4302 = vunpack.c.l.s4 1934713408
        %v4303 = vunpack.c.0.s8 %v4302
        %v4304 = vlaneseq
        %v4305 = vshrl.u32 %v4304, 7
        %v4306 = vsub.s32 %v4303, %v4305
        %v4307 = vrot.slane %v4299, %v4306
        %v4309 = vunpack.c.l.s4 1934713408
        %v4310 = vunpack.c.0.s8 %v4309
        %v4311 = vlaneseq
        %v4312 = vshrl.u32 %v4311, 7
        %v4313 = vsub.s32 %v4310, %v4312
        %v4314 = vrot.slane %v4300, %v4313
        %v4315 = vcombine.low %v4259, %v4275
        %v4316 = vcombine.high %v4259, %v4275
        %v4318 = vunpack.c.l.s4 1934713408
        %v4319 = vunpack.c.0.s8 %v4318
        %v4320 = vlaneseq
        %v4321 = vshrl.u32 %v4320, 7
        %v4322 = vsub.s32 %v4319, %v4321
        %v4323 = vrot.slane %v4315, %v4322
        %v4325 = vunpack.c.l.s4 1934713408
        %v4326 = vunpack.c.0.s8 %v4325
        %v4327 = vlaneseq
        %v4328 = vshrl.u32 %v4327, 7
        %v4329 = vsub.s32 %v4326, %v4328
        %v4330 = vrot.slane %v4316, %v4329
        %v4331 = vcombine.low %v4266, %v4282
        %v4332 = vcombine.high %v4266, %v4282
        %v4334 = vunpack.c.l.s4 1934713408
        %v4335 = vunpack.c.0.s8 %v4334
        %v4336 = vlaneseq
        %v4337 = vshrl.u32 %v4336, 7
        %v4338 = vsub.s32 %v4335, %v4337
        %v4339 = vrot.slane %v4331, %v4338
        %v4341 = vunpack.c.l.s4 1934713408
        %v4342 = vunpack.c.0.s8 %v4341
        %v4343 = vlaneseq
        %v4344 = vshrl.u32 %v4343, 7
        %v4345 = vsub.s32 %v4342, %v4344
        %v4346 = vrot.slane %v4332, %v4345
        %v4347 = vcombine.low %v4291, %v4323
        %v4348 = vcombine.high %v4291, %v4323
        %v4349 = vcombine.low %v4298, %v4330
        %v4350 = vcombine.high %v4298, %v4330
        %v4351 = vcombine.low %v4307, %v4339
        %v4352 = vcombine.high %v4307, %v4339
        %v4353 = vcombine.low %v4314, %v4346
        %v4354 = vcombine.high %v4314, %v4346
        %v4355 = vcombine.low %v4167, %v4177
        %v4356 = vcombine.high %v4167, %v4177
        %v4358 = vunpack.c.l.s4 1983009808
        %v4359 = vunpack.c.0.s8 %v4358
        %v4360 = vlaneseq
        %v4361 = vshrl.u32 %v4360, 7
        %v4362 = vsub.s32 %v4359, %v4361
        %v4363 = vrot.slane %v4355, %v4362
        %v4365 = vunpack.c.l.s4 1983009808
        %v4366 = vunpack.c.0.s8 %v4365
        %v4367 = vlaneseq
        %v4368 = vshrl.u32 %v4367, 7
        %v4369 = vsub.s32 %v4366, %v4368
        %v4370 = vrot.slane %v4356, %v4369
        %v4371 = vcombine.low %v4172, %v4182
        %v4372 = vcombine.high %v4172, %v4182
        %v4374 = vunpack.c.l.s4 1983009808
        %v4375 = vunpack.c.0.s8 %v4374
        %v4376 = vlaneseq
        %v4377 = vshrl.u32 %v4376, 7
        %v4378 = vsub.s32 %v4375, %v4377
        %v4379 = vrot.slane %v4371, %v4378
        %v4381 = vunpack.c.l.s4 1983009808
        %v4382 = vunpack.c.0.s8 %v4381
        %v4383 = vlaneseq
        %v4384 = vshrl.u32 %v4383, 7
        %v4385 = vsub.s32 %v4382, %v4384
        %v4386 = vrot.slane %v4372, %v4385
        %v4387 = vcombine.low %v4187, %v4197
        %v4388 = vcombine.high %v4187, %v4197
        %v4390 = vunpack.c.l.s4 1983009808
        %v4391 = vunpack.c.0.s8 %v4390
        %v4392 = vlaneseq
        %v4393 = vshrl.u32 %v4392, 7
        %v4394 = vsub.s32 %v4391, %v4393
        %v4395 = vrot.slane %v4387, %v4394
        %v4397 = vunpack.c.l.s4 1983009808
        %v4398 = vunpack.c.0.s8 %v4397
        %v4399 = vlaneseq
        %v4400 = vshrl.u32 %v4399, 7
        %v4401 = vsub.s32 %v4398, %v4400
        %v4402 = vrot.slane %v4388, %v4401
        %v4403 = vcombine.low %v4192, %v4202
        %v4404 = vcombine.high %v4192, %v4202
        %v4406 = vunpack.c.l.s4 1983009808
        %v4407 = vunpack.c.0.s8 %v4406
        %v4408 = vlaneseq
        %v4409 = vshrl.u32 %v4408, 7
        %v4410 = vsub.s32 %v4407, %v4409
        %v4411 = vrot.slane %v4403, %v4410
        %v4413 = vunpack.c.l.s4 1983009808
        %v4414 = vunpack.c.0.s8 %v4413
        %v4415 = vlaneseq
        %v4416 = vshrl.u32 %v4415, 7
        %v4417 = vsub.s32 %v4414, %v4416
        %v4418 = vrot.slane %v4404, %v4417
        %v4419 = vcombine.low %v4363, %v4379
        %v4420 = vcombine.high %v4363, %v4379
        %v4422 = vunpack.c.l.s4 1934713408
        %v4423 = vunpack.c.0.s8 %v4422
        %v4424 = vlaneseq
        %v4425 = vshrl.u32 %v4424, 7
        %v4426 = vsub.s32 %v4423, %v4425
        %v4427 = vrot.slane %v4419, %v4426
        %v4429 = vunpack.c.l.s4 1934713408
        %v4430 = vunpack.c.0.s8 %v4429
        %v4431 = vlaneseq
        %v4432 = vshrl.u32 %v4431, 7
        %v4433 = vsub.s32 %v4430, %v4432
        %v4434 = vrot.slane %v4420, %v4433
        %v4435 = vcombine.low %v4370, %v4386
        %v4436 = vcombine.high %v4370, %v4386
        %v4438 = vunpack.c.l.s4 1934713408
        %v4439 = vunpack.c.0.s8 %v4438
        %v4440 = vlaneseq
        %v4441 = vshrl.u32 %v4440, 7
        %v4442 = vsub.s32 %v4439, %v4441
        %v4443 = vrot.slane %v4435, %v4442
        %v4445 = vunpack.c.l.s4 1934713408
        %v4446 = vunpack.c.0.s8 %v4445
        %v4447 = vlaneseq
        %v4448 = vshrl.u32 %v4447, 7
        %v4449 = vsub.s32 %v4446, %v4448
        %v4450 = vrot.slane %v4436, %v4449
        %v4451 = vcombine.low %v4395, %v4411
        %v4452 = vcombine.high %v4395, %v4411
        %v4454 = vunpack.c.l.s4 1934713408
        %v4455 = vunpack.c.0.s8 %v4454
        %v4456 = vlaneseq
        %v4457 = vshrl.u32 %v4456, 7
        %v4458 = vsub.s32 %v4455, %v4457
        %v4459 = vrot.slane %v4451, %v4458
        %v4461 = vunpack.c.l.s4 1934713408
        %v4462 = vunpack.c.0.s8 %v4461
        %v4463 = vlaneseq
        %v4464 = vshrl.u32 %v4463, 7
        %v4465 = vsub.s32 %v4462, %v4464
        %v4466 = vrot.slane %v4452, %v4465
        %v4467 = vcombine.low %v4402, %v4418
        %v4468 = vcombine.high %v4402, %v4418
        %v4470 = vunpack.c.l.s4 1934713408
        %v4471 = vunpack.c.0.s8 %v4470
        %v4472 = vlaneseq
        %v4473 = vshrl.u32 %v4472, 7
        %v4474 = vsub.s32 %v4471, %v4473
        %v4475 = vrot.slane %v4467, %v4474
        %v4477 = vunpack.c.l.s4 1934713408
        %v4478 = vunpack.c.0.s8 %v4477
        %v4479 = vlaneseq
        %v4480 = vshrl.u32 %v4479, 7
        %v4481 = vsub.s32 %v4478, %v4480
        %v4482 = vrot.slane %v4468, %v4481
        %v4483 = vcombine.low %v4427, %v4459
        %v4484 = vcombine.high %v4427, %v4459
        %v4485 = vcombine.low %v4434, %v4466
        %v4486 = vcombine.high %v4434, %v4466
        %v4487 = vcombine.low %v4443, %v4475
        %v4488 = vcombine.high %v4443, %v4475
        %v4489 = vcombine.low %v4450, %v4482
        %v4490 = vcombine.high %v4450, %v4482
        %4492 = vrot.lane.b32.xlu0 %v4348, 16
        %v4493 = vpop.permute.xlu0 %4492
        %4496 = vrot.lane.b32.xlu0 %v4349, 32
        %v4497 = vpop.permute.xlu0 %4496
        %4500 = vrot.lane.b32.xlu0 %v4350, 48
        %v4501 = vpop.permute.xlu0 %4500
        %4504 = vrot.lane.b32.xlu0 %v4351, 64
        %v4505 = vpop.permute.xlu0 %4504
        %4508 = vrot.lane.b32.xlu0 %v4352, 80
        %v4509 = vpop.permute.xlu0 %4508
        %4512 = vrot.lane.b32.xlu0 %v4353, 96
        %v4513 = vpop.permute.xlu0 %4512
        %4516 = vrot.lane.b32.xlu0 %v4354, 112
        %v4517 = vpop.permute.xlu0 %4516
        %4520 = vrot.lane.b32.xlu0 %v4484, 16
        %v4521 = vpop.permute.xlu0 %4520
        %4524 = vrot.lane.b32.xlu0 %v4485, 32
        %v4525 = vpop.permute.xlu0 %4524
        %4528 = vrot.lane.b32.xlu0 %v4486, 48
        %v4529 = vpop.permute.xlu0 %4528
        %4532 = vrot.lane.b32.xlu0 %v4487, 64
        %v4533 = vpop.permute.xlu0 %4532
        %4536 = vrot.lane.b32.xlu0 %v4488, 80
        %v4537 = vpop.permute.xlu0 %4536
        %4540 = vrot.lane.b32.xlu0 %v4489, 96
        %v4541 = vpop.permute.xlu0 %4540
        %4544 = vrot.lane.b32.xlu0 %v4490, 112
        %v4545 = vpop.permute.xlu0 %4544
        %v4547 = vsel %vm539, %v4347, %v4493
        %v4548 = vsel %vm541, %v4547, %v4497
        %v4549 = vsel %vm543, %v4548, %v4501
        %v4550 = vsel %vm545, %v4549, %v4505
        %v4551 = vsel %vm547, %v4550, %v4509
        %v4552 = vsel %vm549, %v4551, %v4513
        %v4553 = vsel %vm551, %v4552, %v4517
        %v4554 = vsel %vm539, %v4483, %v4521
        %v4555 = vsel %vm541, %v4554, %v4525
        %v4556 = vsel %vm543, %v4555, %v4529
        %v4557 = vsel %vm545, %v4556, %v4533
        %v4558 = vsel %vm547, %v4557, %v4537
        %v4559 = vsel %vm549, %v4558, %v4541
        %v4560 = vsel %vm551, %v4559, %v4545
        %4561 = vrot.lane.b32.xlu0 %v4165, 127
        %v4562 = vpop.permute.xlu0 %4561
        %4563 = vrot.lane.b32.xlu0 %v4167, 127
        %v4564 = vpop.permute.xlu0 %4563
        %4565 = vrot.lane.b32.xlu0 %v4170, 127
        %v4566 = vpop.permute.xlu0 %4565
        %4567 = vrot.lane.b32.xlu0 %v4172, 127
        %v4568 = vpop.permute.xlu0 %4567
        %4569 = vrot.lane.b32.xlu0 %v4175, 127
        %v4570 = vpop.permute.xlu0 %4569
        %4571 = vrot.lane.b32.xlu0 %v4177, 127
        %v4572 = vpop.permute.xlu0 %4571
        %4573 = vrot.lane.b32.xlu0 %v4180, 127
        %v4574 = vpop.permute.xlu0 %4573
        %4575 = vrot.lane.b32.xlu0 %v4182, 127
        %v4576 = vpop.permute.xlu0 %4575
        %4577 = vrot.lane.b32.xlu0 %v4185, 127
        %v4578 = vpop.permute.xlu0 %4577
        %4579 = vrot.lane.b32.xlu0 %v4187, 127
        %v4580 = vpop.permute.xlu0 %4579
        %4581 = vrot.lane.b32.xlu0 %v4190, 127
        %v4582 = vpop.permute.xlu0 %4581
        %4583 = vrot.lane.b32.xlu0 %v4192, 127
        %v4584 = vpop.permute.xlu0 %4583
        %4585 = vrot.lane.b32.xlu0 %v4195, 127
        %v4586 = vpop.permute.xlu0 %4585
        %4587 = vrot.lane.b32.xlu0 %v4197, 127
        %v4588 = vpop.permute.xlu0 %4587
        %4589 = vrot.lane.b32.xlu0 %v4200, 127
        %v4590 = vpop.permute.xlu0 %4589
        %4591 = vrot.lane.b32.xlu0 %v4202, 127
        %v4592 = vpop.permute.xlu0 %4591
        %v4609 = vcombine.low %v4562, %v4570
        %v4610 = vcombine.high %v4562, %v4570
        %v4612 = vunpack.c.l.s4 1983009808
        %v4613 = vunpack.c.0.s8 %v4612
        %v4614 = vlaneseq
        %v4615 = vshrl.u32 %v4614, 7
        %v4616 = vsub.s32 %v4613, %v4615
        %v4617 = vrot.slane %v4609, %v4616
        %v4619 = vunpack.c.l.s4 1983009808
        %v4620 = vunpack.c.0.s8 %v4619
        %v4621 = vlaneseq
        %v4622 = vshrl.u32 %v4621, 7
        %v4623 = vsub.s32 %v4620, %v4622
        %v4624 = vrot.slane %v4610, %v4623
        %v4625 = vcombine.low %v4566, %v4574
        %v4626 = vcombine.high %v4566, %v4574
        %v4628 = vunpack.c.l.s4 1983009808
        %v4629 = vunpack.c.0.s8 %v4628
        %v4630 = vlaneseq
        %v4631 = vshrl.u32 %v4630, 7
        %v4632 = vsub.s32 %v4629, %v4631
        %v4633 = vrot.slane %v4625, %v4632
        %v4635 = vunpack.c.l.s4 1983009808
        %v4636 = vunpack.c.0.s8 %v4635
        %v4637 = vlaneseq
        %v4638 = vshrl.u32 %v4637, 7
        %v4639 = vsub.s32 %v4636, %v4638
        %v4640 = vrot.slane %v4626, %v4639
        %v4641 = vcombine.low %v4578, %v4586
        %v4642 = vcombine.high %v4578, %v4586
        %v4644 = vunpack.c.l.s4 1983009808
        %v4645 = vunpack.c.0.s8 %v4644
        %v4646 = vlaneseq
        %v4647 = vshrl.u32 %v4646, 7
        %v4648 = vsub.s32 %v4645, %v4647
        %v4649 = vrot.slane %v4641, %v4648
        %v4651 = vunpack.c.l.s4 1983009808
        %v4652 = vunpack.c.0.s8 %v4651
        %v4653 = vlaneseq
        %v4654 = vshrl.u32 %v4653, 7
        %v4655 = vsub.s32 %v4652, %v4654
        %v4656 = vrot.slane %v4642, %v4655
        %v4657 = vcombine.low %v4582, %v4590
        %v4658 = vcombine.high %v4582, %v4590
        %v4660 = vunpack.c.l.s4 1983009808
        %v4661 = vunpack.c.0.s8 %v4660
        %v4662 = vlaneseq
        %v4663 = vshrl.u32 %v4662, 7
        %v4664 = vsub.s32 %v4661, %v4663
        %v4665 = vrot.slane %v4657, %v4664
        %v4667 = vunpack.c.l.s4 1983009808
        %v4668 = vunpack.c.0.s8 %v4667
        %v4669 = vlaneseq
        %v4670 = vshrl.u32 %v4669, 7
        %v4671 = vsub.s32 %v4668, %v4670
        %v4672 = vrot.slane %v4658, %v4671
        %v4673 = vcombine.low %v4617, %v4633
        %v4674 = vcombine.high %v4617, %v4633
        %v4676 = vunpack.c.l.s4 1934713408
        %v4677 = vunpack.c.0.s8 %v4676
        %v4678 = vlaneseq
        %v4679 = vshrl.u32 %v4678, 7
        %v4680 = vsub.s32 %v4677, %v4679
        %v4681 = vrot.slane %v4673, %v4680
        %v4683 = vunpack.c.l.s4 1934713408
        %v4684 = vunpack.c.0.s8 %v4683
        %v4685 = vlaneseq
        %v4686 = vshrl.u32 %v4685, 7
        %v4687 = vsub.s32 %v4684, %v4686
        %v4688 = vrot.slane %v4674, %v4687
        %v4689 = vcombine.low %v4624, %v4640
        %v4690 = vcombine.high %v4624, %v4640
        %v4692 = vunpack.c.l.s4 1934713408
        %v4693 = vunpack.c.0.s8 %v4692
        %v4694 = vlaneseq
        %v4695 = vshrl.u32 %v4694, 7
        %v4696 = vsub.s32 %v4693, %v4695
        %v4697 = vrot.slane %v4689, %v4696
        %v4699 = vunpack.c.l.s4 1934713408
        %v4700 = vunpack.c.0.s8 %v4699
        %v4701 = vlaneseq
        %v4702 = vshrl.u32 %v4701, 7
        %v4703 = vsub.s32 %v4700, %v4702
        %v4704 = vrot.slane %v4690, %v4703
        %v4705 = vcombine.low %v4649, %v4665
        %v4706 = vcombine.high %v4649, %v4665
        %v4708 = vunpack.c.l.s4 1934713408
        %v4709 = vunpack.c.0.s8 %v4708
        %v4710 = vlaneseq
        %v4711 = vshrl.u32 %v4710, 7
        %v4712 = vsub.s32 %v4709, %v4711
        %v4713 = vrot.slane %v4705, %v4712
        %v4715 = vunpack.c.l.s4 1934713408
        %v4716 = vunpack.c.0.s8 %v4715
        %v4717 = vlaneseq
        %v4718 = vshrl.u32 %v4717, 7
        %v4719 = vsub.s32 %v4716, %v4718
        %v4720 = vrot.slane %v4706, %v4719
        %v4721 = vcombine.low %v4656, %v4672
        %v4722 = vcombine.high %v4656, %v4672
        %v4724 = vunpack.c.l.s4 1934713408
        %v4725 = vunpack.c.0.s8 %v4724
        %v4726 = vlaneseq
        %v4727 = vshrl.u32 %v4726, 7
        %v4728 = vsub.s32 %v4725, %v4727
        %v4729 = vrot.slane %v4721, %v4728
        %v4731 = vunpack.c.l.s4 1934713408
        %v4732 = vunpack.c.0.s8 %v4731
        %v4733 = vlaneseq
        %v4734 = vshrl.u32 %v4733, 7
        %v4735 = vsub.s32 %v4732, %v4734
        %v4736 = vrot.slane %v4722, %v4735
        %v4737 = vcombine.low %v4681, %v4713
        %v4738 = vcombine.high %v4681, %v4713
        %v4739 = vcombine.low %v4688, %v4720
        %v4740 = vcombine.high %v4688, %v4720
        %v4741 = vcombine.low %v4697, %v4729
        %v4742 = vcombine.high %v4697, %v4729
        %v4743 = vcombine.low %v4704, %v4736
        %v4744 = vcombine.high %v4704, %v4736
        %v4745 = vcombine.low %v4564, %v4572
        %v4746 = vcombine.high %v4564, %v4572
        %v4748 = vunpack.c.l.s4 1983009808
        %v4749 = vunpack.c.0.s8 %v4748
        %v4750 = vlaneseq
        %v4751 = vshrl.u32 %v4750, 7
        %v4752 = vsub.s32 %v4749, %v4751
        %v4753 = vrot.slane %v4745, %v4752
        %v4755 = vunpack.c.l.s4 1983009808
        %v4756 = vunpack.c.0.s8 %v4755
        %v4757 = vlaneseq
        %v4758 = vshrl.u32 %v4757, 7
        %v4759 = vsub.s32 %v4756, %v4758
        %v4760 = vrot.slane %v4746, %v4759
        %v4761 = vcombine.low %v4568, %v4576
        %v4762 = vcombine.high %v4568, %v4576
        %v4764 = vunpack.c.l.s4 1983009808
        %v4765 = vunpack.c.0.s8 %v4764
        %v4766 = vlaneseq
        %v4767 = vshrl.u32 %v4766, 7
        %v4768 = vsub.s32 %v4765, %v4767
        %v4769 = vrot.slane %v4761, %v4768
        %v4771 = vunpack.c.l.s4 1983009808
        %v4772 = vunpack.c.0.s8 %v4771
        %v4773 = vlaneseq
        %v4774 = vshrl.u32 %v4773, 7
        %v4775 = vsub.s32 %v4772, %v4774
        %v4776 = vrot.slane %v4762, %v4775
        %v4777 = vcombine.low %v4580, %v4588
        %v4778 = vcombine.high %v4580, %v4588
        %v4780 = vunpack.c.l.s4 1983009808
        %v4781 = vunpack.c.0.s8 %v4780
        %v4782 = vlaneseq
        %v4783 = vshrl.u32 %v4782, 7
        %v4784 = vsub.s32 %v4781, %v4783
        %v4785 = vrot.slane %v4777, %v4784
        %v4787 = vunpack.c.l.s4 1983009808
        %v4788 = vunpack.c.0.s8 %v4787
        %v4789 = vlaneseq
        %v4790 = vshrl.u32 %v4789, 7
        %v4791 = vsub.s32 %v4788, %v4790
        %v4792 = vrot.slane %v4778, %v4791
        %v4793 = vcombine.low %v4584, %v4592
        %v4794 = vcombine.high %v4584, %v4592
        %v4796 = vunpack.c.l.s4 1983009808
        %v4797 = vunpack.c.0.s8 %v4796
        %v4798 = vlaneseq
        %v4799 = vshrl.u32 %v4798, 7
        %v4800 = vsub.s32 %v4797, %v4799
        %v4801 = vrot.slane %v4793, %v4800
        %v4803 = vunpack.c.l.s4 1983009808
        %v4804 = vunpack.c.0.s8 %v4803
        %v4805 = vlaneseq
        %v4806 = vshrl.u32 %v4805, 7
        %v4807 = vsub.s32 %v4804, %v4806
        %v4808 = vrot.slane %v4794, %v4807
        %v4809 = vcombine.low %v4753, %v4769
        %v4810 = vcombine.high %v4753, %v4769
        %v4812 = vunpack.c.l.s4 1934713408
        %v4813 = vunpack.c.0.s8 %v4812
        %v4814 = vlaneseq
        %v4815 = vshrl.u32 %v4814, 7
        %v4816 = vsub.s32 %v4813, %v4815
        %v4817 = vrot.slane %v4809, %v4816
        %v4819 = vunpack.c.l.s4 1934713408
        %v4820 = vunpack.c.0.s8 %v4819
        %v4821 = vlaneseq
        %v4822 = vshrl.u32 %v4821, 7
        %v4823 = vsub.s32 %v4820, %v4822
        %v4824 = vrot.slane %v4810, %v4823
        %v4825 = vcombine.low %v4760, %v4776
        %v4826 = vcombine.high %v4760, %v4776
        %v4828 = vunpack.c.l.s4 1934713408
        %v4829 = vunpack.c.0.s8 %v4828
        %v4830 = vlaneseq
        %v4831 = vshrl.u32 %v4830, 7
        %v4832 = vsub.s32 %v4829, %v4831
        %v4833 = vrot.slane %v4825, %v4832
        %v4835 = vunpack.c.l.s4 1934713408
        %v4836 = vunpack.c.0.s8 %v4835
        %v4837 = vlaneseq
        %v4838 = vshrl.u32 %v4837, 7
        %v4839 = vsub.s32 %v4836, %v4838
        %v4840 = vrot.slane %v4826, %v4839
        %v4841 = vcombine.low %v4785, %v4801
        %v4842 = vcombine.high %v4785, %v4801
        %v4844 = vunpack.c.l.s4 1934713408
        %v4845 = vunpack.c.0.s8 %v4844
        %v4846 = vlaneseq
        %v4847 = vshrl.u32 %v4846, 7
        %v4848 = vsub.s32 %v4845, %v4847
        %v4849 = vrot.slane %v4841, %v4848
        %v4851 = vunpack.c.l.s4 1934713408
        %v4852 = vunpack.c.0.s8 %v4851
        %v4853 = vlaneseq
        %v4854 = vshrl.u32 %v4853, 7
        %v4855 = vsub.s32 %v4852, %v4854
        %v4856 = vrot.slane %v4842, %v4855
        %v4857 = vcombine.low %v4792, %v4808
        %v4858 = vcombine.high %v4792, %v4808
        %v4860 = vunpack.c.l.s4 1934713408
        %v4861 = vunpack.c.0.s8 %v4860
        %v4862 = vlaneseq
        %v4863 = vshrl.u32 %v4862, 7
        %v4864 = vsub.s32 %v4861, %v4863
        %v4865 = vrot.slane %v4857, %v4864
        %v4867 = vunpack.c.l.s4 1934713408
        %v4868 = vunpack.c.0.s8 %v4867
        %v4869 = vlaneseq
        %v4870 = vshrl.u32 %v4869, 7
        %v4871 = vsub.s32 %v4868, %v4870
        %v4872 = vrot.slane %v4858, %v4871
        %v4873 = vcombine.low %v4817, %v4849
        %v4874 = vcombine.high %v4817, %v4849
        %v4875 = vcombine.low %v4824, %v4856
        %v4876 = vcombine.high %v4824, %v4856
        %v4877 = vcombine.low %v4833, %v4865
        %v4878 = vcombine.high %v4833, %v4865
        %v4879 = vcombine.low %v4840, %v4872
        %v4880 = vcombine.high %v4840, %v4872
        %4882 = vrot.lane.b32.xlu0 %v4738, 16
        %v4883 = vpop.permute.xlu0 %4882
        %4886 = vrot.lane.b32.xlu0 %v4739, 32
        %v4887 = vpop.permute.xlu0 %4886
        %4890 = vrot.lane.b32.xlu0 %v4740, 48
        %v4891 = vpop.permute.xlu0 %4890
        %4894 = vrot.lane.b32.xlu0 %v4741, 64
        %v4895 = vpop.permute.xlu0 %4894
        %4898 = vrot.lane.b32.xlu0 %v4742, 80
        %v4899 = vpop.permute.xlu0 %4898
        %4902 = vrot.lane.b32.xlu0 %v4743, 96
        %v4903 = vpop.permute.xlu0 %4902
        %4906 = vrot.lane.b32.xlu0 %v4744, 112
        %v4907 = vpop.permute.xlu0 %4906
        %4910 = vrot.lane.b32.xlu0 %v4874, 16
        %v4911 = vpop.permute.xlu0 %4910
        %4914 = vrot.lane.b32.xlu0 %v4875, 32
        %v4915 = vpop.permute.xlu0 %4914
        %4918 = vrot.lane.b32.xlu0 %v4876, 48
        %v4919 = vpop.permute.xlu0 %4918
        %4922 = vrot.lane.b32.xlu0 %v4877, 64
        %v4923 = vpop.permute.xlu0 %4922
        %4926 = vrot.lane.b32.xlu0 %v4878, 80
        %v4927 = vpop.permute.xlu0 %4926
        %4930 = vrot.lane.b32.xlu0 %v4879, 96
        %v4931 = vpop.permute.xlu0 %4930
        %4934 = vrot.lane.b32.xlu0 %v4880, 112
        %v4935 = vpop.permute.xlu0 %4934
        %v4937 = vsel %vm539, %v4737, %v4883
        %v4938 = vsel %vm541, %v4937, %v4887
        %v4939 = vsel %vm543, %v4938, %v4891
        %v4940 = vsel %vm545, %v4939, %v4895
        %v4941 = vsel %vm547, %v4940, %v4899
        %v4942 = vsel %vm549, %v4941, %v4903
        %v4943 = vsel %vm551, %v4942, %v4907
        %v4944 = vsel %vm539, %v4873, %v4911
        %v4945 = vsel %vm541, %v4944, %v4915
        %v4946 = vsel %vm543, %v4945, %v4919
        %v4947 = vsel %vm545, %v4946, %v4923
        %v4948 = vsel %vm547, %v4947, %v4927
        %v4949 = vsel %vm549, %v4948, %v4931
        %v4950 = vsel %vm551, %v4949, %v4935
        %4951 = vrot.lane.b32.xlu0 %v4165, 126
        %v4952 = vpop.permute.xlu0 %4951
        %4953 = vrot.lane.b32.xlu0 %v4167, 126
        %v4954 = vpop.permute.xlu0 %4953
        %4955 = vrot.lane.b32.xlu0 %v4170, 126
        %v4956 = vpop.permute.xlu0 %4955
        %4957 = vrot.lane.b32.xlu0 %v4172, 126
        %v4958 = vpop.permute.xlu0 %4957
        %4959 = vrot.lane.b32.xlu0 %v4175, 126
        %v4960 = vpop.permute.xlu0 %4959
        %4961 = vrot.lane.b32.xlu0 %v4177, 126
        %v4962 = vpop.permute.xlu0 %4961
        %4963 = vrot.lane.b32.xlu0 %v4180, 126
        %v4964 = vpop.permute.xlu0 %4963
        %4965 = vrot.lane.b32.xlu0 %v4182, 126
        %v4966 = vpop.permute.xlu0 %4965
        %4967 = vrot.lane.b32.xlu0 %v4185, 126
        %v4968 = vpop.permute.xlu0 %4967
        %4969 = vrot.lane.b32.xlu0 %v4187, 126
        %v4970 = vpop.permute.xlu0 %4969
        %4971 = vrot.lane.b32.xlu0 %v4190, 126
        %v4972 = vpop.permute.xlu0 %4971
        %4973 = vrot.lane.b32.xlu0 %v4192, 126
        %v4974 = vpop.permute.xlu0 %4973
        %4975 = vrot.lane.b32.xlu0 %v4195, 126
        %v4976 = vpop.permute.xlu0 %4975
        %4977 = vrot.lane.b32.xlu0 %v4197, 126
        %v4978 = vpop.permute.xlu0 %4977
        %4979 = vrot.lane.b32.xlu0 %v4200, 126
        %v4980 = vpop.permute.xlu0 %4979
        %4981 = vrot.lane.b32.xlu0 %v4202, 126
        %v4982 = vpop.permute.xlu0 %4981
        %v4999 = vcombine.low %v4952, %v4960
        %v5000 = vcombine.high %v4952, %v4960
        %v5002 = vunpack.c.l.s4 1983009808
        %v5003 = vunpack.c.0.s8 %v5002
        %v5004 = vlaneseq
        %v5005 = vshrl.u32 %v5004, 7
        %v5006 = vsub.s32 %v5003, %v5005
        %v5007 = vrot.slane %v4999, %v5006
        %v5009 = vunpack.c.l.s4 1983009808
        %v5010 = vunpack.c.0.s8 %v5009
        %v5011 = vlaneseq
        %v5012 = vshrl.u32 %v5011, 7
        %v5013 = vsub.s32 %v5010, %v5012
        %v5014 = vrot.slane %v5000, %v5013
        %v5015 = vcombine.low %v4956, %v4964
        %v5016 = vcombine.high %v4956, %v4964
        %v5018 = vunpack.c.l.s4 1983009808
        %v5019 = vunpack.c.0.s8 %v5018
        %v5020 = vlaneseq
        %v5021 = vshrl.u32 %v5020, 7
        %v5022 = vsub.s32 %v5019, %v5021
        %v5023 = vrot.slane %v5015, %v5022
        %v5025 = vunpack.c.l.s4 1983009808
        %v5026 = vunpack.c.0.s8 %v5025
        %v5027 = vlaneseq
        %v5028 = vshrl.u32 %v5027, 7
        %v5029 = vsub.s32 %v5026, %v5028
        %v5030 = vrot.slane %v5016, %v5029
        %v5031 = vcombine.low %v4968, %v4976
        %v5032 = vcombine.high %v4968, %v4976
        %v5034 = vunpack.c.l.s4 1983009808
        %v5035 = vunpack.c.0.s8 %v5034
        %v5036 = vlaneseq
        %v5037 = vshrl.u32 %v5036, 7
        %v5038 = vsub.s32 %v5035, %v5037
        %v5039 = vrot.slane %v5031, %v5038
        %v5041 = vunpack.c.l.s4 1983009808
        %v5042 = vunpack.c.0.s8 %v5041
        %v5043 = vlaneseq
        %v5044 = vshrl.u32 %v5043, 7
        %v5045 = vsub.s32 %v5042, %v5044
        %v5046 = vrot.slane %v5032, %v5045
        %v5047 = vcombine.low %v4972, %v4980
        %v5048 = vcombine.high %v4972, %v4980
        %v5050 = vunpack.c.l.s4 1983009808
        %v5051 = vunpack.c.0.s8 %v5050
        %v5052 = vlaneseq
        %v5053 = vshrl.u32 %v5052, 7
        %v5054 = vsub.s32 %v5051, %v5053
        %v5055 = vrot.slane %v5047, %v5054
        %v5057 = vunpack.c.l.s4 1983009808
        %v5058 = vunpack.c.0.s8 %v5057
        %v5059 = vlaneseq
        %v5060 = vshrl.u32 %v5059, 7
        %v5061 = vsub.s32 %v5058, %v5060
        %v5062 = vrot.slane %v5048, %v5061
        %v5063 = vcombine.low %v5007, %v5023
        %v5064 = vcombine.high %v5007, %v5023
        %v5066 = vunpack.c.l.s4 1934713408
        %v5067 = vunpack.c.0.s8 %v5066
        %v5068 = vlaneseq
        %v5069 = vshrl.u32 %v5068, 7
        %v5070 = vsub.s32 %v5067, %v5069
        %v5071 = vrot.slane %v5063, %v5070
        %v5073 = vunpack.c.l.s4 1934713408
        %v5074 = vunpack.c.0.s8 %v5073
        %v5075 = vlaneseq
        %v5076 = vshrl.u32 %v5075, 7
        %v5077 = vsub.s32 %v5074, %v5076
        %v5078 = vrot.slane %v5064, %v5077
        %v5079 = vcombine.low %v5014, %v5030
        %v5080 = vcombine.high %v5014, %v5030
        %v5082 = vunpack.c.l.s4 1934713408
        %v5083 = vunpack.c.0.s8 %v5082
        %v5084 = vlaneseq
        %v5085 = vshrl.u32 %v5084, 7
        %v5086 = vsub.s32 %v5083, %v5085
        %v5087 = vrot.slane %v5079, %v5086
        %v5089 = vunpack.c.l.s4 1934713408
        %v5090 = vunpack.c.0.s8 %v5089
        %v5091 = vlaneseq
        %v5092 = vshrl.u32 %v5091, 7
        %v5093 = vsub.s32 %v5090, %v5092
        %v5094 = vrot.slane %v5080, %v5093
        %v5095 = vcombine.low %v5039, %v5055
        %v5096 = vcombine.high %v5039, %v5055
        %v5098 = vunpack.c.l.s4 1934713408
        %v5099 = vunpack.c.0.s8 %v5098
        %v5100 = vlaneseq
        %v5101 = vshrl.u32 %v5100, 7
        %v5102 = vsub.s32 %v5099, %v5101
        %v5103 = vrot.slane %v5095, %v5102
        %v5105 = vunpack.c.l.s4 1934713408
        %v5106 = vunpack.c.0.s8 %v5105
        %v5107 = vlaneseq
        %v5108 = vshrl.u32 %v5107, 7
        %v5109 = vsub.s32 %v5106, %v5108
        %v5110 = vrot.slane %v5096, %v5109
        %v5111 = vcombine.low %v5046, %v5062
        %v5112 = vcombine.high %v5046, %v5062
        %v5114 = vunpack.c.l.s4 1934713408
        %v5115 = vunpack.c.0.s8 %v5114
        %v5116 = vlaneseq
        %v5117 = vshrl.u32 %v5116, 7
        %v5118 = vsub.s32 %v5115, %v5117
        %v5119 = vrot.slane %v5111, %v5118
        %v5121 = vunpack.c.l.s4 1934713408
        %v5122 = vunpack.c.0.s8 %v5121
        %v5123 = vlaneseq
        %v5124 = vshrl.u32 %v5123, 7
        %v5125 = vsub.s32 %v5122, %v5124
        %v5126 = vrot.slane %v5112, %v5125
        %v5127 = vcombine.low %v5071, %v5103
        %v5128 = vcombine.high %v5071, %v5103
        %v5129 = vcombine.low %v5078, %v5110
        %v5130 = vcombine.high %v5078, %v5110
        %v5131 = vcombine.low %v5087, %v5119
        %v5132 = vcombine.high %v5087, %v5119
        %v5133 = vcombine.low %v5094, %v5126
        %v5134 = vcombine.high %v5094, %v5126
        %v5135 = vcombine.low %v4954, %v4962
        %v5136 = vcombine.high %v4954, %v4962
        %v5138 = vunpack.c.l.s4 1983009808
        %v5139 = vunpack.c.0.s8 %v5138
        %v5140 = vlaneseq
        %v5141 = vshrl.u32 %v5140, 7
        %v5142 = vsub.s32 %v5139, %v5141
        %v5143 = vrot.slane %v5135, %v5142
        %v5145 = vunpack.c.l.s4 1983009808
        %v5146 = vunpack.c.0.s8 %v5145
        %v5147 = vlaneseq
        %v5148 = vshrl.u32 %v5147, 7
        %v5149 = vsub.s32 %v5146, %v5148
        %v5150 = vrot.slane %v5136, %v5149
        %v5151 = vcombine.low %v4958, %v4966
        %v5152 = vcombine.high %v4958, %v4966
        %v5154 = vunpack.c.l.s4 1983009808
        %v5155 = vunpack.c.0.s8 %v5154
        %v5156 = vlaneseq
        %v5157 = vshrl.u32 %v5156, 7
        %v5158 = vsub.s32 %v5155, %v5157
        %v5159 = vrot.slane %v5151, %v5158
        %v5161 = vunpack.c.l.s4 1983009808
        %v5162 = vunpack.c.0.s8 %v5161
        %v5163 = vlaneseq
        %v5164 = vshrl.u32 %v5163, 7
        %v5165 = vsub.s32 %v5162, %v5164
        %v5166 = vrot.slane %v5152, %v5165
        %v5167 = vcombine.low %v4970, %v4978
        %v5168 = vcombine.high %v4970, %v4978
        %v5170 = vunpack.c.l.s4 1983009808
        %v5171 = vunpack.c.0.s8 %v5170
        %v5172 = vlaneseq
        %v5173 = vshrl.u32 %v5172, 7
        %v5174 = vsub.s32 %v5171, %v5173
        %v5175 = vrot.slane %v5167, %v5174
        %v5177 = vunpack.c.l.s4 1983009808
        %v5178 = vunpack.c.0.s8 %v5177
        %v5179 = vlaneseq
        %v5180 = vshrl.u32 %v5179, 7
        %v5181 = vsub.s32 %v5178, %v5180
        %v5182 = vrot.slane %v5168, %v5181
        %v5183 = vcombine.low %v4974, %v4982
        %v5184 = vcombine.high %v4974, %v4982
        %v5186 = vunpack.c.l.s4 1983009808
        %v5187 = vunpack.c.0.s8 %v5186
        %v5188 = vlaneseq
        %v5189 = vshrl.u32 %v5188, 7
        %v5190 = vsub.s32 %v5187, %v5189
        %v5191 = vrot.slane %v5183, %v5190
        %v5193 = vunpack.c.l.s4 1983009808
        %v5194 = vunpack.c.0.s8 %v5193
        %v5195 = vlaneseq
        %v5196 = vshrl.u32 %v5195, 7
        %v5197 = vsub.s32 %v5194, %v5196
        %v5198 = vrot.slane %v5184, %v5197
        %v5199 = vcombine.low %v5143, %v5159
        %v5200 = vcombine.high %v5143, %v5159
        %v5202 = vunpack.c.l.s4 1934713408
        %v5203 = vunpack.c.0.s8 %v5202
        %v5204 = vlaneseq
        %v5205 = vshrl.u32 %v5204, 7
        %v5206 = vsub.s32 %v5203, %v5205
        %v5207 = vrot.slane %v5199, %v5206
        %v5209 = vunpack.c.l.s4 1934713408
        %v5210 = vunpack.c.0.s8 %v5209
        %v5211 = vlaneseq
        %v5212 = vshrl.u32 %v5211, 7
        %v5213 = vsub.s32 %v5210, %v5212
        %v5214 = vrot.slane %v5200, %v5213
        %v5215 = vcombine.low %v5150, %v5166
        %v5216 = vcombine.high %v5150, %v5166
        %v5218 = vunpack.c.l.s4 1934713408
        %v5219 = vunpack.c.0.s8 %v5218
        %v5220 = vlaneseq
        %v5221 = vshrl.u32 %v5220, 7
        %v5222 = vsub.s32 %v5219, %v5221
        %v5223 = vrot.slane %v5215, %v5222
        %v5225 = vunpack.c.l.s4 1934713408
        %v5226 = vunpack.c.0.s8 %v5225
        %v5227 = vlaneseq
        %v5228 = vshrl.u32 %v5227, 7
        %v5229 = vsub.s32 %v5226, %v5228
        %v5230 = vrot.slane %v5216, %v5229
        %v5231 = vcombine.low %v5175, %v5191
        %v5232 = vcombine.high %v5175, %v5191
        %v5234 = vunpack.c.l.s4 1934713408
        %v5235 = vunpack.c.0.s8 %v5234
        %v5236 = vlaneseq
        %v5237 = vshrl.u32 %v5236, 7
        %v5238 = vsub.s32 %v5235, %v5237
        %v5239 = vrot.slane %v5231, %v5238
        %v5241 = vunpack.c.l.s4 1934713408
        %v5242 = vunpack.c.0.s8 %v5241
        %v5243 = vlaneseq
        %v5244 = vshrl.u32 %v5243, 7
        %v5245 = vsub.s32 %v5242, %v5244
        %v5246 = vrot.slane %v5232, %v5245
        %v5247 = vcombine.low %v5182, %v5198
        %v5248 = vcombine.high %v5182, %v5198
        %v5250 = vunpack.c.l.s4 1934713408
        %v5251 = vunpack.c.0.s8 %v5250
        %v5252 = vlaneseq
        %v5253 = vshrl.u32 %v5252, 7
        %v5254 = vsub.s32 %v5251, %v5253
        %v5255 = vrot.slane %v5247, %v5254
        %v5257 = vunpack.c.l.s4 1934713408
        %v5258 = vunpack.c.0.s8 %v5257
        %v5259 = vlaneseq
        %v5260 = vshrl.u32 %v5259, 7
        %v5261 = vsub.s32 %v5258, %v5260
        %v5262 = vrot.slane %v5248, %v5261
        %v5263 = vcombine.low %v5207, %v5239
        %v5264 = vcombine.high %v5207, %v5239
        %v5265 = vcombine.low %v5214, %v5246
        %v5266 = vcombine.high %v5214, %v5246
        %v5267 = vcombine.low %v5223, %v5255
        %v5268 = vcombine.high %v5223, %v5255
        %v5269 = vcombine.low %v5230, %v5262
        %v5270 = vcombine.high %v5230, %v5262
        %5272 = vrot.lane.b32.xlu0 %v5128, 16
        %v5273 = vpop.permute.xlu0 %5272
        %5276 = vrot.lane.b32.xlu0 %v5129, 32
        %v5277 = vpop.permute.xlu0 %5276
        %5280 = vrot.lane.b32.xlu0 %v5130, 48
        %v5281 = vpop.permute.xlu0 %5280
        %5284 = vrot.lane.b32.xlu0 %v5131, 64
        %v5285 = vpop.permute.xlu0 %5284
        %5288 = vrot.lane.b32.xlu0 %v5132, 80
        %v5289 = vpop.permute.xlu0 %5288
        %5292 = vrot.lane.b32.xlu0 %v5133, 96
        %v5293 = vpop.permute.xlu0 %5292
        %5296 = vrot.lane.b32.xlu0 %v5134, 112
        %v5297 = vpop.permute.xlu0 %5296
        %5300 = vrot.lane.b32.xlu0 %v5264, 16
        %v5301 = vpop.permute.xlu0 %5300
        %5304 = vrot.lane.b32.xlu0 %v5265, 32
        %v5305 = vpop.permute.xlu0 %5304
        %5308 = vrot.lane.b32.xlu0 %v5266, 48
        %v5309 = vpop.permute.xlu0 %5308
        %5312 = vrot.lane.b32.xlu0 %v5267, 64
        %v5313 = vpop.permute.xlu0 %5312
        %5316 = vrot.lane.b32.xlu0 %v5268, 80
        %v5317 = vpop.permute.xlu0 %5316
        %5320 = vrot.lane.b32.xlu0 %v5269, 96
        %v5321 = vpop.permute.xlu0 %5320
        %5324 = vrot.lane.b32.xlu0 %v5270, 112
        %v5325 = vpop.permute.xlu0 %5324
        %v5327 = vsel %vm539, %v5127, %v5273
        %v5328 = vsel %vm541, %v5327, %v5277
        %v5329 = vsel %vm543, %v5328, %v5281
        %v5330 = vsel %vm545, %v5329, %v5285
        %v5331 = vsel %vm547, %v5330, %v5289
        %v5332 = vsel %vm549, %v5331, %v5293
        %v5333 = vsel %vm551, %v5332, %v5297
        %v5334 = vsel %vm539, %v5263, %v5301
        %v5335 = vsel %vm541, %v5334, %v5305
        %v5336 = vsel %vm543, %v5335, %v5309
        %v5337 = vsel %vm545, %v5336, %v5313
        %v5338 = vsel %vm547, %v5337, %v5317
        %v5339 = vsel %vm549, %v5338, %v5321
        %v5340 = vsel %vm551, %v5339, %v5325
        %v5341 = vrot.slane %v2993, 2
        %v5342 = vrot.slane %v2994, 2
        %v5343 = vsel %vm1727, %v5341, %v5342
        %v5344 = vrot.slane %v2995, 2
        %v5345 = vsel %vm1727, %v5342, %v5344
        %v5346 = vrot.slane %v2996, 2
        %v5347 = vrot.slane %v2997, 2
        %v5348 = vsel %vm1727, %v5346, %v5347
        %v5349 = vrot.slane %v2998, 2
        %v5350 = vsel %vm1727, %v5347, %v5349
        %v5351 = vrot.slane %v2999, 2
        %v5352 = vrot.slane %v3000, 2
        %v5353 = vsel %vm1727, %v5351, %v5352
        %v5354 = vrot.slane %v3001, 2
        %v5355 = vsel %vm1727, %v5352, %v5354
        %v5356 = vrot.slane %v3002, 2
        %v5357 = vrot.slane %v3003, 2
        %v5358 = vsel %vm1727, %v5356, %v5357
        %v5359 = vrot.slane %v3004, 2
        %v5360 = vsel %vm1727, %v5357, %v5359
        %v5361 = vrot.slane %v3005, 2
        %v5362 = vrot.slane %v3006, 2
        %v5363 = vsel %vm1727, %v5361, %v5362
        %v5364 = vrot.slane %v3007, 2
        %v5365 = vsel %vm1727, %v5362, %v5364
        %v5366 = vrot.slane %v3008, 2
        %v5367 = vrot.slane %v3009, 2
        %v5368 = vsel %vm1727, %v5366, %v5367
        %v5369 = vrot.slane %v3010, 2
        %v5370 = vsel %vm1727, %v5367, %v5369
        %v5371 = vrot.slane %v3011, 2
        %v5372 = vrot.slane %v3012, 2
        %v5373 = vsel %vm1727, %v5371, %v5372
        %v5374 = vrot.slane %v3013, 2
        %v5375 = vsel %vm1727, %v5372, %v5374
        %v5376 = vrot.slane %v3014, 2
        %v5377 = vrot.slane %v3015, 2
        %v5378 = vsel %vm1727, %v5376, %v5377
        %v5379 = vrot.slane %v3016, 2
        %v5380 = vsel %vm1727, %v5377, %v5379
        %v5397 = vcombine.low %v5343, %v5353
        %v5398 = vcombine.high %v5343, %v5353
        %v5400 = vunpack.c.l.s4 1983009808
        %v5401 = vunpack.c.0.s8 %v5400
        %v5402 = vlaneseq
        %v5403 = vshrl.u32 %v5402, 7
        %v5404 = vsub.s32 %v5401, %v5403
        %v5405 = vrot.slane %v5397, %v5404
        %v5407 = vunpack.c.l.s4 1983009808
        %v5408 = vunpack.c.0.s8 %v5407
        %v5409 = vlaneseq
        %v5410 = vshrl.u32 %v5409, 7
        %v5411 = vsub.s32 %v5408, %v5410
        %v5412 = vrot.slane %v5398, %v5411
        %v5413 = vcombine.low %v5348, %v5358
        %v5414 = vcombine.high %v5348, %v5358
        %v5416 = vunpack.c.l.s4 1983009808
        %v5417 = vunpack.c.0.s8 %v5416
        %v5418 = vlaneseq
        %v5419 = vshrl.u32 %v5418, 7
        %v5420 = vsub.s32 %v5417, %v5419
        %v5421 = vrot.slane %v5413, %v5420
        %v5423 = vunpack.c.l.s4 1983009808
        %v5424 = vunpack.c.0.s8 %v5423
        %v5425 = vlaneseq
        %v5426 = vshrl.u32 %v5425, 7
        %v5427 = vsub.s32 %v5424, %v5426
        %v5428 = vrot.slane %v5414, %v5427
        %v5429 = vcombine.low %v5363, %v5373
        %v5430 = vcombine.high %v5363, %v5373
        %v5432 = vunpack.c.l.s4 1983009808
        %v5433 = vunpack.c.0.s8 %v5432
        %v5434 = vlaneseq
        %v5435 = vshrl.u32 %v5434, 7
        %v5436 = vsub.s32 %v5433, %v5435
        %v5437 = vrot.slane %v5429, %v5436
        %v5439 = vunpack.c.l.s4 1983009808
        %v5440 = vunpack.c.0.s8 %v5439
        %v5441 = vlaneseq
        %v5442 = vshrl.u32 %v5441, 7
        %v5443 = vsub.s32 %v5440, %v5442
        %v5444 = vrot.slane %v5430, %v5443
        %v5445 = vcombine.low %v5368, %v5378
        %v5446 = vcombine.high %v5368, %v5378
        %v5448 = vunpack.c.l.s4 1983009808
        %v5449 = vunpack.c.0.s8 %v5448
        %v5450 = vlaneseq
        %v5451 = vshrl.u32 %v5450, 7
        %v5452 = vsub.s32 %v5449, %v5451
        %v5453 = vrot.slane %v5445, %v5452
        %v5455 = vunpack.c.l.s4 1983009808
        %v5456 = vunpack.c.0.s8 %v5455
        %v5457 = vlaneseq
        %v5458 = vshrl.u32 %v5457, 7
        %v5459 = vsub.s32 %v5456, %v5458
        %v5460 = vrot.slane %v5446, %v5459
        %v5461 = vcombine.low %v5405, %v5421
        %v5462 = vcombine.high %v5405, %v5421
        %v5464 = vunpack.c.l.s4 1934713408
        %v5465 = vunpack.c.0.s8 %v5464
        %v5466 = vlaneseq
        %v5467 = vshrl.u32 %v5466, 7
        %v5468 = vsub.s32 %v5465, %v5467
        %v5469 = vrot.slane %v5461, %v5468
        %v5471 = vunpack.c.l.s4 1934713408
        %v5472 = vunpack.c.0.s8 %v5471
        %v5473 = vlaneseq
        %v5474 = vshrl.u32 %v5473, 7
        %v5475 = vsub.s32 %v5472, %v5474
        %v5476 = vrot.slane %v5462, %v5475
        %v5477 = vcombine.low %v5412, %v5428
        %v5478 = vcombine.high %v5412, %v5428
        %v5480 = vunpack.c.l.s4 1934713408
        %v5481 = vunpack.c.0.s8 %v5480
        %v5482 = vlaneseq
        %v5483 = vshrl.u32 %v5482, 7
        %v5484 = vsub.s32 %v5481, %v5483
        %v5485 = vrot.slane %v5477, %v5484
        %v5487 = vunpack.c.l.s4 1934713408
        %v5488 = vunpack.c.0.s8 %v5487
        %v5489 = vlaneseq
        %v5490 = vshrl.u32 %v5489, 7
        %v5491 = vsub.s32 %v5488, %v5490
        %v5492 = vrot.slane %v5478, %v5491
        %v5493 = vcombine.low %v5437, %v5453
        %v5494 = vcombine.high %v5437, %v5453
        %v5496 = vunpack.c.l.s4 1934713408
        %v5497 = vunpack.c.0.s8 %v5496
        %v5498 = vlaneseq
        %v5499 = vshrl.u32 %v5498, 7
        %v5500 = vsub.s32 %v5497, %v5499
        %v5501 = vrot.slane %v5493, %v5500
        %v5503 = vunpack.c.l.s4 1934713408
        %v5504 = vunpack.c.0.s8 %v5503
        %v5505 = vlaneseq
        %v5506 = vshrl.u32 %v5505, 7
        %v5507 = vsub.s32 %v5504, %v5506
        %v5508 = vrot.slane %v5494, %v5507
        %v5509 = vcombine.low %v5444, %v5460
        %v5510 = vcombine.high %v5444, %v5460
        %v5512 = vunpack.c.l.s4 1934713408
        %v5513 = vunpack.c.0.s8 %v5512
        %v5514 = vlaneseq
        %v5515 = vshrl.u32 %v5514, 7
        %v5516 = vsub.s32 %v5513, %v5515
        %v5517 = vrot.slane %v5509, %v5516
        %v5519 = vunpack.c.l.s4 1934713408
        %v5520 = vunpack.c.0.s8 %v5519
        %v5521 = vlaneseq
        %v5522 = vshrl.u32 %v5521, 7
        %v5523 = vsub.s32 %v5520, %v5522
        %v5524 = vrot.slane %v5510, %v5523
        %v5525 = vcombine.low %v5469, %v5501
        %v5526 = vcombine.high %v5469, %v5501
        %v5527 = vcombine.low %v5476, %v5508
        %v5528 = vcombine.high %v5476, %v5508
        %v5529 = vcombine.low %v5485, %v5517
        %v5530 = vcombine.high %v5485, %v5517
        %v5531 = vcombine.low %v5492, %v5524
        %v5532 = vcombine.high %v5492, %v5524
        %v5533 = vcombine.low %v5345, %v5355
        %v5534 = vcombine.high %v5345, %v5355
        %v5536 = vunpack.c.l.s4 1983009808
        %v5537 = vunpack.c.0.s8 %v5536
        %v5538 = vlaneseq
        %v5539 = vshrl.u32 %v5538, 7
        %v5540 = vsub.s32 %v5537, %v5539
        %v5541 = vrot.slane %v5533, %v5540
        %v5543 = vunpack.c.l.s4 1983009808
        %v5544 = vunpack.c.0.s8 %v5543
        %v5545 = vlaneseq
        %v5546 = vshrl.u32 %v5545, 7
        %v5547 = vsub.s32 %v5544, %v5546
        %v5548 = vrot.slane %v5534, %v5547
        %v5549 = vcombine.low %v5350, %v5360
        %v5550 = vcombine.high %v5350, %v5360
        %v5552 = vunpack.c.l.s4 1983009808
        %v5553 = vunpack.c.0.s8 %v5552
        %v5554 = vlaneseq
        %v5555 = vshrl.u32 %v5554, 7
        %v5556 = vsub.s32 %v5553, %v5555
        %v5557 = vrot.slane %v5549, %v5556
        %v5559 = vunpack.c.l.s4 1983009808
        %v5560 = vunpack.c.0.s8 %v5559
        %v5561 = vlaneseq
        %v5562 = vshrl.u32 %v5561, 7
        %v5563 = vsub.s32 %v5560, %v5562
        %v5564 = vrot.slane %v5550, %v5563
        %v5565 = vcombine.low %v5365, %v5375
        %v5566 = vcombine.high %v5365, %v5375
        %v5568 = vunpack.c.l.s4 1983009808
        %v5569 = vunpack.c.0.s8 %v5568
        %v5570 = vlaneseq
        %v5571 = vshrl.u32 %v5570, 7
        %v5572 = vsub.s32 %v5569, %v5571
        %v5573 = vrot.slane %v5565, %v5572
        %v5575 = vunpack.c.l.s4 1983009808
        %v5576 = vunpack.c.0.s8 %v5575
        %v5577 = vlaneseq
        %v5578 = vshrl.u32 %v5577, 7
        %v5579 = vsub.s32 %v5576, %v5578
        %v5580 = vrot.slane %v5566, %v5579
        %v5581 = vcombine.low %v5370, %v5380
        %v5582 = vcombine.high %v5370, %v5380
        %v5584 = vunpack.c.l.s4 1983009808
        %v5585 = vunpack.c.0.s8 %v5584
        %v5586 = vlaneseq
        %v5587 = vshrl.u32 %v5586, 7
        %v5588 = vsub.s32 %v5585, %v5587
        %v5589 = vrot.slane %v5581, %v5588
        %v5591 = vunpack.c.l.s4 1983009808
        %v5592 = vunpack.c.0.s8 %v5591
        %v5593 = vlaneseq
        %v5594 = vshrl.u32 %v5593, 7
        %v5595 = vsub.s32 %v5592, %v5594
        %v5596 = vrot.slane %v5582, %v5595
        %v5597 = vcombine.low %v5541, %v5557
        %v5598 = vcombine.high %v5541, %v5557
        %v5600 = vunpack.c.l.s4 1934713408
        %v5601 = vunpack.c.0.s8 %v5600
        %v5602 = vlaneseq
        %v5603 = vshrl.u32 %v5602, 7
        %v5604 = vsub.s32 %v5601, %v5603
        %v5605 = vrot.slane %v5597, %v5604
        %v5607 = vunpack.c.l.s4 1934713408
        %v5608 = vunpack.c.0.s8 %v5607
        %v5609 = vlaneseq
        %v5610 = vshrl.u32 %v5609, 7
        %v5611 = vsub.s32 %v5608, %v5610
        %v5612 = vrot.slane %v5598, %v5611
        %v5613 = vcombine.low %v5548, %v5564
        %v5614 = vcombine.high %v5548, %v5564
        %v5616 = vunpack.c.l.s4 1934713408
        %v5617 = vunpack.c.0.s8 %v5616
        %v5618 = vlaneseq
        %v5619 = vshrl.u32 %v5618, 7
        %v5620 = vsub.s32 %v5617, %v5619
        %v5621 = vrot.slane %v5613, %v5620
        %v5623 = vunpack.c.l.s4 1934713408
        %v5624 = vunpack.c.0.s8 %v5623
        %v5625 = vlaneseq
        %v5626 = vshrl.u32 %v5625, 7
        %v5627 = vsub.s32 %v5624, %v5626
        %v5628 = vrot.slane %v5614, %v5627
        %v5629 = vcombine.low %v5573, %v5589
        %v5630 = vcombine.high %v5573, %v5589
        %v5632 = vunpack.c.l.s4 1934713408
        %v5633 = vunpack.c.0.s8 %v5632
        %v5634 = vlaneseq
        %v5635 = vshrl.u32 %v5634, 7
        %v5636 = vsub.s32 %v5633, %v5635
        %v5637 = vrot.slane %v5629, %v5636
        %v5639 = vunpack.c.l.s4 1934713408
        %v5640 = vunpack.c.0.s8 %v5639
        %v5641 = vlaneseq
        %v5642 = vshrl.u32 %v5641, 7
        %v5643 = vsub.s32 %v5640, %v5642
        %v5644 = vrot.slane %v5630, %v5643
        %v5645 = vcombine.low %v5580, %v5596
        %v5646 = vcombine.high %v5580, %v5596
        %v5648 = vunpack.c.l.s4 1934713408
        %v5649 = vunpack.c.0.s8 %v5648
        %v5650 = vlaneseq
        %v5651 = vshrl.u32 %v5650, 7
        %v5652 = vsub.s32 %v5649, %v5651
        %v5653 = vrot.slane %v5645, %v5652
        %v5655 = vunpack.c.l.s4 1934713408
        %v5656 = vunpack.c.0.s8 %v5655
        %v5657 = vlaneseq
        %v5658 = vshrl.u32 %v5657, 7
        %v5659 = vsub.s32 %v5656, %v5658
        %v5660 = vrot.slane %v5646, %v5659
        %v5661 = vcombine.low %v5605, %v5637
        %v5662 = vcombine.high %v5605, %v5637
        %v5663 = vcombine.low %v5612, %v5644
        %v5664 = vcombine.high %v5612, %v5644
        %v5665 = vcombine.low %v5621, %v5653
        %v5666 = vcombine.high %v5621, %v5653
        %v5667 = vcombine.low %v5628, %v5660
        %v5668 = vcombine.high %v5628, %v5660
        %5670 = vrot.lane.b32.xlu0 %v5526, 16
        %v5671 = vpop.permute.xlu0 %5670
        %5674 = vrot.lane.b32.xlu0 %v5527, 32
        %v5675 = vpop.permute.xlu0 %5674
        %5678 = vrot.lane.b32.xlu0 %v5528, 48
        %v5679 = vpop.permute.xlu0 %5678
        %5682 = vrot.lane.b32.xlu0 %v5529, 64
        %v5683 = vpop.permute.xlu0 %5682
        %5686 = vrot.lane.b32.xlu0 %v5530, 80
        %v5687 = vpop.permute.xlu0 %5686
        %5690 = vrot.lane.b32.xlu0 %v5531, 96
        %v5691 = vpop.permute.xlu0 %5690
        %5694 = vrot.lane.b32.xlu0 %v5532, 112
        %v5695 = vpop.permute.xlu0 %5694
        %5698 = vrot.lane.b32.xlu0 %v5662, 16
        %v5699 = vpop.permute.xlu0 %5698
        %5702 = vrot.lane.b32.xlu0 %v5663, 32
        %v5703 = vpop.permute.xlu0 %5702
        %5706 = vrot.lane.b32.xlu0 %v5664, 48
        %v5707 = vpop.permute.xlu0 %5706
        %5710 = vrot.lane.b32.xlu0 %v5665, 64
        %v5711 = vpop.permute.xlu0 %5710
        %5714 = vrot.lane.b32.xlu0 %v5666, 80
        %v5715 = vpop.permute.xlu0 %5714
        %5718 = vrot.lane.b32.xlu0 %v5667, 96
        %v5719 = vpop.permute.xlu0 %5718
        %5722 = vrot.lane.b32.xlu0 %v5668, 112
        %v5723 = vpop.permute.xlu0 %5722
        %v5725 = vsel %vm539, %v5525, %v5671
        %v5726 = vsel %vm541, %v5725, %v5675
        %v5727 = vsel %vm543, %v5726, %v5679
        %v5728 = vsel %vm545, %v5727, %v5683
        %v5729 = vsel %vm547, %v5728, %v5687
        %v5730 = vsel %vm549, %v5729, %v5691
        %v5731 = vsel %vm551, %v5730, %v5695
        %v5732 = vsel %vm539, %v5661, %v5699
        %v5733 = vsel %vm541, %v5732, %v5703
        %v5734 = vsel %vm543, %v5733, %v5707
        %v5735 = vsel %vm545, %v5734, %v5711
        %v5736 = vsel %vm547, %v5735, %v5715
        %v5737 = vsel %vm549, %v5736, %v5719
        %v5738 = vsel %vm551, %v5737, %v5723
        %5739 = vrot.lane.b32.xlu0 %v5343, 127
        %v5740 = vpop.permute.xlu0 %5739
        %5741 = vrot.lane.b32.xlu0 %v5345, 127
        %v5742 = vpop.permute.xlu0 %5741
        %5743 = vrot.lane.b32.xlu0 %v5348, 127
        %v5744 = vpop.permute.xlu0 %5743
        %5745 = vrot.lane.b32.xlu0 %v5350, 127
        %v5746 = vpop.permute.xlu0 %5745
        %5747 = vrot.lane.b32.xlu0 %v5353, 127
        %v5748 = vpop.permute.xlu0 %5747
        %5749 = vrot.lane.b32.xlu0 %v5355, 127
        %v5750 = vpop.permute.xlu0 %5749
        %5751 = vrot.lane.b32.xlu0 %v5358, 127
        %v5752 = vpop.permute.xlu0 %5751
        %5753 = vrot.lane.b32.xlu0 %v5360, 127
        %v5754 = vpop.permute.xlu0 %5753
        %5755 = vrot.lane.b32.xlu0 %v5363, 127
        %v5756 = vpop.permute.xlu0 %5755
        %5757 = vrot.lane.b32.xlu0 %v5365, 127
        %v5758 = vpop.permute.xlu0 %5757
        %5759 = vrot.lane.b32.xlu0 %v5368, 127
        %v5760 = vpop.permute.xlu0 %5759
        %5761 = vrot.lane.b32.xlu0 %v5370, 127
        %v5762 = vpop.permute.xlu0 %5761
        %5763 = vrot.lane.b32.xlu0 %v5373, 127
        %v5764 = vpop.permute.xlu0 %5763
        %5765 = vrot.lane.b32.xlu0 %v5375, 127
        %v5766 = vpop.permute.xlu0 %5765
        %5767 = vrot.lane.b32.xlu0 %v5378, 127
        %v5768 = vpop.permute.xlu0 %5767
        %5769 = vrot.lane.b32.xlu0 %v5380, 127
        %v5770 = vpop.permute.xlu0 %5769
        %v5787 = vcombine.low %v5740, %v5748
        %v5788 = vcombine.high %v5740, %v5748
        %v5790 = vunpack.c.l.s4 1983009808
        %v5791 = vunpack.c.0.s8 %v5790
        %v5792 = vlaneseq
        %v5793 = vshrl.u32 %v5792, 7
        %v5794 = vsub.s32 %v5791, %v5793
        %v5795 = vrot.slane %v5787, %v5794
        %v5797 = vunpack.c.l.s4 1983009808
        %v5798 = vunpack.c.0.s8 %v5797
        %v5799 = vlaneseq
        %v5800 = vshrl.u32 %v5799, 7
        %v5801 = vsub.s32 %v5798, %v5800
        %v5802 = vrot.slane %v5788, %v5801
        %v5803 = vcombine.low %v5744, %v5752
        %v5804 = vcombine.high %v5744, %v5752
        %v5806 = vunpack.c.l.s4 1983009808
        %v5807 = vunpack.c.0.s8 %v5806
        %v5808 = vlaneseq
        %v5809 = vshrl.u32 %v5808, 7
        %v5810 = vsub.s32 %v5807, %v5809
        %v5811 = vrot.slane %v5803, %v5810
        %v5813 = vunpack.c.l.s4 1983009808
        %v5814 = vunpack.c.0.s8 %v5813
        %v5815 = vlaneseq
        %v5816 = vshrl.u32 %v5815, 7
        %v5817 = vsub.s32 %v5814, %v5816
        %v5818 = vrot.slane %v5804, %v5817
        %v5819 = vcombine.low %v5756, %v5764
        %v5820 = vcombine.high %v5756, %v5764
        %v5822 = vunpack.c.l.s4 1983009808
        %v5823 = vunpack.c.0.s8 %v5822
        %v5824 = vlaneseq
        %v5825 = vshrl.u32 %v5824, 7
        %v5826 = vsub.s32 %v5823, %v5825
        %v5827 = vrot.slane %v5819, %v5826
        %v5829 = vunpack.c.l.s4 1983009808
        %v5830 = vunpack.c.0.s8 %v5829
        %v5831 = vlaneseq
        %v5832 = vshrl.u32 %v5831, 7
        %v5833 = vsub.s32 %v5830, %v5832
        %v5834 = vrot.slane %v5820, %v5833
        %v5835 = vcombine.low %v5760, %v5768
        %v5836 = vcombine.high %v5760, %v5768
        %v5838 = vunpack.c.l.s4 1983009808
        %v5839 = vunpack.c.0.s8 %v5838
        %v5840 = vlaneseq
        %v5841 = vshrl.u32 %v5840, 7
        %v5842 = vsub.s32 %v5839, %v5841
        %v5843 = vrot.slane %v5835, %v5842
        %v5845 = vunpack.c.l.s4 1983009808
        %v5846 = vunpack.c.0.s8 %v5845
        %v5847 = vlaneseq
        %v5848 = vshrl.u32 %v5847, 7
        %v5849 = vsub.s32 %v5846, %v5848
        %v5850 = vrot.slane %v5836, %v5849
        %v5851 = vcombine.low %v5795, %v5811
        %v5852 = vcombine.high %v5795, %v5811
        %v5854 = vunpack.c.l.s4 1934713408
        %v5855 = vunpack.c.0.s8 %v5854
        %v5856 = vlaneseq
        %v5857 = vshrl.u32 %v5856, 7
        %v5858 = vsub.s32 %v5855, %v5857
        %v5859 = vrot.slane %v5851, %v5858
        %v5861 = vunpack.c.l.s4 1934713408
        %v5862 = vunpack.c.0.s8 %v5861
        %v5863 = vlaneseq
        %v5864 = vshrl.u32 %v5863, 7
        %v5865 = vsub.s32 %v5862, %v5864
        %v5866 = vrot.slane %v5852, %v5865
        %v5867 = vcombine.low %v5802, %v5818
        %v5868 = vcombine.high %v5802, %v5818
        %v5870 = vunpack.c.l.s4 1934713408
        %v5871 = vunpack.c.0.s8 %v5870
        %v5872 = vlaneseq
        %v5873 = vshrl.u32 %v5872, 7
        %v5874 = vsub.s32 %v5871, %v5873
        %v5875 = vrot.slane %v5867, %v5874
        %v5877 = vunpack.c.l.s4 1934713408
        %v5878 = vunpack.c.0.s8 %v5877
        %v5879 = vlaneseq
        %v5880 = vshrl.u32 %v5879, 7
        %v5881 = vsub.s32 %v5878, %v5880
        %v5882 = vrot.slane %v5868, %v5881
        %v5883 = vcombine.low %v5827, %v5843
        %v5884 = vcombine.high %v5827, %v5843
        %v5886 = vunpack.c.l.s4 1934713408
        %v5887 = vunpack.c.0.s8 %v5886
        %v5888 = vlaneseq
        %v5889 = vshrl.u32 %v5888, 7
        %v5890 = vsub.s32 %v5887, %v5889
        %v5891 = vrot.slane %v5883, %v5890
        %v5893 = vunpack.c.l.s4 1934713408
        %v5894 = vunpack.c.0.s8 %v5893
        %v5895 = vlaneseq
        %v5896 = vshrl.u32 %v5895, 7
        %v5897 = vsub.s32 %v5894, %v5896
        %v5898 = vrot.slane %v5884, %v5897
        %v5899 = vcombine.low %v5834, %v5850
        %v5900 = vcombine.high %v5834, %v5850
        %v5902 = vunpack.c.l.s4 1934713408
        %v5903 = vunpack.c.0.s8 %v5902
        %v5904 = vlaneseq
        %v5905 = vshrl.u32 %v5904, 7
        %v5906 = vsub.s32 %v5903, %v5905
        %v5907 = vrot.slane %v5899, %v5906
        %v5909 = vunpack.c.l.s4 1934713408
        %v5910 = vunpack.c.0.s8 %v5909
        %v5911 = vlaneseq
        %v5912 = vshrl.u32 %v5911, 7
        %v5913 = vsub.s32 %v5910, %v5912
        %v5914 = vrot.slane %v5900, %v5913
        %v5915 = vcombine.low %v5859, %v5891
        %v5916 = vcombine.high %v5859, %v5891
        %v5917 = vcombine.low %v5866, %v5898
        %v5918 = vcombine.high %v5866, %v5898
        %v5919 = vcombine.low %v5875, %v5907
        %v5920 = vcombine.high %v5875, %v5907
        %v5921 = vcombine.low %v5882, %v5914
        %v5922 = vcombine.high %v5882, %v5914
        %v5923 = vcombine.low %v5742, %v5750
        %v5924 = vcombine.high %v5742, %v5750
        %v5926 = vunpack.c.l.s4 1983009808
        %v5927 = vunpack.c.0.s8 %v5926
        %v5928 = vlaneseq
        %v5929 = vshrl.u32 %v5928, 7
        %v5930 = vsub.s32 %v5927, %v5929
        %v5931 = vrot.slane %v5923, %v5930
        %v5933 = vunpack.c.l.s4 1983009808
        %v5934 = vunpack.c.0.s8 %v5933
        %v5935 = vlaneseq
        %v5936 = vshrl.u32 %v5935, 7
        %v5937 = vsub.s32 %v5934, %v5936
        %v5938 = vrot.slane %v5924, %v5937
        %v5939 = vcombine.low %v5746, %v5754
        %v5940 = vcombine.high %v5746, %v5754
        %v5942 = vunpack.c.l.s4 1983009808
        %v5943 = vunpack.c.0.s8 %v5942
        %v5944 = vlaneseq
        %v5945 = vshrl.u32 %v5944, 7
        %v5946 = vsub.s32 %v5943, %v5945
        %v5947 = vrot.slane %v5939, %v5946
        %v5949 = vunpack.c.l.s4 1983009808
        %v5950 = vunpack.c.0.s8 %v5949
        %v5951 = vlaneseq
        %v5952 = vshrl.u32 %v5951, 7
        %v5953 = vsub.s32 %v5950, %v5952
        %v5954 = vrot.slane %v5940, %v5953
        %v5955 = vcombine.low %v5758, %v5766
        %v5956 = vcombine.high %v5758, %v5766
        %v5958 = vunpack.c.l.s4 1983009808
        %v5959 = vunpack.c.0.s8 %v5958
        %v5960 = vlaneseq
        %v5961 = vshrl.u32 %v5960, 7
        %v5962 = vsub.s32 %v5959, %v5961
        %v5963 = vrot.slane %v5955, %v5962
        %v5965 = vunpack.c.l.s4 1983009808
        %v5966 = vunpack.c.0.s8 %v5965
        %v5967 = vlaneseq
        %v5968 = vshrl.u32 %v5967, 7
        %v5969 = vsub.s32 %v5966, %v5968
        %v5970 = vrot.slane %v5956, %v5969
        %v5971 = vcombine.low %v5762, %v5770
        %v5972 = vcombine.high %v5762, %v5770
        %v5974 = vunpack.c.l.s4 1983009808
        %v5975 = vunpack.c.0.s8 %v5974
        %v5976 = vlaneseq
        %v5977 = vshrl.u32 %v5976, 7
        %v5978 = vsub.s32 %v5975, %v5977
        %v5979 = vrot.slane %v5971, %v5978
        %v5981 = vunpack.c.l.s4 1983009808
        %v5982 = vunpack.c.0.s8 %v5981
        %v5983 = vlaneseq
        %v5984 = vshrl.u32 %v5983, 7
        %v5985 = vsub.s32 %v5982, %v5984
        %v5986 = vrot.slane %v5972, %v5985
        %v5987 = vcombine.low %v5931, %v5947
        %v5988 = vcombine.high %v5931, %v5947
        %v5990 = vunpack.c.l.s4 1934713408
        %v5991 = vunpack.c.0.s8 %v5990
        %v5992 = vlaneseq
        %v5993 = vshrl.u32 %v5992, 7
        %v5994 = vsub.s32 %v5991, %v5993
        %v5995 = vrot.slane %v5987, %v5994
        %v5997 = vunpack.c.l.s4 1934713408
        %v5998 = vunpack.c.0.s8 %v5997
        %v5999 = vlaneseq
        %v6000 = vshrl.u32 %v5999, 7
        %v6001 = vsub.s32 %v5998, %v6000
        %v6002 = vrot.slane %v5988, %v6001
        %v6003 = vcombine.low %v5938, %v5954
        %v6004 = vcombine.high %v5938, %v5954
        %v6006 = vunpack.c.l.s4 1934713408
        %v6007 = vunpack.c.0.s8 %v6006
        %v6008 = vlaneseq
        %v6009 = vshrl.u32 %v6008, 7
        %v6010 = vsub.s32 %v6007, %v6009
        %v6011 = vrot.slane %v6003, %v6010
        %v6013 = vunpack.c.l.s4 1934713408
        %v6014 = vunpack.c.0.s8 %v6013
        %v6015 = vlaneseq
        %v6016 = vshrl.u32 %v6015, 7
        %v6017 = vsub.s32 %v6014, %v6016
        %v6018 = vrot.slane %v6004, %v6017
        %v6019 = vcombine.low %v5963, %v5979
        %v6020 = vcombine.high %v5963, %v5979
        %v6022 = vunpack.c.l.s4 1934713408
        %v6023 = vunpack.c.0.s8 %v6022
        %v6024 = vlaneseq
        %v6025 = vshrl.u32 %v6024, 7
        %v6026 = vsub.s32 %v6023, %v6025
        %v6027 = vrot.slane %v6019, %v6026
        %v6029 = vunpack.c.l.s4 1934713408
        %v6030 = vunpack.c.0.s8 %v6029
        %v6031 = vlaneseq
        %v6032 = vshrl.u32 %v6031, 7
        %v6033 = vsub.s32 %v6030, %v6032
        %v6034 = vrot.slane %v6020, %v6033
        %v6035 = vcombine.low %v5970, %v5986
        %v6036 = vcombine.high %v5970, %v5986
        %v6038 = vunpack.c.l.s4 1934713408
        %v6039 = vunpack.c.0.s8 %v6038
        %v6040 = vlaneseq
        %v6041 = vshrl.u32 %v6040, 7
        %v6042 = vsub.s32 %v6039, %v6041
        %v6043 = vrot.slane %v6035, %v6042
        %v6045 = vunpack.c.l.s4 1934713408
        %v6046 = vunpack.c.0.s8 %v6045
        %v6047 = vlaneseq
        %v6048 = vshrl.u32 %v6047, 7
        %v6049 = vsub.s32 %v6046, %v6048
        %v6050 = vrot.slane %v6036, %v6049
        %v6051 = vcombine.low %v5995, %v6027
        %v6052 = vcombine.high %v5995, %v6027
        %v6053 = vcombine.low %v6002, %v6034
        %v6054 = vcombine.high %v6002, %v6034
        %v6055 = vcombine.low %v6011, %v6043
        %v6056 = vcombine.high %v6011, %v6043
        %v6057 = vcombine.low %v6018, %v6050
        %v6058 = vcombine.high %v6018, %v6050
        %6060 = vrot.lane.b32.xlu0 %v5916, 16
        %v6061 = vpop.permute.xlu0 %6060
        %6064 = vrot.lane.b32.xlu0 %v5917, 32
        %v6065 = vpop.permute.xlu0 %6064
        %6068 = vrot.lane.b32.xlu0 %v5918, 48
        %v6069 = vpop.permute.xlu0 %6068
        %6072 = vrot.lane.b32.xlu0 %v5919, 64
        %v6073 = vpop.permute.xlu0 %6072
        %6076 = vrot.lane.b32.xlu0 %v5920, 80
        %v6077 = vpop.permute.xlu0 %6076
        %6080 = vrot.lane.b32.xlu0 %v5921, 96
        %v6081 = vpop.permute.xlu0 %6080
        %6084 = vrot.lane.b32.xlu0 %v5922, 112
        %v6085 = vpop.permute.xlu0 %6084
        %6088 = vrot.lane.b32.xlu0 %v6052, 16
        %v6089 = vpop.permute.xlu0 %6088
        %6092 = vrot.lane.b32.xlu0 %v6053, 32
        %v6093 = vpop.permute.xlu0 %6092
        %6096 = vrot.lane.b32.xlu0 %v6054, 48
        %v6097 = vpop.permute.xlu0 %6096
        %6100 = vrot.lane.b32.xlu0 %v6055, 64
        %v6101 = vpop.permute.xlu0 %6100
        %6104 = vrot.lane.b32.xlu0 %v6056, 80
        %v6105 = vpop.permute.xlu0 %6104
        %6108 = vrot.lane.b32.xlu0 %v6057, 96
        %v6109 = vpop.permute.xlu0 %6108
        %6112 = vrot.lane.b32.xlu0 %v6058, 112
        %v6113 = vpop.permute.xlu0 %6112
        %v6115 = vsel %vm539, %v5915, %v6061
        %v6116 = vsel %vm541, %v6115, %v6065
        %v6117 = vsel %vm543, %v6116, %v6069
        %v6118 = vsel %vm545, %v6117, %v6073
        %v6119 = vsel %vm547, %v6118, %v6077
        %v6120 = vsel %vm549, %v6119, %v6081
        %v6121 = vsel %vm551, %v6120, %v6085
        %v6122 = vsel %vm539, %v6051, %v6089
        %v6123 = vsel %vm541, %v6122, %v6093
        %v6124 = vsel %vm543, %v6123, %v6097
        %v6125 = vsel %vm545, %v6124, %v6101
        %v6126 = vsel %vm547, %v6125, %v6105
        %v6127 = vsel %vm549, %v6126, %v6109
        %v6128 = vsel %vm551, %v6127, %v6113
        %6129 = vrot.lane.b32.xlu0 %v5343, 126
        %v6130 = vpop.permute.xlu0 %6129
        %6131 = vrot.lane.b32.xlu0 %v5345, 126
        %v6132 = vpop.permute.xlu0 %6131
        %6133 = vrot.lane.b32.xlu0 %v5348, 126
        %v6134 = vpop.permute.xlu0 %6133
        %6135 = vrot.lane.b32.xlu0 %v5350, 126
        %v6136 = vpop.permute.xlu0 %6135
        %6137 = vrot.lane.b32.xlu0 %v5353, 126
        %v6138 = vpop.permute.xlu0 %6137
        %6139 = vrot.lane.b32.xlu0 %v5355, 126
        %v6140 = vpop.permute.xlu0 %6139
        %6141 = vrot.lane.b32.xlu0 %v5358, 126
        %v6142 = vpop.permute.xlu0 %6141
        %6143 = vrot.lane.b32.xlu0 %v5360, 126
        %v6144 = vpop.permute.xlu0 %6143
        %6145 = vrot.lane.b32.xlu0 %v5363, 126
        %v6146 = vpop.permute.xlu0 %6145
        %6147 = vrot.lane.b32.xlu0 %v5365, 126
        %v6148 = vpop.permute.xlu0 %6147
        %6149 = vrot.lane.b32.xlu0 %v5368, 126
        %v6150 = vpop.permute.xlu0 %6149
        %6151 = vrot.lane.b32.xlu0 %v5370, 126
        %v6152 = vpop.permute.xlu0 %6151
        %6153 = vrot.lane.b32.xlu0 %v5373, 126
        %v6154 = vpop.permute.xlu0 %6153
        %6155 = vrot.lane.b32.xlu0 %v5375, 126
        %v6156 = vpop.permute.xlu0 %6155
        %6157 = vrot.lane.b32.xlu0 %v5378, 126
        %v6158 = vpop.permute.xlu0 %6157
        %6159 = vrot.lane.b32.xlu0 %v5380, 126
        %v6160 = vpop.permute.xlu0 %6159
        %v6177 = vcombine.low %v6130, %v6138
        %v6178 = vcombine.high %v6130, %v6138
        %v6180 = vunpack.c.l.s4 1983009808
        %v6181 = vunpack.c.0.s8 %v6180
        %v6182 = vlaneseq
        %v6183 = vshrl.u32 %v6182, 7
        %v6184 = vsub.s32 %v6181, %v6183
        %v6185 = vrot.slane %v6177, %v6184
        %v6187 = vunpack.c.l.s4 1983009808
        %v6188 = vunpack.c.0.s8 %v6187
        %v6189 = vlaneseq
        %v6190 = vshrl.u32 %v6189, 7
        %v6191 = vsub.s32 %v6188, %v6190
        %v6192 = vrot.slane %v6178, %v6191
        %v6193 = vcombine.low %v6134, %v6142
        %v6194 = vcombine.high %v6134, %v6142
        %v6196 = vunpack.c.l.s4 1983009808
        %v6197 = vunpack.c.0.s8 %v6196
        %v6198 = vlaneseq
        %v6199 = vshrl.u32 %v6198, 7
        %v6200 = vsub.s32 %v6197, %v6199
        %v6201 = vrot.slane %v6193, %v6200
        %v6203 = vunpack.c.l.s4 1983009808
        %v6204 = vunpack.c.0.s8 %v6203
        %v6205 = vlaneseq
        %v6206 = vshrl.u32 %v6205, 7
        %v6207 = vsub.s32 %v6204, %v6206
        %v6208 = vrot.slane %v6194, %v6207
        %v6209 = vcombine.low %v6146, %v6154
        %v6210 = vcombine.high %v6146, %v6154
        %v6212 = vunpack.c.l.s4 1983009808
        %v6213 = vunpack.c.0.s8 %v6212
        %v6214 = vlaneseq
        %v6215 = vshrl.u32 %v6214, 7
        %v6216 = vsub.s32 %v6213, %v6215
        %v6217 = vrot.slane %v6209, %v6216
        %v6219 = vunpack.c.l.s4 1983009808
        %v6220 = vunpack.c.0.s8 %v6219
        %v6221 = vlaneseq
        %v6222 = vshrl.u32 %v6221, 7
        %v6223 = vsub.s32 %v6220, %v6222
        %v6224 = vrot.slane %v6210, %v6223
        %v6225 = vcombine.low %v6150, %v6158
        %v6226 = vcombine.high %v6150, %v6158
        %v6228 = vunpack.c.l.s4 1983009808
        %v6229 = vunpack.c.0.s8 %v6228
        %v6230 = vlaneseq
        %v6231 = vshrl.u32 %v6230, 7
        %v6232 = vsub.s32 %v6229, %v6231
        %v6233 = vrot.slane %v6225, %v6232
        %v6235 = vunpack.c.l.s4 1983009808
        %v6236 = vunpack.c.0.s8 %v6235
        %v6237 = vlaneseq
        %v6238 = vshrl.u32 %v6237, 7
        %v6239 = vsub.s32 %v6236, %v6238
        %v6240 = vrot.slane %v6226, %v6239
        %v6241 = vcombine.low %v6185, %v6201
        %v6242 = vcombine.high %v6185, %v6201
        %v6244 = vunpack.c.l.s4 1934713408
        %v6245 = vunpack.c.0.s8 %v6244
        %v6246 = vlaneseq
        %v6247 = vshrl.u32 %v6246, 7
        %v6248 = vsub.s32 %v6245, %v6247
        %v6249 = vrot.slane %v6241, %v6248
        %v6251 = vunpack.c.l.s4 1934713408
        %v6252 = vunpack.c.0.s8 %v6251
        %v6253 = vlaneseq
        %v6254 = vshrl.u32 %v6253, 7
        %v6255 = vsub.s32 %v6252, %v6254
        %v6256 = vrot.slane %v6242, %v6255
        %v6257 = vcombine.low %v6192, %v6208
        %v6258 = vcombine.high %v6192, %v6208
        %v6260 = vunpack.c.l.s4 1934713408
        %v6261 = vunpack.c.0.s8 %v6260
        %v6262 = vlaneseq
        %v6263 = vshrl.u32 %v6262, 7
        %v6264 = vsub.s32 %v6261, %v6263
        %v6265 = vrot.slane %v6257, %v6264
        %v6267 = vunpack.c.l.s4 1934713408
        %v6268 = vunpack.c.0.s8 %v6267
        %v6269 = vlaneseq
        %v6270 = vshrl.u32 %v6269, 7
        %v6271 = vsub.s32 %v6268, %v6270
        %v6272 = vrot.slane %v6258, %v6271
        %v6273 = vcombine.low %v6217, %v6233
        %v6274 = vcombine.high %v6217, %v6233
        %v6276 = vunpack.c.l.s4 1934713408
        %v6277 = vunpack.c.0.s8 %v6276
        %v6278 = vlaneseq
        %v6279 = vshrl.u32 %v6278, 7
        %v6280 = vsub.s32 %v6277, %v6279
        %v6281 = vrot.slane %v6273, %v6280
        %v6283 = vunpack.c.l.s4 1934713408
        %v6284 = vunpack.c.0.s8 %v6283
        %v6285 = vlaneseq
        %v6286 = vshrl.u32 %v6285, 7
        %v6287 = vsub.s32 %v6284, %v6286
        %v6288 = vrot.slane %v6274, %v6287
        %v6289 = vcombine.low %v6224, %v6240
        %v6290 = vcombine.high %v6224, %v6240
        %v6292 = vunpack.c.l.s4 1934713408
        %v6293 = vunpack.c.0.s8 %v6292
        %v6294 = vlaneseq
        %v6295 = vshrl.u32 %v6294, 7
        %v6296 = vsub.s32 %v6293, %v6295
        %v6297 = vrot.slane %v6289, %v6296
        %v6299 = vunpack.c.l.s4 1934713408
        %v6300 = vunpack.c.0.s8 %v6299
        %v6301 = vlaneseq
        %v6302 = vshrl.u32 %v6301, 7
        %v6303 = vsub.s32 %v6300, %v6302
        %v6304 = vrot.slane %v6290, %v6303
        %v6305 = vcombine.low %v6249, %v6281
        %v6306 = vcombine.high %v6249, %v6281
        %v6307 = vcombine.low %v6256, %v6288
        %v6308 = vcombine.high %v6256, %v6288
        %v6309 = vcombine.low %v6265, %v6297
        %v6310 = vcombine.high %v6265, %v6297
        %v6311 = vcombine.low %v6272, %v6304
        %v6312 = vcombine.high %v6272, %v6304
        %v6313 = vcombine.low %v6132, %v6140
        %v6314 = vcombine.high %v6132, %v6140
        %v6316 = vunpack.c.l.s4 1983009808
        %v6317 = vunpack.c.0.s8 %v6316
        %v6318 = vlaneseq
        %v6319 = vshrl.u32 %v6318, 7
        %v6320 = vsub.s32 %v6317, %v6319
        %v6321 = vrot.slane %v6313, %v6320
        %v6323 = vunpack.c.l.s4 1983009808
        %v6324 = vunpack.c.0.s8 %v6323
        %v6325 = vlaneseq
        %v6326 = vshrl.u32 %v6325, 7
        %v6327 = vsub.s32 %v6324, %v6326
        %v6328 = vrot.slane %v6314, %v6327
        %v6329 = vcombine.low %v6136, %v6144
        %v6330 = vcombine.high %v6136, %v6144
        %v6332 = vunpack.c.l.s4 1983009808
        %v6333 = vunpack.c.0.s8 %v6332
        %v6334 = vlaneseq
        %v6335 = vshrl.u32 %v6334, 7
        %v6336 = vsub.s32 %v6333, %v6335
        %v6337 = vrot.slane %v6329, %v6336
        %v6339 = vunpack.c.l.s4 1983009808
        %v6340 = vunpack.c.0.s8 %v6339
        %v6341 = vlaneseq
        %v6342 = vshrl.u32 %v6341, 7
        %v6343 = vsub.s32 %v6340, %v6342
        %v6344 = vrot.slane %v6330, %v6343
        %v6345 = vcombine.low %v6148, %v6156
        %v6346 = vcombine.high %v6148, %v6156
        %v6348 = vunpack.c.l.s4 1983009808
        %v6349 = vunpack.c.0.s8 %v6348
        %v6350 = vlaneseq
        %v6351 = vshrl.u32 %v6350, 7
        %v6352 = vsub.s32 %v6349, %v6351
        %v6353 = vrot.slane %v6345, %v6352
        %v6355 = vunpack.c.l.s4 1983009808
        %v6356 = vunpack.c.0.s8 %v6355
        %v6357 = vlaneseq
        %v6358 = vshrl.u32 %v6357, 7
        %v6359 = vsub.s32 %v6356, %v6358
        %v6360 = vrot.slane %v6346, %v6359
        %v6361 = vcombine.low %v6152, %v6160
        %v6362 = vcombine.high %v6152, %v6160
        %v6364 = vunpack.c.l.s4 1983009808
        %v6365 = vunpack.c.0.s8 %v6364
        %v6366 = vlaneseq
        %v6367 = vshrl.u32 %v6366, 7
        %v6368 = vsub.s32 %v6365, %v6367
        %v6369 = vrot.slane %v6361, %v6368
        %v6371 = vunpack.c.l.s4 1983009808
        %v6372 = vunpack.c.0.s8 %v6371
        %v6373 = vlaneseq
        %v6374 = vshrl.u32 %v6373, 7
        %v6375 = vsub.s32 %v6372, %v6374
        %v6376 = vrot.slane %v6362, %v6375
        %v6377 = vcombine.low %v6321, %v6337
        %v6378 = vcombine.high %v6321, %v6337
        %v6380 = vunpack.c.l.s4 1934713408
        %v6381 = vunpack.c.0.s8 %v6380
        %v6382 = vlaneseq
        %v6383 = vshrl.u32 %v6382, 7
        %v6384 = vsub.s32 %v6381, %v6383
        %v6385 = vrot.slane %v6377, %v6384
        %v6387 = vunpack.c.l.s4 1934713408
        %v6388 = vunpack.c.0.s8 %v6387
        %v6389 = vlaneseq
        %v6390 = vshrl.u32 %v6389, 7
        %v6391 = vsub.s32 %v6388, %v6390
        %v6392 = vrot.slane %v6378, %v6391
        %v6393 = vcombine.low %v6328, %v6344
        %v6394 = vcombine.high %v6328, %v6344
        %v6396 = vunpack.c.l.s4 1934713408
        %v6397 = vunpack.c.0.s8 %v6396
        %v6398 = vlaneseq
        %v6399 = vshrl.u32 %v6398, 7
        %v6400 = vsub.s32 %v6397, %v6399
        %v6401 = vrot.slane %v6393, %v6400
        %v6403 = vunpack.c.l.s4 1934713408
        %v6404 = vunpack.c.0.s8 %v6403
        %v6405 = vlaneseq
        %v6406 = vshrl.u32 %v6405, 7
        %v6407 = vsub.s32 %v6404, %v6406
        %v6408 = vrot.slane %v6394, %v6407
        %v6409 = vcombine.low %v6353, %v6369
        %v6410 = vcombine.high %v6353, %v6369
        %v6412 = vunpack.c.l.s4 1934713408
        %v6413 = vunpack.c.0.s8 %v6412
        %v6414 = vlaneseq
        %v6415 = vshrl.u32 %v6414, 7
        %v6416 = vsub.s32 %v6413, %v6415
        %v6417 = vrot.slane %v6409, %v6416
        %v6419 = vunpack.c.l.s4 1934713408
        %v6420 = vunpack.c.0.s8 %v6419
        %v6421 = vlaneseq
        %v6422 = vshrl.u32 %v6421, 7
        %v6423 = vsub.s32 %v6420, %v6422
        %v6424 = vrot.slane %v6410, %v6423
        %v6425 = vcombine.low %v6360, %v6376
        %v6426 = vcombine.high %v6360, %v6376
        %v6428 = vunpack.c.l.s4 1934713408
        %v6429 = vunpack.c.0.s8 %v6428
        %v6430 = vlaneseq
        %v6431 = vshrl.u32 %v6430, 7
        %v6432 = vsub.s32 %v6429, %v6431
        %v6433 = vrot.slane %v6425, %v6432
        %v6435 = vunpack.c.l.s4 1934713408
        %v6436 = vunpack.c.0.s8 %v6435
        %v6437 = vlaneseq
        %v6438 = vshrl.u32 %v6437, 7
        %v6439 = vsub.s32 %v6436, %v6438
        %v6440 = vrot.slane %v6426, %v6439
        %v6441 = vcombine.low %v6385, %v6417
        %v6442 = vcombine.high %v6385, %v6417
        %v6443 = vcombine.low %v6392, %v6424
        %v6444 = vcombine.high %v6392, %v6424
        %v6445 = vcombine.low %v6401, %v6433
        %v6446 = vcombine.high %v6401, %v6433
        %v6447 = vcombine.low %v6408, %v6440
        %v6448 = vcombine.high %v6408, %v6440
        %6450 = vrot.lane.b32.xlu0 %v6306, 16
        %v6451 = vpop.permute.xlu0 %6450
        %6454 = vrot.lane.b32.xlu0 %v6307, 32
        %v6455 = vpop.permute.xlu0 %6454
        %6458 = vrot.lane.b32.xlu0 %v6308, 48
        %v6459 = vpop.permute.xlu0 %6458
        %6462 = vrot.lane.b32.xlu0 %v6309, 64
        %v6463 = vpop.permute.xlu0 %6462
        %6466 = vrot.lane.b32.xlu0 %v6310, 80
        %v6467 = vpop.permute.xlu0 %6466
        %6470 = vrot.lane.b32.xlu0 %v6311, 96
        %v6471 = vpop.permute.xlu0 %6470
        %6474 = vrot.lane.b32.xlu0 %v6312, 112
        %v6475 = vpop.permute.xlu0 %6474
        %6478 = vrot.lane.b32.xlu0 %v6442, 16
        %v6479 = vpop.permute.xlu0 %6478
        %6482 = vrot.lane.b32.xlu0 %v6443, 32
        %v6483 = vpop.permute.xlu0 %6482
        %6486 = vrot.lane.b32.xlu0 %v6444, 48
        %v6487 = vpop.permute.xlu0 %6486
        %6490 = vrot.lane.b32.xlu0 %v6445, 64
        %v6491 = vpop.permute.xlu0 %6490
        %6494 = vrot.lane.b32.xlu0 %v6446, 80
        %v6495 = vpop.permute.xlu0 %6494
        %6498 = vrot.lane.b32.xlu0 %v6447, 96
        %v6499 = vpop.permute.xlu0 %6498
        %6502 = vrot.lane.b32.xlu0 %v6448, 112
        %v6503 = vpop.permute.xlu0 %6502
        %v6505 = vsel %vm539, %v6305, %v6451
        %v6506 = vsel %vm541, %v6505, %v6455
        %v6507 = vsel %vm543, %v6506, %v6459
        %v6508 = vsel %vm545, %v6507, %v6463
        %v6509 = vsel %vm547, %v6508, %v6467
        %v6510 = vsel %vm549, %v6509, %v6471
        %v6511 = vsel %vm551, %v6510, %v6475
        %v6512 = vsel %vm539, %v6441, %v6479
        %v6513 = vsel %vm541, %v6512, %v6483
        %v6514 = vsel %vm543, %v6513, %v6487
        %v6515 = vsel %vm545, %v6514, %v6491
        %v6516 = vsel %vm547, %v6515, %v6495
        %v6517 = vsel %vm549, %v6516, %v6499
        %v6518 = vsel %vm551, %v6517, %v6503
        %v6519 = vpack.c.bf16 %v3757, %v3351
        %v6520 = vpack.c.bf16 %v3764, %v3358
        %v6521 = vpack.c.bf16 %v4553, %v4147
        %v6522 = vpack.c.bf16 %v4560, %v4154
        %v6523 = vpack.c.bf16 %v5333, %v4943
        %v6524 = vpack.c.bf16 %v5340, %v4950
        %v6525 = vpack.c.bf16 %v6121, %v5731
        %v6526 = vpack.c.bf16 %v6128, %v5738
        %v6527 = vpack.c.bf16 %v6511, %v6511
        %v6528 = vpack.c.bf16 %v6518, %v6518
        %v6529 = vld [vmem:[%s4] sm:$0xf]
        %vm6530 = vcmask 588800
        %v6532 = vsel %vm6530, %v6529, 0
        %v6535 = vsel %vm2446, %v6527, 0
        %v6538 = vsel %vm2446, %v6528, 0
        %6540 = vmatprep.subr.bf16.mxu0 0
        %6541 = vmatpush1.bf16.msra.mxu0 0
        %6542 = vmatprep.subr.bf16.mxu0 0
        %6543 = vmatpush1.bf16.msra.mxu0 0
        %6544 = vmatprep.subr.bf16.mxu0 0
        %6545 = vmatpush1.bf16.msra.mxu0 0
        %6546 = vmatprep.subr.bf16.mxu0 %v6538
        %6547 = vmatpush1.bf16.msra.mxu0 %v6535
        %6548 = vmatprep.subr.bf16.mxu0 %v6526
        %6549 = vmatpush1.bf16.msra.mxu0 %v6525
        %6550 = vmatprep.subr.bf16.mxu0 %v6524
        %6551 = vmatpush1.bf16.msra.mxu0 %v6523
        %6552 = vmatprep.subr.bf16.mxu0 %v6522
        %6553 = vmatpush1.bf16.msra.mxu0 %v6521
        %6554 = vmatprep.subr.bf16.mxu0 %v6520
        %6555 = vmatpush1.bf16.msra.mxu0 %v6519
        %6556 = vmatprep.subr.bf16.mxu0 0
        %6557 = vmatpush2.bf16.msra.mxu0 0
        %6558 = vmatprep.subr.bf16.mxu0 0
        %6559 = vmatpush2.bf16.msra.mxu0 0
        %6560 = vmatprep.subr.bf16.mxu0 0
        %6561 = vmatpush2.bf16.msra.mxu0 0
        %6562 = vmatprep.subr.bf16.mxu0 0
        %6563 = vmatpush2.bf16.msra.mxu0 0
        %6564 = vmatprep.subr.bf16.mxu0 0
        %6565 = vmatpush2.bf16.msra.mxu0 0
        %6566 = vmatprep.subr.bf16.mxu0 0
        %6567 = vmatpush2.bf16.msra.mxu0 0
        %6568 = vmatprep.subr.bf16.mxu0 0
        %6569 = vmatpush2.bf16.msra.mxu0 0
        %6570 = vmatprep.subr.bf16.mxu0 0
        %6571 = vmatpush2.bf16.msra.mxu0 0
        %6572 = vmatprep.mubr.bf16.mxu0 0
        %6573 = vmatmul.mubr.bf16.gmra.mxu0 %v6532
        %v6574 = vpop.f32.mrf.mxu0
        %v6575 = vadd.f32 0.0, %v6574
        %v6576 = vpop.f32.mrf.mxu0
        %v6577 = vadd.f32 0.0, %v6576
        %v6578 = vpop.f32.mrf.mxu0
        %v6579 = vpop.f32.mrf.mxu0
        %6580 = vdwg.mxu0
        %v6581 = vld [vmem:[#allocation7] sm:$0xff]
        %v6582 = vadd.f32 %v6575, %v6577
        %6583 = vadd.xlane.f32.xlu0 %v6582
        %v6584 = vpop.xlane.xlu0 %6583
        %v6585 = vadd.f32 %v6581, %v6584
        %6586 = vst.msk [vmem:[#allocation7] sm:$0xff] %vm2519, %v6585
        %v6587 = vld [vmem:[#allocation8] sm:$0xff]
        %v6588 = vmul.f32 %v6575, %v6575
        %v6589 = vmul.f32 %v6577, %v6577
        %v6590 = vadd.f32 %v6588, %v6589
        %6591 = vadd.xlane.f32.xlu0 %v6590
        %v6592 = vpop.xlane.xlu0 %6591
        %v6593 = vadd.f32 %v6587, %v6592
        %6594 = vst.msk [vmem:[#allocation8] sm:$0xff] %vm2519, %v6593
        %6595 = vst [vmem:[%s7] sm:$0xff] %v6575
        %6596 = vst [vmem:[%s7 + $0x8] sm:$0xff] %v6577
        %s6597 = scalar_lea.vmem [#allocation4], 16
        %v6598 = vld [vmem:[%s6597] sm:$0xff]
        %v6599 = vld [vmem:[%s6597 + $0x8] sm:$0xff]
        %v6600 = vmul.f32 %v6598, %v2584
        %v6601 = vmul.f32 %v6599, %v2584
        %v6602 = vadd.f32 %v6600, %v2591
        %v6603 = vadd.f32 %v6601, %v2591
        %v6604 = vmax.f32 %v6602, 0.0
        %v6605 = vmax.f32 %v6603, 0.0
        %6607 = vrot.lane.b32.xlu0 %v6604, 112
        %v6608 = vpop.permute.xlu0 %6607
        %6610 = vrot.lane.b32.xlu0 %v6604, 96
        %v6611 = vpop.permute.xlu0 %6610
        %6613 = vrot.lane.b32.xlu0 %v6604, 80
        %v6614 = vpop.permute.xlu0 %6613
        %6616 = vrot.lane.b32.xlu0 %v6604, 64
        %v6617 = vpop.permute.xlu0 %6616
        %6619 = vrot.lane.b32.xlu0 %v6604, 48
        %v6620 = vpop.permute.xlu0 %6619
        %6622 = vrot.lane.b32.xlu0 %v6604, 32
        %v6623 = vpop.permute.xlu0 %6622
        %6625 = vrot.lane.b32.xlu0 %v6604, 16
        %v6626 = vpop.permute.xlu0 %6625
        %6629 = vrot.lane.b32.xlu0 %v6605, 112
        %v6630 = vpop.permute.xlu0 %6629
        %6632 = vrot.lane.b32.xlu0 %v6605, 96
        %v6633 = vpop.permute.xlu0 %6632
        %6635 = vrot.lane.b32.xlu0 %v6605, 80
        %v6636 = vpop.permute.xlu0 %6635
        %6638 = vrot.lane.b32.xlu0 %v6605, 64
        %v6639 = vpop.permute.xlu0 %6638
        %6641 = vrot.lane.b32.xlu0 %v6605, 48
        %v6642 = vpop.permute.xlu0 %6641
        %6644 = vrot.lane.b32.xlu0 %v6605, 32
        %v6645 = vpop.permute.xlu0 %6644
        %6647 = vrot.lane.b32.xlu0 %v6605, 16
        %v6648 = vpop.permute.xlu0 %6647
        %v6650 = vcombine.low %v6604, %v6611
        %v6651 = vcombine.high %v6604, %v6611
        %v6653 = vunpack.c.l.s4 1983009808
        %v6654 = vunpack.c.0.s8 %v6653
        %v6655 = vlaneseq
        %v6656 = vshrl.u32 %v6655, 7
        %v6657 = vsub.s32 %v6654, %v6656
        %v6658 = vrot.slane %v6650, %v6657
        %v6660 = vunpack.c.l.s4 1983009808
        %v6661 = vunpack.c.0.s8 %v6660
        %v6662 = vlaneseq
        %v6663 = vshrl.u32 %v6662, 7
        %v6664 = vsub.s32 %v6661, %v6663
        %v6665 = vrot.slane %v6651, %v6664
        %v6666 = vcombine.low %v6608, %v6614
        %v6667 = vcombine.high %v6608, %v6614
        %v6669 = vunpack.c.l.s4 1983009808
        %v6670 = vunpack.c.0.s8 %v6669
        %v6671 = vlaneseq
        %v6672 = vshrl.u32 %v6671, 7
        %v6673 = vsub.s32 %v6670, %v6672
        %v6674 = vrot.slane %v6666, %v6673
        %v6676 = vunpack.c.l.s4 1983009808
        %v6677 = vunpack.c.0.s8 %v6676
        %v6678 = vlaneseq
        %v6679 = vshrl.u32 %v6678, 7
        %v6680 = vsub.s32 %v6677, %v6679
        %v6681 = vrot.slane %v6667, %v6680
        %v6682 = vcombine.low %v6617, %v6623
        %v6683 = vcombine.high %v6617, %v6623
        %v6685 = vunpack.c.l.s4 1983009808
        %v6686 = vunpack.c.0.s8 %v6685
        %v6687 = vlaneseq
        %v6688 = vshrl.u32 %v6687, 7
        %v6689 = vsub.s32 %v6686, %v6688
        %v6690 = vrot.slane %v6682, %v6689
        %v6692 = vunpack.c.l.s4 1983009808
        %v6693 = vunpack.c.0.s8 %v6692
        %v6694 = vlaneseq
        %v6695 = vshrl.u32 %v6694, 7
        %v6696 = vsub.s32 %v6693, %v6695
        %v6697 = vrot.slane %v6683, %v6696
        %v6698 = vcombine.low %v6620, %v6626
        %v6699 = vcombine.high %v6620, %v6626
        %v6701 = vunpack.c.l.s4 1983009808
        %v6702 = vunpack.c.0.s8 %v6701
        %v6703 = vlaneseq
        %v6704 = vshrl.u32 %v6703, 7
        %v6705 = vsub.s32 %v6702, %v6704
        %v6706 = vrot.slane %v6698, %v6705
        %v6708 = vunpack.c.l.s4 1983009808
        %v6709 = vunpack.c.0.s8 %v6708
        %v6710 = vlaneseq
        %v6711 = vshrl.u32 %v6710, 7
        %v6712 = vsub.s32 %v6709, %v6711
        %v6713 = vrot.slane %v6699, %v6712
        %v6714 = vcombine.low %v6658, %v6674
        %v6715 = vcombine.high %v6658, %v6674
        %v6717 = vunpack.c.l.s4 1934713408
        %v6718 = vunpack.c.0.s8 %v6717
        %v6719 = vlaneseq
        %v6720 = vshrl.u32 %v6719, 7
        %v6721 = vsub.s32 %v6718, %v6720
        %v6722 = vrot.slane %v6714, %v6721
        %v6724 = vunpack.c.l.s4 1934713408
        %v6725 = vunpack.c.0.s8 %v6724
        %v6726 = vlaneseq
        %v6727 = vshrl.u32 %v6726, 7
        %v6728 = vsub.s32 %v6725, %v6727
        %v6729 = vrot.slane %v6715, %v6728
        %v6730 = vcombine.low %v6665, %v6681
        %v6731 = vcombine.high %v6665, %v6681
        %v6733 = vunpack.c.l.s4 1934713408
        %v6734 = vunpack.c.0.s8 %v6733
        %v6735 = vlaneseq
        %v6736 = vshrl.u32 %v6735, 7
        %v6737 = vsub.s32 %v6734, %v6736
        %v6738 = vrot.slane %v6730, %v6737
        %v6740 = vunpack.c.l.s4 1934713408
        %v6741 = vunpack.c.0.s8 %v6740
        %v6742 = vlaneseq
        %v6743 = vshrl.u32 %v6742, 7
        %v6744 = vsub.s32 %v6741, %v6743
        %v6745 = vrot.slane %v6731, %v6744
        %v6746 = vcombine.low %v6690, %v6706
        %v6747 = vcombine.high %v6690, %v6706
        %v6749 = vunpack.c.l.s4 1934713408
        %v6750 = vunpack.c.0.s8 %v6749
        %v6751 = vlaneseq
        %v6752 = vshrl.u32 %v6751, 7
        %v6753 = vsub.s32 %v6750, %v6752
        %v6754 = vrot.slane %v6746, %v6753
        %v6756 = vunpack.c.l.s4 1934713408
        %v6757 = vunpack.c.0.s8 %v6756
        %v6758 = vlaneseq
        %v6759 = vshrl.u32 %v6758, 7
        %v6760 = vsub.s32 %v6757, %v6759
        %v6761 = vrot.slane %v6747, %v6760
        %v6762 = vcombine.low %v6697, %v6713
        %v6763 = vcombine.high %v6697, %v6713
        %v6765 = vunpack.c.l.s4 1934713408
        %v6766 = vunpack.c.0.s8 %v6765
        %v6767 = vlaneseq
        %v6768 = vshrl.u32 %v6767, 7
        %v6769 = vsub.s32 %v6766, %v6768
        %v6770 = vrot.slane %v6762, %v6769
        %v6772 = vunpack.c.l.s4 1934713408
        %v6773 = vunpack.c.0.s8 %v6772
        %v6774 = vlaneseq
        %v6775 = vshrl.u32 %v6774, 7
        %v6776 = vsub.s32 %v6773, %v6775
        %v6777 = vrot.slane %v6763, %v6776
        %v6778 = vcombine.low %v6722, %v6754
        %v6779 = vcombine.high %v6722, %v6754
        %v6780 = vcombine.low %v6729, %v6761
        %v6781 = vcombine.high %v6729, %v6761
        %v6782 = vcombine.low %v6738, %v6770
        %v6783 = vcombine.high %v6738, %v6770
        %v6784 = vcombine.low %v6745, %v6777
        %v6785 = vcombine.high %v6745, %v6777
        %v6786 = vcombine.low %v6605, %v6633
        %v6787 = vcombine.high %v6605, %v6633
        %v6789 = vunpack.c.l.s4 1983009808
        %v6790 = vunpack.c.0.s8 %v6789
        %v6791 = vlaneseq
        %v6792 = vshrl.u32 %v6791, 7
        %v6793 = vsub.s32 %v6790, %v6792
        %v6794 = vrot.slane %v6786, %v6793
        %v6796 = vunpack.c.l.s4 1983009808
        %v6797 = vunpack.c.0.s8 %v6796
        %v6798 = vlaneseq
        %v6799 = vshrl.u32 %v6798, 7
        %v6800 = vsub.s32 %v6797, %v6799
        %v6801 = vrot.slane %v6787, %v6800
        %v6802 = vcombine.low %v6630, %v6636
        %v6803 = vcombine.high %v6630, %v6636
        %v6805 = vunpack.c.l.s4 1983009808
        %v6806 = vunpack.c.0.s8 %v6805
        %v6807 = vlaneseq
        %v6808 = vshrl.u32 %v6807, 7
        %v6809 = vsub.s32 %v6806, %v6808
        %v6810 = vrot.slane %v6802, %v6809
        %v6812 = vunpack.c.l.s4 1983009808
        %v6813 = vunpack.c.0.s8 %v6812
        %v6814 = vlaneseq
        %v6815 = vshrl.u32 %v6814, 7
        %v6816 = vsub.s32 %v6813, %v6815
        %v6817 = vrot.slane %v6803, %v6816
        %v6818 = vcombine.low %v6639, %v6645
        %v6819 = vcombine.high %v6639, %v6645
        %v6821 = vunpack.c.l.s4 1983009808
        %v6822 = vunpack.c.0.s8 %v6821
        %v6823 = vlaneseq
        %v6824 = vshrl.u32 %v6823, 7
        %v6825 = vsub.s32 %v6822, %v6824
        %v6826 = vrot.slane %v6818, %v6825
        %v6828 = vunpack.c.l.s4 1983009808
        %v6829 = vunpack.c.0.s8 %v6828
        %v6830 = vlaneseq
        %v6831 = vshrl.u32 %v6830, 7
        %v6832 = vsub.s32 %v6829, %v6831
        %v6833 = vrot.slane %v6819, %v6832
        %v6834 = vcombine.low %v6642, %v6648
        %v6835 = vcombine.high %v6642, %v6648
        %v6837 = vunpack.c.l.s4 1983009808
        %v6838 = vunpack.c.0.s8 %v6837
        %v6839 = vlaneseq
        %v6840 = vshrl.u32 %v6839, 7
        %v6841 = vsub.s32 %v6838, %v6840
        %v6842 = vrot.slane %v6834, %v6841
        %v6844 = vunpack.c.l.s4 1983009808
        %v6845 = vunpack.c.0.s8 %v6844
        %v6846 = vlaneseq
        %v6847 = vshrl.u32 %v6846, 7
        %v6848 = vsub.s32 %v6845, %v6847
        %v6849 = vrot.slane %v6835, %v6848
        %v6850 = vcombine.low %v6794, %v6810
        %v6851 = vcombine.high %v6794, %v6810
        %v6853 = vunpack.c.l.s4 1934713408
        %v6854 = vunpack.c.0.s8 %v6853
        %v6855 = vlaneseq
        %v6856 = vshrl.u32 %v6855, 7
        %v6857 = vsub.s32 %v6854, %v6856
        %v6858 = vrot.slane %v6850, %v6857
        %v6860 = vunpack.c.l.s4 1934713408
        %v6861 = vunpack.c.0.s8 %v6860
        %v6862 = vlaneseq
        %v6863 = vshrl.u32 %v6862, 7
        %v6864 = vsub.s32 %v6861, %v6863
        %v6865 = vrot.slane %v6851, %v6864
        %v6866 = vcombine.low %v6801, %v6817
        %v6867 = vcombine.high %v6801, %v6817
        %v6869 = vunpack.c.l.s4 1934713408
        %v6870 = vunpack.c.0.s8 %v6869
        %v6871 = vlaneseq
        %v6872 = vshrl.u32 %v6871, 7
        %v6873 = vsub.s32 %v6870, %v6872
        %v6874 = vrot.slane %v6866, %v6873
        %v6876 = vunpack.c.l.s4 1934713408
        %v6877 = vunpack.c.0.s8 %v6876
        %v6878 = vlaneseq
        %v6879 = vshrl.u32 %v6878, 7
        %v6880 = vsub.s32 %v6877, %v6879
        %v6881 = vrot.slane %v6867, %v6880
        %v6882 = vcombine.low %v6826, %v6842
        %v6883 = vcombine.high %v6826, %v6842
        %v6885 = vunpack.c.l.s4 1934713408
        %v6886 = vunpack.c.0.s8 %v6885
        %v6887 = vlaneseq
        %v6888 = vshrl.u32 %v6887, 7
        %v6889 = vsub.s32 %v6886, %v6888
        %v6890 = vrot.slane %v6882, %v6889
        %v6892 = vunpack.c.l.s4 1934713408
        %v6893 = vunpack.c.0.s8 %v6892
        %v6894 = vlaneseq
        %v6895 = vshrl.u32 %v6894, 7
        %v6896 = vsub.s32 %v6893, %v6895
        %v6897 = vrot.slane %v6883, %v6896
        %v6898 = vcombine.low %v6833, %v6849
        %v6899 = vcombine.high %v6833, %v6849
        %v6901 = vunpack.c.l.s4 1934713408
        %v6902 = vunpack.c.0.s8 %v6901
        %v6903 = vlaneseq
        %v6904 = vshrl.u32 %v6903, 7
        %v6905 = vsub.s32 %v6902, %v6904
        %v6906 = vrot.slane %v6898, %v6905
        %v6908 = vunpack.c.l.s4 1934713408
        %v6909 = vunpack.c.0.s8 %v6908
        %v6910 = vlaneseq
        %v6911 = vshrl.u32 %v6910, 7
        %v6912 = vsub.s32 %v6909, %v6911
        %v6913 = vrot.slane %v6899, %v6912
        %v6914 = vcombine.low %v6858, %v6890
        %v6915 = vcombine.high %v6858, %v6890
        %v6916 = vcombine.low %v6865, %v6897
        %v6917 = vcombine.high %v6865, %v6897
        %v6918 = vcombine.low %v6874, %v6906
        %v6919 = vcombine.high %v6874, %v6906
        %v6920 = vcombine.low %v6881, %v6913
        %v6921 = vcombine.high %v6881, %v6913
        %6938 = vrot.lane.b32.xlu0 %v6778, 1
        %v6939 = vpop.permute.xlu0 %6938
        %6940 = vrot.lane.b32.xlu0 %v6914, 1
        %v6941 = vpop.permute.xlu0 %6940
        %6942 = vrot.lane.b32.xlu0 %v6779, 1
        %v6943 = vpop.permute.xlu0 %6942
        %6944 = vrot.lane.b32.xlu0 %v6915, 1
        %v6945 = vpop.permute.xlu0 %6944
        %6946 = vrot.lane.b32.xlu0 %v6780, 1
        %v6947 = vpop.permute.xlu0 %6946
        %6948 = vrot.lane.b32.xlu0 %v6916, 1
        %v6949 = vpop.permute.xlu0 %6948
        %6950 = vrot.lane.b32.xlu0 %v6781, 1
        %v6951 = vpop.permute.xlu0 %6950
        %6952 = vrot.lane.b32.xlu0 %v6917, 1
        %v6953 = vpop.permute.xlu0 %6952
        %6954 = vrot.lane.b32.xlu0 %v6782, 1
        %v6955 = vpop.permute.xlu0 %6954
        %6956 = vrot.lane.b32.xlu0 %v6918, 1
        %v6957 = vpop.permute.xlu0 %6956
        %6958 = vrot.lane.b32.xlu0 %v6783, 1
        %v6959 = vpop.permute.xlu0 %6958
        %6960 = vrot.lane.b32.xlu0 %v6919, 1
        %v6961 = vpop.permute.xlu0 %6960
        %6962 = vrot.lane.b32.xlu0 %v6784, 1
        %v6963 = vpop.permute.xlu0 %6962
        %6964 = vrot.lane.b32.xlu0 %v6920, 1
        %v6965 = vpop.permute.xlu0 %6964
        %6966 = vrot.lane.b32.xlu0 %v6785, 1
        %v6967 = vpop.permute.xlu0 %6966
        %6968 = vrot.lane.b32.xlu0 %v6921, 1
        %v6969 = vpop.permute.xlu0 %6968
        %6986 = vst.msk [vmem:[#allocation3 + $0x1] sm:$0xff] %vm326, %v6939
        %6987 = vst.msk [vmem:[#allocation3 + $0x9] sm:$0xff] %vm326, %v6941
        %6988 = vst.msk [vmem:[#allocation3 + $0x19] sm:$0xff] %vm326, %v6943
        %6989 = vst.msk [vmem:[#allocation3 + $0x21] sm:$0xff] %vm326, %v6945
        %6990 = vst.msk [vmem:[#allocation3 + $0x31] sm:$0xff] %vm326, %v6947
        %6991 = vst.msk [vmem:[#allocation3 + $0x39] sm:$0xff] %vm326, %v6949
        %6992 = vst.msk [vmem:[#allocation3 + $0x49] sm:$0xff] %vm326, %v6951
        %6993 = vst.msk [vmem:[#allocation3 + $0x51] sm:$0xff] %vm326, %v6953
        %6994 = vst.msk [vmem:[#allocation3 + $0x61] sm:$0xff] %vm326, %v6955
        %6995 = vst.msk [vmem:[#allocation3 + $0x69] sm:$0xff] %vm326, %v6957
        %6996 = vst.msk [vmem:[#allocation3 + $0x79] sm:$0xff] %vm326, %v6959
        %6997 = vst.msk [vmem:[#allocation3 + $0x81] sm:$0xff] %vm326, %v6961
        %6998 = vst.msk [vmem:[#allocation3 + $0x91] sm:$0xff] %vm326, %v6963
        %6999 = vst.msk [vmem:[#allocation3 + $0x99] sm:$0xff] %vm326, %v6965
        %7000 = vst.msk [vmem:[#allocation3 + $0xa9] sm:$0xff] %vm326, %v6967
        %7001 = vst.msk [vmem:[#allocation3 + $0xb1] sm:$0xff] %vm326, %v6969
        %v7002 = vld [vmem:[#allocation3] sm:$0xff]
        %v7003 = vld [vmem:[#allocation3 + $0x8] sm:$0xff]
        %v7004 = vld [vmem:[#allocation3 + $0x10] sm:$0x3]
        %v7005 = vld [vmem:[#allocation3 + $0x18] sm:$0xff]
        %v7006 = vld [vmem:[#allocation3 + $0x20] sm:$0xff]
        %v7007 = vld [vmem:[#allocation3 + $0x28] sm:$0x3]
        %v7008 = vld [vmem:[#allocation3 + $0x30] sm:$0xff]
        %v7009 = vld [vmem:[#allocation3 + $0x38] sm:$0xff]
        %v7010 = vld [vmem:[#allocation3 + $0x40] sm:$0x3]
        %v7011 = vld [vmem:[#allocation3 + $0x48] sm:$0xff]
        %v7012 = vld [vmem:[#allocation3 + $0x50] sm:$0xff]
        %v7013 = vld [vmem:[#allocation3 + $0x58] sm:$0x3]
        %v7014 = vld [vmem:[#allocation3 + $0x60] sm:$0xff]
        %v7015 = vld [vmem:[#allocation3 + $0x68] sm:$0xff]
        %v7016 = vld [vmem:[#allocation3 + $0x70] sm:$0x3]
        %v7017 = vld [vmem:[#allocation3 + $0x78] sm:$0xff]
        %v7018 = vld [vmem:[#allocation3 + $0x80] sm:$0xff]
        %v7019 = vld [vmem:[#allocation3 + $0x88] sm:$0x3]
        %v7020 = vld [vmem:[#allocation3 + $0x90] sm:$0xff]
        %v7021 = vld [vmem:[#allocation3 + $0x98] sm:$0xff]
        %v7022 = vld [vmem:[#allocation3 + $0xa0] sm:$0x3]
        %v7023 = vld [vmem:[#allocation3 + $0xa8] sm:$0xff]
        %v7024 = vld [vmem:[#allocation3 + $0xb0] sm:$0xff]
        %v7025 = vld [vmem:[#allocation3 + $0xb8] sm:$0x3]
        %v7026 = vcombine.low %v7002, %v7008
        %v7027 = vcombine.high %v7002, %v7008
        %v7029 = vunpack.c.l.s4 1983009808
        %v7030 = vunpack.c.0.s8 %v7029
        %v7031 = vlaneseq
        %v7032 = vshrl.u32 %v7031, 7
        %v7033 = vsub.s32 %v7030, %v7032
        %v7034 = vrot.slane %v7026, %v7033
        %v7036 = vunpack.c.l.s4 1983009808
        %v7037 = vunpack.c.0.s8 %v7036
        %v7038 = vlaneseq
        %v7039 = vshrl.u32 %v7038, 7
        %v7040 = vsub.s32 %v7037, %v7039
        %v7041 = vrot.slane %v7027, %v7040
        %v7042 = vcombine.low %v7005, %v7011
        %v7043 = vcombine.high %v7005, %v7011
        %v7045 = vunpack.c.l.s4 1983009808
        %v7046 = vunpack.c.0.s8 %v7045
        %v7047 = vlaneseq
        %v7048 = vshrl.u32 %v7047, 7
        %v7049 = vsub.s32 %v7046, %v7048
        %v7050 = vrot.slane %v7042, %v7049
        %v7052 = vunpack.c.l.s4 1983009808
        %v7053 = vunpack.c.0.s8 %v7052
        %v7054 = vlaneseq
        %v7055 = vshrl.u32 %v7054, 7
        %v7056 = vsub.s32 %v7053, %v7055
        %v7057 = vrot.slane %v7043, %v7056
        %v7058 = vcombine.low %v7014, %v7020
        %v7059 = vcombine.high %v7014, %v7020
        %v7061 = vunpack.c.l.s4 1983009808
        %v7062 = vunpack.c.0.s8 %v7061
        %v7063 = vlaneseq
        %v7064 = vshrl.u32 %v7063, 7
        %v7065 = vsub.s32 %v7062, %v7064
        %v7066 = vrot.slane %v7058, %v7065
        %v7068 = vunpack.c.l.s4 1983009808
        %v7069 = vunpack.c.0.s8 %v7068
        %v7070 = vlaneseq
        %v7071 = vshrl.u32 %v7070, 7
        %v7072 = vsub.s32 %v7069, %v7071
        %v7073 = vrot.slane %v7059, %v7072
        %v7074 = vcombine.low %v7017, %v7023
        %v7075 = vcombine.high %v7017, %v7023
        %v7077 = vunpack.c.l.s4 1983009808
        %v7078 = vunpack.c.0.s8 %v7077
        %v7079 = vlaneseq
        %v7080 = vshrl.u32 %v7079, 7
        %v7081 = vsub.s32 %v7078, %v7080
        %v7082 = vrot.slane %v7074, %v7081
        %v7084 = vunpack.c.l.s4 1983009808
        %v7085 = vunpack.c.0.s8 %v7084
        %v7086 = vlaneseq
        %v7087 = vshrl.u32 %v7086, 7
        %v7088 = vsub.s32 %v7085, %v7087
        %v7089 = vrot.slane %v7075, %v7088
        %v7090 = vcombine.low %v7034, %v7050
        %v7091 = vcombine.high %v7034, %v7050
        %v7093 = vunpack.c.l.s4 1934713408
        %v7094 = vunpack.c.0.s8 %v7093
        %v7095 = vlaneseq
        %v7096 = vshrl.u32 %v7095, 7
        %v7097 = vsub.s32 %v7094, %v7096
        %v7098 = vrot.slane %v7090, %v7097
        %v7100 = vunpack.c.l.s4 1934713408
        %v7101 = vunpack.c.0.s8 %v7100
        %v7102 = vlaneseq
        %v7103 = vshrl.u32 %v7102, 7
        %v7104 = vsub.s32 %v7101, %v7103
        %v7105 = vrot.slane %v7091, %v7104
        %v7106 = vcombine.low %v7041, %v7057
        %v7107 = vcombine.high %v7041, %v7057
        %v7109 = vunpack.c.l.s4 1934713408
        %v7110 = vunpack.c.0.s8 %v7109
        %v7111 = vlaneseq
        %v7112 = vshrl.u32 %v7111, 7
        %v7113 = vsub.s32 %v7110, %v7112
        %v7114 = vrot.slane %v7106, %v7113
        %v7116 = vunpack.c.l.s4 1934713408
        %v7117 = vunpack.c.0.s8 %v7116
        %v7118 = vlaneseq
        %v7119 = vshrl.u32 %v7118, 7
        %v7120 = vsub.s32 %v7117, %v7119
        %v7121 = vrot.slane %v7107, %v7120
        %v7122 = vcombine.low %v7066, %v7082
        %v7123 = vcombine.high %v7066, %v7082
        %v7125 = vunpack.c.l.s4 1934713408
        %v7126 = vunpack.c.0.s8 %v7125
        %v7127 = vlaneseq
        %v7128 = vshrl.u32 %v7127, 7
        %v7129 = vsub.s32 %v7126, %v7128
        %v7130 = vrot.slane %v7122, %v7129
        %v7132 = vunpack.c.l.s4 1934713408
        %v7133 = vunpack.c.0.s8 %v7132
        %v7134 = vlaneseq
        %v7135 = vshrl.u32 %v7134, 7
        %v7136 = vsub.s32 %v7133, %v7135
        %v7137 = vrot.slane %v7123, %v7136
        %v7138 = vcombine.low %v7073, %v7089
        %v7139 = vcombine.high %v7073, %v7089
        %v7141 = vunpack.c.l.s4 1934713408
        %v7142 = vunpack.c.0.s8 %v7141
        %v7143 = vlaneseq
        %v7144 = vshrl.u32 %v7143, 7
        %v7145 = vsub.s32 %v7142, %v7144
        %v7146 = vrot.slane %v7138, %v7145
        %v7148 = vunpack.c.l.s4 1934713408
        %v7149 = vunpack.c.0.s8 %v7148
        %v7150 = vlaneseq
        %v7151 = vshrl.u32 %v7150, 7
        %v7152 = vsub.s32 %v7149, %v7151
        %v7153 = vrot.slane %v7139, %v7152
        %v7154 = vcombine.low %v7098, %v7130
        %v7155 = vcombine.high %v7098, %v7130
        %v7156 = vcombine.low %v7105, %v7137
        %v7157 = vcombine.high %v7105, %v7137
        %v7158 = vcombine.low %v7114, %v7146
        %v7159 = vcombine.high %v7114, %v7146
        %v7160 = vcombine.low %v7121, %v7153
        %v7161 = vcombine.high %v7121, %v7153
        %v7162 = vcombine.low %v7003, %v7009
        %v7163 = vcombine.high %v7003, %v7009
        %v7165 = vunpack.c.l.s4 1983009808
        %v7166 = vunpack.c.0.s8 %v7165
        %v7167 = vlaneseq
        %v7168 = vshrl.u32 %v7167, 7
        %v7169 = vsub.s32 %v7166, %v7168
        %v7170 = vrot.slane %v7162, %v7169
        %v7172 = vunpack.c.l.s4 1983009808
        %v7173 = vunpack.c.0.s8 %v7172
        %v7174 = vlaneseq
        %v7175 = vshrl.u32 %v7174, 7
        %v7176 = vsub.s32 %v7173, %v7175
        %v7177 = vrot.slane %v7163, %v7176
        %v7178 = vcombine.low %v7006, %v7012
        %v7179 = vcombine.high %v7006, %v7012
        %v7181 = vunpack.c.l.s4 1983009808
        %v7182 = vunpack.c.0.s8 %v7181
        %v7183 = vlaneseq
        %v7184 = vshrl.u32 %v7183, 7
        %v7185 = vsub.s32 %v7182, %v7184
        %v7186 = vrot.slane %v7178, %v7185
        %v7188 = vunpack.c.l.s4 1983009808
        %v7189 = vunpack.c.0.s8 %v7188
        %v7190 = vlaneseq
        %v7191 = vshrl.u32 %v7190, 7
        %v7192 = vsub.s32 %v7189, %v7191
        %v7193 = vrot.slane %v7179, %v7192
        %v7194 = vcombine.low %v7015, %v7021
        %v7195 = vcombine.high %v7015, %v7021
        %v7197 = vunpack.c.l.s4 1983009808
        %v7198 = vunpack.c.0.s8 %v7197
        %v7199 = vlaneseq
        %v7200 = vshrl.u32 %v7199, 7
        %v7201 = vsub.s32 %v7198, %v7200
        %v7202 = vrot.slane %v7194, %v7201
        %v7204 = vunpack.c.l.s4 1983009808
        %v7205 = vunpack.c.0.s8 %v7204
        %v7206 = vlaneseq
        %v7207 = vshrl.u32 %v7206, 7
        %v7208 = vsub.s32 %v7205, %v7207
        %v7209 = vrot.slane %v7195, %v7208
        %v7210 = vcombine.low %v7018, %v7024
        %v7211 = vcombine.high %v7018, %v7024
        %v7213 = vunpack.c.l.s4 1983009808
        %v7214 = vunpack.c.0.s8 %v7213
        %v7215 = vlaneseq
        %v7216 = vshrl.u32 %v7215, 7
        %v7217 = vsub.s32 %v7214, %v7216
        %v7218 = vrot.slane %v7210, %v7217
        %v7220 = vunpack.c.l.s4 1983009808
        %v7221 = vunpack.c.0.s8 %v7220
        %v7222 = vlaneseq
        %v7223 = vshrl.u32 %v7222, 7
        %v7224 = vsub.s32 %v7221, %v7223
        %v7225 = vrot.slane %v7211, %v7224
        %v7226 = vcombine.low %v7170, %v7186
        %v7227 = vcombine.high %v7170, %v7186
        %v7229 = vunpack.c.l.s4 1934713408
        %v7230 = vunpack.c.0.s8 %v7229
        %v7231 = vlaneseq
        %v7232 = vshrl.u32 %v7231, 7
        %v7233 = vsub.s32 %v7230, %v7232
        %v7234 = vrot.slane %v7226, %v7233
        %v7236 = vunpack.c.l.s4 1934713408
        %v7237 = vunpack.c.0.s8 %v7236
        %v7238 = vlaneseq
        %v7239 = vshrl.u32 %v7238, 7
        %v7240 = vsub.s32 %v7237, %v7239
        %v7241 = vrot.slane %v7227, %v7240
        %v7242 = vcombine.low %v7177, %v7193
        %v7243 = vcombine.high %v7177, %v7193
        %v7245 = vunpack.c.l.s4 1934713408
        %v7246 = vunpack.c.0.s8 %v7245
        %v7247 = vlaneseq
        %v7248 = vshrl.u32 %v7247, 7
        %v7249 = vsub.s32 %v7246, %v7248
        %v7250 = vrot.slane %v7242, %v7249
        %v7252 = vunpack.c.l.s4 1934713408
        %v7253 = vunpack.c.0.s8 %v7252
        %v7254 = vlaneseq
        %v7255 = vshrl.u32 %v7254, 7
        %v7256 = vsub.s32 %v7253, %v7255
        %v7257 = vrot.slane %v7243, %v7256
        %v7258 = vcombine.low %v7202, %v7218
        %v7259 = vcombine.high %v7202, %v7218
        %v7261 = vunpack.c.l.s4 1934713408
        %v7262 = vunpack.c.0.s8 %v7261
        %v7263 = vlaneseq
        %v7264 = vshrl.u32 %v7263, 7
        %v7265 = vsub.s32 %v7262, %v7264
        %v7266 = vrot.slane %v7258, %v7265
        %v7268 = vunpack.c.l.s4 1934713408
        %v7269 = vunpack.c.0.s8 %v7268
        %v7270 = vlaneseq
        %v7271 = vshrl.u32 %v7270, 7
        %v7272 = vsub.s32 %v7269, %v7271
        %v7273 = vrot.slane %v7259, %v7272
        %v7274 = vcombine.low %v7209, %v7225
        %v7275 = vcombine.high %v7209, %v7225
        %v7277 = vunpack.c.l.s4 1934713408
        %v7278 = vunpack.c.0.s8 %v7277
        %v7279 = vlaneseq
        %v7280 = vshrl.u32 %v7279, 7
        %v7281 = vsub.s32 %v7278, %v7280
        %v7282 = vrot.slane %v7274, %v7281
        %v7284 = vunpack.c.l.s4 1934713408
        %v7285 = vunpack.c.0.s8 %v7284
        %v7286 = vlaneseq
        %v7287 = vshrl.u32 %v7286, 7
        %v7288 = vsub.s32 %v7285, %v7287
        %v7289 = vrot.slane %v7275, %v7288
        %v7290 = vcombine.low %v7234, %v7266
        %v7291 = vcombine.high %v7234, %v7266
        %v7292 = vcombine.low %v7241, %v7273
        %v7293 = vcombine.high %v7241, %v7273
        %v7294 = vcombine.low %v7250, %v7282
        %v7295 = vcombine.high %v7250, %v7282
        %v7296 = vcombine.low %v7257, %v7289
        %v7297 = vcombine.high %v7257, %v7289
        %7299 = vrot.lane.b32.xlu0 %v7155, 16
        %v7300 = vpop.permute.xlu0 %7299
        %7303 = vrot.lane.b32.xlu0 %v7156, 32
        %v7304 = vpop.permute.xlu0 %7303
        %7307 = vrot.lane.b32.xlu0 %v7157, 48
        %v7308 = vpop.permute.xlu0 %7307
        %7311 = vrot.lane.b32.xlu0 %v7158, 64
        %v7312 = vpop.permute.xlu0 %7311
        %7315 = vrot.lane.b32.xlu0 %v7159, 80
        %v7316 = vpop.permute.xlu0 %7315
        %7319 = vrot.lane.b32.xlu0 %v7160, 96
        %v7320 = vpop.permute.xlu0 %7319
        %7323 = vrot.lane.b32.xlu0 %v7161, 112
        %v7324 = vpop.permute.xlu0 %7323
        %7327 = vrot.lane.b32.xlu0 %v7291, 16
        %v7328 = vpop.permute.xlu0 %7327
        %7331 = vrot.lane.b32.xlu0 %v7292, 32
        %v7332 = vpop.permute.xlu0 %7331
        %7335 = vrot.lane.b32.xlu0 %v7293, 48
        %v7336 = vpop.permute.xlu0 %7335
        %7339 = vrot.lane.b32.xlu0 %v7294, 64
        %v7340 = vpop.permute.xlu0 %7339
        %7343 = vrot.lane.b32.xlu0 %v7295, 80
        %v7344 = vpop.permute.xlu0 %7343
        %7347 = vrot.lane.b32.xlu0 %v7296, 96
        %v7348 = vpop.permute.xlu0 %7347
        %7351 = vrot.lane.b32.xlu0 %v7297, 112
        %v7352 = vpop.permute.xlu0 %7351
        %v7354 = vsel %vm539, %v7154, %v7300
        %v7355 = vsel %vm541, %v7354, %v7304
        %v7356 = vsel %vm543, %v7355, %v7308
        %v7357 = vsel %vm545, %v7356, %v7312
        %v7358 = vsel %vm547, %v7357, %v7316
        %v7359 = vsel %vm549, %v7358, %v7320
        %v7360 = vsel %vm551, %v7359, %v7324
        %v7361 = vsel %vm539, %v7290, %v7328
        %v7362 = vsel %vm541, %v7361, %v7332
        %v7363 = vsel %vm543, %v7362, %v7336
        %v7364 = vsel %vm545, %v7363, %v7340
        %v7365 = vsel %vm547, %v7364, %v7344
        %v7366 = vsel %vm549, %v7365, %v7348
        %v7367 = vsel %vm551, %v7366, %v7352
        %7384 = vrot.lane.b32.xlu0 %v7002, 127
        %v7385 = vpop.permute.xlu0 %7384
        %7386 = vrot.lane.b32.xlu0 %v7003, 127
        %v7387 = vpop.permute.xlu0 %7386
        %7388 = vrot.lane.b32.xlu0 %v7005, 127
        %v7389 = vpop.permute.xlu0 %7388
        %7390 = vrot.lane.b32.xlu0 %v7006, 127
        %v7391 = vpop.permute.xlu0 %7390
        %7392 = vrot.lane.b32.xlu0 %v7008, 127
        %v7393 = vpop.permute.xlu0 %7392
        %7394 = vrot.lane.b32.xlu0 %v7009, 127
        %v7395 = vpop.permute.xlu0 %7394
        %7396 = vrot.lane.b32.xlu0 %v7011, 127
        %v7397 = vpop.permute.xlu0 %7396
        %7398 = vrot.lane.b32.xlu0 %v7012, 127
        %v7399 = vpop.permute.xlu0 %7398
        %7400 = vrot.lane.b32.xlu0 %v7014, 127
        %v7401 = vpop.permute.xlu0 %7400
        %7402 = vrot.lane.b32.xlu0 %v7015, 127
        %v7403 = vpop.permute.xlu0 %7402
        %7404 = vrot.lane.b32.xlu0 %v7017, 127
        %v7405 = vpop.permute.xlu0 %7404
        %7406 = vrot.lane.b32.xlu0 %v7018, 127
        %v7407 = vpop.permute.xlu0 %7406
        %7408 = vrot.lane.b32.xlu0 %v7020, 127
        %v7409 = vpop.permute.xlu0 %7408
        %7410 = vrot.lane.b32.xlu0 %v7021, 127
        %v7411 = vpop.permute.xlu0 %7410
        %7412 = vrot.lane.b32.xlu0 %v7023, 127
        %v7413 = vpop.permute.xlu0 %7412
        %7414 = vrot.lane.b32.xlu0 %v7024, 127
        %v7415 = vpop.permute.xlu0 %7414
        %v7432 = vcombine.low %v7385, %v7393
        %v7433 = vcombine.high %v7385, %v7393
        %v7435 = vunpack.c.l.s4 1983009808
        %v7436 = vunpack.c.0.s8 %v7435
        %v7437 = vlaneseq
        %v7438 = vshrl.u32 %v7437, 7
        %v7439 = vsub.s32 %v7436, %v7438
        %v7440 = vrot.slane %v7432, %v7439
        %v7442 = vunpack.c.l.s4 1983009808
        %v7443 = vunpack.c.0.s8 %v7442
        %v7444 = vlaneseq
        %v7445 = vshrl.u32 %v7444, 7
        %v7446 = vsub.s32 %v7443, %v7445
        %v7447 = vrot.slane %v7433, %v7446
        %v7448 = vcombine.low %v7389, %v7397
        %v7449 = vcombine.high %v7389, %v7397
        %v7451 = vunpack.c.l.s4 1983009808
        %v7452 = vunpack.c.0.s8 %v7451
        %v7453 = vlaneseq
        %v7454 = vshrl.u32 %v7453, 7
        %v7455 = vsub.s32 %v7452, %v7454
        %v7456 = vrot.slane %v7448, %v7455
        %v7458 = vunpack.c.l.s4 1983009808
        %v7459 = vunpack.c.0.s8 %v7458
        %v7460 = vlaneseq
        %v7461 = vshrl.u32 %v7460, 7
        %v7462 = vsub.s32 %v7459, %v7461
        %v7463 = vrot.slane %v7449, %v7462
        %v7464 = vcombine.low %v7401, %v7409
        %v7465 = vcombine.high %v7401, %v7409
        %v7467 = vunpack.c.l.s4 1983009808
        %v7468 = vunpack.c.0.s8 %v7467
        %v7469 = vlaneseq
        %v7470 = vshrl.u32 %v7469, 7
        %v7471 = vsub.s32 %v7468, %v7470
        %v7472 = vrot.slane %v7464, %v7471
        %v7474 = vunpack.c.l.s4 1983009808
        %v7475 = vunpack.c.0.s8 %v7474
        %v7476 = vlaneseq
        %v7477 = vshrl.u32 %v7476, 7
        %v7478 = vsub.s32 %v7475, %v7477
        %v7479 = vrot.slane %v7465, %v7478
        %v7480 = vcombine.low %v7405, %v7413
        %v7481 = vcombine.high %v7405, %v7413
        %v7483 = vunpack.c.l.s4 1983009808
        %v7484 = vunpack.c.0.s8 %v7483
        %v7485 = vlaneseq
        %v7486 = vshrl.u32 %v7485, 7
        %v7487 = vsub.s32 %v7484, %v7486
        %v7488 = vrot.slane %v7480, %v7487
        %v7490 = vunpack.c.l.s4 1983009808
        %v7491 = vunpack.c.0.s8 %v7490
        %v7492 = vlaneseq
        %v7493 = vshrl.u32 %v7492, 7
        %v7494 = vsub.s32 %v7491, %v7493
        %v7495 = vrot.slane %v7481, %v7494
        %v7496 = vcombine.low %v7440, %v7456
        %v7497 = vcombine.high %v7440, %v7456
        %v7499 = vunpack.c.l.s4 1934713408
        %v7500 = vunpack.c.0.s8 %v7499
        %v7501 = vlaneseq
        %v7502 = vshrl.u32 %v7501, 7
        %v7503 = vsub.s32 %v7500, %v7502
        %v7504 = vrot.slane %v7496, %v7503
        %v7506 = vunpack.c.l.s4 1934713408
        %v7507 = vunpack.c.0.s8 %v7506
        %v7508 = vlaneseq
        %v7509 = vshrl.u32 %v7508, 7
        %v7510 = vsub.s32 %v7507, %v7509
        %v7511 = vrot.slane %v7497, %v7510
        %v7512 = vcombine.low %v7447, %v7463
        %v7513 = vcombine.high %v7447, %v7463
        %v7515 = vunpack.c.l.s4 1934713408
        %v7516 = vunpack.c.0.s8 %v7515
        %v7517 = vlaneseq
        %v7518 = vshrl.u32 %v7517, 7
        %v7519 = vsub.s32 %v7516, %v7518
        %v7520 = vrot.slane %v7512, %v7519
        %v7522 = vunpack.c.l.s4 1934713408
        %v7523 = vunpack.c.0.s8 %v7522
        %v7524 = vlaneseq
        %v7525 = vshrl.u32 %v7524, 7
        %v7526 = vsub.s32 %v7523, %v7525
        %v7527 = vrot.slane %v7513, %v7526
        %v7528 = vcombine.low %v7472, %v7488
        %v7529 = vcombine.high %v7472, %v7488
        %v7531 = vunpack.c.l.s4 1934713408
        %v7532 = vunpack.c.0.s8 %v7531
        %v7533 = vlaneseq
        %v7534 = vshrl.u32 %v7533, 7
        %v7535 = vsub.s32 %v7532, %v7534
        %v7536 = vrot.slane %v7528, %v7535
        %v7538 = vunpack.c.l.s4 1934713408
        %v7539 = vunpack.c.0.s8 %v7538
        %v7540 = vlaneseq
        %v7541 = vshrl.u32 %v7540, 7
        %v7542 = vsub.s32 %v7539, %v7541
        %v7543 = vrot.slane %v7529, %v7542
        %v7544 = vcombine.low %v7479, %v7495
        %v7545 = vcombine.high %v7479, %v7495
        %v7547 = vunpack.c.l.s4 1934713408
        %v7548 = vunpack.c.0.s8 %v7547
        %v7549 = vlaneseq
        %v7550 = vshrl.u32 %v7549, 7
        %v7551 = vsub.s32 %v7548, %v7550
        %v7552 = vrot.slane %v7544, %v7551
        %v7554 = vunpack.c.l.s4 1934713408
        %v7555 = vunpack.c.0.s8 %v7554
        %v7556 = vlaneseq
        %v7557 = vshrl.u32 %v7556, 7
        %v7558 = vsub.s32 %v7555, %v7557
        %v7559 = vrot.slane %v7545, %v7558
        %v7560 = vcombine.low %v7504, %v7536
        %v7561 = vcombine.high %v7504, %v7536
        %v7562 = vcombine.low %v7511, %v7543
        %v7563 = vcombine.high %v7511, %v7543
        %v7564 = vcombine.low %v7520, %v7552
        %v7565 = vcombine.high %v7520, %v7552
        %v7566 = vcombine.low %v7527, %v7559
        %v7567 = vcombine.high %v7527, %v7559
        %v7568 = vcombine.low %v7387, %v7395
        %v7569 = vcombine.high %v7387, %v7395
        %v7571 = vunpack.c.l.s4 1983009808
        %v7572 = vunpack.c.0.s8 %v7571
        %v7573 = vlaneseq
        %v7574 = vshrl.u32 %v7573, 7
        %v7575 = vsub.s32 %v7572, %v7574
        %v7576 = vrot.slane %v7568, %v7575
        %v7578 = vunpack.c.l.s4 1983009808
        %v7579 = vunpack.c.0.s8 %v7578
        %v7580 = vlaneseq
        %v7581 = vshrl.u32 %v7580, 7
        %v7582 = vsub.s32 %v7579, %v7581
        %v7583 = vrot.slane %v7569, %v7582
        %v7584 = vcombine.low %v7391, %v7399
        %v7585 = vcombine.high %v7391, %v7399
        %v7587 = vunpack.c.l.s4 1983009808
        %v7588 = vunpack.c.0.s8 %v7587
        %v7589 = vlaneseq
        %v7590 = vshrl.u32 %v7589, 7
        %v7591 = vsub.s32 %v7588, %v7590
        %v7592 = vrot.slane %v7584, %v7591
        %v7594 = vunpack.c.l.s4 1983009808
        %v7595 = vunpack.c.0.s8 %v7594
        %v7596 = vlaneseq
        %v7597 = vshrl.u32 %v7596, 7
        %v7598 = vsub.s32 %v7595, %v7597
        %v7599 = vrot.slane %v7585, %v7598
        %v7600 = vcombine.low %v7403, %v7411
        %v7601 = vcombine.high %v7403, %v7411
        %v7603 = vunpack.c.l.s4 1983009808
        %v7604 = vunpack.c.0.s8 %v7603
        %v7605 = vlaneseq
        %v7606 = vshrl.u32 %v7605, 7
        %v7607 = vsub.s32 %v7604, %v7606
        %v7608 = vrot.slane %v7600, %v7607
        %v7610 = vunpack.c.l.s4 1983009808
        %v7611 = vunpack.c.0.s8 %v7610
        %v7612 = vlaneseq
        %v7613 = vshrl.u32 %v7612, 7
        %v7614 = vsub.s32 %v7611, %v7613
        %v7615 = vrot.slane %v7601, %v7614
        %v7616 = vcombine.low %v7407, %v7415
        %v7617 = vcombine.high %v7407, %v7415
        %v7619 = vunpack.c.l.s4 1983009808
        %v7620 = vunpack.c.0.s8 %v7619
        %v7621 = vlaneseq
        %v7622 = vshrl.u32 %v7621, 7
        %v7623 = vsub.s32 %v7620, %v7622
        %v7624 = vrot.slane %v7616, %v7623
        %v7626 = vunpack.c.l.s4 1983009808
        %v7627 = vunpack.c.0.s8 %v7626
        %v7628 = vlaneseq
        %v7629 = vshrl.u32 %v7628, 7
        %v7630 = vsub.s32 %v7627, %v7629
        %v7631 = vrot.slane %v7617, %v7630
        %v7632 = vcombine.low %v7576, %v7592
        %v7633 = vcombine.high %v7576, %v7592
        %v7635 = vunpack.c.l.s4 1934713408
        %v7636 = vunpack.c.0.s8 %v7635
        %v7637 = vlaneseq
        %v7638 = vshrl.u32 %v7637, 7
        %v7639 = vsub.s32 %v7636, %v7638
        %v7640 = vrot.slane %v7632, %v7639
        %v7642 = vunpack.c.l.s4 1934713408
        %v7643 = vunpack.c.0.s8 %v7642
        %v7644 = vlaneseq
        %v7645 = vshrl.u32 %v7644, 7
        %v7646 = vsub.s32 %v7643, %v7645
        %v7647 = vrot.slane %v7633, %v7646
        %v7648 = vcombine.low %v7583, %v7599
        %v7649 = vcombine.high %v7583, %v7599
        %v7651 = vunpack.c.l.s4 1934713408
        %v7652 = vunpack.c.0.s8 %v7651
        %v7653 = vlaneseq
        %v7654 = vshrl.u32 %v7653, 7
        %v7655 = vsub.s32 %v7652, %v7654
        %v7656 = vrot.slane %v7648, %v7655
        %v7658 = vunpack.c.l.s4 1934713408
        %v7659 = vunpack.c.0.s8 %v7658
        %v7660 = vlaneseq
        %v7661 = vshrl.u32 %v7660, 7
        %v7662 = vsub.s32 %v7659, %v7661
        %v7663 = vrot.slane %v7649, %v7662
        %v7664 = vcombine.low %v7608, %v7624
        %v7665 = vcombine.high %v7608, %v7624
        %v7667 = vunpack.c.l.s4 1934713408
        %v7668 = vunpack.c.0.s8 %v7667
        %v7669 = vlaneseq
        %v7670 = vshrl.u32 %v7669, 7
        %v7671 = vsub.s32 %v7668, %v7670
        %v7672 = vrot.slane %v7664, %v7671
        %v7674 = vunpack.c.l.s4 1934713408
        %v7675 = vunpack.c.0.s8 %v7674
        %v7676 = vlaneseq
        %v7677 = vshrl.u32 %v7676, 7
        %v7678 = vsub.s32 %v7675, %v7677
        %v7679 = vrot.slane %v7665, %v7678
        %v7680 = vcombine.low %v7615, %v7631
        %v7681 = vcombine.high %v7615, %v7631
        %v7683 = vunpack.c.l.s4 1934713408
        %v7684 = vunpack.c.0.s8 %v7683
        %v7685 = vlaneseq
        %v7686 = vshrl.u32 %v7685, 7
        %v7687 = vsub.s32 %v7684, %v7686
        %v7688 = vrot.slane %v7680, %v7687
        %v7690 = vunpack.c.l.s4 1934713408
        %v7691 = vunpack.c.0.s8 %v7690
        %v7692 = vlaneseq
        %v7693 = vshrl.u32 %v7692, 7
        %v7694 = vsub.s32 %v7691, %v7693
        %v7695 = vrot.slane %v7681, %v7694
        %v7696 = vcombine.low %v7640, %v7672
        %v7697 = vcombine.high %v7640, %v7672
        %v7698 = vcombine.low %v7647, %v7679
        %v7699 = vcombine.high %v7647, %v7679
        %v7700 = vcombine.low %v7656, %v7688
        %v7701 = vcombine.high %v7656, %v7688
        %v7702 = vcombine.low %v7663, %v7695
        %v7703 = vcombine.high %v7663, %v7695
        %7705 = vrot.lane.b32.xlu0 %v7561, 16
        %v7706 = vpop.permute.xlu0 %7705
        %7709 = vrot.lane.b32.xlu0 %v7562, 32
        %v7710 = vpop.permute.xlu0 %7709
        %7713 = vrot.lane.b32.xlu0 %v7563, 48
        %v7714 = vpop.permute.xlu0 %7713
        %7717 = vrot.lane.b32.xlu0 %v7564, 64
        %v7718 = vpop.permute.xlu0 %7717
        %7721 = vrot.lane.b32.xlu0 %v7565, 80
        %v7722 = vpop.permute.xlu0 %7721
        %7725 = vrot.lane.b32.xlu0 %v7566, 96
        %v7726 = vpop.permute.xlu0 %7725
        %7729 = vrot.lane.b32.xlu0 %v7567, 112
        %v7730 = vpop.permute.xlu0 %7729
        %7733 = vrot.lane.b32.xlu0 %v7697, 16
        %v7734 = vpop.permute.xlu0 %7733
        %7737 = vrot.lane.b32.xlu0 %v7698, 32
        %v7738 = vpop.permute.xlu0 %7737
        %7741 = vrot.lane.b32.xlu0 %v7699, 48
        %v7742 = vpop.permute.xlu0 %7741
        %7745 = vrot.lane.b32.xlu0 %v7700, 64
        %v7746 = vpop.permute.xlu0 %7745
        %7749 = vrot.lane.b32.xlu0 %v7701, 80
        %v7750 = vpop.permute.xlu0 %7749
        %7753 = vrot.lane.b32.xlu0 %v7702, 96
        %v7754 = vpop.permute.xlu0 %7753
        %7757 = vrot.lane.b32.xlu0 %v7703, 112
        %v7758 = vpop.permute.xlu0 %7757
        %v7760 = vsel %vm539, %v7560, %v7706
        %v7761 = vsel %vm541, %v7760, %v7710
        %v7762 = vsel %vm543, %v7761, %v7714
        %v7763 = vsel %vm545, %v7762, %v7718
        %v7764 = vsel %vm547, %v7763, %v7722
        %v7765 = vsel %vm549, %v7764, %v7726
        %v7766 = vsel %vm551, %v7765, %v7730
        %v7767 = vsel %vm539, %v7696, %v7734
        %v7768 = vsel %vm541, %v7767, %v7738
        %v7769 = vsel %vm543, %v7768, %v7742
        %v7770 = vsel %vm545, %v7769, %v7746
        %v7771 = vsel %vm547, %v7770, %v7750
        %v7772 = vsel %vm549, %v7771, %v7754
        %v7773 = vsel %vm551, %v7772, %v7758
        %7774 = vrot.lane.b32.xlu0 %v7002, 126
        %v7775 = vpop.permute.xlu0 %7774
        %7776 = vrot.lane.b32.xlu0 %v7003, 126
        %v7777 = vpop.permute.xlu0 %7776
        %7778 = vrot.lane.b32.xlu0 %v7005, 126
        %v7779 = vpop.permute.xlu0 %7778
        %7780 = vrot.lane.b32.xlu0 %v7006, 126
        %v7781 = vpop.permute.xlu0 %7780
        %7782 = vrot.lane.b32.xlu0 %v7008, 126
        %v7783 = vpop.permute.xlu0 %7782
        %7784 = vrot.lane.b32.xlu0 %v7009, 126
        %v7785 = vpop.permute.xlu0 %7784
        %7786 = vrot.lane.b32.xlu0 %v7011, 126
        %v7787 = vpop.permute.xlu0 %7786
        %7788 = vrot.lane.b32.xlu0 %v7012, 126
        %v7789 = vpop.permute.xlu0 %7788
        %7790 = vrot.lane.b32.xlu0 %v7014, 126
        %v7791 = vpop.permute.xlu0 %7790
        %7792 = vrot.lane.b32.xlu0 %v7015, 126
        %v7793 = vpop.permute.xlu0 %7792
        %7794 = vrot.lane.b32.xlu0 %v7017, 126
        %v7795 = vpop.permute.xlu0 %7794
        %7796 = vrot.lane.b32.xlu0 %v7018, 126
        %v7797 = vpop.permute.xlu0 %7796
        %7798 = vrot.lane.b32.xlu0 %v7020, 126
        %v7799 = vpop.permute.xlu0 %7798
        %7800 = vrot.lane.b32.xlu0 %v7021, 126
        %v7801 = vpop.permute.xlu0 %7800
        %7802 = vrot.lane.b32.xlu0 %v7023, 126
        %v7803 = vpop.permute.xlu0 %7802
        %7804 = vrot.lane.b32.xlu0 %v7024, 126
        %v7805 = vpop.permute.xlu0 %7804
        %v7822 = vcombine.low %v7775, %v7783
        %v7823 = vcombine.high %v7775, %v7783
        %v7825 = vunpack.c.l.s4 1983009808
        %v7826 = vunpack.c.0.s8 %v7825
        %v7827 = vlaneseq
        %v7828 = vshrl.u32 %v7827, 7
        %v7829 = vsub.s32 %v7826, %v7828
        %v7830 = vrot.slane %v7822, %v7829
        %v7832 = vunpack.c.l.s4 1983009808
        %v7833 = vunpack.c.0.s8 %v7832
        %v7834 = vlaneseq
        %v7835 = vshrl.u32 %v7834, 7
        %v7836 = vsub.s32 %v7833, %v7835
        %v7837 = vrot.slane %v7823, %v7836
        %v7838 = vcombine.low %v7779, %v7787
        %v7839 = vcombine.high %v7779, %v7787
        %v7841 = vunpack.c.l.s4 1983009808
        %v7842 = vunpack.c.0.s8 %v7841
        %v7843 = vlaneseq
        %v7844 = vshrl.u32 %v7843, 7
        %v7845 = vsub.s32 %v7842, %v7844
        %v7846 = vrot.slane %v7838, %v7845
        %v7848 = vunpack.c.l.s4 1983009808
        %v7849 = vunpack.c.0.s8 %v7848
        %v7850 = vlaneseq
        %v7851 = vshrl.u32 %v7850, 7
        %v7852 = vsub.s32 %v7849, %v7851
        %v7853 = vrot.slane %v7839, %v7852
        %v7854 = vcombine.low %v7791, %v7799
        %v7855 = vcombine.high %v7791, %v7799
        %v7857 = vunpack.c.l.s4 1983009808
        %v7858 = vunpack.c.0.s8 %v7857
        %v7859 = vlaneseq
        %v7860 = vshrl.u32 %v7859, 7
        %v7861 = vsub.s32 %v7858, %v7860
        %v7862 = vrot.slane %v7854, %v7861
        %v7864 = vunpack.c.l.s4 1983009808
        %v7865 = vunpack.c.0.s8 %v7864
        %v7866 = vlaneseq
        %v7867 = vshrl.u32 %v7866, 7
        %v7868 = vsub.s32 %v7865, %v7867
        %v7869 = vrot.slane %v7855, %v7868
        %v7870 = vcombine.low %v7795, %v7803
        %v7871 = vcombine.high %v7795, %v7803
        %v7873 = vunpack.c.l.s4 1983009808
        %v7874 = vunpack.c.0.s8 %v7873
        %v7875 = vlaneseq
        %v7876 = vshrl.u32 %v7875, 7
        %v7877 = vsub.s32 %v7874, %v7876
        %v7878 = vrot.slane %v7870, %v7877
        %v7880 = vunpack.c.l.s4 1983009808
        %v7881 = vunpack.c.0.s8 %v7880
        %v7882 = vlaneseq
        %v7883 = vshrl.u32 %v7882, 7
        %v7884 = vsub.s32 %v7881, %v7883
        %v7885 = vrot.slane %v7871, %v7884
        %v7886 = vcombine.low %v7830, %v7846
        %v7887 = vcombine.high %v7830, %v7846
        %v7889 = vunpack.c.l.s4 1934713408
        %v7890 = vunpack.c.0.s8 %v7889
        %v7891 = vlaneseq
        %v7892 = vshrl.u32 %v7891, 7
        %v7893 = vsub.s32 %v7890, %v7892
        %v7894 = vrot.slane %v7886, %v7893
        %v7896 = vunpack.c.l.s4 1934713408
        %v7897 = vunpack.c.0.s8 %v7896
        %v7898 = vlaneseq
        %v7899 = vshrl.u32 %v7898, 7
        %v7900 = vsub.s32 %v7897, %v7899
        %v7901 = vrot.slane %v7887, %v7900
        %v7902 = vcombine.low %v7837, %v7853
        %v7903 = vcombine.high %v7837, %v7853
        %v7905 = vunpack.c.l.s4 1934713408
        %v7906 = vunpack.c.0.s8 %v7905
        %v7907 = vlaneseq
        %v7908 = vshrl.u32 %v7907, 7
        %v7909 = vsub.s32 %v7906, %v7908
        %v7910 = vrot.slane %v7902, %v7909
        %v7912 = vunpack.c.l.s4 1934713408
        %v7913 = vunpack.c.0.s8 %v7912
        %v7914 = vlaneseq
        %v7915 = vshrl.u32 %v7914, 7
        %v7916 = vsub.s32 %v7913, %v7915
        %v7917 = vrot.slane %v7903, %v7916
        %v7918 = vcombine.low %v7862, %v7878
        %v7919 = vcombine.high %v7862, %v7878
        %v7921 = vunpack.c.l.s4 1934713408
        %v7922 = vunpack.c.0.s8 %v7921
        %v7923 = vlaneseq
        %v7924 = vshrl.u32 %v7923, 7
        %v7925 = vsub.s32 %v7922, %v7924
        %v7926 = vrot.slane %v7918, %v7925
        %v7928 = vunpack.c.l.s4 1934713408
        %v7929 = vunpack.c.0.s8 %v7928
        %v7930 = vlaneseq
        %v7931 = vshrl.u32 %v7930, 7
        %v7932 = vsub.s32 %v7929, %v7931
        %v7933 = vrot.slane %v7919, %v7932
        %v7934 = vcombine.low %v7869, %v7885
        %v7935 = vcombine.high %v7869, %v7885
        %v7937 = vunpack.c.l.s4 1934713408
        %v7938 = vunpack.c.0.s8 %v7937
        %v7939 = vlaneseq
        %v7940 = vshrl.u32 %v7939, 7
        %v7941 = vsub.s32 %v7938, %v7940
        %v7942 = vrot.slane %v7934, %v7941
        %v7944 = vunpack.c.l.s4 1934713408
        %v7945 = vunpack.c.0.s8 %v7944
        %v7946 = vlaneseq
        %v7947 = vshrl.u32 %v7946, 7
        %v7948 = vsub.s32 %v7945, %v7947
        %v7949 = vrot.slane %v7935, %v7948
        %v7950 = vcombine.low %v7894, %v7926
        %v7951 = vcombine.high %v7894, %v7926
        %v7952 = vcombine.low %v7901, %v7933
        %v7953 = vcombine.high %v7901, %v7933
        %v7954 = vcombine.low %v7910, %v7942
        %v7955 = vcombine.high %v7910, %v7942
        %v7956 = vcombine.low %v7917, %v7949
        %v7957 = vcombine.high %v7917, %v7949
        %v7958 = vcombine.low %v7777, %v7785
        %v7959 = vcombine.high %v7777, %v7785
        %v7961 = vunpack.c.l.s4 1983009808
        %v7962 = vunpack.c.0.s8 %v7961
        %v7963 = vlaneseq
        %v7964 = vshrl.u32 %v7963, 7
        %v7965 = vsub.s32 %v7962, %v7964
        %v7966 = vrot.slane %v7958, %v7965
        %v7968 = vunpack.c.l.s4 1983009808
        %v7969 = vunpack.c.0.s8 %v7968
        %v7970 = vlaneseq
        %v7971 = vshrl.u32 %v7970, 7
        %v7972 = vsub.s32 %v7969, %v7971
        %v7973 = vrot.slane %v7959, %v7972
        %v7974 = vcombine.low %v7781, %v7789
        %v7975 = vcombine.high %v7781, %v7789
        %v7977 = vunpack.c.l.s4 1983009808
        %v7978 = vunpack.c.0.s8 %v7977
        %v7979 = vlaneseq
        %v7980 = vshrl.u32 %v7979, 7
        %v7981 = vsub.s32 %v7978, %v7980
        %v7982 = vrot.slane %v7974, %v7981
        %v7984 = vunpack.c.l.s4 1983009808
        %v7985 = vunpack.c.0.s8 %v7984
        %v7986 = vlaneseq
        %v7987 = vshrl.u32 %v7986, 7
        %v7988 = vsub.s32 %v7985, %v7987
        %v7989 = vrot.slane %v7975, %v7988
        %v7990 = vcombine.low %v7793, %v7801
        %v7991 = vcombine.high %v7793, %v7801
        %v7993 = vunpack.c.l.s4 1983009808
        %v7994 = vunpack.c.0.s8 %v7993
        %v7995 = vlaneseq
        %v7996 = vshrl.u32 %v7995, 7
        %v7997 = vsub.s32 %v7994, %v7996
        %v7998 = vrot.slane %v7990, %v7997
        %v8000 = vunpack.c.l.s4 1983009808
        %v8001 = vunpack.c.0.s8 %v8000
        %v8002 = vlaneseq
        %v8003 = vshrl.u32 %v8002, 7
        %v8004 = vsub.s32 %v8001, %v8003
        %v8005 = vrot.slane %v7991, %v8004
        %v8006 = vcombine.low %v7797, %v7805
        %v8007 = vcombine.high %v7797, %v7805
        %v8009 = vunpack.c.l.s4 1983009808
        %v8010 = vunpack.c.0.s8 %v8009
        %v8011 = vlaneseq
        %v8012 = vshrl.u32 %v8011, 7
        %v8013 = vsub.s32 %v8010, %v8012
        %v8014 = vrot.slane %v8006, %v8013
        %v8016 = vunpack.c.l.s4 1983009808
        %v8017 = vunpack.c.0.s8 %v8016
        %v8018 = vlaneseq
        %v8019 = vshrl.u32 %v8018, 7
        %v8020 = vsub.s32 %v8017, %v8019
        %v8021 = vrot.slane %v8007, %v8020
        %v8022 = vcombine.low %v7966, %v7982
        %v8023 = vcombine.high %v7966, %v7982
        %v8025 = vunpack.c.l.s4 1934713408
        %v8026 = vunpack.c.0.s8 %v8025
        %v8027 = vlaneseq
        %v8028 = vshrl.u32 %v8027, 7
        %v8029 = vsub.s32 %v8026, %v8028
        %v8030 = vrot.slane %v8022, %v8029
        %v8032 = vunpack.c.l.s4 1934713408
        %v8033 = vunpack.c.0.s8 %v8032
        %v8034 = vlaneseq
        %v8035 = vshrl.u32 %v8034, 7
        %v8036 = vsub.s32 %v8033, %v8035
        %v8037 = vrot.slane %v8023, %v8036
        %v8038 = vcombine.low %v7973, %v7989
        %v8039 = vcombine.high %v7973, %v7989
        %v8041 = vunpack.c.l.s4 1934713408
        %v8042 = vunpack.c.0.s8 %v8041
        %v8043 = vlaneseq
        %v8044 = vshrl.u32 %v8043, 7
        %v8045 = vsub.s32 %v8042, %v8044
        %v8046 = vrot.slane %v8038, %v8045
        %v8048 = vunpack.c.l.s4 1934713408
        %v8049 = vunpack.c.0.s8 %v8048
        %v8050 = vlaneseq
        %v8051 = vshrl.u32 %v8050, 7
        %v8052 = vsub.s32 %v8049, %v8051
        %v8053 = vrot.slane %v8039, %v8052
        %v8054 = vcombine.low %v7998, %v8014
        %v8055 = vcombine.high %v7998, %v8014
        %v8057 = vunpack.c.l.s4 1934713408
        %v8058 = vunpack.c.0.s8 %v8057
        %v8059 = vlaneseq
        %v8060 = vshrl.u32 %v8059, 7
        %v8061 = vsub.s32 %v8058, %v8060
        %v8062 = vrot.slane %v8054, %v8061
        %v8064 = vunpack.c.l.s4 1934713408
        %v8065 = vunpack.c.0.s8 %v8064
        %v8066 = vlaneseq
        %v8067 = vshrl.u32 %v8066, 7
        %v8068 = vsub.s32 %v8065, %v8067
        %v8069 = vrot.slane %v8055, %v8068
        %v8070 = vcombine.low %v8005, %v8021
        %v8071 = vcombine.high %v8005, %v8021
        %v8073 = vunpack.c.l.s4 1934713408
        %v8074 = vunpack.c.0.s8 %v8073
        %v8075 = vlaneseq
        %v8076 = vshrl.u32 %v8075, 7
        %v8077 = vsub.s32 %v8074, %v8076
        %v8078 = vrot.slane %v8070, %v8077
        %v8080 = vunpack.c.l.s4 1934713408
        %v8081 = vunpack.c.0.s8 %v8080
        %v8082 = vlaneseq
        %v8083 = vshrl.u32 %v8082, 7
        %v8084 = vsub.s32 %v8081, %v8083
        %v8085 = vrot.slane %v8071, %v8084
        %v8086 = vcombine.low %v8030, %v8062
        %v8087 = vcombine.high %v8030, %v8062
        %v8088 = vcombine.low %v8037, %v8069
        %v8089 = vcombine.high %v8037, %v8069
        %v8090 = vcombine.low %v8046, %v8078
        %v8091 = vcombine.high %v8046, %v8078
        %v8092 = vcombine.low %v8053, %v8085
        %v8093 = vcombine.high %v8053, %v8085
        %8095 = vrot.lane.b32.xlu0 %v7951, 16
        %v8096 = vpop.permute.xlu0 %8095
        %8099 = vrot.lane.b32.xlu0 %v7952, 32
        %v8100 = vpop.permute.xlu0 %8099
        %8103 = vrot.lane.b32.xlu0 %v7953, 48
        %v8104 = vpop.permute.xlu0 %8103
        %8107 = vrot.lane.b32.xlu0 %v7954, 64
        %v8108 = vpop.permute.xlu0 %8107
        %8111 = vrot.lane.b32.xlu0 %v7955, 80
        %v8112 = vpop.permute.xlu0 %8111
        %8115 = vrot.lane.b32.xlu0 %v7956, 96
        %v8116 = vpop.permute.xlu0 %8115
        %8119 = vrot.lane.b32.xlu0 %v7957, 112
        %v8120 = vpop.permute.xlu0 %8119
        %8123 = vrot.lane.b32.xlu0 %v8087, 16
        %v8124 = vpop.permute.xlu0 %8123
        %8127 = vrot.lane.b32.xlu0 %v8088, 32
        %v8128 = vpop.permute.xlu0 %8127
        %8131 = vrot.lane.b32.xlu0 %v8089, 48
        %v8132 = vpop.permute.xlu0 %8131
        %8135 = vrot.lane.b32.xlu0 %v8090, 64
        %v8136 = vpop.permute.xlu0 %8135
        %8139 = vrot.lane.b32.xlu0 %v8091, 80
        %v8140 = vpop.permute.xlu0 %8139
        %8143 = vrot.lane.b32.xlu0 %v8092, 96
        %v8144 = vpop.permute.xlu0 %8143
        %8147 = vrot.lane.b32.xlu0 %v8093, 112
        %v8148 = vpop.permute.xlu0 %8147
        %v8150 = vsel %vm539, %v7950, %v8096
        %v8151 = vsel %vm541, %v8150, %v8100
        %v8152 = vsel %vm543, %v8151, %v8104
        %v8153 = vsel %vm545, %v8152, %v8108
        %v8154 = vsel %vm547, %v8153, %v8112
        %v8155 = vsel %vm549, %v8154, %v8116
        %v8156 = vsel %vm551, %v8155, %v8120
        %v8157 = vsel %vm539, %v8086, %v8124
        %v8158 = vsel %vm541, %v8157, %v8128
        %v8159 = vsel %vm543, %v8158, %v8132
        %v8160 = vsel %vm545, %v8159, %v8136
        %v8161 = vsel %vm547, %v8160, %v8140
        %v8162 = vsel %vm549, %v8161, %v8144
        %v8163 = vsel %vm551, %v8162, %v8148
        %v8172 = vrot.slane %v7002, 1
        %v8173 = vrot.slane %v7003, 1
        %v8174 = vsel %vm1032, %v8172, %v8173
        %v8175 = vrot.slane %v7004, 1
        %v8176 = vsel %vm1032, %v8173, %v8175
        %v8177 = vrot.slane %v7005, 1
        %v8178 = vrot.slane %v7006, 1
        %v8179 = vsel %vm1032, %v8177, %v8178
        %v8180 = vrot.slane %v7007, 1
        %v8181 = vsel %vm1032, %v8178, %v8180
        %v8182 = vrot.slane %v7008, 1
        %v8183 = vrot.slane %v7009, 1
        %v8184 = vsel %vm1032, %v8182, %v8183
        %v8185 = vrot.slane %v7010, 1
        %v8186 = vsel %vm1032, %v8183, %v8185
        %v8187 = vrot.slane %v7011, 1
        %v8188 = vrot.slane %v7012, 1
        %v8189 = vsel %vm1032, %v8187, %v8188
        %v8190 = vrot.slane %v7013, 1
        %v8191 = vsel %vm1032, %v8188, %v8190
        %v8192 = vrot.slane %v7014, 1
        %v8193 = vrot.slane %v7015, 1
        %v8194 = vsel %vm1032, %v8192, %v8193
        %v8195 = vrot.slane %v7016, 1
        %v8196 = vsel %vm1032, %v8193, %v8195
        %v8197 = vrot.slane %v7017, 1
        %v8198 = vrot.slane %v7018, 1
        %v8199 = vsel %vm1032, %v8197, %v8198
        %v8200 = vrot.slane %v7019, 1
        %v8201 = vsel %vm1032, %v8198, %v8200
        %v8202 = vrot.slane %v7020, 1
        %v8203 = vrot.slane %v7021, 1
        %v8204 = vsel %vm1032, %v8202, %v8203
        %v8205 = vrot.slane %v7022, 1
        %v8206 = vsel %vm1032, %v8203, %v8205
        %v8207 = vrot.slane %v7023, 1
        %v8208 = vrot.slane %v7024, 1
        %v8209 = vsel %vm1032, %v8207, %v8208
        %v8210 = vrot.slane %v7025, 1
        %v8211 = vsel %vm1032, %v8208, %v8210
        %v8228 = vcombine.low %v8174, %v8184
        %v8229 = vcombine.high %v8174, %v8184
        %v8231 = vunpack.c.l.s4 1983009808
        %v8232 = vunpack.c.0.s8 %v8231
        %v8233 = vlaneseq
        %v8234 = vshrl.u32 %v8233, 7
        %v8235 = vsub.s32 %v8232, %v8234
        %v8236 = vrot.slane %v8228, %v8235
        %v8238 = vunpack.c.l.s4 1983009808
        %v8239 = vunpack.c.0.s8 %v8238
        %v8240 = vlaneseq
        %v8241 = vshrl.u32 %v8240, 7
        %v8242 = vsub.s32 %v8239, %v8241
        %v8243 = vrot.slane %v8229, %v8242
        %v8244 = vcombine.low %v8179, %v8189
        %v8245 = vcombine.high %v8179, %v8189
        %v8247 = vunpack.c.l.s4 1983009808
        %v8248 = vunpack.c.0.s8 %v8247
        %v8249 = vlaneseq
        %v8250 = vshrl.u32 %v8249, 7
        %v8251 = vsub.s32 %v8248, %v8250
        %v8252 = vrot.slane %v8244, %v8251
        %v8254 = vunpack.c.l.s4 1983009808
        %v8255 = vunpack.c.0.s8 %v8254
        %v8256 = vlaneseq
        %v8257 = vshrl.u32 %v8256, 7
        %v8258 = vsub.s32 %v8255, %v8257
        %v8259 = vrot.slane %v8245, %v8258
        %v8260 = vcombine.low %v8194, %v8204
        %v8261 = vcombine.high %v8194, %v8204
        %v8263 = vunpack.c.l.s4 1983009808
        %v8264 = vunpack.c.0.s8 %v8263
        %v8265 = vlaneseq
        %v8266 = vshrl.u32 %v8265, 7
        %v8267 = vsub.s32 %v8264, %v8266
        %v8268 = vrot.slane %v8260, %v8267
        %v8270 = vunpack.c.l.s4 1983009808
        %v8271 = vunpack.c.0.s8 %v8270
        %v8272 = vlaneseq
        %v8273 = vshrl.u32 %v8272, 7
        %v8274 = vsub.s32 %v8271, %v8273
        %v8275 = vrot.slane %v8261, %v8274
        %v8276 = vcombine.low %v8199, %v8209
        %v8277 = vcombine.high %v8199, %v8209
        %v8279 = vunpack.c.l.s4 1983009808
        %v8280 = vunpack.c.0.s8 %v8279
        %v8281 = vlaneseq
        %v8282 = vshrl.u32 %v8281, 7
        %v8283 = vsub.s32 %v8280, %v8282
        %v8284 = vrot.slane %v8276, %v8283
        %v8286 = vunpack.c.l.s4 1983009808
        %v8287 = vunpack.c.0.s8 %v8286
        %v8288 = vlaneseq
        %v8289 = vshrl.u32 %v8288, 7
        %v8290 = vsub.s32 %v8287, %v8289
        %v8291 = vrot.slane %v8277, %v8290
        %v8292 = vcombine.low %v8236, %v8252
        %v8293 = vcombine.high %v8236, %v8252
        %v8295 = vunpack.c.l.s4 1934713408
        %v8296 = vunpack.c.0.s8 %v8295
        %v8297 = vlaneseq
        %v8298 = vshrl.u32 %v8297, 7
        %v8299 = vsub.s32 %v8296, %v8298
        %v8300 = vrot.slane %v8292, %v8299
        %v8302 = vunpack.c.l.s4 1934713408
        %v8303 = vunpack.c.0.s8 %v8302
        %v8304 = vlaneseq
        %v8305 = vshrl.u32 %v8304, 7
        %v8306 = vsub.s32 %v8303, %v8305
        %v8307 = vrot.slane %v8293, %v8306
        %v8308 = vcombine.low %v8243, %v8259
        %v8309 = vcombine.high %v8243, %v8259
        %v8311 = vunpack.c.l.s4 1934713408
        %v8312 = vunpack.c.0.s8 %v8311
        %v8313 = vlaneseq
        %v8314 = vshrl.u32 %v8313, 7
        %v8315 = vsub.s32 %v8312, %v8314
        %v8316 = vrot.slane %v8308, %v8315
        %v8318 = vunpack.c.l.s4 1934713408
        %v8319 = vunpack.c.0.s8 %v8318
        %v8320 = vlaneseq
        %v8321 = vshrl.u32 %v8320, 7
        %v8322 = vsub.s32 %v8319, %v8321
        %v8323 = vrot.slane %v8309, %v8322
        %v8324 = vcombine.low %v8268, %v8284
        %v8325 = vcombine.high %v8268, %v8284
        %v8327 = vunpack.c.l.s4 1934713408
        %v8328 = vunpack.c.0.s8 %v8327
        %v8329 = vlaneseq
        %v8330 = vshrl.u32 %v8329, 7
        %v8331 = vsub.s32 %v8328, %v8330
        %v8332 = vrot.slane %v8324, %v8331
        %v8334 = vunpack.c.l.s4 1934713408
        %v8335 = vunpack.c.0.s8 %v8334
        %v8336 = vlaneseq
        %v8337 = vshrl.u32 %v8336, 7
        %v8338 = vsub.s32 %v8335, %v8337
        %v8339 = vrot.slane %v8325, %v8338
        %v8340 = vcombine.low %v8275, %v8291
        %v8341 = vcombine.high %v8275, %v8291
        %v8343 = vunpack.c.l.s4 1934713408
        %v8344 = vunpack.c.0.s8 %v8343
        %v8345 = vlaneseq
        %v8346 = vshrl.u32 %v8345, 7
        %v8347 = vsub.s32 %v8344, %v8346
        %v8348 = vrot.slane %v8340, %v8347
        %v8350 = vunpack.c.l.s4 1934713408
        %v8351 = vunpack.c.0.s8 %v8350
        %v8352 = vlaneseq
        %v8353 = vshrl.u32 %v8352, 7
        %v8354 = vsub.s32 %v8351, %v8353
        %v8355 = vrot.slane %v8341, %v8354
        %v8356 = vcombine.low %v8300, %v8332
        %v8357 = vcombine.high %v8300, %v8332
        %v8358 = vcombine.low %v8307, %v8339
        %v8359 = vcombine.high %v8307, %v8339
        %v8360 = vcombine.low %v8316, %v8348
        %v8361 = vcombine.high %v8316, %v8348
        %v8362 = vcombine.low %v8323, %v8355
        %v8363 = vcombine.high %v8323, %v8355
        %v8364 = vcombine.low %v8176, %v8186
        %v8365 = vcombine.high %v8176, %v8186
        %v8367 = vunpack.c.l.s4 1983009808
        %v8368 = vunpack.c.0.s8 %v8367
        %v8369 = vlaneseq
        %v8370 = vshrl.u32 %v8369, 7
        %v8371 = vsub.s32 %v8368, %v8370
        %v8372 = vrot.slane %v8364, %v8371
        %v8374 = vunpack.c.l.s4 1983009808
        %v8375 = vunpack.c.0.s8 %v8374
        %v8376 = vlaneseq
        %v8377 = vshrl.u32 %v8376, 7
        %v8378 = vsub.s32 %v8375, %v8377
        %v8379 = vrot.slane %v8365, %v8378
        %v8380 = vcombine.low %v8181, %v8191
        %v8381 = vcombine.high %v8181, %v8191
        %v8383 = vunpack.c.l.s4 1983009808
        %v8384 = vunpack.c.0.s8 %v8383
        %v8385 = vlaneseq
        %v8386 = vshrl.u32 %v8385, 7
        %v8387 = vsub.s32 %v8384, %v8386
        %v8388 = vrot.slane %v8380, %v8387
        %v8390 = vunpack.c.l.s4 1983009808
        %v8391 = vunpack.c.0.s8 %v8390
        %v8392 = vlaneseq
        %v8393 = vshrl.u32 %v8392, 7
        %v8394 = vsub.s32 %v8391, %v8393
        %v8395 = vrot.slane %v8381, %v8394
        %v8396 = vcombine.low %v8196, %v8206
        %v8397 = vcombine.high %v8196, %v8206
        %v8399 = vunpack.c.l.s4 1983009808
        %v8400 = vunpack.c.0.s8 %v8399
        %v8401 = vlaneseq
        %v8402 = vshrl.u32 %v8401, 7
        %v8403 = vsub.s32 %v8400, %v8402
        %v8404 = vrot.slane %v8396, %v8403
        %v8406 = vunpack.c.l.s4 1983009808
        %v8407 = vunpack.c.0.s8 %v8406
        %v8408 = vlaneseq
        %v8409 = vshrl.u32 %v8408, 7
        %v8410 = vsub.s32 %v8407, %v8409
        %v8411 = vrot.slane %v8397, %v8410
        %v8412 = vcombine.low %v8201, %v8211
        %v8413 = vcombine.high %v8201, %v8211
        %v8415 = vunpack.c.l.s4 1983009808
        %v8416 = vunpack.c.0.s8 %v8415
        %v8417 = vlaneseq
        %v8418 = vshrl.u32 %v8417, 7
        %v8419 = vsub.s32 %v8416, %v8418
        %v8420 = vrot.slane %v8412, %v8419
        %v8422 = vunpack.c.l.s4 1983009808
        %v8423 = vunpack.c.0.s8 %v8422
        %v8424 = vlaneseq
        %v8425 = vshrl.u32 %v8424, 7
        %v8426 = vsub.s32 %v8423, %v8425
        %v8427 = vrot.slane %v8413, %v8426
        %v8428 = vcombine.low %v8372, %v8388
        %v8429 = vcombine.high %v8372, %v8388
        %v8431 = vunpack.c.l.s4 1934713408
        %v8432 = vunpack.c.0.s8 %v8431
        %v8433 = vlaneseq
        %v8434 = vshrl.u32 %v8433, 7
        %v8435 = vsub.s32 %v8432, %v8434
        %v8436 = vrot.slane %v8428, %v8435
        %v8438 = vunpack.c.l.s4 1934713408
        %v8439 = vunpack.c.0.s8 %v8438
        %v8440 = vlaneseq
        %v8441 = vshrl.u32 %v8440, 7
        %v8442 = vsub.s32 %v8439, %v8441
        %v8443 = vrot.slane %v8429, %v8442
        %v8444 = vcombine.low %v8379, %v8395
        %v8445 = vcombine.high %v8379, %v8395
        %v8447 = vunpack.c.l.s4 1934713408
        %v8448 = vunpack.c.0.s8 %v8447
        %v8449 = vlaneseq
        %v8450 = vshrl.u32 %v8449, 7
        %v8451 = vsub.s32 %v8448, %v8450
        %v8452 = vrot.slane %v8444, %v8451
        %v8454 = vunpack.c.l.s4 1934713408
        %v8455 = vunpack.c.0.s8 %v8454
        %v8456 = vlaneseq
        %v8457 = vshrl.u32 %v8456, 7
        %v8458 = vsub.s32 %v8455, %v8457
        %v8459 = vrot.slane %v8445, %v8458
        %v8460 = vcombine.low %v8404, %v8420
        %v8461 = vcombine.high %v8404, %v8420
        %v8463 = vunpack.c.l.s4 1934713408
        %v8464 = vunpack.c.0.s8 %v8463
        %v8465 = vlaneseq
        %v8466 = vshrl.u32 %v8465, 7
        %v8467 = vsub.s32 %v8464, %v8466
        %v8468 = vrot.slane %v8460, %v8467
        %v8470 = vunpack.c.l.s4 1934713408
        %v8471 = vunpack.c.0.s8 %v8470
        %v8472 = vlaneseq
        %v8473 = vshrl.u32 %v8472, 7
        %v8474 = vsub.s32 %v8471, %v8473
        %v8475 = vrot.slane %v8461, %v8474
        %v8476 = vcombine.low %v8411, %v8427
        %v8477 = vcombine.high %v8411, %v8427
        %v8479 = vunpack.c.l.s4 1934713408
        %v8480 = vunpack.c.0.s8 %v8479
        %v8481 = vlaneseq
        %v8482 = vshrl.u32 %v8481, 7
        %v8483 = vsub.s32 %v8480, %v8482
        %v8484 = vrot.slane %v8476, %v8483
        %v8486 = vunpack.c.l.s4 1934713408
        %v8487 = vunpack.c.0.s8 %v8486
        %v8488 = vlaneseq
        %v8489 = vshrl.u32 %v8488, 7
        %v8490 = vsub.s32 %v8487, %v8489
        %v8491 = vrot.slane %v8477, %v8490
        %v8492 = vcombine.low %v8436, %v8468
        %v8493 = vcombine.high %v8436, %v8468
        %v8494 = vcombine.low %v8443, %v8475
        %v8495 = vcombine.high %v8443, %v8475
        %v8496 = vcombine.low %v8452, %v8484
        %v8497 = vcombine.high %v8452, %v8484
        %v8498 = vcombine.low %v8459, %v8491
        %v8499 = vcombine.high %v8459, %v8491
        %8501 = vrot.lane.b32.xlu0 %v8357, 16
        %v8502 = vpop.permute.xlu0 %8501
        %8505 = vrot.lane.b32.xlu0 %v8358, 32
        %v8506 = vpop.permute.xlu0 %8505
        %8509 = vrot.lane.b32.xlu0 %v8359, 48
        %v8510 = vpop.permute.xlu0 %8509
        %8513 = vrot.lane.b32.xlu0 %v8360, 64
        %v8514 = vpop.permute.xlu0 %8513
        %8517 = vrot.lane.b32.xlu0 %v8361, 80
        %v8518 = vpop.permute.xlu0 %8517
        %8521 = vrot.lane.b32.xlu0 %v8362, 96
        %v8522 = vpop.permute.xlu0 %8521
        %8525 = vrot.lane.b32.xlu0 %v8363, 112
        %v8526 = vpop.permute.xlu0 %8525
        %8529 = vrot.lane.b32.xlu0 %v8493, 16
        %v8530 = vpop.permute.xlu0 %8529
        %8533 = vrot.lane.b32.xlu0 %v8494, 32
        %v8534 = vpop.permute.xlu0 %8533
        %8537 = vrot.lane.b32.xlu0 %v8495, 48
        %v8538 = vpop.permute.xlu0 %8537
        %8541 = vrot.lane.b32.xlu0 %v8496, 64
        %v8542 = vpop.permute.xlu0 %8541
        %8545 = vrot.lane.b32.xlu0 %v8497, 80
        %v8546 = vpop.permute.xlu0 %8545
        %8549 = vrot.lane.b32.xlu0 %v8498, 96
        %v8550 = vpop.permute.xlu0 %8549
        %8553 = vrot.lane.b32.xlu0 %v8499, 112
        %v8554 = vpop.permute.xlu0 %8553
        %v8556 = vsel %vm539, %v8356, %v8502
        %v8557 = vsel %vm541, %v8556, %v8506
        %v8558 = vsel %vm543, %v8557, %v8510
        %v8559 = vsel %vm545, %v8558, %v8514
        %v8560 = vsel %vm547, %v8559, %v8518
        %v8561 = vsel %vm549, %v8560, %v8522
        %v8562 = vsel %vm551, %v8561, %v8526
        %v8563 = vsel %vm539, %v8492, %v8530
        %v8564 = vsel %vm541, %v8563, %v8534
        %v8565 = vsel %vm543, %v8564, %v8538
        %v8566 = vsel %vm545, %v8565, %v8542
        %v8567 = vsel %vm547, %v8566, %v8546
        %v8568 = vsel %vm549, %v8567, %v8550
        %v8569 = vsel %vm551, %v8568, %v8554
        %8570 = vrot.lane.b32.xlu0 %v8174, 127
        %v8571 = vpop.permute.xlu0 %8570
        %8572 = vrot.lane.b32.xlu0 %v8176, 127
        %v8573 = vpop.permute.xlu0 %8572
        %8574 = vrot.lane.b32.xlu0 %v8179, 127
        %v8575 = vpop.permute.xlu0 %8574
        %8576 = vrot.lane.b32.xlu0 %v8181, 127
        %v8577 = vpop.permute.xlu0 %8576
        %8578 = vrot.lane.b32.xlu0 %v8184, 127
        %v8579 = vpop.permute.xlu0 %8578
        %8580 = vrot.lane.b32.xlu0 %v8186, 127
        %v8581 = vpop.permute.xlu0 %8580
        %8582 = vrot.lane.b32.xlu0 %v8189, 127
        %v8583 = vpop.permute.xlu0 %8582
        %8584 = vrot.lane.b32.xlu0 %v8191, 127
        %v8585 = vpop.permute.xlu0 %8584
        %8586 = vrot.lane.b32.xlu0 %v8194, 127
        %v8587 = vpop.permute.xlu0 %8586
        %8588 = vrot.lane.b32.xlu0 %v8196, 127
        %v8589 = vpop.permute.xlu0 %8588
        %8590 = vrot.lane.b32.xlu0 %v8199, 127
        %v8591 = vpop.permute.xlu0 %8590
        %8592 = vrot.lane.b32.xlu0 %v8201, 127
        %v8593 = vpop.permute.xlu0 %8592
        %8594 = vrot.lane.b32.xlu0 %v8204, 127
        %v8595 = vpop.permute.xlu0 %8594
        %8596 = vrot.lane.b32.xlu0 %v8206, 127
        %v8597 = vpop.permute.xlu0 %8596
        %8598 = vrot.lane.b32.xlu0 %v8209, 127
        %v8599 = vpop.permute.xlu0 %8598
        %8600 = vrot.lane.b32.xlu0 %v8211, 127
        %v8601 = vpop.permute.xlu0 %8600
        %v8618 = vcombine.low %v8571, %v8579
        %v8619 = vcombine.high %v8571, %v8579
        %v8621 = vunpack.c.l.s4 1983009808
        %v8622 = vunpack.c.0.s8 %v8621
        %v8623 = vlaneseq
        %v8624 = vshrl.u32 %v8623, 7
        %v8625 = vsub.s32 %v8622, %v8624
        %v8626 = vrot.slane %v8618, %v8625
        %v8628 = vunpack.c.l.s4 1983009808
        %v8629 = vunpack.c.0.s8 %v8628
        %v8630 = vlaneseq
        %v8631 = vshrl.u32 %v8630, 7
        %v8632 = vsub.s32 %v8629, %v8631
        %v8633 = vrot.slane %v8619, %v8632
        %v8634 = vcombine.low %v8575, %v8583
        %v8635 = vcombine.high %v8575, %v8583
        %v8637 = vunpack.c.l.s4 1983009808
        %v8638 = vunpack.c.0.s8 %v8637
        %v8639 = vlaneseq
        %v8640 = vshrl.u32 %v8639, 7
        %v8641 = vsub.s32 %v8638, %v8640
        %v8642 = vrot.slane %v8634, %v8641
        %v8644 = vunpack.c.l.s4 1983009808
        %v8645 = vunpack.c.0.s8 %v8644
        %v8646 = vlaneseq
        %v8647 = vshrl.u32 %v8646, 7
        %v8648 = vsub.s32 %v8645, %v8647
        %v8649 = vrot.slane %v8635, %v8648
        %v8650 = vcombine.low %v8587, %v8595
        %v8651 = vcombine.high %v8587, %v8595
        %v8653 = vunpack.c.l.s4 1983009808
        %v8654 = vunpack.c.0.s8 %v8653
        %v8655 = vlaneseq
        %v8656 = vshrl.u32 %v8655, 7
        %v8657 = vsub.s32 %v8654, %v8656
        %v8658 = vrot.slane %v8650, %v8657
        %v8660 = vunpack.c.l.s4 1983009808
        %v8661 = vunpack.c.0.s8 %v8660
        %v8662 = vlaneseq
        %v8663 = vshrl.u32 %v8662, 7
        %v8664 = vsub.s32 %v8661, %v8663
        %v8665 = vrot.slane %v8651, %v8664
        %v8666 = vcombine.low %v8591, %v8599
        %v8667 = vcombine.high %v8591, %v8599
        %v8669 = vunpack.c.l.s4 1983009808
        %v8670 = vunpack.c.0.s8 %v8669
        %v8671 = vlaneseq
        %v8672 = vshrl.u32 %v8671, 7
        %v8673 = vsub.s32 %v8670, %v8672
        %v8674 = vrot.slane %v8666, %v8673
        %v8676 = vunpack.c.l.s4 1983009808
        %v8677 = vunpack.c.0.s8 %v8676
        %v8678 = vlaneseq
        %v8679 = vshrl.u32 %v8678, 7
        %v8680 = vsub.s32 %v8677, %v8679
        %v8681 = vrot.slane %v8667, %v8680
        %v8682 = vcombine.low %v8626, %v8642
        %v8683 = vcombine.high %v8626, %v8642
        %v8685 = vunpack.c.l.s4 1934713408
        %v8686 = vunpack.c.0.s8 %v8685
        %v8687 = vlaneseq
        %v8688 = vshrl.u32 %v8687, 7
        %v8689 = vsub.s32 %v8686, %v8688
        %v8690 = vrot.slane %v8682, %v8689
        %v8692 = vunpack.c.l.s4 1934713408
        %v8693 = vunpack.c.0.s8 %v8692
        %v8694 = vlaneseq
        %v8695 = vshrl.u32 %v8694, 7
        %v8696 = vsub.s32 %v8693, %v8695
        %v8697 = vrot.slane %v8683, %v8696
        %v8698 = vcombine.low %v8633, %v8649
        %v8699 = vcombine.high %v8633, %v8649
        %v8701 = vunpack.c.l.s4 1934713408
        %v8702 = vunpack.c.0.s8 %v8701
        %v8703 = vlaneseq
        %v8704 = vshrl.u32 %v8703, 7
        %v8705 = vsub.s32 %v8702, %v8704
        %v8706 = vrot.slane %v8698, %v8705
        %v8708 = vunpack.c.l.s4 1934713408
        %v8709 = vunpack.c.0.s8 %v8708
        %v8710 = vlaneseq
        %v8711 = vshrl.u32 %v8710, 7
        %v8712 = vsub.s32 %v8709, %v8711
        %v8713 = vrot.slane %v8699, %v8712
        %v8714 = vcombine.low %v8658, %v8674
        %v8715 = vcombine.high %v8658, %v8674
        %v8717 = vunpack.c.l.s4 1934713408
        %v8718 = vunpack.c.0.s8 %v8717
        %v8719 = vlaneseq
        %v8720 = vshrl.u32 %v8719, 7
        %v8721 = vsub.s32 %v8718, %v8720
        %v8722 = vrot.slane %v8714, %v8721
        %v8724 = vunpack.c.l.s4 1934713408
        %v8725 = vunpack.c.0.s8 %v8724
        %v8726 = vlaneseq
        %v8727 = vshrl.u32 %v8726, 7
        %v8728 = vsub.s32 %v8725, %v8727
        %v8729 = vrot.slane %v8715, %v8728
        %v8730 = vcombine.low %v8665, %v8681
        %v8731 = vcombine.high %v8665, %v8681
        %v8733 = vunpack.c.l.s4 1934713408
        %v8734 = vunpack.c.0.s8 %v8733
        %v8735 = vlaneseq
        %v8736 = vshrl.u32 %v8735, 7
        %v8737 = vsub.s32 %v8734, %v8736
        %v8738 = vrot.slane %v8730, %v8737
        %v8740 = vunpack.c.l.s4 1934713408
        %v8741 = vunpack.c.0.s8 %v8740
        %v8742 = vlaneseq
        %v8743 = vshrl.u32 %v8742, 7
        %v8744 = vsub.s32 %v8741, %v8743
        %v8745 = vrot.slane %v8731, %v8744
        %v8746 = vcombine.low %v8690, %v8722
        %v8747 = vcombine.high %v8690, %v8722
        %v8748 = vcombine.low %v8697, %v8729
        %v8749 = vcombine.high %v8697, %v8729
        %v8750 = vcombine.low %v8706, %v8738
        %v8751 = vcombine.high %v8706, %v8738
        %v8752 = vcombine.low %v8713, %v8745
        %v8753 = vcombine.high %v8713, %v8745
        %v8754 = vcombine.low %v8573, %v8581
        %v8755 = vcombine.high %v8573, %v8581
        %v8757 = vunpack.c.l.s4 1983009808
        %v8758 = vunpack.c.0.s8 %v8757
        %v8759 = vlaneseq
        %v8760 = vshrl.u32 %v8759, 7
        %v8761 = vsub.s32 %v8758, %v8760
        %v8762 = vrot.slane %v8754, %v8761
        %v8764 = vunpack.c.l.s4 1983009808
        %v8765 = vunpack.c.0.s8 %v8764
        %v8766 = vlaneseq
        %v8767 = vshrl.u32 %v8766, 7
        %v8768 = vsub.s32 %v8765, %v8767
        %v8769 = vrot.slane %v8755, %v8768
        %v8770 = vcombine.low %v8577, %v8585
        %v8771 = vcombine.high %v8577, %v8585
        %v8773 = vunpack.c.l.s4 1983009808
        %v8774 = vunpack.c.0.s8 %v8773
        %v8775 = vlaneseq
        %v8776 = vshrl.u32 %v8775, 7
        %v8777 = vsub.s32 %v8774, %v8776
        %v8778 = vrot.slane %v8770, %v8777
        %v8780 = vunpack.c.l.s4 1983009808
        %v8781 = vunpack.c.0.s8 %v8780
        %v8782 = vlaneseq
        %v8783 = vshrl.u32 %v8782, 7
        %v8784 = vsub.s32 %v8781, %v8783
        %v8785 = vrot.slane %v8771, %v8784
        %v8786 = vcombine.low %v8589, %v8597
        %v8787 = vcombine.high %v8589, %v8597
        %v8789 = vunpack.c.l.s4 1983009808
        %v8790 = vunpack.c.0.s8 %v8789
        %v8791 = vlaneseq
        %v8792 = vshrl.u32 %v8791, 7
        %v8793 = vsub.s32 %v8790, %v8792
        %v8794 = vrot.slane %v8786, %v8793
        %v8796 = vunpack.c.l.s4 1983009808
        %v8797 = vunpack.c.0.s8 %v8796
        %v8798 = vlaneseq
        %v8799 = vshrl.u32 %v8798, 7
        %v8800 = vsub.s32 %v8797, %v8799
        %v8801 = vrot.slane %v8787, %v8800
        %v8802 = vcombine.low %v8593, %v8601
        %v8803 = vcombine.high %v8593, %v8601
        %v8805 = vunpack.c.l.s4 1983009808
        %v8806 = vunpack.c.0.s8 %v8805
        %v8807 = vlaneseq
        %v8808 = vshrl.u32 %v8807, 7
        %v8809 = vsub.s32 %v8806, %v8808
        %v8810 = vrot.slane %v8802, %v8809
        %v8812 = vunpack.c.l.s4 1983009808
        %v8813 = vunpack.c.0.s8 %v8812
        %v8814 = vlaneseq
        %v8815 = vshrl.u32 %v8814, 7
        %v8816 = vsub.s32 %v8813, %v8815
        %v8817 = vrot.slane %v8803, %v8816
        %v8818 = vcombine.low %v8762, %v8778
        %v8819 = vcombine.high %v8762, %v8778
        %v8821 = vunpack.c.l.s4 1934713408
        %v8822 = vunpack.c.0.s8 %v8821
        %v8823 = vlaneseq
        %v8824 = vshrl.u32 %v8823, 7
        %v8825 = vsub.s32 %v8822, %v8824
        %v8826 = vrot.slane %v8818, %v8825
        %v8828 = vunpack.c.l.s4 1934713408
        %v8829 = vunpack.c.0.s8 %v8828
        %v8830 = vlaneseq
        %v8831 = vshrl.u32 %v8830, 7
        %v8832 = vsub.s32 %v8829, %v8831
        %v8833 = vrot.slane %v8819, %v8832
        %v8834 = vcombine.low %v8769, %v8785
        %v8835 = vcombine.high %v8769, %v8785
        %v8837 = vunpack.c.l.s4 1934713408
        %v8838 = vunpack.c.0.s8 %v8837
        %v8839 = vlaneseq
        %v8840 = vshrl.u32 %v8839, 7
        %v8841 = vsub.s32 %v8838, %v8840
        %v8842 = vrot.slane %v8834, %v8841
        %v8844 = vunpack.c.l.s4 1934713408
        %v8845 = vunpack.c.0.s8 %v8844
        %v8846 = vlaneseq
        %v8847 = vshrl.u32 %v8846, 7
        %v8848 = vsub.s32 %v8845, %v8847
        %v8849 = vrot.slane %v8835, %v8848
        %v8850 = vcombine.low %v8794, %v8810
        %v8851 = vcombine.high %v8794, %v8810
        %v8853 = vunpack.c.l.s4 1934713408
        %v8854 = vunpack.c.0.s8 %v8853
        %v8855 = vlaneseq
        %v8856 = vshrl.u32 %v8855, 7
        %v8857 = vsub.s32 %v8854, %v8856
        %v8858 = vrot.slane %v8850, %v8857
        %v8860 = vunpack.c.l.s4 1934713408
        %v8861 = vunpack.c.0.s8 %v8860
        %v8862 = vlaneseq
        %v8863 = vshrl.u32 %v8862, 7
        %v8864 = vsub.s32 %v8861, %v8863
        %v8865 = vrot.slane %v8851, %v8864
        %v8866 = vcombine.low %v8801, %v8817
        %v8867 = vcombine.high %v8801, %v8817
        %v8869 = vunpack.c.l.s4 1934713408
        %v8870 = vunpack.c.0.s8 %v8869
        %v8871 = vlaneseq
        %v8872 = vshrl.u32 %v8871, 7
        %v8873 = vsub.s32 %v8870, %v8872
        %v8874 = vrot.slane %v8866, %v8873
        %v8876 = vunpack.c.l.s4 1934713408
        %v8877 = vunpack.c.0.s8 %v8876
        %v8878 = vlaneseq
        %v8879 = vshrl.u32 %v8878, 7
        %v8880 = vsub.s32 %v8877, %v8879
        %v8881 = vrot.slane %v8867, %v8880
        %v8882 = vcombine.low %v8826, %v8858
        %v8883 = vcombine.high %v8826, %v8858
        %v8884 = vcombine.low %v8833, %v8865
        %v8885 = vcombine.high %v8833, %v8865
        %v8886 = vcombine.low %v8842, %v8874
        %v8887 = vcombine.high %v8842, %v8874
        %v8888 = vcombine.low %v8849, %v8881
        %v8889 = vcombine.high %v8849, %v8881
        %8891 = vrot.lane.b32.xlu0 %v8747, 16
        %v8892 = vpop.permute.xlu0 %8891
        %8895 = vrot.lane.b32.xlu0 %v8748, 32
        %v8896 = vpop.permute.xlu0 %8895
        %8899 = vrot.lane.b32.xlu0 %v8749, 48
        %v8900 = vpop.permute.xlu0 %8899
        %8903 = vrot.lane.b32.xlu0 %v8750, 64
        %v8904 = vpop.permute.xlu0 %8903
        %8907 = vrot.lane.b32.xlu0 %v8751, 80
        %v8908 = vpop.permute.xlu0 %8907
        %8911 = vrot.lane.b32.xlu0 %v8752, 96
        %v8912 = vpop.permute.xlu0 %8911
        %8915 = vrot.lane.b32.xlu0 %v8753, 112
        %v8916 = vpop.permute.xlu0 %8915
        %8919 = vrot.lane.b32.xlu0 %v8883, 16
        %v8920 = vpop.permute.xlu0 %8919
        %8923 = vrot.lane.b32.xlu0 %v8884, 32
        %v8924 = vpop.permute.xlu0 %8923
        %8927 = vrot.lane.b32.xlu0 %v8885, 48
        %v8928 = vpop.permute.xlu0 %8927
        %8931 = vrot.lane.b32.xlu0 %v8886, 64
        %v8932 = vpop.permute.xlu0 %8931
        %8935 = vrot.lane.b32.xlu0 %v8887, 80
        %v8936 = vpop.permute.xlu0 %8935
        %8939 = vrot.lane.b32.xlu0 %v8888, 96
        %v8940 = vpop.permute.xlu0 %8939
        %8943 = vrot.lane.b32.xlu0 %v8889, 112
        %v8944 = vpop.permute.xlu0 %8943
        %v8946 = vsel %vm539, %v8746, %v8892
        %v8947 = vsel %vm541, %v8946, %v8896
        %v8948 = vsel %vm543, %v8947, %v8900
        %v8949 = vsel %vm545, %v8948, %v8904
        %v8950 = vsel %vm547, %v8949, %v8908
        %v8951 = vsel %vm549, %v8950, %v8912
        %v8952 = vsel %vm551, %v8951, %v8916
        %v8953 = vsel %vm539, %v8882, %v8920
        %v8954 = vsel %vm541, %v8953, %v8924
        %v8955 = vsel %vm543, %v8954, %v8928
        %v8956 = vsel %vm545, %v8955, %v8932
        %v8957 = vsel %vm547, %v8956, %v8936
        %v8958 = vsel %vm549, %v8957, %v8940
        %v8959 = vsel %vm551, %v8958, %v8944
        %8960 = vrot.lane.b32.xlu0 %v8174, 126
        %v8961 = vpop.permute.xlu0 %8960
        %8962 = vrot.lane.b32.xlu0 %v8176, 126
        %v8963 = vpop.permute.xlu0 %8962
        %8964 = vrot.lane.b32.xlu0 %v8179, 126
        %v8965 = vpop.permute.xlu0 %8964
        %8966 = vrot.lane.b32.xlu0 %v8181, 126
        %v8967 = vpop.permute.xlu0 %8966
        %8968 = vrot.lane.b32.xlu0 %v8184, 126
        %v8969 = vpop.permute.xlu0 %8968
        %8970 = vrot.lane.b32.xlu0 %v8186, 126
        %v8971 = vpop.permute.xlu0 %8970
        %8972 = vrot.lane.b32.xlu0 %v8189, 126
        %v8973 = vpop.permute.xlu0 %8972
        %8974 = vrot.lane.b32.xlu0 %v8191, 126
        %v8975 = vpop.permute.xlu0 %8974
        %8976 = vrot.lane.b32.xlu0 %v8194, 126
        %v8977 = vpop.permute.xlu0 %8976
        %8978 = vrot.lane.b32.xlu0 %v8196, 126
        %v8979 = vpop.permute.xlu0 %8978
        %8980 = vrot.lane.b32.xlu0 %v8199, 126
        %v8981 = vpop.permute.xlu0 %8980
        %8982 = vrot.lane.b32.xlu0 %v8201, 126
        %v8983 = vpop.permute.xlu0 %8982
        %8984 = vrot.lane.b32.xlu0 %v8204, 126
        %v8985 = vpop.permute.xlu0 %8984
        %8986 = vrot.lane.b32.xlu0 %v8206, 126
        %v8987 = vpop.permute.xlu0 %8986
        %8988 = vrot.lane.b32.xlu0 %v8209, 126
        %v8989 = vpop.permute.xlu0 %8988
        %8990 = vrot.lane.b32.xlu0 %v8211, 126
        %v8991 = vpop.permute.xlu0 %8990
        %v9008 = vcombine.low %v8961, %v8969
        %v9009 = vcombine.high %v8961, %v8969
        %v9011 = vunpack.c.l.s4 1983009808
        %v9012 = vunpack.c.0.s8 %v9011
        %v9013 = vlaneseq
        %v9014 = vshrl.u32 %v9013, 7
        %v9015 = vsub.s32 %v9012, %v9014
        %v9016 = vrot.slane %v9008, %v9015
        %v9018 = vunpack.c.l.s4 1983009808
        %v9019 = vunpack.c.0.s8 %v9018
        %v9020 = vlaneseq
        %v9021 = vshrl.u32 %v9020, 7
        %v9022 = vsub.s32 %v9019, %v9021
        %v9023 = vrot.slane %v9009, %v9022
        %v9024 = vcombine.low %v8965, %v8973
        %v9025 = vcombine.high %v8965, %v8973
        %v9027 = vunpack.c.l.s4 1983009808
        %v9028 = vunpack.c.0.s8 %v9027
        %v9029 = vlaneseq
        %v9030 = vshrl.u32 %v9029, 7
        %v9031 = vsub.s32 %v9028, %v9030
        %v9032 = vrot.slane %v9024, %v9031
        %v9034 = vunpack.c.l.s4 1983009808
        %v9035 = vunpack.c.0.s8 %v9034
        %v9036 = vlaneseq
        %v9037 = vshrl.u32 %v9036, 7
        %v9038 = vsub.s32 %v9035, %v9037
        %v9039 = vrot.slane %v9025, %v9038
        %v9040 = vcombine.low %v8977, %v8985
        %v9041 = vcombine.high %v8977, %v8985
        %v9043 = vunpack.c.l.s4 1983009808
        %v9044 = vunpack.c.0.s8 %v9043
        %v9045 = vlaneseq
        %v9046 = vshrl.u32 %v9045, 7
        %v9047 = vsub.s32 %v9044, %v9046
        %v9048 = vrot.slane %v9040, %v9047
        %v9050 = vunpack.c.l.s4 1983009808
        %v9051 = vunpack.c.0.s8 %v9050
        %v9052 = vlaneseq
        %v9053 = vshrl.u32 %v9052, 7
        %v9054 = vsub.s32 %v9051, %v9053
        %v9055 = vrot.slane %v9041, %v9054
        %v9056 = vcombine.low %v8981, %v8989
        %v9057 = vcombine.high %v8981, %v8989
        %v9059 = vunpack.c.l.s4 1983009808
        %v9060 = vunpack.c.0.s8 %v9059
        %v9061 = vlaneseq
        %v9062 = vshrl.u32 %v9061, 7
        %v9063 = vsub.s32 %v9060, %v9062
        %v9064 = vrot.slane %v9056, %v9063
        %v9066 = vunpack.c.l.s4 1983009808
        %v9067 = vunpack.c.0.s8 %v9066
        %v9068 = vlaneseq
        %v9069 = vshrl.u32 %v9068, 7
        %v9070 = vsub.s32 %v9067, %v9069
        %v9071 = vrot.slane %v9057, %v9070
        %v9072 = vcombine.low %v9016, %v9032
        %v9073 = vcombine.high %v9016, %v9032
        %v9075 = vunpack.c.l.s4 1934713408
        %v9076 = vunpack.c.0.s8 %v9075
        %v9077 = vlaneseq
        %v9078 = vshrl.u32 %v9077, 7
        %v9079 = vsub.s32 %v9076, %v9078
        %v9080 = vrot.slane %v9072, %v9079
        %v9082 = vunpack.c.l.s4 1934713408
        %v9083 = vunpack.c.0.s8 %v9082
        %v9084 = vlaneseq
        %v9085 = vshrl.u32 %v9084, 7
        %v9086 = vsub.s32 %v9083, %v9085
        %v9087 = vrot.slane %v9073, %v9086
        %v9088 = vcombine.low %v9023, %v9039
        %v9089 = vcombine.high %v9023, %v9039
        %v9091 = vunpack.c.l.s4 1934713408
        %v9092 = vunpack.c.0.s8 %v9091
        %v9093 = vlaneseq
        %v9094 = vshrl.u32 %v9093, 7
        %v9095 = vsub.s32 %v9092, %v9094
        %v9096 = vrot.slane %v9088, %v9095
        %v9098 = vunpack.c.l.s4 1934713408
        %v9099 = vunpack.c.0.s8 %v9098
        %v9100 = vlaneseq
        %v9101 = vshrl.u32 %v9100, 7
        %v9102 = vsub.s32 %v9099, %v9101
        %v9103 = vrot.slane %v9089, %v9102
        %v9104 = vcombine.low %v9048, %v9064
        %v9105 = vcombine.high %v9048, %v9064
        %v9107 = vunpack.c.l.s4 1934713408
        %v9108 = vunpack.c.0.s8 %v9107
        %v9109 = vlaneseq
        %v9110 = vshrl.u32 %v9109, 7
        %v9111 = vsub.s32 %v9108, %v9110
        %v9112 = vrot.slane %v9104, %v9111
        %v9114 = vunpack.c.l.s4 1934713408
        %v9115 = vunpack.c.0.s8 %v9114
        %v9116 = vlaneseq
        %v9117 = vshrl.u32 %v9116, 7
        %v9118 = vsub.s32 %v9115, %v9117
        %v9119 = vrot.slane %v9105, %v9118
        %v9120 = vcombine.low %v9055, %v9071
        %v9121 = vcombine.high %v9055, %v9071
        %v9123 = vunpack.c.l.s4 1934713408
        %v9124 = vunpack.c.0.s8 %v9123
        %v9125 = vlaneseq
        %v9126 = vshrl.u32 %v9125, 7
        %v9127 = vsub.s32 %v9124, %v9126
        %v9128 = vrot.slane %v9120, %v9127
        %v9130 = vunpack.c.l.s4 1934713408
        %v9131 = vunpack.c.0.s8 %v9130
        %v9132 = vlaneseq
        %v9133 = vshrl.u32 %v9132, 7
        %v9134 = vsub.s32 %v9131, %v9133
        %v9135 = vrot.slane %v9121, %v9134
        %v9136 = vcombine.low %v9080, %v9112
        %v9137 = vcombine.high %v9080, %v9112
        %v9138 = vcombine.low %v9087, %v9119
        %v9139 = vcombine.high %v9087, %v9119
        %v9140 = vcombine.low %v9096, %v9128
        %v9141 = vcombine.high %v9096, %v9128
        %v9142 = vcombine.low %v9103, %v9135
        %v9143 = vcombine.high %v9103, %v9135
        %v9144 = vcombine.low %v8963, %v8971
        %v9145 = vcombine.high %v8963, %v8971
        %v9147 = vunpack.c.l.s4 1983009808
        %v9148 = vunpack.c.0.s8 %v9147
        %v9149 = vlaneseq
        %v9150 = vshrl.u32 %v9149, 7
        %v9151 = vsub.s32 %v9148, %v9150
        %v9152 = vrot.slane %v9144, %v9151
        %v9154 = vunpack.c.l.s4 1983009808
        %v9155 = vunpack.c.0.s8 %v9154
        %v9156 = vlaneseq
        %v9157 = vshrl.u32 %v9156, 7
        %v9158 = vsub.s32 %v9155, %v9157
        %v9159 = vrot.slane %v9145, %v9158
        %v9160 = vcombine.low %v8967, %v8975
        %v9161 = vcombine.high %v8967, %v8975
        %v9163 = vunpack.c.l.s4 1983009808
        %v9164 = vunpack.c.0.s8 %v9163
        %v9165 = vlaneseq
        %v9166 = vshrl.u32 %v9165, 7
        %v9167 = vsub.s32 %v9164, %v9166
        %v9168 = vrot.slane %v9160, %v9167
        %v9170 = vunpack.c.l.s4 1983009808
        %v9171 = vunpack.c.0.s8 %v9170
        %v9172 = vlaneseq
        %v9173 = vshrl.u32 %v9172, 7
        %v9174 = vsub.s32 %v9171, %v9173
        %v9175 = vrot.slane %v9161, %v9174
        %v9176 = vcombine.low %v8979, %v8987
        %v9177 = vcombine.high %v8979, %v8987
        %v9179 = vunpack.c.l.s4 1983009808
        %v9180 = vunpack.c.0.s8 %v9179
        %v9181 = vlaneseq
        %v9182 = vshrl.u32 %v9181, 7
        %v9183 = vsub.s32 %v9180, %v9182
        %v9184 = vrot.slane %v9176, %v9183
        %v9186 = vunpack.c.l.s4 1983009808
        %v9187 = vunpack.c.0.s8 %v9186
        %v9188 = vlaneseq
        %v9189 = vshrl.u32 %v9188, 7
        %v9190 = vsub.s32 %v9187, %v9189
        %v9191 = vrot.slane %v9177, %v9190
        %v9192 = vcombine.low %v8983, %v8991
        %v9193 = vcombine.high %v8983, %v8991
        %v9195 = vunpack.c.l.s4 1983009808
        %v9196 = vunpack.c.0.s8 %v9195
        %v9197 = vlaneseq
        %v9198 = vshrl.u32 %v9197, 7
        %v9199 = vsub.s32 %v9196, %v9198
        %v9200 = vrot.slane %v9192, %v9199
        %v9202 = vunpack.c.l.s4 1983009808
        %v9203 = vunpack.c.0.s8 %v9202
        %v9204 = vlaneseq
        %v9205 = vshrl.u32 %v9204, 7
        %v9206 = vsub.s32 %v9203, %v9205
        %v9207 = vrot.slane %v9193, %v9206
        %v9208 = vcombine.low %v9152, %v9168
        %v9209 = vcombine.high %v9152, %v9168
        %v9211 = vunpack.c.l.s4 1934713408
        %v9212 = vunpack.c.0.s8 %v9211
        %v9213 = vlaneseq
        %v9214 = vshrl.u32 %v9213, 7
        %v9215 = vsub.s32 %v9212, %v9214
        %v9216 = vrot.slane %v9208, %v9215
        %v9218 = vunpack.c.l.s4 1934713408
        %v9219 = vunpack.c.0.s8 %v9218
        %v9220 = vlaneseq
        %v9221 = vshrl.u32 %v9220, 7
        %v9222 = vsub.s32 %v9219, %v9221
        %v9223 = vrot.slane %v9209, %v9222
        %v9224 = vcombine.low %v9159, %v9175
        %v9225 = vcombine.high %v9159, %v9175
        %v9227 = vunpack.c.l.s4 1934713408
        %v9228 = vunpack.c.0.s8 %v9227
        %v9229 = vlaneseq
        %v9230 = vshrl.u32 %v9229, 7
        %v9231 = vsub.s32 %v9228, %v9230
        %v9232 = vrot.slane %v9224, %v9231
        %v9234 = vunpack.c.l.s4 1934713408
        %v9235 = vunpack.c.0.s8 %v9234
        %v9236 = vlaneseq
        %v9237 = vshrl.u32 %v9236, 7
        %v9238 = vsub.s32 %v9235, %v9237
        %v9239 = vrot.slane %v9225, %v9238
        %v9240 = vcombine.low %v9184, %v9200
        %v9241 = vcombine.high %v9184, %v9200
        %v9243 = vunpack.c.l.s4 1934713408
        %v9244 = vunpack.c.0.s8 %v9243
        %v9245 = vlaneseq
        %v9246 = vshrl.u32 %v9245, 7
        %v9247 = vsub.s32 %v9244, %v9246
        %v9248 = vrot.slane %v9240, %v9247
        %v9250 = vunpack.c.l.s4 1934713408
        %v9251 = vunpack.c.0.s8 %v9250
        %v9252 = vlaneseq
        %v9253 = vshrl.u32 %v9252, 7
        %v9254 = vsub.s32 %v9251, %v9253
        %v9255 = vrot.slane %v9241, %v9254
        %v9256 = vcombine.low %v9191, %v9207
        %v9257 = vcombine.high %v9191, %v9207
        %v9259 = vunpack.c.l.s4 1934713408
        %v9260 = vunpack.c.0.s8 %v9259
        %v9261 = vlaneseq
        %v9262 = vshrl.u32 %v9261, 7
        %v9263 = vsub.s32 %v9260, %v9262
        %v9264 = vrot.slane %v9256, %v9263
        %v9266 = vunpack.c.l.s4 1934713408
        %v9267 = vunpack.c.0.s8 %v9266
        %v9268 = vlaneseq
        %v9269 = vshrl.u32 %v9268, 7
        %v9270 = vsub.s32 %v9267, %v9269
        %v9271 = vrot.slane %v9257, %v9270
        %v9272 = vcombine.low %v9216, %v9248
        %v9273 = vcombine.high %v9216, %v9248
        %v9274 = vcombine.low %v9223, %v9255
        %v9275 = vcombine.high %v9223, %v9255
        %v9276 = vcombine.low %v9232, %v9264
        %v9277 = vcombine.high %v9232, %v9264
        %v9278 = vcombine.low %v9239, %v9271
        %v9279 = vcombine.high %v9239, %v9271
        %9281 = vrot.lane.b32.xlu0 %v9137, 16
        %v9282 = vpop.permute.xlu0 %9281
        %9285 = vrot.lane.b32.xlu0 %v9138, 32
        %v9286 = vpop.permute.xlu0 %9285
        %9289 = vrot.lane.b32.xlu0 %v9139, 48
        %v9290 = vpop.permute.xlu0 %9289
        %9293 = vrot.lane.b32.xlu0 %v9140, 64
        %v9294 = vpop.permute.xlu0 %9293
        %9297 = vrot.lane.b32.xlu0 %v9141, 80
        %v9298 = vpop.permute.xlu0 %9297
        %9301 = vrot.lane.b32.xlu0 %v9142, 96
        %v9302 = vpop.permute.xlu0 %9301
        %9305 = vrot.lane.b32.xlu0 %v9143, 112
        %v9306 = vpop.permute.xlu0 %9305
        %9309 = vrot.lane.b32.xlu0 %v9273, 16
        %v9310 = vpop.permute.xlu0 %9309
        %9313 = vrot.lane.b32.xlu0 %v9274, 32
        %v9314 = vpop.permute.xlu0 %9313
        %9317 = vrot.lane.b32.xlu0 %v9275, 48
        %v9318 = vpop.permute.xlu0 %9317
        %9321 = vrot.lane.b32.xlu0 %v9276, 64
        %v9322 = vpop.permute.xlu0 %9321
        %9325 = vrot.lane.b32.xlu0 %v9277, 80
        %v9326 = vpop.permute.xlu0 %9325
        %9329 = vrot.lane.b32.xlu0 %v9278, 96
        %v9330 = vpop.permute.xlu0 %9329
        %9333 = vrot.lane.b32.xlu0 %v9279, 112
        %v9334 = vpop.permute.xlu0 %9333
        %v9336 = vsel %vm539, %v9136, %v9282
        %v9337 = vsel %vm541, %v9336, %v9286
        %v9338 = vsel %vm543, %v9337, %v9290
        %v9339 = vsel %vm545, %v9338, %v9294
        %v9340 = vsel %vm547, %v9339, %v9298
        %v9341 = vsel %vm549, %v9340, %v9302
        %v9342 = vsel %vm551, %v9341, %v9306
        %v9343 = vsel %vm539, %v9272, %v9310
        %v9344 = vsel %vm541, %v9343, %v9314
        %v9345 = vsel %vm543, %v9344, %v9318
        %v9346 = vsel %vm545, %v9345, %v9322
        %v9347 = vsel %vm547, %v9346, %v9326
        %v9348 = vsel %vm549, %v9347, %v9330
        %v9349 = vsel %vm551, %v9348, %v9334
        %v9350 = vrot.slane %v7002, 2
        %v9351 = vrot.slane %v7003, 2
        %v9352 = vsel %vm1727, %v9350, %v9351
        %v9353 = vrot.slane %v7004, 2
        %v9354 = vsel %vm1727, %v9351, %v9353
        %v9355 = vrot.slane %v7005, 2
        %v9356 = vrot.slane %v7006, 2
        %v9357 = vsel %vm1727, %v9355, %v9356
        %v9358 = vrot.slane %v7007, 2
        %v9359 = vsel %vm1727, %v9356, %v9358
        %v9360 = vrot.slane %v7008, 2
        %v9361 = vrot.slane %v7009, 2
        %v9362 = vsel %vm1727, %v9360, %v9361
        %v9363 = vrot.slane %v7010, 2
        %v9364 = vsel %vm1727, %v9361, %v9363
        %v9365 = vrot.slane %v7011, 2
        %v9366 = vrot.slane %v7012, 2
        %v9367 = vsel %vm1727, %v9365, %v9366
        %v9368 = vrot.slane %v7013, 2
        %v9369 = vsel %vm1727, %v9366, %v9368
        %v9370 = vrot.slane %v7014, 2
        %v9371 = vrot.slane %v7015, 2
        %v9372 = vsel %vm1727, %v9370, %v9371
        %v9373 = vrot.slane %v7016, 2
        %v9374 = vsel %vm1727, %v9371, %v9373
        %v9375 = vrot.slane %v7017, 2
        %v9376 = vrot.slane %v7018, 2
        %v9377 = vsel %vm1727, %v9375, %v9376
        %v9378 = vrot.slane %v7019, 2
        %v9379 = vsel %vm1727, %v9376, %v9378
        %v9380 = vrot.slane %v7020, 2
        %v9381 = vrot.slane %v7021, 2
        %v9382 = vsel %vm1727, %v9380, %v9381
        %v9383 = vrot.slane %v7022, 2
        %v9384 = vsel %vm1727, %v9381, %v9383
        %v9385 = vrot.slane %v7023, 2
        %v9386 = vrot.slane %v7024, 2
        %v9387 = vsel %vm1727, %v9385, %v9386
        %v9388 = vrot.slane %v7025, 2
        %v9389 = vsel %vm1727, %v9386, %v9388
        %v9406 = vcombine.low %v9352, %v9362
        %v9407 = vcombine.high %v9352, %v9362
        %v9409 = vunpack.c.l.s4 1983009808
        %v9410 = vunpack.c.0.s8 %v9409
        %v9411 = vlaneseq
        %v9412 = vshrl.u32 %v9411, 7
        %v9413 = vsub.s32 %v9410, %v9412
        %v9414 = vrot.slane %v9406, %v9413
        %v9416 = vunpack.c.l.s4 1983009808
        %v9417 = vunpack.c.0.s8 %v9416
        %v9418 = vlaneseq
        %v9419 = vshrl.u32 %v9418, 7
        %v9420 = vsub.s32 %v9417, %v9419
        %v9421 = vrot.slane %v9407, %v9420
        %v9422 = vcombine.low %v9357, %v9367
        %v9423 = vcombine.high %v9357, %v9367
        %v9425 = vunpack.c.l.s4 1983009808
        %v9426 = vunpack.c.0.s8 %v9425
        %v9427 = vlaneseq
        %v9428 = vshrl.u32 %v9427, 7
        %v9429 = vsub.s32 %v9426, %v9428
        %v9430 = vrot.slane %v9422, %v9429
        %v9432 = vunpack.c.l.s4 1983009808
        %v9433 = vunpack.c.0.s8 %v9432
        %v9434 = vlaneseq
        %v9435 = vshrl.u32 %v9434, 7
        %v9436 = vsub.s32 %v9433, %v9435
        %v9437 = vrot.slane %v9423, %v9436
        %v9438 = vcombine.low %v9372, %v9382
        %v9439 = vcombine.high %v9372, %v9382
        %v9441 = vunpack.c.l.s4 1983009808
        %v9442 = vunpack.c.0.s8 %v9441
        %v9443 = vlaneseq
        %v9444 = vshrl.u32 %v9443, 7
        %v9445 = vsub.s32 %v9442, %v9444
        %v9446 = vrot.slane %v9438, %v9445
        %v9448 = vunpack.c.l.s4 1983009808
        %v9449 = vunpack.c.0.s8 %v9448
        %v9450 = vlaneseq
        %v9451 = vshrl.u32 %v9450, 7
        %v9452 = vsub.s32 %v9449, %v9451
        %v9453 = vrot.slane %v9439, %v9452
        %v9454 = vcombine.low %v9377, %v9387
        %v9455 = vcombine.high %v9377, %v9387
        %v9457 = vunpack.c.l.s4 1983009808
        %v9458 = vunpack.c.0.s8 %v9457
        %v9459 = vlaneseq
        %v9460 = vshrl.u32 %v9459, 7
        %v9461 = vsub.s32 %v9458, %v9460
        %v9462 = vrot.slane %v9454, %v9461
        %v9464 = vunpack.c.l.s4 1983009808
        %v9465 = vunpack.c.0.s8 %v9464
        %v9466 = vlaneseq
        %v9467 = vshrl.u32 %v9466, 7
        %v9468 = vsub.s32 %v9465, %v9467
        %v9469 = vrot.slane %v9455, %v9468
        %v9470 = vcombine.low %v9414, %v9430
        %v9471 = vcombine.high %v9414, %v9430
        %v9473 = vunpack.c.l.s4 1934713408
        %v9474 = vunpack.c.0.s8 %v9473
        %v9475 = vlaneseq
        %v9476 = vshrl.u32 %v9475, 7
        %v9477 = vsub.s32 %v9474, %v9476
        %v9478 = vrot.slane %v9470, %v9477
        %v9480 = vunpack.c.l.s4 1934713408
        %v9481 = vunpack.c.0.s8 %v9480
        %v9482 = vlaneseq
        %v9483 = vshrl.u32 %v9482, 7
        %v9484 = vsub.s32 %v9481, %v9483
        %v9485 = vrot.slane %v9471, %v9484
        %v9486 = vcombine.low %v9421, %v9437
        %v9487 = vcombine.high %v9421, %v9437
        %v9489 = vunpack.c.l.s4 1934713408
        %v9490 = vunpack.c.0.s8 %v9489
        %v9491 = vlaneseq
        %v9492 = vshrl.u32 %v9491, 7
        %v9493 = vsub.s32 %v9490, %v9492
        %v9494 = vrot.slane %v9486, %v9493
        %v9496 = vunpack.c.l.s4 1934713408
        %v9497 = vunpack.c.0.s8 %v9496
        %v9498 = vlaneseq
        %v9499 = vshrl.u32 %v9498, 7
        %v9500 = vsub.s32 %v9497, %v9499
        %v9501 = vrot.slane %v9487, %v9500
        %v9502 = vcombine.low %v9446, %v9462
        %v9503 = vcombine.high %v9446, %v9462
        %v9505 = vunpack.c.l.s4 1934713408
        %v9506 = vunpack.c.0.s8 %v9505
        %v9507 = vlaneseq
        %v9508 = vshrl.u32 %v9507, 7
        %v9509 = vsub.s32 %v9506, %v9508
        %v9510 = vrot.slane %v9502, %v9509
        %v9512 = vunpack.c.l.s4 1934713408
        %v9513 = vunpack.c.0.s8 %v9512
        %v9514 = vlaneseq
        %v9515 = vshrl.u32 %v9514, 7
        %v9516 = vsub.s32 %v9513, %v9515
        %v9517 = vrot.slane %v9503, %v9516
        %v9518 = vcombine.low %v9453, %v9469
        %v9519 = vcombine.high %v9453, %v9469
        %v9521 = vunpack.c.l.s4 1934713408
        %v9522 = vunpack.c.0.s8 %v9521
        %v9523 = vlaneseq
        %v9524 = vshrl.u32 %v9523, 7
        %v9525 = vsub.s32 %v9522, %v9524
        %v9526 = vrot.slane %v9518, %v9525
        %v9528 = vunpack.c.l.s4 1934713408
        %v9529 = vunpack.c.0.s8 %v9528
        %v9530 = vlaneseq
        %v9531 = vshrl.u32 %v9530, 7
        %v9532 = vsub.s32 %v9529, %v9531
        %v9533 = vrot.slane %v9519, %v9532
        %v9534 = vcombine.low %v9478, %v9510
        %v9535 = vcombine.high %v9478, %v9510
        %v9536 = vcombine.low %v9485, %v9517
        %v9537 = vcombine.high %v9485, %v9517
        %v9538 = vcombine.low %v9494, %v9526
        %v9539 = vcombine.high %v9494, %v9526
        %v9540 = vcombine.low %v9501, %v9533
        %v9541 = vcombine.high %v9501, %v9533
        %v9542 = vcombine.low %v9354, %v9364
        %v9543 = vcombine.high %v9354, %v9364
        %v9545 = vunpack.c.l.s4 1983009808
        %v9546 = vunpack.c.0.s8 %v9545
        %v9547 = vlaneseq
        %v9548 = vshrl.u32 %v9547, 7
        %v9549 = vsub.s32 %v9546, %v9548
        %v9550 = vrot.slane %v9542, %v9549
        %v9552 = vunpack.c.l.s4 1983009808
        %v9553 = vunpack.c.0.s8 %v9552
        %v9554 = vlaneseq
        %v9555 = vshrl.u32 %v9554, 7
        %v9556 = vsub.s32 %v9553, %v9555
        %v9557 = vrot.slane %v9543, %v9556
        %v9558 = vcombine.low %v9359, %v9369
        %v9559 = vcombine.high %v9359, %v9369
        %v9561 = vunpack.c.l.s4 1983009808
        %v9562 = vunpack.c.0.s8 %v9561
        %v9563 = vlaneseq
        %v9564 = vshrl.u32 %v9563, 7
        %v9565 = vsub.s32 %v9562, %v9564
        %v9566 = vrot.slane %v9558, %v9565
        %v9568 = vunpack.c.l.s4 1983009808
        %v9569 = vunpack.c.0.s8 %v9568
        %v9570 = vlaneseq
        %v9571 = vshrl.u32 %v9570, 7
        %v9572 = vsub.s32 %v9569, %v9571
        %v9573 = vrot.slane %v9559, %v9572
        %v9574 = vcombine.low %v9374, %v9384
        %v9575 = vcombine.high %v9374, %v9384
        %v9577 = vunpack.c.l.s4 1983009808
        %v9578 = vunpack.c.0.s8 %v9577
        %v9579 = vlaneseq
        %v9580 = vshrl.u32 %v9579, 7
        %v9581 = vsub.s32 %v9578, %v9580
        %v9582 = vrot.slane %v9574, %v9581
        %v9584 = vunpack.c.l.s4 1983009808
        %v9585 = vunpack.c.0.s8 %v9584
        %v9586 = vlaneseq
        %v9587 = vshrl.u32 %v9586, 7
        %v9588 = vsub.s32 %v9585, %v9587
        %v9589 = vrot.slane %v9575, %v9588
        %v9590 = vcombine.low %v9379, %v9389
        %v9591 = vcombine.high %v9379, %v9389
        %v9593 = vunpack.c.l.s4 1983009808
        %v9594 = vunpack.c.0.s8 %v9593
        %v9595 = vlaneseq
        %v9596 = vshrl.u32 %v9595, 7
        %v9597 = vsub.s32 %v9594, %v9596
        %v9598 = vrot.slane %v9590, %v9597
        %v9600 = vunpack.c.l.s4 1983009808
        %v9601 = vunpack.c.0.s8 %v9600
        %v9602 = vlaneseq
        %v9603 = vshrl.u32 %v9602, 7
        %v9604 = vsub.s32 %v9601, %v9603
        %v9605 = vrot.slane %v9591, %v9604
        %v9606 = vcombine.low %v9550, %v9566
        %v9607 = vcombine.high %v9550, %v9566
        %v9609 = vunpack.c.l.s4 1934713408
        %v9610 = vunpack.c.0.s8 %v9609
        %v9611 = vlaneseq
        %v9612 = vshrl.u32 %v9611, 7
        %v9613 = vsub.s32 %v9610, %v9612
        %v9614 = vrot.slane %v9606, %v9613
        %v9616 = vunpack.c.l.s4 1934713408
        %v9617 = vunpack.c.0.s8 %v9616
        %v9618 = vlaneseq
        %v9619 = vshrl.u32 %v9618, 7
        %v9620 = vsub.s32 %v9617, %v9619
        %v9621 = vrot.slane %v9607, %v9620
        %v9622 = vcombine.low %v9557, %v9573
        %v9623 = vcombine.high %v9557, %v9573
        %v9625 = vunpack.c.l.s4 1934713408
        %v9626 = vunpack.c.0.s8 %v9625
        %v9627 = vlaneseq
        %v9628 = vshrl.u32 %v9627, 7
        %v9629 = vsub.s32 %v9626, %v9628
        %v9630 = vrot.slane %v9622, %v9629
        %v9632 = vunpack.c.l.s4 1934713408
        %v9633 = vunpack.c.0.s8 %v9632
        %v9634 = vlaneseq
        %v9635 = vshrl.u32 %v9634, 7
        %v9636 = vsub.s32 %v9633, %v9635
        %v9637 = vrot.slane %v9623, %v9636
        %v9638 = vcombine.low %v9582, %v9598
        %v9639 = vcombine.high %v9582, %v9598
        %v9641 = vunpack.c.l.s4 1934713408
        %v9642 = vunpack.c.0.s8 %v9641
        %v9643 = vlaneseq
        %v9644 = vshrl.u32 %v9643, 7
        %v9645 = vsub.s32 %v9642, %v9644
        %v9646 = vrot.slane %v9638, %v9645
        %v9648 = vunpack.c.l.s4 1934713408
        %v9649 = vunpack.c.0.s8 %v9648
        %v9650 = vlaneseq
        %v9651 = vshrl.u32 %v9650, 7
        %v9652 = vsub.s32 %v9649, %v9651
        %v9653 = vrot.slane %v9639, %v9652
        %v9654 = vcombine.low %v9589, %v9605
        %v9655 = vcombine.high %v9589, %v9605
        %v9657 = vunpack.c.l.s4 1934713408
        %v9658 = vunpack.c.0.s8 %v9657
        %v9659 = vlaneseq
        %v9660 = vshrl.u32 %v9659, 7
        %v9661 = vsub.s32 %v9658, %v9660
        %v9662 = vrot.slane %v9654, %v9661
        %v9664 = vunpack.c.l.s4 1934713408
        %v9665 = vunpack.c.0.s8 %v9664
        %v9666 = vlaneseq
        %v9667 = vshrl.u32 %v9666, 7
        %v9668 = vsub.s32 %v9665, %v9667
        %v9669 = vrot.slane %v9655, %v9668
        %v9670 = vcombine.low %v9614, %v9646
        %v9671 = vcombine.high %v9614, %v9646
        %v9672 = vcombine.low %v9621, %v9653
        %v9673 = vcombine.high %v9621, %v9653
        %v9674 = vcombine.low %v9630, %v9662
        %v9675 = vcombine.high %v9630, %v9662
        %v9676 = vcombine.low %v9637, %v9669
        %v9677 = vcombine.high %v9637, %v9669
        %9679 = vrot.lane.b32.xlu0 %v9535, 16
        %v9680 = vpop.permute.xlu0 %9679
        %9683 = vrot.lane.b32.xlu0 %v9536, 32
        %v9684 = vpop.permute.xlu0 %9683
        %9687 = vrot.lane.b32.xlu0 %v9537, 48
        %v9688 = vpop.permute.xlu0 %9687
        %9691 = vrot.lane.b32.xlu0 %v9538, 64
        %v9692 = vpop.permute.xlu0 %9691
        %9695 = vrot.lane.b32.xlu0 %v9539, 80
        %v9696 = vpop.permute.xlu0 %9695
        %9699 = vrot.lane.b32.xlu0 %v9540, 96
        %v9700 = vpop.permute.xlu0 %9699
        %9703 = vrot.lane.b32.xlu0 %v9541, 112
        %v9704 = vpop.permute.xlu0 %9703
        %9707 = vrot.lane.b32.xlu0 %v9671, 16
        %v9708 = vpop.permute.xlu0 %9707
        %9711 = vrot.lane.b32.xlu0 %v9672, 32
        %v9712 = vpop.permute.xlu0 %9711
        %9715 = vrot.lane.b32.xlu0 %v9673, 48
        %v9716 = vpop.permute.xlu0 %9715
        %9719 = vrot.lane.b32.xlu0 %v9674, 64
        %v9720 = vpop.permute.xlu0 %9719
        %9723 = vrot.lane.b32.xlu0 %v9675, 80
        %v9724 = vpop.permute.xlu0 %9723
        %9727 = vrot.lane.b32.xlu0 %v9676, 96
        %v9728 = vpop.permute.xlu0 %9727
        %9731 = vrot.lane.b32.xlu0 %v9677, 112
        %v9732 = vpop.permute.xlu0 %9731
        %v9734 = vsel %vm539, %v9534, %v9680
        %v9735 = vsel %vm541, %v9734, %v9684
        %v9736 = vsel %vm543, %v9735, %v9688
        %v9737 = vsel %vm545, %v9736, %v9692
        %v9738 = vsel %vm547, %v9737, %v9696
        %v9739 = vsel %vm549, %v9738, %v9700
        %v9740 = vsel %vm551, %v9739, %v9704
        %v9741 = vsel %vm539, %v9670, %v9708
        %v9742 = vsel %vm541, %v9741, %v9712
        %v9743 = vsel %vm543, %v9742, %v9716
        %v9744 = vsel %vm545, %v9743, %v9720
        %v9745 = vsel %vm547, %v9744, %v9724
        %v9746 = vsel %vm549, %v9745, %v9728
        %v9747 = vsel %vm551, %v9746, %v9732
        %9748 = vrot.lane.b32.xlu0 %v9352, 127
        %v9749 = vpop.permute.xlu0 %9748
        %9750 = vrot.lane.b32.xlu0 %v9354, 127
        %v9751 = vpop.permute.xlu0 %9750
        %9752 = vrot.lane.b32.xlu0 %v9357, 127
        %v9753 = vpop.permute.xlu0 %9752
        %9754 = vrot.lane.b32.xlu0 %v9359, 127
        %v9755 = vpop.permute.xlu0 %9754
        %9756 = vrot.lane.b32.xlu0 %v9362, 127
        %v9757 = vpop.permute.xlu0 %9756
        %9758 = vrot.lane.b32.xlu0 %v9364, 127
        %v9759 = vpop.permute.xlu0 %9758
        %9760 = vrot.lane.b32.xlu0 %v9367, 127
        %v9761 = vpop.permute.xlu0 %9760
        %9762 = vrot.lane.b32.xlu0 %v9369, 127
        %v9763 = vpop.permute.xlu0 %9762
        %9764 = vrot.lane.b32.xlu0 %v9372, 127
        %v9765 = vpop.permute.xlu0 %9764
        %9766 = vrot.lane.b32.xlu0 %v9374, 127
        %v9767 = vpop.permute.xlu0 %9766
        %9768 = vrot.lane.b32.xlu0 %v9377, 127
        %v9769 = vpop.permute.xlu0 %9768
        %9770 = vrot.lane.b32.xlu0 %v9379, 127
        %v9771 = vpop.permute.xlu0 %9770
        %9772 = vrot.lane.b32.xlu0 %v9382, 127
        %v9773 = vpop.permute.xlu0 %9772
        %9774 = vrot.lane.b32.xlu0 %v9384, 127
        %v9775 = vpop.permute.xlu0 %9774
        %9776 = vrot.lane.b32.xlu0 %v9387, 127
        %v9777 = vpop.permute.xlu0 %9776
        %9778 = vrot.lane.b32.xlu0 %v9389, 127
        %v9779 = vpop.permute.xlu0 %9778
        %v9796 = vcombine.low %v9749, %v9757
        %v9797 = vcombine.high %v9749, %v9757
        %v9799 = vunpack.c.l.s4 1983009808
        %v9800 = vunpack.c.0.s8 %v9799
        %v9801 = vlaneseq
        %v9802 = vshrl.u32 %v9801, 7
        %v9803 = vsub.s32 %v9800, %v9802
        %v9804 = vrot.slane %v9796, %v9803
        %v9806 = vunpack.c.l.s4 1983009808
        %v9807 = vunpack.c.0.s8 %v9806
        %v9808 = vlaneseq
        %v9809 = vshrl.u32 %v9808, 7
        %v9810 = vsub.s32 %v9807, %v9809
        %v9811 = vrot.slane %v9797, %v9810
        %v9812 = vcombine.low %v9753, %v9761
        %v9813 = vcombine.high %v9753, %v9761
        %v9815 = vunpack.c.l.s4 1983009808
        %v9816 = vunpack.c.0.s8 %v9815
        %v9817 = vlaneseq
        %v9818 = vshrl.u32 %v9817, 7
        %v9819 = vsub.s32 %v9816, %v9818
        %v9820 = vrot.slane %v9812, %v9819
        %v9822 = vunpack.c.l.s4 1983009808
        %v9823 = vunpack.c.0.s8 %v9822
        %v9824 = vlaneseq
        %v9825 = vshrl.u32 %v9824, 7
        %v9826 = vsub.s32 %v9823, %v9825
        %v9827 = vrot.slane %v9813, %v9826
        %v9828 = vcombine.low %v9765, %v9773
        %v9829 = vcombine.high %v9765, %v9773
        %v9831 = vunpack.c.l.s4 1983009808
        %v9832 = vunpack.c.0.s8 %v9831
        %v9833 = vlaneseq
        %v9834 = vshrl.u32 %v9833, 7
        %v9835 = vsub.s32 %v9832, %v9834
        %v9836 = vrot.slane %v9828, %v9835
        %v9838 = vunpack.c.l.s4 1983009808
        %v9839 = vunpack.c.0.s8 %v9838
        %v9840 = vlaneseq
        %v9841 = vshrl.u32 %v9840, 7
        %v9842 = vsub.s32 %v9839, %v9841
        %v9843 = vrot.slane %v9829, %v9842
        %v9844 = vcombine.low %v9769, %v9777
        %v9845 = vcombine.high %v9769, %v9777
        %v9847 = vunpack.c.l.s4 1983009808
        %v9848 = vunpack.c.0.s8 %v9847
        %v9849 = vlaneseq
        %v9850 = vshrl.u32 %v9849, 7
        %v9851 = vsub.s32 %v9848, %v9850
        %v9852 = vrot.slane %v9844, %v9851
        %v9854 = vunpack.c.l.s4 1983009808
        %v9855 = vunpack.c.0.s8 %v9854
        %v9856 = vlaneseq
        %v9857 = vshrl.u32 %v9856, 7
        %v9858 = vsub.s32 %v9855, %v9857
        %v9859 = vrot.slane %v9845, %v9858
        %v9860 = vcombine.low %v9804, %v9820
        %v9861 = vcombine.high %v9804, %v9820
        %v9863 = vunpack.c.l.s4 1934713408
        %v9864 = vunpack.c.0.s8 %v9863
        %v9865 = vlaneseq
        %v9866 = vshrl.u32 %v9865, 7
        %v9867 = vsub.s32 %v9864, %v9866
        %v9868 = vrot.slane %v9860, %v9867
        %v9870 = vunpack.c.l.s4 1934713408
        %v9871 = vunpack.c.0.s8 %v9870
        %v9872 = vlaneseq
        %v9873 = vshrl.u32 %v9872, 7
        %v9874 = vsub.s32 %v9871, %v9873
        %v9875 = vrot.slane %v9861, %v9874
        %v9876 = vcombine.low %v9811, %v9827
        %v9877 = vcombine.high %v9811, %v9827
        %v9879 = vunpack.c.l.s4 1934713408
        %v9880 = vunpack.c.0.s8 %v9879
        %v9881 = vlaneseq
        %v9882 = vshrl.u32 %v9881, 7
        %v9883 = vsub.s32 %v9880, %v9882
        %v9884 = vrot.slane %v9876, %v9883
        %v9886 = vunpack.c.l.s4 1934713408
        %v9887 = vunpack.c.0.s8 %v9886
        %v9888 = vlaneseq
        %v9889 = vshrl.u32 %v9888, 7
        %v9890 = vsub.s32 %v9887, %v9889
        %v9891 = vrot.slane %v9877, %v9890
        %v9892 = vcombine.low %v9836, %v9852
        %v9893 = vcombine.high %v9836, %v9852
        %v9895 = vunpack.c.l.s4 1934713408
        %v9896 = vunpack.c.0.s8 %v9895
        %v9897 = vlaneseq
        %v9898 = vshrl.u32 %v9897, 7
        %v9899 = vsub.s32 %v9896, %v9898
        %v9900 = vrot.slane %v9892, %v9899
        %v9902 = vunpack.c.l.s4 1934713408
        %v9903 = vunpack.c.0.s8 %v9902
        %v9904 = vlaneseq
        %v9905 = vshrl.u32 %v9904, 7
        %v9906 = vsub.s32 %v9903, %v9905
        %v9907 = vrot.slane %v9893, %v9906
        %v9908 = vcombine.low %v9843, %v9859
        %v9909 = vcombine.high %v9843, %v9859
        %v9911 = vunpack.c.l.s4 1934713408
        %v9912 = vunpack.c.0.s8 %v9911
        %v9913 = vlaneseq
        %v9914 = vshrl.u32 %v9913, 7
        %v9915 = vsub.s32 %v9912, %v9914
        %v9916 = vrot.slane %v9908, %v9915
        %v9918 = vunpack.c.l.s4 1934713408
        %v9919 = vunpack.c.0.s8 %v9918
        %v9920 = vlaneseq
        %v9921 = vshrl.u32 %v9920, 7
        %v9922 = vsub.s32 %v9919, %v9921
        %v9923 = vrot.slane %v9909, %v9922
        %v9924 = vcombine.low %v9868, %v9900
        %v9925 = vcombine.high %v9868, %v9900
        %v9926 = vcombine.low %v9875, %v9907
        %v9927 = vcombine.high %v9875, %v9907
        %v9928 = vcombine.low %v9884, %v9916
        %v9929 = vcombine.high %v9884, %v9916
        %v9930 = vcombine.low %v9891, %v9923
        %v9931 = vcombine.high %v9891, %v9923
        %v9932 = vcombine.low %v9751, %v9759
        %v9933 = vcombine.high %v9751, %v9759
        %v9935 = vunpack.c.l.s4 1983009808
        %v9936 = vunpack.c.0.s8 %v9935
        %v9937 = vlaneseq
        %v9938 = vshrl.u32 %v9937, 7
        %v9939 = vsub.s32 %v9936, %v9938
        %v9940 = vrot.slane %v9932, %v9939
        %v9942 = vunpack.c.l.s4 1983009808
        %v9943 = vunpack.c.0.s8 %v9942
        %v9944 = vlaneseq
        %v9945 = vshrl.u32 %v9944, 7
        %v9946 = vsub.s32 %v9943, %v9945
        %v9947 = vrot.slane %v9933, %v9946
        %v9948 = vcombine.low %v9755, %v9763
        %v9949 = vcombine.high %v9755, %v9763
        %v9951 = vunpack.c.l.s4 1983009808
        %v9952 = vunpack.c.0.s8 %v9951
        %v9953 = vlaneseq
        %v9954 = vshrl.u32 %v9953, 7
        %v9955 = vsub.s32 %v9952, %v9954
        %v9956 = vrot.slane %v9948, %v9955
        %v9958 = vunpack.c.l.s4 1983009808
        %v9959 = vunpack.c.0.s8 %v9958
        %v9960 = vlaneseq
        %v9961 = vshrl.u32 %v9960, 7
        %v9962 = vsub.s32 %v9959, %v9961
        %v9963 = vrot.slane %v9949, %v9962
        %v9964 = vcombine.low %v9767, %v9775
        %v9965 = vcombine.high %v9767, %v9775
        %v9967 = vunpack.c.l.s4 1983009808
        %v9968 = vunpack.c.0.s8 %v9967
        %v9969 = vlaneseq
        %v9970 = vshrl.u32 %v9969, 7
        %v9971 = vsub.s32 %v9968, %v9970
        %v9972 = vrot.slane %v9964, %v9971
        %v9974 = vunpack.c.l.s4 1983009808
        %v9975 = vunpack.c.0.s8 %v9974
        %v9976 = vlaneseq
        %v9977 = vshrl.u32 %v9976, 7
        %v9978 = vsub.s32 %v9975, %v9977
        %v9979 = vrot.slane %v9965, %v9978
        %v9980 = vcombine.low %v9771, %v9779
        %v9981 = vcombine.high %v9771, %v9779
        %v9983 = vunpack.c.l.s4 1983009808
        %v9984 = vunpack.c.0.s8 %v9983
        %v9985 = vlaneseq
        %v9986 = vshrl.u32 %v9985, 7
        %v9987 = vsub.s32 %v9984, %v9986
        %v9988 = vrot.slane %v9980, %v9987
        %v9990 = vunpack.c.l.s4 1983009808
        %v9991 = vunpack.c.0.s8 %v9990
        %v9992 = vlaneseq
        %v9993 = vshrl.u32 %v9992, 7
        %v9994 = vsub.s32 %v9991, %v9993
        %v9995 = vrot.slane %v9981, %v9994
        %v9996 = vcombine.low %v9940, %v9956
        %v9997 = vcombine.high %v9940, %v9956
        %v9999 = vunpack.c.l.s4 1934713408
        %v10000 = vunpack.c.0.s8 %v9999
        %v10001 = vlaneseq
        %v10002 = vshrl.u32 %v10001, 7
        %v10003 = vsub.s32 %v10000, %v10002
        %v10004 = vrot.slane %v9996, %v10003
        %v10006 = vunpack.c.l.s4 1934713408
        %v10007 = vunpack.c.0.s8 %v10006
        %v10008 = vlaneseq
        %v10009 = vshrl.u32 %v10008, 7
        %v10010 = vsub.s32 %v10007, %v10009
        %v10011 = vrot.slane %v9997, %v10010
        %v10012 = vcombine.low %v9947, %v9963
        %v10013 = vcombine.high %v9947, %v9963
        %v10015 = vunpack.c.l.s4 1934713408
        %v10016 = vunpack.c.0.s8 %v10015
        %v10017 = vlaneseq
        %v10018 = vshrl.u32 %v10017, 7
        %v10019 = vsub.s32 %v10016, %v10018
        %v10020 = vrot.slane %v10012, %v10019
        %v10022 = vunpack.c.l.s4 1934713408
        %v10023 = vunpack.c.0.s8 %v10022
        %v10024 = vlaneseq
        %v10025 = vshrl.u32 %v10024, 7
        %v10026 = vsub.s32 %v10023, %v10025
        %v10027 = vrot.slane %v10013, %v10026
        %v10028 = vcombine.low %v9972, %v9988
        %v10029 = vcombine.high %v9972, %v9988
        %v10031 = vunpack.c.l.s4 1934713408
        %v10032 = vunpack.c.0.s8 %v10031
        %v10033 = vlaneseq
        %v10034 = vshrl.u32 %v10033, 7
        %v10035 = vsub.s32 %v10032, %v10034
        %v10036 = vrot.slane %v10028, %v10035
        %v10038 = vunpack.c.l.s4 1934713408
        %v10039 = vunpack.c.0.s8 %v10038
        %v10040 = vlaneseq
        %v10041 = vshrl.u32 %v10040, 7
        %v10042 = vsub.s32 %v10039, %v10041
        %v10043 = vrot.slane %v10029, %v10042
        %v10044 = vcombine.low %v9979, %v9995
        %v10045 = vcombine.high %v9979, %v9995
        %v10047 = vunpack.c.l.s4 1934713408
        %v10048 = vunpack.c.0.s8 %v10047
        %v10049 = vlaneseq
        %v10050 = vshrl.u32 %v10049, 7
        %v10051 = vsub.s32 %v10048, %v10050
        %v10052 = vrot.slane %v10044, %v10051
        %v10054 = vunpack.c.l.s4 1934713408
        %v10055 = vunpack.c.0.s8 %v10054
        %v10056 = vlaneseq
        %v10057 = vshrl.u32 %v10056, 7
        %v10058 = vsub.s32 %v10055, %v10057
        %v10059 = vrot.slane %v10045, %v10058
        %v10060 = vcombine.low %v10004, %v10036
        %v10061 = vcombine.high %v10004, %v10036
        %v10062 = vcombine.low %v10011, %v10043
        %v10063 = vcombine.high %v10011, %v10043
        %v10064 = vcombine.low %v10020, %v10052
        %v10065 = vcombine.high %v10020, %v10052
        %v10066 = vcombine.low %v10027, %v10059
        %v10067 = vcombine.high %v10027, %v10059
        %10069 = vrot.lane.b32.xlu0 %v9925, 16
        %v10070 = vpop.permute.xlu0 %10069
        %10073 = vrot.lane.b32.xlu0 %v9926, 32
        %v10074 = vpop.permute.xlu0 %10073
        %10077 = vrot.lane.b32.xlu0 %v9927, 48
        %v10078 = vpop.permute.xlu0 %10077
        %10081 = vrot.lane.b32.xlu0 %v9928, 64
        %v10082 = vpop.permute.xlu0 %10081
        %10085 = vrot.lane.b32.xlu0 %v9929, 80
        %v10086 = vpop.permute.xlu0 %10085
        %10089 = vrot.lane.b32.xlu0 %v9930, 96
        %v10090 = vpop.permute.xlu0 %10089
        %10093 = vrot.lane.b32.xlu0 %v9931, 112
        %v10094 = vpop.permute.xlu0 %10093
        %10097 = vrot.lane.b32.xlu0 %v10061, 16
        %v10098 = vpop.permute.xlu0 %10097
        %10101 = vrot.lane.b32.xlu0 %v10062, 32
        %v10102 = vpop.permute.xlu0 %10101
        %10105 = vrot.lane.b32.xlu0 %v10063, 48
        %v10106 = vpop.permute.xlu0 %10105
        %10109 = vrot.lane.b32.xlu0 %v10064, 64
        %v10110 = vpop.permute.xlu0 %10109
        %10113 = vrot.lane.b32.xlu0 %v10065, 80
        %v10114 = vpop.permute.xlu0 %10113
        %10117 = vrot.lane.b32.xlu0 %v10066, 96
        %v10118 = vpop.permute.xlu0 %10117
        %10121 = vrot.lane.b32.xlu0 %v10067, 112
        %v10122 = vpop.permute.xlu0 %10121
        %v10124 = vsel %vm539, %v9924, %v10070
        %v10125 = vsel %vm541, %v10124, %v10074
        %v10126 = vsel %vm543, %v10125, %v10078
        %v10127 = vsel %vm545, %v10126, %v10082
        %v10128 = vsel %vm547, %v10127, %v10086
        %v10129 = vsel %vm549, %v10128, %v10090
        %v10130 = vsel %vm551, %v10129, %v10094
        %v10131 = vsel %vm539, %v10060, %v10098
        %v10132 = vsel %vm541, %v10131, %v10102
        %v10133 = vsel %vm543, %v10132, %v10106
        %v10134 = vsel %vm545, %v10133, %v10110
        %v10135 = vsel %vm547, %v10134, %v10114
        %v10136 = vsel %vm549, %v10135, %v10118
        %v10137 = vsel %vm551, %v10136, %v10122
        %10138 = vrot.lane.b32.xlu0 %v9352, 126
        %v10139 = vpop.permute.xlu0 %10138
        %10140 = vrot.lane.b32.xlu0 %v9354, 126
        %v10141 = vpop.permute.xlu0 %10140
        %10142 = vrot.lane.b32.xlu0 %v9357, 126
        %v10143 = vpop.permute.xlu0 %10142
        %10144 = vrot.lane.b32.xlu0 %v9359, 126
        %v10145 = vpop.permute.xlu0 %10144
        %10146 = vrot.lane.b32.xlu0 %v9362, 126
        %v10147 = vpop.permute.xlu0 %10146
        %10148 = vrot.lane.b32.xlu0 %v9364, 126
        %v10149 = vpop.permute.xlu0 %10148
        %10150 = vrot.lane.b32.xlu0 %v9367, 126
        %v10151 = vpop.permute.xlu0 %10150
        %10152 = vrot.lane.b32.xlu0 %v9369, 126
        %v10153 = vpop.permute.xlu0 %10152
        %10154 = vrot.lane.b32.xlu0 %v9372, 126
        %v10155 = vpop.permute.xlu0 %10154
        %10156 = vrot.lane.b32.xlu0 %v9374, 126
        %v10157 = vpop.permute.xlu0 %10156
        %10158 = vrot.lane.b32.xlu0 %v9377, 126
        %v10159 = vpop.permute.xlu0 %10158
        %10160 = vrot.lane.b32.xlu0 %v9379, 126
        %v10161 = vpop.permute.xlu0 %10160
        %10162 = vrot.lane.b32.xlu0 %v9382, 126
        %v10163 = vpop.permute.xlu0 %10162
        %10164 = vrot.lane.b32.xlu0 %v9384, 126
        %v10165 = vpop.permute.xlu0 %10164
        %10166 = vrot.lane.b32.xlu0 %v9387, 126
        %v10167 = vpop.permute.xlu0 %10166
        %10168 = vrot.lane.b32.xlu0 %v9389, 126
        %v10169 = vpop.permute.xlu0 %10168
        %v10186 = vcombine.low %v10139, %v10147
        %v10187 = vcombine.high %v10139, %v10147
        %v10189 = vunpack.c.l.s4 1983009808
        %v10190 = vunpack.c.0.s8 %v10189
        %v10191 = vlaneseq
        %v10192 = vshrl.u32 %v10191, 7
        %v10193 = vsub.s32 %v10190, %v10192
        %v10194 = vrot.slane %v10186, %v10193
        %v10196 = vunpack.c.l.s4 1983009808
        %v10197 = vunpack.c.0.s8 %v10196
        %v10198 = vlaneseq
        %v10199 = vshrl.u32 %v10198, 7
        %v10200 = vsub.s32 %v10197, %v10199
        %v10201 = vrot.slane %v10187, %v10200
        %v10202 = vcombine.low %v10143, %v10151
        %v10203 = vcombine.high %v10143, %v10151
        %v10205 = vunpack.c.l.s4 1983009808
        %v10206 = vunpack.c.0.s8 %v10205
        %v10207 = vlaneseq
        %v10208 = vshrl.u32 %v10207, 7
        %v10209 = vsub.s32 %v10206, %v10208
        %v10210 = vrot.slane %v10202, %v10209
        %v10212 = vunpack.c.l.s4 1983009808
        %v10213 = vunpack.c.0.s8 %v10212
        %v10214 = vlaneseq
        %v10215 = vshrl.u32 %v10214, 7
        %v10216 = vsub.s32 %v10213, %v10215
        %v10217 = vrot.slane %v10203, %v10216
        %v10218 = vcombine.low %v10155, %v10163
        %v10219 = vcombine.high %v10155, %v10163
        %v10221 = vunpack.c.l.s4 1983009808
        %v10222 = vunpack.c.0.s8 %v10221
        %v10223 = vlaneseq
        %v10224 = vshrl.u32 %v10223, 7
        %v10225 = vsub.s32 %v10222, %v10224
        %v10226 = vrot.slane %v10218, %v10225
        %v10228 = vunpack.c.l.s4 1983009808
        %v10229 = vunpack.c.0.s8 %v10228
        %v10230 = vlaneseq
        %v10231 = vshrl.u32 %v10230, 7
        %v10232 = vsub.s32 %v10229, %v10231
        %v10233 = vrot.slane %v10219, %v10232
        %v10234 = vcombine.low %v10159, %v10167
        %v10235 = vcombine.high %v10159, %v10167
        %v10237 = vunpack.c.l.s4 1983009808
        %v10238 = vunpack.c.0.s8 %v10237
        %v10239 = vlaneseq
        %v10240 = vshrl.u32 %v10239, 7
        %v10241 = vsub.s32 %v10238, %v10240
        %v10242 = vrot.slane %v10234, %v10241
        %v10244 = vunpack.c.l.s4 1983009808
        %v10245 = vunpack.c.0.s8 %v10244
        %v10246 = vlaneseq
        %v10247 = vshrl.u32 %v10246, 7
        %v10248 = vsub.s32 %v10245, %v10247
        %v10249 = vrot.slane %v10235, %v10248
        %v10250 = vcombine.low %v10194, %v10210
        %v10251 = vcombine.high %v10194, %v10210
        %v10253 = vunpack.c.l.s4 1934713408
        %v10254 = vunpack.c.0.s8 %v10253
        %v10255 = vlaneseq
        %v10256 = vshrl.u32 %v10255, 7
        %v10257 = vsub.s32 %v10254, %v10256
        %v10258 = vrot.slane %v10250, %v10257
        %v10260 = vunpack.c.l.s4 1934713408
        %v10261 = vunpack.c.0.s8 %v10260
        %v10262 = vlaneseq
        %v10263 = vshrl.u32 %v10262, 7
        %v10264 = vsub.s32 %v10261, %v10263
        %v10265 = vrot.slane %v10251, %v10264
        %v10266 = vcombine.low %v10201, %v10217
        %v10267 = vcombine.high %v10201, %v10217
        %v10269 = vunpack.c.l.s4 1934713408
        %v10270 = vunpack.c.0.s8 %v10269
        %v10271 = vlaneseq
        %v10272 = vshrl.u32 %v10271, 7
        %v10273 = vsub.s32 %v10270, %v10272
        %v10274 = vrot.slane %v10266, %v10273
        %v10276 = vunpack.c.l.s4 1934713408
        %v10277 = vunpack.c.0.s8 %v10276
        %v10278 = vlaneseq
        %v10279 = vshrl.u32 %v10278, 7
        %v10280 = vsub.s32 %v10277, %v10279
        %v10281 = vrot.slane %v10267, %v10280
        %v10282 = vcombine.low %v10226, %v10242
        %v10283 = vcombine.high %v10226, %v10242
        %v10285 = vunpack.c.l.s4 1934713408
        %v10286 = vunpack.c.0.s8 %v10285
        %v10287 = vlaneseq
        %v10288 = vshrl.u32 %v10287, 7
        %v10289 = vsub.s32 %v10286, %v10288
        %v10290 = vrot.slane %v10282, %v10289
        %v10292 = vunpack.c.l.s4 1934713408
        %v10293 = vunpack.c.0.s8 %v10292
        %v10294 = vlaneseq
        %v10295 = vshrl.u32 %v10294, 7
        %v10296 = vsub.s32 %v10293, %v10295
        %v10297 = vrot.slane %v10283, %v10296
        %v10298 = vcombine.low %v10233, %v10249
        %v10299 = vcombine.high %v10233, %v10249
        %v10301 = vunpack.c.l.s4 1934713408
        %v10302 = vunpack.c.0.s8 %v10301
        %v10303 = vlaneseq
        %v10304 = vshrl.u32 %v10303, 7
        %v10305 = vsub.s32 %v10302, %v10304
        %v10306 = vrot.slane %v10298, %v10305
        %v10308 = vunpack.c.l.s4 1934713408
        %v10309 = vunpack.c.0.s8 %v10308
        %v10310 = vlaneseq
        %v10311 = vshrl.u32 %v10310, 7
        %v10312 = vsub.s32 %v10309, %v10311
        %v10313 = vrot.slane %v10299, %v10312
        %v10314 = vcombine.low %v10258, %v10290
        %v10315 = vcombine.high %v10258, %v10290
        %v10316 = vcombine.low %v10265, %v10297
        %v10317 = vcombine.high %v10265, %v10297
        %v10318 = vcombine.low %v10274, %v10306
        %v10319 = vcombine.high %v10274, %v10306
        %v10320 = vcombine.low %v10281, %v10313
        %v10321 = vcombine.high %v10281, %v10313
        %v10322 = vcombine.low %v10141, %v10149
        %v10323 = vcombine.high %v10141, %v10149
        %v10325 = vunpack.c.l.s4 1983009808
        %v10326 = vunpack.c.0.s8 %v10325
        %v10327 = vlaneseq
        %v10328 = vshrl.u32 %v10327, 7
        %v10329 = vsub.s32 %v10326, %v10328
        %v10330 = vrot.slane %v10322, %v10329
        %v10332 = vunpack.c.l.s4 1983009808
        %v10333 = vunpack.c.0.s8 %v10332
        %v10334 = vlaneseq
        %v10335 = vshrl.u32 %v10334, 7
        %v10336 = vsub.s32 %v10333, %v10335
        %v10337 = vrot.slane %v10323, %v10336
        %v10338 = vcombine.low %v10145, %v10153
        %v10339 = vcombine.high %v10145, %v10153
        %v10341 = vunpack.c.l.s4 1983009808
        %v10342 = vunpack.c.0.s8 %v10341
        %v10343 = vlaneseq
        %v10344 = vshrl.u32 %v10343, 7
        %v10345 = vsub.s32 %v10342, %v10344
        %v10346 = vrot.slane %v10338, %v10345
        %v10348 = vunpack.c.l.s4 1983009808
        %v10349 = vunpack.c.0.s8 %v10348
        %v10350 = vlaneseq
        %v10351 = vshrl.u32 %v10350, 7
        %v10352 = vsub.s32 %v10349, %v10351
        %v10353 = vrot.slane %v10339, %v10352
        %v10354 = vcombine.low %v10157, %v10165
        %v10355 = vcombine.high %v10157, %v10165
        %v10357 = vunpack.c.l.s4 1983009808
        %v10358 = vunpack.c.0.s8 %v10357
        %v10359 = vlaneseq
        %v10360 = vshrl.u32 %v10359, 7
        %v10361 = vsub.s32 %v10358, %v10360
        %v10362 = vrot.slane %v10354, %v10361
        %v10364 = vunpack.c.l.s4 1983009808
        %v10365 = vunpack.c.0.s8 %v10364
        %v10366 = vlaneseq
        %v10367 = vshrl.u32 %v10366, 7
        %v10368 = vsub.s32 %v10365, %v10367
        %v10369 = vrot.slane %v10355, %v10368
        %v10370 = vcombine.low %v10161, %v10169
        %v10371 = vcombine.high %v10161, %v10169
        %v10373 = vunpack.c.l.s4 1983009808
        %v10374 = vunpack.c.0.s8 %v10373
        %v10375 = vlaneseq
        %v10376 = vshrl.u32 %v10375, 7
        %v10377 = vsub.s32 %v10374, %v10376
        %v10378 = vrot.slane %v10370, %v10377
        %v10380 = vunpack.c.l.s4 1983009808
        %v10381 = vunpack.c.0.s8 %v10380
        %v10382 = vlaneseq
        %v10383 = vshrl.u32 %v10382, 7
        %v10384 = vsub.s32 %v10381, %v10383
        %v10385 = vrot.slane %v10371, %v10384
        %v10386 = vcombine.low %v10330, %v10346
        %v10387 = vcombine.high %v10330, %v10346
        %v10389 = vunpack.c.l.s4 1934713408
        %v10390 = vunpack.c.0.s8 %v10389
        %v10391 = vlaneseq
        %v10392 = vshrl.u32 %v10391, 7
        %v10393 = vsub.s32 %v10390, %v10392
        %v10394 = vrot.slane %v10386, %v10393
        %v10396 = vunpack.c.l.s4 1934713408
        %v10397 = vunpack.c.0.s8 %v10396
        %v10398 = vlaneseq
        %v10399 = vshrl.u32 %v10398, 7
        %v10400 = vsub.s32 %v10397, %v10399
        %v10401 = vrot.slane %v10387, %v10400
        %v10402 = vcombine.low %v10337, %v10353
        %v10403 = vcombine.high %v10337, %v10353
        %v10405 = vunpack.c.l.s4 1934713408
        %v10406 = vunpack.c.0.s8 %v10405
        %v10407 = vlaneseq
        %v10408 = vshrl.u32 %v10407, 7
        %v10409 = vsub.s32 %v10406, %v10408
        %v10410 = vrot.slane %v10402, %v10409
        %v10412 = vunpack.c.l.s4 1934713408
        %v10413 = vunpack.c.0.s8 %v10412
        %v10414 = vlaneseq
        %v10415 = vshrl.u32 %v10414, 7
        %v10416 = vsub.s32 %v10413, %v10415
        %v10417 = vrot.slane %v10403, %v10416
        %v10418 = vcombine.low %v10362, %v10378
        %v10419 = vcombine.high %v10362, %v10378
        %v10421 = vunpack.c.l.s4 1934713408
        %v10422 = vunpack.c.0.s8 %v10421
        %v10423 = vlaneseq
        %v10424 = vshrl.u32 %v10423, 7
        %v10425 = vsub.s32 %v10422, %v10424
        %v10426 = vrot.slane %v10418, %v10425
        %v10428 = vunpack.c.l.s4 1934713408
        %v10429 = vunpack.c.0.s8 %v10428
        %v10430 = vlaneseq
        %v10431 = vshrl.u32 %v10430, 7
        %v10432 = vsub.s32 %v10429, %v10431
        %v10433 = vrot.slane %v10419, %v10432
        %v10434 = vcombine.low %v10369, %v10385
        %v10435 = vcombine.high %v10369, %v10385
        %v10437 = vunpack.c.l.s4 1934713408
        %v10438 = vunpack.c.0.s8 %v10437
        %v10439 = vlaneseq
        %v10440 = vshrl.u32 %v10439, 7
        %v10441 = vsub.s32 %v10438, %v10440
        %v10442 = vrot.slane %v10434, %v10441
        %v10444 = vunpack.c.l.s4 1934713408
        %v10445 = vunpack.c.0.s8 %v10444
        %v10446 = vlaneseq
        %v10447 = vshrl.u32 %v10446, 7
        %v10448 = vsub.s32 %v10445, %v10447
        %v10449 = vrot.slane %v10435, %v10448
        %v10450 = vcombine.low %v10394, %v10426
        %v10451 = vcombine.high %v10394, %v10426
        %v10452 = vcombine.low %v10401, %v10433
        %v10453 = vcombine.high %v10401, %v10433
        %v10454 = vcombine.low %v10410, %v10442
        %v10455 = vcombine.high %v10410, %v10442
        %v10456 = vcombine.low %v10417, %v10449
        %v10457 = vcombine.high %v10417, %v10449
        %10459 = vrot.lane.b32.xlu0 %v10315, 16
        %v10460 = vpop.permute.xlu0 %10459
        %10463 = vrot.lane.b32.xlu0 %v10316, 32
        %v10464 = vpop.permute.xlu0 %10463
        %10467 = vrot.lane.b32.xlu0 %v10317, 48
        %v10468 = vpop.permute.xlu0 %10467
        %10471 = vrot.lane.b32.xlu0 %v10318, 64
        %v10472 = vpop.permute.xlu0 %10471
        %10475 = vrot.lane.b32.xlu0 %v10319, 80
        %v10476 = vpop.permute.xlu0 %10475
        %10479 = vrot.lane.b32.xlu0 %v10320, 96
        %v10480 = vpop.permute.xlu0 %10479
        %10483 = vrot.lane.b32.xlu0 %v10321, 112
        %v10484 = vpop.permute.xlu0 %10483
        %10487 = vrot.lane.b32.xlu0 %v10451, 16
        %v10488 = vpop.permute.xlu0 %10487
        %10491 = vrot.lane.b32.xlu0 %v10452, 32
        %v10492 = vpop.permute.xlu0 %10491
        %10495 = vrot.lane.b32.xlu0 %v10453, 48
        %v10496 = vpop.permute.xlu0 %10495
        %10499 = vrot.lane.b32.xlu0 %v10454, 64
        %v10500 = vpop.permute.xlu0 %10499
        %10503 = vrot.lane.b32.xlu0 %v10455, 80
        %v10504 = vpop.permute.xlu0 %10503
        %10507 = vrot.lane.b32.xlu0 %v10456, 96
        %v10508 = vpop.permute.xlu0 %10507
        %10511 = vrot.lane.b32.xlu0 %v10457, 112
        %v10512 = vpop.permute.xlu0 %10511
        %v10514 = vsel %vm539, %v10314, %v10460
        %v10515 = vsel %vm541, %v10514, %v10464
        %v10516 = vsel %vm543, %v10515, %v10468
        %v10517 = vsel %vm545, %v10516, %v10472
        %v10518 = vsel %vm547, %v10517, %v10476
        %v10519 = vsel %vm549, %v10518, %v10480
        %v10520 = vsel %vm551, %v10519, %v10484
        %v10521 = vsel %vm539, %v10450, %v10488
        %v10522 = vsel %vm541, %v10521, %v10492
        %v10523 = vsel %vm543, %v10522, %v10496
        %v10524 = vsel %vm545, %v10523, %v10500
        %v10525 = vsel %vm547, %v10524, %v10504
        %v10526 = vsel %vm549, %v10525, %v10508
        %v10527 = vsel %vm551, %v10526, %v10512
        %v10528 = vpack.c.bf16 %v7766, %v7360
        %v10529 = vpack.c.bf16 %v7773, %v7367
        %v10530 = vpack.c.bf16 %v8562, %v8156
        %v10531 = vpack.c.bf16 %v8569, %v8163
        %v10532 = vpack.c.bf16 %v9342, %v8952
        %v10533 = vpack.c.bf16 %v9349, %v8959
        %v10534 = vpack.c.bf16 %v10130, %v9740
        %v10535 = vpack.c.bf16 %v10137, %v9747
        %v10536 = vpack.c.bf16 %v10520, %v10520
        %v10537 = vpack.c.bf16 %v10527, %v10527
        %v10538 = vld [vmem:[%s4] sm:$0xf]
        %v10540 = vsel %vm6530, %v10538, 0
        %v10543 = vsel %vm2446, %v10536, 0
        %v10546 = vsel %vm2446, %v10537, 0
        %10548 = vmatprep.subr.bf16.mxu0 0
        %10549 = vmatpush1.bf16.msra.mxu0 0
        %10550 = vmatprep.subr.bf16.mxu0 0
        %10551 = vmatpush1.bf16.msra.mxu0 0
        %10552 = vmatprep.subr.bf16.mxu0 0
        %10553 = vmatpush1.bf16.msra.mxu0 0
        %10554 = vmatprep.subr.bf16.mxu0 %v10546
        %10555 = vmatpush1.bf16.msra.mxu0 %v10543
        %10556 = vmatprep.subr.bf16.mxu0 %v10535
        %10557 = vmatpush1.bf16.msra.mxu0 %v10534
        %10558 = vmatprep.subr.bf16.mxu0 %v10533
        %10559 = vmatpush1.bf16.msra.mxu0 %v10532
        %10560 = vmatprep.subr.bf16.mxu0 %v10531
        %10561 = vmatpush1.bf16.msra.mxu0 %v10530
        %10562 = vmatprep.subr.bf16.mxu0 %v10529
        %10563 = vmatpush1.bf16.msra.mxu0 %v10528
        %10564 = vmatprep.subr.bf16.mxu0 0
        %10565 = vmatpush2.bf16.msra.mxu0 0
        %10566 = vmatprep.subr.bf16.mxu0 0
        %10567 = vmatpush2.bf16.msra.mxu0 0
        %10568 = vmatprep.subr.bf16.mxu0 0
        %10569 = vmatpush2.bf16.msra.mxu0 0
        %10570 = vmatprep.subr.bf16.mxu0 0
        %10571 = vmatpush2.bf16.msra.mxu0 0
        %10572 = vmatprep.subr.bf16.mxu0 0
        %10573 = vmatpush2.bf16.msra.mxu0 0
        %10574 = vmatprep.subr.bf16.mxu0 0
        %10575 = vmatpush2.bf16.msra.mxu0 0
        %10576 = vmatprep.subr.bf16.mxu0 0
        %10577 = vmatpush2.bf16.msra.mxu0 0
        %10578 = vmatprep.subr.bf16.mxu0 0
        %10579 = vmatpush2.bf16.msra.mxu0 0
        %10580 = vmatprep.mubr.bf16.mxu0 0
        %10581 = vmatmul.mubr.bf16.gmra.mxu0 %v10540
        %v10582 = vpop.f32.mrf.mxu0
        %v10583 = vadd.f32 0.0, %v10582
        %v10584 = vpop.f32.mrf.mxu0
        %v10585 = vadd.f32 0.0, %v10584
        %v10586 = vpop.f32.mrf.mxu0
        %v10587 = vpop.f32.mrf.mxu0
        %10588 = vdwg.mxu0
        %v10589 = vld [vmem:[#allocation7] sm:$0xff]
        %v10590 = vadd.f32 %v10583, %v10585
        %10591 = vadd.xlane.f32.xlu0 %v10590
        %v10592 = vpop.xlane.xlu0 %10591
        %v10593 = vadd.f32 %v10589, %v10592
        %10594 = vst.msk [vmem:[#allocation7] sm:$0xff] %vm2519, %v10593
        %v10595 = vld [vmem:[#allocation8] sm:$0xff]
        %v10596 = vmul.f32 %v10583, %v10583
        %v10597 = vmul.f32 %v10585, %v10585
        %v10598 = vadd.f32 %v10596, %v10597
        %10599 = vadd.xlane.f32.xlu0 %v10598
        %v10600 = vpop.xlane.xlu0 %10599
        %v10601 = vadd.f32 %v10595, %v10600
        %10602 = vst.msk [vmem:[#allocation8] sm:$0xff] %vm2519, %v10601
        %s10603 = scalar_lea.vmem %s7, 16
        %10604 = vst [vmem:[%s10603] sm:$0xff] %v10583
        %10605 = vst [vmem:[%s10603 + $0x8] sm:$0xff] %v10585
        %v10606 = vld [vmem:[#allocation7] sm:$0xff]
        %v10607 = vmul.f32 %v10606, 0.001953125
        %v10608 = vld [vmem:[#allocation8] sm:$0xff]
        %v10609 = vmul.f32 %v10608, 0.001953125
        %v10610 = vmul.f32 %v10607, %v10607
        %v10611 = vsub.f32 %v10609, %v10610
        %v10612 = vld [vmem:[%s5] sm:$0xff]
        %v10613 = vadd.f32 %v10611, 1e-05
        %v10614 = vrsqrt.pop %v10613
        %v10615 = vmul.f32 %v10612, %v10614
        %v10616 = vld [vmem:[%s6] sm:$0xff]
        %v10617 = vmul.f32 %v10607, %v10615
        %v10618 = vsub.f32 %v10616, %v10617
        %v10619 = vld [vmem:[%s7] sm:$0xff]
        %v10620 = vld [vmem:[%s7 + $0x8] sm:$0xff]
        %10622 = vset.pattern.permute.xlu0 0
        %10623 = vperm.xlu0 %10622, %v10615
        %v10624 = vpop.permute.xlu0 %10623
        %v10626 = vmul.f32 %v10619, %v10624
        %v10627 = vmul.f32 %v10620, %v10624
        %10629 = vset.pattern.permute.xlu0 0
        %10630 = vperm.xlu0 %10629, %v10618
        %v10631 = vpop.permute.xlu0 %10630
        %v10633 = vadd.f32 %v10626, %v10631
        %v10634 = vadd.f32 %v10627, %v10631
        %v10635 = vmax.f32 %v10633, 0.0
        %v10636 = vmax.f32 %v10634, 0.0
        %10637 = vst [vmem:[%s7] sm:$0xff] %v10635
        %10638 = vst [vmem:[%s7 + $0x8] sm:$0xff] %v10636
        %v10639 = vld [vmem:[%s10603] sm:$0xff]
        %v10640 = vld [vmem:[%s10603 + $0x8] sm:$0xff]
        %v10641 = vmul.f32 %v10639, %v10624
        %v10642 = vmul.f32 %v10640, %v10624
        %v10643 = vadd.f32 %v10641, %v10631
        %v10644 = vadd.f32 %v10642, %v10631
        %v10645 = vmax.f32 %v10643, 0.0
        %v10646 = vmax.f32 %v10644, 0.0
        %10647 = vst [vmem:[%s10603] sm:$0xff] %v10645
        %10648 = vst [vmem:[%s10603 + $0x8] sm:$0xff] %v10646
      $region56: #{double_conv.1} parent=47 // pred_fallthru
        _
      // Predicated region
      $region57: #{double_conv.1} parent=47 // pred_check
        %p10649 = pneg %p183
      $region58: #{double_conv.1} parent=47 // pred_check_branch
        %10651 = sbr.rel (%p10649) target = $region60
      $region59: #{double_conv.1} parent=47 // pred_region
        _
      $region60: #{double_conv.1} parent=47 // pred_fallthru
        _
      // Predicated region
      $region61: #{double_conv.1} parent=47 // pred_check
        %p10652 = pneg %p183
      $region62: #{double_conv.1} parent=47 // pred_check_branch
        %10654 = sbr.rel (%p10652) target = $region64
      $region63: #{double_conv.1} parent=47 // pred_region
        _
      $region64: #{double_conv.1} parent=47 // pred_fallthru
        _
    $region48: #{double_conv.1} parent=5 // pred_fallthru
      _
    %p10655 = scmp.le.s32.totalorder 2, %s13
    // Predicated region
    $region65: #{double_conv.1} parent=5 // pred_check
      %p10656 = pneg %p10655
    $region66: #{double_conv.1} parent=5 // pred_check_branch
      %10658 = sbr.rel (%p10656) target = $region68
    $region67: #{double_conv.1} parent=5 // pred_region
      %s10659 = ssub.s32 %s13, 2
    $region68: #{double_conv.1} parent=5 // pred_fallthru
      _
  $region6: #{double_conv.1} parent=0 // loop_footer
    %s17 = sadd.s32 1, %s13
  $region7: #{double_conv.1} parent=0 // loop_footer_branch
    %12 = sbr.rel target = $region3
  $region8: #{double_conv.1} parent=0 // loop_exit
    _

</llo_original>
